<compile_context>
chip_gen: v7x
topology: tpu7x:2x2x1
jax: 0.10.0
libtpu: 0.0.40
codegen_flags: <defaults>
</compile_context>

<pallas_src>
import math
import functools

import numpy as np
import jax
import jax.numpy as jnp
from jax import lax
from jax.experimental import pallas as pl
from jax.experimental.pallas import tpu as pltpu

WINDOW_SIZE = 11
SIGMA = 1.5
_C1 = 0.01 ** 2
_C2 = 0.03 ** 2

_TARGET_INPUT_BYTES_PER_STEP = 512 * 1024   # aim for >= ~0.5 MiB of input per grid step


def _gaussian_1d(window_size: int = WINDOW_SIZE, sigma: float = SIGMA) -> np.ndarray:
    """Deterministic 'parameter' of the module: normalized 1D Gaussian taps."""
    g = np.array(
        [math.exp(-((x - window_size // 2) ** 2) / (2.0 * sigma ** 2))
         for x in range(window_size)],
        dtype=np.float64,
    )
    return g / g.sum()


def _toeplitz_same(n: int, g: np.ndarray) -> np.ndarray:
    """Banded Toeplitz T with T[src, dst] = g[src - dst + pad].

    `y = x @ T` is exactly a 'same' cross-correlation with zero padding along the
    last axis of x (matching F.conv2d(padding=window_size//2))."""
    ws = len(g)
    pad = ws // 2
    t = np.zeros((n, n), dtype=np.float64)
    for src in range(n):
        for dst in range(n):
            d = src - dst + pad
            if 0 <= d < ws:
                t[src, dst] = g[d]
    return t


def _ssim_group_kernel(x1_ref, x2_ref, twbd_ref, th5_ref, out_ref,
                       *, Bg, G, H, W, GW, precision):
    """Bg lane-groups of G planes each: Toeplitz convs on the MXU + SSIM map
    + lane-dense (8, GW) partial sums per group."""
    twbd = twbd_ref[...]                   # (GW, GW) block-diagonal row Toeplitz
    th5 = th5_ref[...]                     # (5H, 5H) block-diagonal column Toeplitz
    x1 = x1_ref[...]                       # (Bg*G, H, W) float32, natural NCHW planes
    x2 = x2_ref[...]

    # Product fields once for the whole block (cheap VPU work).
    p11 = x1 * x1
    p22 = x2 * x2
    p12 = x1 * x2

    for b in range(Bg):
        # ---- row pass (conv along W) with the plane->lane interleave folded in ----
        # Per plane g: (5H, W) @ tw_bd[g*W:(g+1)*W, :] lands plane g's row-convolved
        # fields in lanes [g*W, (g+1)*W) of a (5H, GW) accumulator.  Same total MACs
        # as one block-diagonal matmul on pre-transposed data, but no HBM transpose.
        rowc = None
        for g in range(G):
            p = b * G + g
            stacked = jnp.concatenate(
                [x1[p], x2[p], p11[p], p22[p], p12[p]], axis=0)        # (5H, W)
            term = jnp.dot(stacked, twbd[g * W:(g + 1) * W, :],
                           preferred_element_type=jnp.float32,
                           precision=precision)                        # (5H, GW)
            rowc = term if rowc is None else rowc + term

        # ---- column pass (conv along H): one block-diagonal kron(eye(5), th) ----
        conv = jnp.dot(th5, rowc,
                       preferred_element_type=jnp.float32,
                       precision=precision)                            # (5H, GW)

        mu1 = conv[0 * H:1 * H]
        mu2 = conv[1 * H:2 * H]
        e_x1x1 = conv[2 * H:3 * H]
        e_x2x2 = conv[3 * H:4 * H]
        e_x1x2 = conv[4 * H:5 * H]

        mu1_sq = mu1 * mu1
        mu2_sq = mu2 * mu2
        mu1_mu2 = mu1 * mu2
        sigma1_sq = e_x1x1 - mu1_sq
        sigma2_sq = e_x2x2 - mu2_sq
        sigma12 = e_x1x2 - mu1_mu2

        num = (2.0 * mu1_mu2 + _C1) * (2.0 * sigma12 + _C2)
        den = (mu1_sq + mu2_sq + _C1) * (sigma1_sq + sigma2_sq + _C2)

        # EUP approximate reciprocal + one Newton-Raphson step (~f32 accurate).
        r = pl.reciprocal(den, approx=True)
        r = r * (2.0 - den * r)
        ssim_map = num * r                                             # (H, GW)

        # ---- lane-dense partial sums: pairwise tree over (8, GW) sublane tiles ----
        if H % 8 == 0:
            parts = [ssim_map[j * 8:(j + 1) * 8, :] for j in range(H // 8)]
            while len(parts) > 1:
                nxt = [parts[i] + parts[i + 1] for i in range(0, len(parts) - 1, 2)]
                if len(parts) % 2:
                    nxt.append(parts[-1])
                parts = nxt
            psum = parts[0]                                            # (8, GW)
        else:
            psum = jnp.concatenate(
                [jnp.sum(ssim_map, axis=0, keepdims=True),
                 jnp.zeros((7, GW), jnp.float32)], axis=0)             # (8, GW)

        out_ref[b] = psum


def _vmem_bytes_estimate(P, Bg, H, W, GW):
    """Rough VMEM requirement (double-buffered operands + constants + temporaries)."""
    f32 = 4
    in_blk = P * H * W * f32                      # one input block (x1 or x2)
    const = (GW * GW + 25 * H * H) * f32          # tw_bd + th5
    out_blk = Bg * 8 * GW * f32
    work = 3 * in_blk + (2 * 5 * H * GW + 12 * H * GW) * f32
    total = 2 * (2 * in_blk) + 2 * const + 2 * out_blk + work
    # 2x margin, 8 MiB floor, 32 MiB cap (half of a v7x TensorCore's physical VMEM).
    return int(min(max(2 * total, 8 * 1024 * 1024), 32 * 1024 * 1024))


def ssim_loss(img1, img2, window_size: int = WINDOW_SIZE, size_average: bool = True,
              precision=None):
    """Equivalent of SSIMLoss()(img1, img2) for NCHW float inputs."""
    assert size_average, "only size_average=True (scalar loss) is implemented"
    N, C, H, W = img1.shape
    NC = N * C

    # Lane-pack G planes per group (fills up to 128 lanes for small W).
    G = min(max(1, 128 // W), NC)
    GW = G * W
    num_groups = pl.cdiv(NC, G)

    # Bg groups per grid step: reach ~0.5 MiB of input per step, but keep at least
    # 2 grid steps when more than one group exists (v7x megacore sharding).
    group_in_bytes = 2 * G * H * W * 4
    Bg = max(1, min(num_groups, _TARGET_INPUT_BYTES_PER_STEP // max(group_in_bytes, 1)))
    if num_groups > 1:
        Bg = min(Bg, pl.cdiv(num_groups, 2))
    num_blocks = pl.cdiv(num_groups, Bg)
    total_groups = num_blocks * Bg
    P = Bg * G                                  # planes per grid step
    NCp = total_groups * G

    # Toeplitz "parameters" (the Gaussian window of the PyTorch module).
    g1d = _gaussian_1d(window_size, SIGMA)
    tw = _toeplitz_same(W, g1d)                 # (W, W):  y = x @ tw    (row conv)
    th_col = _toeplitz_same(H, g1d).T           # (H, H):  z = th_col @ x (column conv)
    tw_bd = np.kron(np.eye(G), tw).astype(np.float32)      # (GW, GW) block-diagonal
    th5 = np.kron(np.eye(5), th_col).astype(np.float32)    # (5H, 5H) block-diagonal

    # Natural plane-major layout; NO transpose, only zero-plane padding (dropped later).
    x1 = img1.astype(jnp.float32).reshape(NC, H, W)
    x2 = img2.astype(jnp.float32).reshape(NC, H, W)
    if NCp != NC:
        zpad = jnp.zeros((NCp - NC, H, W), jnp.float32)
        x1 = jnp.concatenate([x1, zpad], axis=0)
        x2 = jnp.concatenate([x2, zpad], axis=0)

    vmem_bytes = _vmem_bytes_estimate(P, Bg, H, W, GW)

    def call(prec):
        kernel = functools.partial(_ssim_group_kernel,
                                   Bg=Bg, G=G, H=H, W=W, GW=GW, precision=prec)
        return pl.pallas_call(
            kernel,
            out_shape=jax.ShapeDtypeStruct((total_groups, 8, GW), jnp.float32),
            grid=(num_blocks,),
            in_specs=[
                pl.BlockSpec((P, H, W), lambda i: (i, 0, 0)),
                pl.BlockSpec((P, H, W), lambda i: (i, 0, 0)),
                pl.BlockSpec((GW, GW), lambda i: (0, 0)),
                pl.BlockSpec((5 * H, 5 * H), lambda i: (0, 0)),
            ],
            out_specs=pl.BlockSpec((Bg, 8, GW), lambda i: (i, 0, 0)),
            compiler_params=pltpu.CompilerParams(
                dimension_semantics=("parallel",),     # independent groups of planes
                vmem_limit_bytes=vmem_bytes,
            ),
        )(x1, x2, jnp.asarray(tw_bd), jnp.asarray(th5))

    if precision is None:
        # Prefer 3-pass bf16 (HIGH) per the perf review; some Mosaic versions only
        # accept DEFAULT/HIGHEST for dot precision, so fall back to exact-f32 HIGHEST.
        try:
            out = call(lax.Precision.HIGH)
        except Exception:
            out = call(lax.Precision.HIGHEST)
    else:
        out = call(precision)

    # Final (tiny) reduction + normalization in plain JAX.
    col_sums = out.sum(axis=1)                                          # (groups, GW)
    plane_sums = col_sums.reshape(total_groups, G, W).sum(axis=-1)      # (groups, G)
    plane_sums = plane_sums.reshape(NCp)[:NC]                           # drop padded planes
    ssim_mean = plane_sums.sum() / (NC * H * W)
    return -ssim_mean


def _ssim_loss_reference(img1, img2, window_size: int = WINDOW_SIZE):
    """Pure-JAX reference mirroring the PyTorch code (grouped 2D conv)."""
    N, C, H, W = img1.shape
    pad = window_size // 2
    g = jnp.asarray(_gaussian_1d(window_size, SIGMA), jnp.float32)
    w2d = jnp.outer(g, g)
    window = jnp.broadcast_to(w2d[None, None], (C, 1, window_size, window_size))

    def conv(x):
        return lax.conv_general_dilated(
            x, window, (1, 1), [(pad, pad), (pad, pad)],
            dimension_numbers=("NCHW", "OIHW", "NCHW"),
            feature_group_count=C,
            precision=lax.Precision.HIGHEST)

    mu1, mu2 = conv(img1), conv(img2)
    mu1_sq, mu2_sq, mu1_mu2 = mu1 ** 2, mu2 ** 2, mu1 * mu2
    sigma1_sq = conv(img1 * img1) - mu1_sq
    sigma2_sq = conv(img2 * img2) - mu2_sq
    sigma12 = conv(img1 * img2) - mu1_mu2
    ssim_map = ((2 * mu1_mu2 + _C1) * (2 * sigma12 + _C2)) / (
        (mu1_sq + mu2_sq + _C1) * (sigma1_sq + sigma2_sq + _C2))
    return -jnp.mean(ssim_map)


if __name__ == "__main__":
    key = jax.random.PRNGKey(0)
    k1, k2 = jax.random.split(key)
    N, C, H, W = 2, 4, 16, 16
    img1 = jax.random.uniform(k1, (N, C, H, W), dtype=jnp.float32)
    img2 = jax.random.uniform(k2, (N, C, H, W), dtype=jnp.float32)

    loss = jax.block_until_ready(ssim_loss(img1, img2))
    ref = jax.block_until_ready(_ssim_loss_reference(img1, img2))

    assert np.isfinite(float(loss))
    np.testing.assert_allclose(float(loss), float(ref), rtol=2e-4, atol=2e-5)
    print("KERNEL_OK")
</pallas_src>

<mosaic_0001>
module attributes {stable_mosaic.version = 11 : i64} {
  func.func @_ssim_group_kernel(%arg0: i32, %arg1: memref<8x16x16xf32, #tpu.memory_space<vmem>>, %arg2: memref<8x16x16xf32, #tpu.memory_space<vmem>>, %arg3: memref<128x128xf32, #tpu.memory_space<vmem>>, %arg4: memref<80x80xf32, #tpu.memory_space<vmem>>, %arg5: memref<1x8x128xf32, #tpu.memory_space<vmem>>) attributes {dimension_semantics = [#tpu.dimension_semantics<parallel>], iteration_bounds = array<i64: 1>, scalar_prefetch = 0 : i64, scratch_operands = 0 : i64, tpu.core_type = #tpu.core_type<tc>, window_params = [{transform_indices = @transform_0, window_bounds = array<i64: 8, 16, 16>}, {transform_indices = @transform_1, window_bounds = array<i64: 8, 16, 16>}, {pipeline_mode = #tpu.pipeline_mode<synchronous>, transform_indices = @transform_2, window_bounds = array<i64: 128, 128>}, {pipeline_mode = #tpu.pipeline_mode<synchronous>, transform_indices = @transform_3, window_bounds = array<i64: 80, 80>}, {transform_indices = @transform_4, window_bounds = array<i64: 1, 8, 128>}]} {
    %c0 = arith.constant 0 : index
    %c0_0 = arith.constant 0 : index
    %0 = vector.load %arg3[%c0, %c0_0] : memref<128x128xf32, #tpu.memory_space<vmem>>, vector<128x128xf32>
    %c0_1 = arith.constant 0 : index
    %c0_2 = arith.constant 0 : index
    %1 = vector.load %arg4[%c0_1, %c0_2] : memref<80x80xf32, #tpu.memory_space<vmem>>, vector<80x80xf32>
    %c0_3 = arith.constant 0 : index
    %c0_4 = arith.constant 0 : index
    %c0_5 = arith.constant 0 : index
    %2 = vector.load %arg1[%c0_3, %c0_4, %c0_5] : memref<8x16x16xf32, #tpu.memory_space<vmem>>, vector<8x16x16xf32>
    %c0_6 = arith.constant 0 : index
    %c0_7 = arith.constant 0 : index
    %c0_8 = arith.constant 0 : index
    %3 = vector.load %arg2[%c0_6, %c0_7, %c0_8] : memref<8x16x16xf32, #tpu.memory_space<vmem>>, vector<8x16x16xf32>
    %4 = arith.mulf %2, %2 : vector<8x16x16xf32>
    %5 = arith.mulf %3, %3 : vector<8x16x16xf32>
    %6 = arith.mulf %2, %3 : vector<8x16x16xf32>
    %7 = vector.extract_strided_slice %2 {offsets = [0, 0, 0], sizes = [1, 16, 16], strides = [1, 1, 1]} : vector<8x16x16xf32> to vector<1x16x16xf32>
    %8 = vector.shape_cast %7 : vector<1x16x16xf32> to vector<16x16xf32>
    %9 = vector.extract_strided_slice %3 {offsets = [0, 0, 0], sizes = [1, 16, 16], strides = [1, 1, 1]} : vector<8x16x16xf32> to vector<1x16x16xf32>
    %10 = vector.shape_cast %9 : vector<1x16x16xf32> to vector<16x16xf32>
    %11 = vector.extract_strided_slice %4 {offsets = [0, 0, 0], sizes = [1, 16, 16], strides = [1, 1, 1]} : vector<8x16x16xf32> to vector<1x16x16xf32>
    %12 = vector.shape_cast %11 : vector<1x16x16xf32> to vector<16x16xf32>
    %13 = vector.extract_strided_slice %5 {offsets = [0, 0, 0], sizes = [1, 16, 16], strides = [1, 1, 1]} : vector<8x16x16xf32> to vector<1x16x16xf32>
    %14 = vector.shape_cast %13 : vector<1x16x16xf32> to vector<16x16xf32>
    %15 = vector.extract_strided_slice %6 {offsets = [0, 0, 0], sizes = [1, 16, 16], strides = [1, 1, 1]} : vector<8x16x16xf32> to vector<1x16x16xf32>
    %16 = vector.shape_cast %15 : vector<1x16x16xf32> to vector<16x16xf32>
    %17 = tpu.concatenate %8, %10, %12, %14, %16 in 0 : vector<16x16xf32>, vector<16x16xf32>, vector<16x16xf32>, vector<16x16xf32>, vector<16x16xf32> -> vector<80x16xf32>
    %18 = vector.extract_strided_slice %0 {offsets = [0, 0], sizes = [16, 128], strides = [1, 1]} : vector<128x128xf32> to vector<16x128xf32>
    %cst = arith.constant dense<0.000000e+00> : vector<80x128xf32>
    %19 = tpu.matmul %17, %18, %cst {dimension_numbers = #tpu.dot_dimension_numbers<[1], [0], [0], [1], [0, 0, 1, 1], [], []>, precision = #tpu.contract_precision<fp32>} : vector<80x16xf32>, vector<16x128xf32>, vector<80x128xf32> -> vector<80x128xf32>
    %20 = vector.extract_strided_slice %2 {offsets = [1, 0, 0], sizes = [1, 16, 16], strides = [1, 1, 1]} : vector<8x16x16xf32> to vector<1x16x16xf32>
    %21 = vector.shape_cast %20 : vector<1x16x16xf32> to vector<16x16xf32>
    %22 = vector.extract_strided_slice %3 {offsets = [1, 0, 0], sizes = [1, 16, 16], strides = [1, 1, 1]} : vector<8x16x16xf32> to vector<1x16x16xf32>
    %23 = vector.shape_cast %22 : vector<1x16x16xf32> to vector<16x16xf32>
    %24 = vector.extract_strided_slice %4 {offsets = [1, 0, 0], sizes = [1, 16, 16], strides = [1, 1, 1]} : vector<8x16x16xf32> to vector<1x16x16xf32>
    %25 = vector.shape_cast %24 : vector<1x16x16xf32> to vector<16x16xf32>
    %26 = vector.extract_strided_slice %5 {offsets = [1, 0, 0], sizes = [1, 16, 16], strides = [1, 1, 1]} : vector<8x16x16xf32> to vector<1x16x16xf32>
    %27 = vector.shape_cast %26 : vector<1x16x16xf32> to vector<16x16xf32>
    %28 = vector.extract_strided_slice %6 {offsets = [1, 0, 0], sizes = [1, 16, 16], strides = [1, 1, 1]} : vector<8x16x16xf32> to vector<1x16x16xf32>
    %29 = vector.shape_cast %28 : vector<1x16x16xf32> to vector<16x16xf32>
    %30 = tpu.concatenate %21, %23, %25, %27, %29 in 0 : vector<16x16xf32>, vector<16x16xf32>, vector<16x16xf32>, vector<16x16xf32>, vector<16x16xf32> -> vector<80x16xf32>
    %31 = vector.extract_strided_slice %0 {offsets = [16, 0], sizes = [16, 128], strides = [1, 1]} : vector<128x128xf32> to vector<16x128xf32>
    %cst_9 = arith.constant dense<0.000000e+00> : vector<80x128xf32>
    %32 = tpu.matmul %30, %31, %cst_9 {dimension_numbers = #tpu.dot_dimension_numbers<[1], [0], [0], [1], [0, 0, 1, 1], [], []>, precision = #tpu.contract_precision<fp32>} : vector<80x16xf32>, vector<16x128xf32>, vector<80x128xf32> -> vector<80x128xf32>
    %33 = arith.addf %19, %32 : vector<80x128xf32>
    %34 = vector.extract_strided_slice %2 {offsets = [2, 0, 0], sizes = [1, 16, 16], strides = [1, 1, 1]} : vector<8x16x16xf32> to vector<1x16x16xf32>
    %35 = vector.shape_cast %34 : vector<1x16x16xf32> to vector<16x16xf32>
    %36 = vector.extract_strided_slice %3 {offsets = [2, 0, 0], sizes = [1, 16, 16], strides = [1, 1, 1]} : vector<8x16x16xf32> to vector<1x16x16xf32>
    %37 = vector.shape_cast %36 : vector<1x16x16xf32> to vector<16x16xf32>
    %38 = vector.extract_strided_slice %4 {offsets = [2, 0, 0], sizes = [1, 16, 16], strides = [1, 1, 1]} : vector<8x16x16xf32> to vector<1x16x16xf32>
    %39 = vector.shape_cast %38 : vector<1x16x16xf32> to vector<16x16xf32>
    %40 = vector.extract_strided_slice %5 {offsets = [2, 0, 0], sizes = [1, 16, 16], strides = [1, 1, 1]} : vector<8x16x16xf32> to vector<1x16x16xf32>
    %41 = vector.shape_cast %40 : vector<1x16x16xf32> to vector<16x16xf32>
    %42 = vector.extract_strided_slice %6 {offsets = [2, 0, 0], sizes = [1, 16, 16], strides = [1, 1, 1]} : vector<8x16x16xf32> to vector<1x16x16xf32>
    %43 = vector.shape_cast %42 : vector<1x16x16xf32> to vector<16x16xf32>
    %44 = tpu.concatenate %35, %37, %39, %41, %43 in 0 : vector<16x16xf32>, vector<16x16xf32>, vector<16x16xf32>, vector<16x16xf32>, vector<16x16xf32> -> vector<80x16xf32>
    %45 = vector.extract_strided_slice %0 {offsets = [32, 0], sizes = [16, 128], strides = [1, 1]} : vector<128x128xf32> to vector<16x128xf32>
    %cst_10 = arith.constant dense<0.000000e+00> : vector<80x128xf32>
    %46 = tpu.matmul %44, %45, %cst_10 {dimension_numbers = #tpu.dot_dimension_numbers<[1], [0], [0], [1], [0, 0, 1, 1], [], []>, precision = #tpu.contract_precision<fp32>} : vector<80x16xf32>, vector<16x128xf32>, vector<80x128xf32> -> vector<80x128xf32>
    %47 = arith.addf %33, %46 : vector<80x128xf32>
    %48 = vector.extract_strided_slice %2 {offsets = [3, 0, 0], sizes = [1, 16, 16], strides = [1, 1, 1]} : vector<8x16x16xf32> to vector<1x16x16xf32>
    %49 = vector.shape_cast %48 : vector<1x16x16xf32> to vector<16x16xf32>
    %50 = vector.extract_strided_slice %3 {offsets = [3, 0, 0], sizes = [1, 16, 16], strides = [1, 1, 1]} : vector<8x16x16xf32> to vector<1x16x16xf32>
    %51 = vector.shape_cast %50 : vector<1x16x16xf32> to vector<16x16xf32>
    %52 = vector.extract_strided_slice %4 {offsets = [3, 0, 0], sizes = [1, 16, 16], strides = [1, 1, 1]} : vector<8x16x16xf32> to vector<1x16x16xf32>
    %53 = vector.shape_cast %52 : vector<1x16x16xf32> to vector<16x16xf32>
    %54 = vector.extract_strided_slice %5 {offsets = [3, 0, 0], sizes = [1, 16, 16], strides = [1, 1, 1]} : vector<8x16x16xf32> to vector<1x16x16xf32>
    %55 = vector.shape_cast %54 : vector<1x16x16xf32> to vector<16x16xf32>
    %56 = vector.extract_strided_slice %6 {offsets = [3, 0, 0], sizes = [1, 16, 16], strides = [1, 1, 1]} : vector<8x16x16xf32> to vector<1x16x16xf32>
    %57 = vector.shape_cast %56 : vector<1x16x16xf32> to vector<16x16xf32>
    %58 = tpu.concatenate %49, %51, %53, %55, %57 in 0 : vector<16x16xf32>, vector<16x16xf32>, vector<16x16xf32>, vector<16x16xf32>, vector<16x16xf32> -> vector<80x16xf32>
    %59 = vector.extract_strided_slice %0 {offsets = [48, 0], sizes = [16, 128], strides = [1, 1]} : vector<128x128xf32> to vector<16x128xf32>
    %cst_11 = arith.constant dense<0.000000e+00> : vector<80x128xf32>
    %60 = tpu.matmul %58, %59, %cst_11 {dimension_numbers = #tpu.dot_dimension_numbers<[1], [0], [0], [1], [0, 0, 1, 1], [], []>, precision = #tpu.contract_precision<fp32>} : vector<80x16xf32>, vector<16x128xf32>, vector<80x128xf32> -> vector<80x128xf32>
    %61 = arith.addf %47, %60 : vector<80x128xf32>
    %62 = vector.extract_strided_slice %2 {offsets = [4, 0, 0], sizes = [1, 16, 16], strides = [1, 1, 1]} : vector<8x16x16xf32> to vector<1x16x16xf32>
    %63 = vector.shape_cast %62 : vector<1x16x16xf32> to vector<16x16xf32>
    %64 = vector.extract_strided_slice %3 {offsets = [4, 0, 0], sizes = [1, 16, 16], strides = [1, 1, 1]} : vector<8x16x16xf32> to vector<1x16x16xf32>
    %65 = vector.shape_cast %64 : vector<1x16x16xf32> to vector<16x16xf32>
    %66 = vector.extract_strided_slice %4 {offsets = [4, 0, 0], sizes = [1, 16, 16], strides = [1, 1, 1]} : vector<8x16x16xf32> to vector<1x16x16xf32>
    %67 = vector.shape_cast %66 : vector<1x16x16xf32> to vector<16x16xf32>
    %68 = vector.extract_strided_slice %5 {offsets = [4, 0, 0], sizes = [1, 16, 16], strides = [1, 1, 1]} : vector<8x16x16xf32> to vector<1x16x16xf32>
    %69 = vector.shape_cast %68 : vector<1x16x16xf32> to vector<16x16xf32>
    %70 = vector.extract_strided_slice %6 {offsets = [4, 0, 0], sizes = [1, 16, 16], strides = [1, 1, 1]} : vector<8x16x16xf32> to vector<1x16x16xf32>
    %71 = vector.shape_cast %70 : vector<1x16x16xf32> to vector<16x16xf32>
    %72 = tpu.concatenate %63, %65, %67, %69, %71 in 0 : vector<16x16xf32>, vector<16x16xf32>, vector<16x16xf32>, vector<16x16xf32>, vector<16x16xf32> -> vector<80x16xf32>
    %73 = vector.extract_strided_slice %0 {offsets = [64, 0], sizes = [16, 128], strides = [1, 1]} : vector<128x128xf32> to vector<16x128xf32>
    %cst_12 = arith.constant dense<0.000000e+00> : vector<80x128xf32>
    %74 = tpu.matmul %72, %73, %cst_12 {dimension_numbers = #tpu.dot_dimension_numbers<[1], [0], [0], [1], [0, 0, 1, 1], [], []>, precision = #tpu.contract_precision<fp32>} : vector<80x16xf32>, vector<16x128xf32>, vector<80x128xf32> -> vector<80x128xf32>
    %75 = arith.addf %61, %74 : vector<80x128xf32>
    %76 = vector.extract_strided_slice %2 {offsets = [5, 0, 0], sizes = [1, 16, 16], strides = [1, 1, 1]} : vector<8x16x16xf32> to vector<1x16x16xf32>
    %77 = vector.shape_cast %76 : vector<1x16x16xf32> to vector<16x16xf32>
    %78 = vector.extract_strided_slice %3 {offsets = [5, 0, 0], sizes = [1, 16, 16], strides = [1, 1, 1]} : vector<8x16x16xf32> to vector<1x16x16xf32>
    %79 = vector.shape_cast %78 : vector<1x16x16xf32> to vector<16x16xf32>
    %80 = vector.extract_strided_slice %4 {offsets = [5, 0, 0], sizes = [1, 16, 16], strides = [1, 1, 1]} : vector<8x16x16xf32> to vector<1x16x16xf32>
    %81 = vector.shape_cast %80 : vector<1x16x16xf32> to vector<16x16xf32>
    %82 = vector.extract_strided_slice %5 {offsets = [5, 0, 0], sizes = [1, 16, 16], strides = [1, 1, 1]} : vector<8x16x16xf32> to vector<1x16x16xf32>
    %83 = vector.shape_cast %82 : vector<1x16x16xf32> to vector<16x16xf32>
    %84 = vector.extract_strided_slice %6 {offsets = [5, 0, 0], sizes = [1, 16, 16], strides = [1, 1, 1]} : vector<8x16x16xf32> to vector<1x16x16xf32>
    %85 = vector.shape_cast %84 : vector<1x16x16xf32> to vector<16x16xf32>
    %86 = tpu.concatenate %77, %79, %81, %83, %85 in 0 : vector<16x16xf32>, vector<16x16xf32>, vector<16x16xf32>, vector<16x16xf32>, vector<16x16xf32> -> vector<80x16xf32>
    %87 = vector.extract_strided_slice %0 {offsets = [80, 0], sizes = [16, 128], strides = [1, 1]} : vector<128x128xf32> to vector<16x128xf32>
    %cst_13 = arith.constant dense<0.000000e+00> : vector<80x128xf32>
    %88 = tpu.matmul %86, %87, %cst_13 {dimension_numbers = #tpu.dot_dimension_numbers<[1], [0], [0], [1], [0, 0, 1, 1], [], []>, precision = #tpu.contract_precision<fp32>} : vector<80x16xf32>, vector<16x128xf32>, vector<80x128xf32> -> vector<80x128xf32>
    %89 = arith.addf %75, %88 : vector<80x128xf32>
    %90 = vector.extract_strided_slice %2 {offsets = [6, 0, 0], sizes = [1, 16, 16], strides = [1, 1, 1]} : vector<8x16x16xf32> to vector<1x16x16xf32>
    %91 = vector.shape_cast %90 : vector<1x16x16xf32> to vector<16x16xf32>
    %92 = vector.extract_strided_slice %3 {offsets = [6, 0, 0], sizes = [1, 16, 16], strides = [1, 1, 1]} : vector<8x16x16xf32> to vector<1x16x16xf32>
    %93 = vector.shape_cast %92 : vector<1x16x16xf32> to vector<16x16xf32>
    %94 = vector.extract_strided_slice %4 {offsets = [6, 0, 0], sizes = [1, 16, 16], strides = [1, 1, 1]} : vector<8x16x16xf32> to vector<1x16x16xf32>
    %95 = vector.shape_cast %94 : vector<1x16x16xf32> to vector<16x16xf32>
    %96 = vector.extract_strided_slice %5 {offsets = [6, 0, 0], sizes = [1, 16, 16], strides = [1, 1, 1]} : vector<8x16x16xf32> to vector<1x16x16xf32>
    %97 = vector.shape_cast %96 : vector<1x16x16xf32> to vector<16x16xf32>
    %98 = vector.extract_strided_slice %6 {offsets = [6, 0, 0], sizes = [1, 16, 16], strides = [1, 1, 1]} : vector<8x16x16xf32> to vector<1x16x16xf32>
    %99 = vector.shape_cast %98 : vector<1x16x16xf32> to vector<16x16xf32>
    %100 = tpu.concatenate %91, %93, %95, %97, %99 in 0 : vector<16x16xf32>, vector<16x16xf32>, vector<16x16xf32>, vector<16x16xf32>, vector<16x16xf32> -> vector<80x16xf32>
    %101 = vector.extract_strided_slice %0 {offsets = [96, 0], sizes = [16, 128], strides = [1, 1]} : vector<128x128xf32> to vector<16x128xf32>
    %cst_14 = arith.constant dense<0.000000e+00> : vector<80x128xf32>
    %102 = tpu.matmul %100, %101, %cst_14 {dimension_numbers = #tpu.dot_dimension_numbers<[1], [0], [0], [1], [0, 0, 1, 1], [], []>, precision = #tpu.contract_precision<fp32>} : vector<80x16xf32>, vector<16x128xf32>, vector<80x128xf32> -> vector<80x128xf32>
    %103 = arith.addf %89, %102 : vector<80x128xf32>
    %104 = vector.extract_strided_slice %2 {offsets = [7, 0, 0], sizes = [1, 16, 16], strides = [1, 1, 1]} : vector<8x16x16xf32> to vector<1x16x16xf32>
    %105 = vector.shape_cast %104 : vector<1x16x16xf32> to vector<16x16xf32>
    %106 = vector.extract_strided_slice %3 {offsets = [7, 0, 0], sizes = [1, 16, 16], strides = [1, 1, 1]} : vector<8x16x16xf32> to vector<1x16x16xf32>
    %107 = vector.shape_cast %106 : vector<1x16x16xf32> to vector<16x16xf32>
    %108 = vector.extract_strided_slice %4 {offsets = [7, 0, 0], sizes = [1, 16, 16], strides = [1, 1, 1]} : vector<8x16x16xf32> to vector<1x16x16xf32>
    %109 = vector.shape_cast %108 : vector<1x16x16xf32> to vector<16x16xf32>
    %110 = vector.extract_strided_slice %5 {offsets = [7, 0, 0], sizes = [1, 16, 16], strides = [1, 1, 1]} : vector<8x16x16xf32> to vector<1x16x16xf32>
    %111 = vector.shape_cast %110 : vector<1x16x16xf32> to vector<16x16xf32>
    %112 = vector.extract_strided_slice %6 {offsets = [7, 0, 0], sizes = [1, 16, 16], strides = [1, 1, 1]} : vector<8x16x16xf32> to vector<1x16x16xf32>
    %113 = vector.shape_cast %112 : vector<1x16x16xf32> to vector<16x16xf32>
    %114 = tpu.concatenate %105, %107, %109, %111, %113 in 0 : vector<16x16xf32>, vector<16x16xf32>, vector<16x16xf32>, vector<16x16xf32>, vector<16x16xf32> -> vector<80x16xf32>
    %115 = vector.extract_strided_slice %0 {offsets = [112, 0], sizes = [16, 128], strides = [1, 1]} : vector<128x128xf32> to vector<16x128xf32>
    %cst_15 = arith.constant dense<0.000000e+00> : vector<80x128xf32>
    %116 = tpu.matmul %114, %115, %cst_15 {dimension_numbers = #tpu.dot_dimension_numbers<[1], [0], [0], [1], [0, 0, 1, 1], [], []>, precision = #tpu.contract_precision<fp32>} : vector<80x16xf32>, vector<16x128xf32>, vector<80x128xf32> -> vector<80x128xf32>
    %117 = arith.addf %103, %116 : vector<80x128xf32>
    %cst_16 = arith.constant dense<0.000000e+00> : vector<80x128xf32>
    %118 = tpu.matmul %1, %117, %cst_16 {dimension_numbers = #tpu.dot_dimension_numbers<[1], [0], [0], [1], [0, 0, 1, 1], [], []>, precision = #tpu.contract_precision<fp32>} : vector<80x80xf32>, vector<80x128xf32>, vector<80x128xf32> -> vector<80x128xf32>
    %119 = vector.extract_strided_slice %118 {offsets = [0, 0], sizes = [16, 128], strides = [1, 1]} : vector<80x128xf32> to vector<16x128xf32>
    %120 = vector.extract_strided_slice %118 {offsets = [16, 0], sizes = [16, 128], strides = [1, 1]} : vector<80x128xf32> to vector<16x128xf32>
    %121 = vector.extract_strided_slice %118 {offsets = [32, 0], sizes = [16, 128], strides = [1, 1]} : vector<80x128xf32> to vector<16x128xf32>
    %122 = vector.extract_strided_slice %118 {offsets = [48, 0], sizes = [16, 128], strides = [1, 1]} : vector<80x128xf32> to vector<16x128xf32>
    %123 = vector.extract_strided_slice %118 {offsets = [64, 0], sizes = [16, 128], strides = [1, 1]} : vector<80x128xf32> to vector<16x128xf32>
    %124 = arith.mulf %119, %119 : vector<16x128xf32>
    %125 = arith.mulf %120, %120 : vector<16x128xf32>
    %126 = arith.mulf %119, %120 : vector<16x128xf32>
    %127 = arith.subf %121, %124 : vector<16x128xf32>
    %128 = arith.subf %122, %125 : vector<16x128xf32>
    %129 = arith.subf %123, %126 : vector<16x128xf32>
    %cst_17 = arith.constant 2.000000e+00 : f32
    %130 = vector.broadcast %cst_17 : f32 to vector<16x128xf32>
    %131 = arith.mulf %130, %126 : vector<16x128xf32>
    %cst_18 = arith.constant 9.99999974E-5 : f32
    %132 = vector.broadcast %cst_18 : f32 to vector<16x128xf32>
    %133 = arith.addf %131, %132 : vector<16x128xf32>
    %cst_19 = arith.constant 2.000000e+00 : f32
    %134 = vector.broadcast %cst_19 : f32 to vector<16x128xf32>
    %135 = arith.mulf %134, %129 : vector<16x128xf32>
    %cst_20 = arith.constant 8.99999984E-4 : f32
    %136 = vector.broadcast %cst_20 : f32 to vector<16x128xf32>
    %137 = arith.addf %135, %136 : vector<16x128xf32>
    %138 = arith.mulf %133, %137 : vector<16x128xf32>
    %139 = arith.addf %124, %125 : vector<16x128xf32>
    %cst_21 = arith.constant 9.99999974E-5 : f32
    %140 = vector.broadcast %cst_21 : f32 to vector<16x128xf32>
    %141 = arith.addf %139, %140 : vector<16x128xf32>
    %142 = arith.addf %127, %128 : vector<16x128xf32>
    %cst_22 = arith.constant 8.99999984E-4 : f32
    %143 = vector.broadcast %cst_22 : f32 to vector<16x128xf32>
    %144 = arith.addf %142, %143 : vector<16x128xf32>
    %145 = arith.mulf %141, %144 : vector<16x128xf32>
    %146 = tpu.reciprocal %145 {approx = true} : vector<16x128xf32> -> vector<16x128xf32>
    %147 = arith.mulf %145, %146 : vector<16x128xf32>
    %cst_23 = arith.constant 2.000000e+00 : f32
    %148 = vector.broadcast %cst_23 : f32 to vector<16x128xf32>
    %149 = arith.subf %148, %147 : vector<16x128xf32>
    %150 = arith.mulf %146, %149 : vector<16x128xf32>
    %151 = arith.mulf %138, %150 : vector<16x128xf32>
    %152 = vector.extract_strided_slice %151 {offsets = [0, 0], sizes = [8, 128], strides = [1, 1]} : vector<16x128xf32> to vector<8x128xf32>
    %153 = vector.extract_strided_slice %151 {offsets = [8, 0], sizes = [8, 128], strides = [1, 1]} : vector<16x128xf32> to vector<8x128xf32>
    %154 = arith.addf %152, %153 : vector<8x128xf32>
    %c0_24 = arith.constant 0 : index
    %c0_25 = arith.constant 0 : index
    %c0_26 = arith.constant 0 : index
    %155 = vector.load %arg5[%c0_24, %c0_25, %c0_26] : memref<1x8x128xf32, #tpu.memory_space<vmem>>, vector<1x8x128xf32>
    %156 = vector.shape_cast %155 : vector<1x8x128xf32> to vector<8x128xf32>
    %157 = vector.shape_cast %154 : vector<8x128xf32> to vector<1x8x128xf32>
    tpu.vector_store %arg5[%c0_24, %c0_25, %c0_26], %157 {strides = array<i32>} : memref<1x8x128xf32, #tpu.memory_space<vmem>>, vector<1x8x128xf32>,
    return
  }
  func.func @transform_0(%arg0: i32) -> (i32, i32, i32) {
    %c0_i32 = arith.constant 0 : i32
    %c0_i32_0 = arith.constant 0 : i32
    %c0_i32_1 = arith.constant 0 : i32
    return %arg0, %c0_i32, %c0_i32_0 : i32, i32, i32
  }
  func.func @transform_1(%arg0: i32) -> (i32, i32, i32) {
    %c0_i32 = arith.constant 0 : i32
    %c0_i32_0 = arith.constant 0 : i32
    %c0_i32_1 = arith.constant 0 : i32
    return %arg0, %c0_i32, %c0_i32_0 : i32, i32, i32
  }
  func.func @transform_2(%arg0: i32) -> (i32, i32) {
    %c0_i32 = arith.constant 0 : i32
    %c0_i32_0 = arith.constant 0 : i32
    %c0_i32_1 = arith.constant 0 : i32
    return %c0_i32, %c0_i32_0 : i32, i32
  }
  func.func @transform_3(%arg0: i32) -> (i32, i32) {
    %c0_i32 = arith.constant 0 : i32
    %c0_i32_0 = arith.constant 0 : i32
    %c0_i32_1 = arith.constant 0 : i32
    return %c0_i32, %c0_i32_0 : i32, i32
  }
  func.func @transform_4(%arg0: i32) -> (i32, i32, i32) {
    %c0_i32 = arith.constant 0 : i32
    %c0_i32_0 = arith.constant 0 : i32
    %c0_i32_1 = arith.constant 0 : i32
    return %arg0, %c0_i32, %c0_i32_0 : i32, i32, i32
  }
}

</mosaic_0001>

<llo_original>
// kernel: tpu_custom_call.1
$region0: #{tpu_custom_call.1}
  #allocation0 [shape = 'u32[]', space=smem, size = 0x4, offset = 0x4, fixed_abs, tag = 'smem constant byte address 0x4 - core index']
  #allocation1 [shape = 'u32[144,128]{1,0:T(1,128)}', space=vmem, size = 0x12000, scoped, tag = 'internal scratch']
  %s0 = inlined_call_operand.hbm [shape: f32[8,16,16], index: 0, kind: input, shape index: {}]
  %s1 = inlined_call_operand.hbm [shape: f32[8,16,16], index: 1, kind: input, shape index: {}]
  %s2 = inlined_call_operand.hbm [shape: f32[128,128], index: 2, kind: input, shape index: {}]
  %s3 = inlined_call_operand.hbm [shape: f32[80,80], index: 3, kind: input, shape index: {}]
  %s4 = inlined_call_operand.hbm [shape: f32[1,8,128], index: 4, kind: output, shape index: {}]
  %s5 = sld [smem:[#allocation0]]
  $region42: #{tpu_custom_call.1} parent=0
    _
  %s7 = ssub.s32 1, %s5
  %s8 = scalar_select 0, %s7, %s5
  $region1: #{tpu_custom_call.1} parent=0
    #allocation2 [shape = 'u8[65536]{0}', space=vmem, size = 0x10000, scoped, tag = 'input window, operand 0, single buffered']
    #allocation3 [shape = 's32[1]{0}', space=sflag, size = 0x4, scoped, tag = 'scoped memory for tpu_custom_call.1']
    #allocation4 [shape = 's32[1]{0}', space=sflag, size = 0x4, scoped, tag = 'scoped memory for tpu_custom_call.1']
    #allocation5 [shape = 'u8[65536]{0}', space=vmem, size = 0x10000, scoped, tag = 'input window, operand 1, single buffered']
    #allocation6 [shape = 's32[1]{0}', space=sflag, size = 0x4, scoped, tag = 'scoped memory for tpu_custom_call.1']
    #allocation7 [shape = 'u8[65536]{0}', space=vmem, size = 0x10000, scoped, tag = 'input window, operand 2, single buffered']
    #allocation8 [shape = 'u8[40960]{0}', space=vmem, size = 0xa000, scoped, tag = 'input window, operand 3, single buffered']
    #allocation9 [shape = 's32[1]{0}', space=sflag, size = 0x4, scoped, tag = 'scoped memory for tpu_custom_call.1']
    #allocation10 [shape = 'u8[4096]{0}', space=vmem, size = 0x1000, scoped, tag = 'output window, operand 0, single buffered']
    %9 = vsyncpa [#allocation3], 0
    %10 = vsyncpa [#allocation6], 0
    %11 = vsyncpa [#allocation9], 0
    %12 = vsyncpa [#allocation4], 0
    // Predicated region
    $region2: #{tpu_custom_call.1} parent=1 // pred_check
      _
    $region3: #{tpu_custom_call.1} parent=1 // pred_check_branch
      %14 = sbr.rel (0) target = $region5
    $region4: #{tpu_custom_call.1} parent=1 // pred_region
      %s16 = ssub.s32 2048, 2048
      %17 = vsyncadd [#allocation3], %s16
      %s18 = sshll.u32 [#allocation2], 4
      %s19 = int_to_ptr.vmem [resolvable:$true] %s18
      %24 = dma.hbm_to_vmem [thread:$0]  %s0, 2048, %s19, [#allocation3], 128, 128, 8
    $region5: #{tpu_custom_call.1} parent=1 // pred_fallthru
      _
    // Predicated region
    $region6: #{tpu_custom_call.1} parent=1 // pred_check
      _
    $region7: #{tpu_custom_call.1} parent=1 // pred_check_branch
      %26 = sbr.rel (0) target = $region9
    $region8: #{tpu_custom_call.1} parent=1 // pred_region
      %s28 = ssub.s32 2048, 2048
      %29 = vsyncadd [#allocation6], %s28
      %s30 = sshll.u32 [#allocation5], 4
      %s31 = int_to_ptr.vmem [resolvable:$true] %s30
      %36 = dma.hbm_to_vmem [thread:$0]  %s1, 2048, %s31, [#allocation6], 128, 128, 8
    $region9: #{tpu_custom_call.1} parent=1 // pred_fallthru
      _
    // Predicated region
    $region10: #{tpu_custom_call.1} parent=1 // pred_check
      _
    $region11: #{tpu_custom_call.1} parent=1 // pred_check_branch
      %38 = sbr.rel (0) target = $region13
    $region12: #{tpu_custom_call.1} parent=1 // pred_region
      %s40 = ssub.s32 2048, 2048
      %41 = vsyncadd [#allocation6], %s40
      %s42 = sshll.u32 [#allocation7], 4
      %s43 = int_to_ptr.vmem [resolvable:$true] %s42
      %48 = dma.hbm_to_vmem [thread:$0]  %s2, 2048, %s43, [#allocation6], 128, 128, 8
    $region13: #{tpu_custom_call.1} parent=1 // pred_fallthru
      _
    // Predicated region
    $region14: #{tpu_custom_call.1} parent=1 // pred_check
      _
    $region15: #{tpu_custom_call.1} parent=1 // pred_check_branch
      %50 = sbr.rel (0) target = $region17
    $region16: #{tpu_custom_call.1} parent=1 // pred_region
      %s52 = ssub.s32 1280, 1280
      %53 = vsyncadd [#allocation9], %s52
      %s54 = sshll.u32 [#allocation8], 4
      %s55 = int_to_ptr.vmem [resolvable:$true] %s54
      %60 = dma.hbm_to_vmem [thread:$0]  %s3, 1280, %s55, [#allocation9], 128, 128, 8
    $region17: #{tpu_custom_call.1} parent=1 // pred_fallthru
      _
    // Predicated region
    $region18: #{tpu_custom_call.1} parent=1 // pred_check
      _
    $region19: #{tpu_custom_call.1} parent=1 // pred_check_branch
      %62 = sbr.rel (0) target = $region21
    $region20: #{tpu_custom_call.1} parent=1 // pred_region
      %63 = dma.done [#allocation3], 2048
    $region21: #{tpu_custom_call.1} parent=1 // pred_fallthru
      _
    // Predicated region
    $region22: #{tpu_custom_call.1} parent=1 // pred_check
      _
    $region23: #{tpu_custom_call.1} parent=1 // pred_check_branch
      %65 = sbr.rel (0) target = $region25
    $region24: #{tpu_custom_call.1} parent=1 // pred_region
      %66 = dma.done [#allocation6], 2048
    $region25: #{tpu_custom_call.1} parent=1 // pred_fallthru
      _
    // Predicated region
    $region26: #{tpu_custom_call.1} parent=1 // pred_check
      _
    $region27: #{tpu_custom_call.1} parent=1 // pred_check_branch
      %68 = sbr.rel (0) target = $region29
    $region28: #{tpu_custom_call.1} parent=1 // pred_region
      %69 = dma.done [#allocation6], 2048
    $region29: #{tpu_custom_call.1} parent=1 // pred_fallthru
      _
    // Predicated region
    $region30: #{tpu_custom_call.1} parent=1 // pred_check
      _
    $region31: #{tpu_custom_call.1} parent=1 // pred_check_branch
      %71 = sbr.rel (0) target = $region33
    $region32: #{tpu_custom_call.1} parent=1 // pred_region
      %72 = dma.done [#allocation9], 1280
    $region33: #{tpu_custom_call.1} parent=1 // pred_fallthru
      _
    %v73 = vld [vmem:[#allocation7] sm:$0xff]
    %v74 = vld [vmem:[#allocation7 + $0x8] sm:$0xff]
    %v75 = vld [vmem:[#allocation7 + $0x10] sm:$0xff]
    %v76 = vld [vmem:[#allocation7 + $0x18] sm:$0xff]
    %v77 = vld [vmem:[#allocation7 + $0x20] sm:$0xff]
    %v78 = vld [vmem:[#allocation7 + $0x28] sm:$0xff]
    %v79 = vld [vmem:[#allocation7 + $0x30] sm:$0xff]
    %v80 = vld [vmem:[#allocation7 + $0x38] sm:$0xff]
    %v81 = vld [vmem:[#allocation7 + $0x40] sm:$0xff]
    %v82 = vld [vmem:[#allocation7 + $0x48] sm:$0xff]
    %v83 = vld [vmem:[#allocation7 + $0x50] sm:$0xff]
    %v84 = vld [vmem:[#allocation7 + $0x58] sm:$0xff]
    %v85 = vld [vmem:[#allocation7 + $0x60] sm:$0xff]
    %v86 = vld [vmem:[#allocation7 + $0x68] sm:$0xff]
    %v87 = vld [vmem:[#allocation7 + $0x70] sm:$0xff]
    %v88 = vld [vmem:[#allocation7 + $0x78] sm:$0xff]
    %v89 = vld [vmem:[#allocation8] sm:$0xff]
    %v90 = vld [vmem:[#allocation8 + $0x8] sm:$0xff]
    %v91 = vld [vmem:[#allocation8 + $0x10] sm:$0xff]
    %v92 = vld [vmem:[#allocation8 + $0x18] sm:$0xff]
    %v93 = vld [vmem:[#allocation8 + $0x20] sm:$0xff]
    %v94 = vld [vmem:[#allocation8 + $0x28] sm:$0xff]
    %v95 = vld [vmem:[#allocation8 + $0x30] sm:$0xff]
    %v96 = vld [vmem:[#allocation8 + $0x38] sm:$0xff]
    %v97 = vld [vmem:[#allocation8 + $0x40] sm:$0xff]
    %v98 = vld [vmem:[#allocation8 + $0x48] sm:$0xff]
    %v99 = vld [vmem:[#allocation2] sm:$0xff]
    %v100 = vld [vmem:[#allocation2 + $0x8] sm:$0xff]
    %v101 = vld [vmem:[#allocation2 + $0x10] sm:$0xff]
    %v102 = vld [vmem:[#allocation2 + $0x18] sm:$0xff]
    %v103 = vld [vmem:[#allocation2 + $0x20] sm:$0xff]
    %v104 = vld [vmem:[#allocation2 + $0x28] sm:$0xff]
    %v105 = vld [vmem:[#allocation2 + $0x30] sm:$0xff]
    %v106 = vld [vmem:[#allocation2 + $0x38] sm:$0xff]
    %v107 = vld [vmem:[#allocation2 + $0x40] sm:$0xff]
    %v108 = vld [vmem:[#allocation2 + $0x48] sm:$0xff]
    %v109 = vld [vmem:[#allocation2 + $0x50] sm:$0xff]
    %v110 = vld [vmem:[#allocation2 + $0x58] sm:$0xff]
    %v111 = vld [vmem:[#allocation2 + $0x60] sm:$0xff]
    %v112 = vld [vmem:[#allocation2 + $0x68] sm:$0xff]
    %v113 = vld [vmem:[#allocation2 + $0x70] sm:$0xff]
    %v114 = vld [vmem:[#allocation2 + $0x78] sm:$0xff]
    %v115 = vld [vmem:[#allocation5] sm:$0xff]
    %v116 = vld [vmem:[#allocation5 + $0x8] sm:$0xff]
    %v117 = vld [vmem:[#allocation5 + $0x10] sm:$0xff]
    %v118 = vld [vmem:[#allocation5 + $0x18] sm:$0xff]
    %v119 = vld [vmem:[#allocation5 + $0x20] sm:$0xff]
    %v120 = vld [vmem:[#allocation5 + $0x28] sm:$0xff]
    %v121 = vld [vmem:[#allocation5 + $0x30] sm:$0xff]
    %v122 = vld [vmem:[#allocation5 + $0x38] sm:$0xff]
    %v123 = vld [vmem:[#allocation5 + $0x40] sm:$0xff]
    %v124 = vld [vmem:[#allocation5 + $0x48] sm:$0xff]
    %v125 = vld [vmem:[#allocation5 + $0x50] sm:$0xff]
    %v126 = vld [vmem:[#allocation5 + $0x58] sm:$0xff]
    %v127 = vld [vmem:[#allocation5 + $0x60] sm:$0xff]
    %v128 = vld [vmem:[#allocation5 + $0x68] sm:$0xff]
    %v129 = vld [vmem:[#allocation5 + $0x70] sm:$0xff]
    %v130 = vld [vmem:[#allocation5 + $0x78] sm:$0xff]
    %v131 = vmul.f32 %v99, %v99
    %v132 = vmul.f32 %v100, %v100
    %v133 = vmul.f32 %v101, %v101
    %v134 = vmul.f32 %v102, %v102
    %v135 = vmul.f32 %v103, %v103
    %v136 = vmul.f32 %v104, %v104
    %v137 = vmul.f32 %v105, %v105
    %v138 = vmul.f32 %v106, %v106
    %v139 = vmul.f32 %v107, %v107
    %v140 = vmul.f32 %v108, %v108
    %v141 = vmul.f32 %v109, %v109
    %v142 = vmul.f32 %v110, %v110
    %v143 = vmul.f32 %v111, %v111
    %v144 = vmul.f32 %v112, %v112
    %v145 = vmul.f32 %v113, %v113
    %v146 = vmul.f32 %v114, %v114
    %v147 = vmul.f32 %v115, %v115
    %v148 = vmul.f32 %v116, %v116
    %v149 = vmul.f32 %v117, %v117
    %v150 = vmul.f32 %v118, %v118
    %v151 = vmul.f32 %v119, %v119
    %v152 = vmul.f32 %v120, %v120
    %v153 = vmul.f32 %v121, %v121
    %v154 = vmul.f32 %v122, %v122
    %v155 = vmul.f32 %v123, %v123
    %v156 = vmul.f32 %v124, %v124
    %v157 = vmul.f32 %v125, %v125
    %v158 = vmul.f32 %v126, %v126
    %v159 = vmul.f32 %v127, %v127
    %v160 = vmul.f32 %v128, %v128
    %v161 = vmul.f32 %v129, %v129
    %v162 = vmul.f32 %v130, %v130
    %v163 = vmul.f32 %v99, %v115
    %v164 = vmul.f32 %v100, %v116
    %v165 = vmul.f32 %v101, %v117
    %v166 = vmul.f32 %v102, %v118
    %v167 = vmul.f32 %v103, %v119
    %v168 = vmul.f32 %v104, %v120
    %v169 = vmul.f32 %v105, %v121
    %v170 = vmul.f32 %v106, %v122
    %v171 = vmul.f32 %v107, %v123
    %v172 = vmul.f32 %v108, %v124
    %v173 = vmul.f32 %v109, %v125
    %v174 = vmul.f32 %v110, %v126
    %v175 = vmul.f32 %v111, %v127
    %v176 = vmul.f32 %v112, %v128
    %v177 = vmul.f32 %v113, %v129
    %v178 = vmul.f32 %v114, %v130
    %vm179 = vcmask 130048
    %v181 = vsel %vm179, %v101, 0
    %v184 = vsel %vm179, %v102, 0
    %v187 = vsel %vm179, %v117, 0
    %v190 = vsel %vm179, %v118, 0
    %v193 = vsel %vm179, %v133, 0
    %v196 = vsel %vm179, %v134, 0
    %v199 = vsel %vm179, %v149, 0
    %v202 = vsel %vm179, %v150, 0
    %v205 = vsel %vm179, %v165, 0
    %v208 = vsel %vm179, %v166, 0
    %210 = vmatprep.subr.mxu0 0.0
    %v211 = vand.u32 %v75, 4294901760
    %212 = vmatpush1.msra.mxu0 %v211
    %213 = vmatprep.subr.mxu0 0.0
    %v214 = vand.u32 %v76, 4294901760
    %215 = vmatpush1.msra.mxu0 %v214
    %216 = vmatprep.subr.mxu0 0.0
    %217 = vmatpush1.msra.mxu0 0.0
    %218 = vmatprep.subr.mxu0 0.0
    %219 = vmatpush1.msra.mxu0 0.0
    %220 = vmatprep.subr.mxu0 0.0
    %221 = vmatpush1.msra.mxu0 0.0
    %222 = vmatprep.subr.mxu0 0.0
    %223 = vmatpush1.msra.mxu0 0.0
    %224 = vmatprep.subr.mxu0 0.0
    %225 = vmatpush1.msra.mxu0 0.0
    %226 = vmatprep.subr.mxu0 0.0
    %227 = vmatpush1.msra.mxu0 0.0
    %228 = vmatprep.subr.mxu0 0.0
    %229 = vmatpush1.msra.mxu0 0.0
    %230 = vmatprep.subr.mxu0 0.0
    %231 = vmatpush1.msra.mxu0 0.0
    %232 = vmatprep.subr.mxu0 0.0
    %233 = vmatpush1.msra.mxu0 0.0
    %234 = vmatprep.subr.mxu0 0.0
    %235 = vmatpush1.msra.mxu0 0.0
    %236 = vmatprep.subr.mxu0 0.0
    %237 = vmatpush1.msra.mxu0 0.0
    %238 = vmatprep.subr.mxu0 0.0
    %239 = vmatpush1.msra.mxu0 0.0
    %240 = vmatprep.subr.mxu0 0.0
    %241 = vmatpush1.msra.mxu0 0.0
    %242 = vmatprep.subr.mxu0 0.0
    %243 = vmatpush1.msra.mxu0 0.0
    %244 = vmatprep.subr.mxu0 0.0
    %245 = vmatpush1.msra.mxu0 0.0
    %246 = vmatprep.subr.mxu0 0.0
    %247 = vmatpush1.msra.mxu0 0.0
    %248 = vmatprep.subr.mxu0 0.0
    %249 = vmatpush1.msra.mxu0 0.0
    %250 = vmatprep.subr.mxu0 0.0
    %251 = vmatpush1.msra.mxu0 0.0
    %252 = vmatprep.subr.mxu0 0.0
    %253 = vmatpush1.msra.mxu0 0.0
    %254 = vmatprep.subr.mxu0 0.0
    %255 = vmatpush1.msra.mxu0 0.0
    %256 = vmatprep.subr.mxu0 0.0
    %257 = vmatpush1.msra.mxu0 0.0
    %258 = vmatprep.subr.mxu0 0.0
    %259 = vmatpush1.msra.mxu0 0.0
    %260 = vmatprep.subr.mxu0 0.0
    %261 = vmatpush1.msra.mxu0 0.0
    %262 = vmatprep.subr.mxu0 0.0
    %263 = vmatpush1.msra.mxu0 0.0
    %264 = vmatprep.subr.mxu0 0.0
    %265 = vmatpush1.msra.mxu0 0.0
    %266 = vmatprep.subr.mxu0 0.0
    %267 = vmatpush1.msra.mxu0 0.0
    %268 = vmatprep.subr.mxu0 0.0
    %269 = vmatpush1.msra.mxu0 0.0
    %270 = vmatprep.subr.mxu0 0.0
    %271 = vmatpush1.msra.mxu0 0.0
    %272 = vmatprep.subr.mxu0 0.0
    %273 = vmatpush1.msra.mxu0 0.0
    %274 = vmatprep.subr.mxu0 0.0
    %275 = vmatpush1.msra.mxu0 0.0
    %276 = vmatprep.mubr.f32.mxu0 0.0
    %v277 = vand.u32 %v181, 4294901760
    %v278 = vsub.f32 %v181, %v277
    %v279 = vand.u32 %v278, 4294901760
    %v280 = vsub.f32 %v278, %v279
    %v281 = vand.u32 %v280, 4294901760
    %282 = vmatmul.mubr.f32.gmra.mrb[0].mxu0 %v281
    %v283 = vpop.f32.mrb[0].mxu0
    %v284 = vadd.f32 0.0, %v283
    %v285 = vpop.f32.mrb[0].mxu0
    %286 = vmatprep.mubr.f32.mxu0 0.0
    %v287 = vand.u32 %v184, 4294901760
    %v288 = vsub.f32 %v184, %v287
    %v289 = vand.u32 %v288, 4294901760
    %v290 = vsub.f32 %v288, %v289
    %v291 = vand.u32 %v290, 4294901760
    %292 = vmatmul.mubr.f32.gmra.mrb[0].mxu0 %v291
    %v293 = vpop.f32.mrb[0].mxu0
    %v294 = vadd.f32 0.0, %v293
    %v295 = vpop.f32.mrb[0].mxu0
    %296 = vmatprep.mubr.f32.mxu0 0.0
    %v297 = vand.u32 %v187, 4294901760
    %v298 = vsub.f32 %v187, %v297
    %v299 = vand.u32 %v298, 4294901760
    %v300 = vsub.f32 %v298, %v299
    %v301 = vand.u32 %v300, 4294901760
    %302 = vmatmul.mubr.f32.gmra.mrb[0].mxu0 %v301
    %v303 = vpop.f32.mrb[0].mxu0
    %v304 = vadd.f32 0.0, %v303
    %v305 = vpop.f32.mrb[0].mxu0
    %306 = vmatprep.mubr.f32.mxu0 0.0
    %v307 = vand.u32 %v190, 4294901760
    %v308 = vsub.f32 %v190, %v307
    %v309 = vand.u32 %v308, 4294901760
    %v310 = vsub.f32 %v308, %v309
    %v311 = vand.u32 %v310, 4294901760
    %312 = vmatmul.mubr.f32.gmra.mrb[0].mxu0 %v311
    %v313 = vpop.f32.mrb[0].mxu0
    %v314 = vadd.f32 0.0, %v313
    %v315 = vpop.f32.mrb[0].mxu0
    %316 = vmatprep.mubr.f32.mxu0 0.0
    %v317 = vand.u32 %v193, 4294901760
    %v318 = vsub.f32 %v193, %v317
    %v319 = vand.u32 %v318, 4294901760
    %v320 = vsub.f32 %v318, %v319
    %v321 = vand.u32 %v320, 4294901760
    %322 = vmatmul.mubr.f32.gmra.mrb[0].mxu0 %v321
    %v323 = vpop.f32.mrb[0].mxu0
    %v324 = vadd.f32 0.0, %v323
    %v325 = vpop.f32.mrb[0].mxu0
    %326 = vmatprep.mubr.f32.mxu0 0.0
    %v327 = vand.u32 %v196, 4294901760
    %v328 = vsub.f32 %v196, %v327
    %v329 = vand.u32 %v328, 4294901760
    %v330 = vsub.f32 %v328, %v329
    %v331 = vand.u32 %v330, 4294901760
    %332 = vmatmul.mubr.f32.gmra.mrb[0].mxu0 %v331
    %v333 = vpop.f32.mrb[0].mxu0
    %v334 = vadd.f32 0.0, %v333
    %v335 = vpop.f32.mrb[0].mxu0
    %336 = vmatprep.mubr.f32.mxu0 0.0
    %v337 = vand.u32 %v199, 4294901760
    %v338 = vsub.f32 %v199, %v337
    %v339 = vand.u32 %v338, 4294901760
    %v340 = vsub.f32 %v338, %v339
    %v341 = vand.u32 %v340, 4294901760
    %342 = vmatmul.mubr.f32.gmra.mrb[0].mxu0 %v341
    %v343 = vpop.f32.mrb[0].mxu0
    %v344 = vadd.f32 0.0, %v343
    %v345 = vpop.f32.mrb[0].mxu0
    %346 = vmatprep.mubr.f32.mxu0 0.0
    %v347 = vand.u32 %v202, 4294901760
    %v348 = vsub.f32 %v202, %v347
    %v349 = vand.u32 %v348, 4294901760
    %v350 = vsub.f32 %v348, %v349
    %v351 = vand.u32 %v350, 4294901760
    %352 = vmatmul.mubr.f32.gmra.mrb[0].mxu0 %v351
    %v353 = vpop.f32.mrb[0].mxu0
    %v354 = vadd.f32 0.0, %v353
    %v355 = vpop.f32.mrb[0].mxu0
    %356 = vmatprep.mubr.f32.mxu0 0.0
    %v357 = vand.u32 %v205, 4294901760
    %v358 = vsub.f32 %v205, %v357
    %v359 = vand.u32 %v358, 4294901760
    %v360 = vsub.f32 %v358, %v359
    %v361 = vand.u32 %v360, 4294901760
    %362 = vmatmul.mubr.f32.gmra.mrb[0].mxu0 %v361
    %v363 = vpop.f32.mrb[0].mxu0
    %v364 = vadd.f32 0.0, %v363
    %v365 = vpop.f32.mrb[0].mxu0
    %366 = vmatprep.mubr.f32.mxu0 0.0
    %v367 = vand.u32 %v208, 4294901760
    %v368 = vsub.f32 %v208, %v367
    %v369 = vand.u32 %v368, 4294901760
    %v370 = vsub.f32 %v368, %v369
    %v371 = vand.u32 %v370, 4294901760
    %372 = vmatmul.mubr.f32.gmra.mrb[0].mxu0 %v371
    %v373 = vpop.f32.mrb[0].mxu0
    %v374 = vadd.f32 0.0, %v373
    %v375 = vpop.f32.mrb[0].mxu0
    %376 = vdwg.mxu0
    %377 = vmatprep.subr.mxu0 0.0
    %v378 = vand.u32 %v75, 4294901760
    %v379 = vsub.f32 %v75, %v378
    %v380 = vand.u32 %v379, 4294901760
    %v381 = vsub.f32 %v379, %v380
    %v382 = vand.u32 %v381, 4294901760
    %383 = vmatpush1.msra.mxu0 %v382
    %384 = vmatprep.subr.mxu0 0.0
    %v385 = vand.u32 %v76, 4294901760
    %v386 = vsub.f32 %v76, %v385
    %v387 = vand.u32 %v386, 4294901760
    %v388 = vsub.f32 %v386, %v387
    %v389 = vand.u32 %v388, 4294901760
    %390 = vmatpush1.msra.mxu0 %v389
    %391 = vmatprep.subr.mxu0 0.0
    %392 = vmatpush1.msra.mxu0 0.0
    %393 = vmatprep.subr.mxu0 0.0
    %394 = vmatpush1.msra.mxu0 0.0
    %395 = vmatprep.subr.mxu0 0.0
    %396 = vmatpush1.msra.mxu0 0.0
    %397 = vmatprep.subr.mxu0 0.0
    %398 = vmatpush1.msra.mxu0 0.0
    %399 = vmatprep.subr.mxu0 0.0
    %400 = vmatpush1.msra.mxu0 0.0
    %401 = vmatprep.subr.mxu0 0.0
    %402 = vmatpush1.msra.mxu0 0.0
    %403 = vmatprep.subr.mxu0 0.0
    %404 = vmatpush1.msra.mxu0 0.0
    %405 = vmatprep.subr.mxu0 0.0
    %406 = vmatpush1.msra.mxu0 0.0
    %407 = vmatprep.subr.mxu0 0.0
    %408 = vmatpush1.msra.mxu0 0.0
    %409 = vmatprep.subr.mxu0 0.0
    %410 = vmatpush1.msra.mxu0 0.0
    %411 = vmatprep.subr.mxu0 0.0
    %412 = vmatpush1.msra.mxu0 0.0
    %413 = vmatprep.subr.mxu0 0.0
    %414 = vmatpush1.msra.mxu0 0.0
    %415 = vmatprep.subr.mxu0 0.0
    %416 = vmatpush1.msra.mxu0 0.0
    %417 = vmatprep.subr.mxu0 0.0
    %418 = vmatpush1.msra.mxu0 0.0
    %419 = vmatprep.subr.mxu0 0.0
    %420 = vmatpush1.msra.mxu0 0.0
    %421 = vmatprep.subr.mxu0 0.0
    %422 = vmatpush1.msra.mxu0 0.0
    %423 = vmatprep.subr.mxu0 0.0
    %424 = vmatpush1.msra.mxu0 0.0
    %425 = vmatprep.subr.mxu0 0.0
    %426 = vmatpush1.msra.mxu0 0.0
    %427 = vmatprep.subr.mxu0 0.0
    %428 = vmatpush1.msra.mxu0 0.0
    %429 = vmatprep.subr.mxu0 0.0
    %430 = vmatpush1.msra.mxu0 0.0
    %431 = vmatprep.subr.mxu0 0.0
    %432 = vmatpush1.msra.mxu0 0.0
    %433 = vmatprep.subr.mxu0 0.0
    %434 = vmatpush1.msra.mxu0 0.0
    %435 = vmatprep.subr.mxu0 0.0
    %436 = vmatpush1.msra.mxu0 0.0
    %437 = vmatprep.subr.mxu0 0.0
    %438 = vmatpush1.msra.mxu0 0.0
    %439 = vmatprep.subr.mxu0 0.0
    %440 = vmatpush1.msra.mxu0 0.0
    %441 = vmatprep.subr.mxu0 0.0
    %442 = vmatpush1.msra.mxu0 0.0
    %443 = vmatprep.subr.mxu0 0.0
    %444 = vmatpush1.msra.mxu0 0.0
    %445 = vmatprep.subr.mxu0 0.0
    %446 = vmatpush1.msra.mxu0 0.0
    %447 = vmatprep.subr.mxu0 0.0
    %448 = vmatpush1.msra.mxu0 0.0
    %449 = vmatprep.subr.mxu0 0.0
    %450 = vmatpush1.msra.mxu0 0.0
    %451 = vmatprep.mubr.f32.mxu0 0.0
    %v452 = vand.u32 %v181, 4294901760
    %453 = vmatmul.mubr.f32.gmra.mrb[0].mxu0 %v452
    %v454 = vpop.f32.mrb[0].mxu0
    %v455 = vadd.f32 %v284, %v454
    %v456 = vpop.f32.mrb[0].mxu0
    %457 = vmatprep.mubr.f32.mxu0 0.0
    %v458 = vand.u32 %v184, 4294901760
    %459 = vmatmul.mubr.f32.gmra.mrb[0].mxu0 %v458
    %v460 = vpop.f32.mrb[0].mxu0
    %v461 = vadd.f32 %v294, %v460
    %v462 = vpop.f32.mrb[0].mxu0
    %463 = vmatprep.mubr.f32.mxu0 0.0
    %v464 = vand.u32 %v187, 4294901760
    %465 = vmatmul.mubr.f32.gmra.mrb[0].mxu0 %v464
    %v466 = vpop.f32.mrb[0].mxu0
    %v467 = vadd.f32 %v304, %v466
    %v468 = vpop.f32.mrb[0].mxu0
    %469 = vmatprep.mubr.f32.mxu0 0.0
    %v470 = vand.u32 %v190, 4294901760
    %471 = vmatmul.mubr.f32.gmra.mrb[0].mxu0 %v470
    %v472 = vpop.f32.mrb[0].mxu0
    %v473 = vadd.f32 %v314, %v472
    %v474 = vpop.f32.mrb[0].mxu0
    %475 = vmatprep.mubr.f32.mxu0 0.0
    %v476 = vand.u32 %v193, 4294901760
    %477 = vmatmul.mubr.f32.gmra.mrb[0].mxu0 %v476
    %v478 = vpop.f32.mrb[0].mxu0
    %v479 = vadd.f32 %v324, %v478
    %v480 = vpop.f32.mrb[0].mxu0
    %481 = vmatprep.mubr.f32.mxu0 0.0
    %v482 = vand.u32 %v196, 4294901760
    %483 = vmatmul.mubr.f32.gmra.mrb[0].mxu0 %v482
    %v484 = vpop.f32.mrb[0].mxu0
    %v485 = vadd.f32 %v334, %v484
    %v486 = vpop.f32.mrb[0].mxu0
    %487 = vmatprep.mubr.f32.mxu0 0.0
    %v488 = vand.u32 %v199, 4294901760
    %489 = vmatmul.mubr.f32.gmra.mrb[0].mxu0 %v488
    %v490 = vpop.f32.mrb[0].mxu0
    %v491 = vadd.f32 %v344, %v490
    %v492 = vpop.f32.mrb[0].mxu0
    %493 = vmatprep.mubr.f32.mxu0 0.0
    %v494 = vand.u32 %v202, 4294901760
    %495 = vmatmul.mubr.f32.gmra.mrb[0].mxu0 %v494
    %v496 = vpop.f32.mrb[0].mxu0
    %v497 = vadd.f32 %v354, %v496
    %v498 = vpop.f32.mrb[0].mxu0
    %499 = vmatprep.mubr.f32.mxu0 0.0
    %v500 = vand.u32 %v205, 4294901760
    %501 = vmatmul.mubr.f32.gmra.mrb[0].mxu0 %v500
    %v502 = vpop.f32.mrb[0].mxu0
    %v503 = vadd.f32 %v364, %v502
    %v504 = vpop.f32.mrb[0].mxu0
    %505 = vmatprep.mubr.f32.mxu0 0.0
    %v506 = vand.u32 %v208, 4294901760
    %507 = vmatmul.mubr.f32.gmra.mrb[0].mxu0 %v506
    %v508 = vpop.f32.mrb[0].mxu0
    %v509 = vadd.f32 %v374, %v508
    %v510 = vpop.f32.mrb[0].mxu0
    %511 = vdwg.mxu0
    %512 = vmatprep.subr.mxu0 0.0
    %v513 = vand.u32 %v75, 4294901760
    %v514 = vsub.f32 %v75, %v513
    %515 = vmatpush1.msra.mxu0 %v514
    %516 = vmatprep.subr.mxu0 0.0
    %v517 = vand.u32 %v76, 4294901760
    %v518 = vsub.f32 %v76, %v517
    %519 = vmatpush1.msra.mxu0 %v518
    %520 = vmatprep.subr.mxu0 0.0
    %521 = vmatpush1.msra.mxu0 0.0
    %522 = vmatprep.subr.mxu0 0.0
    %523 = vmatpush1.msra.mxu0 0.0
    %524 = vmatprep.subr.mxu0 0.0
    %525 = vmatpush1.msra.mxu0 0.0
    %526 = vmatprep.subr.mxu0 0.0
    %527 = vmatpush1.msra.mxu0 0.0
    %528 = vmatprep.subr.mxu0 0.0
    %529 = vmatpush1.msra.mxu0 0.0
    %530 = vmatprep.subr.mxu0 0.0
    %531 = vmatpush1.msra.mxu0 0.0
    %532 = vmatprep.subr.mxu0 0.0
    %533 = vmatpush1.msra.mxu0 0.0
    %534 = vmatprep.subr.mxu0 0.0
    %535 = vmatpush1.msra.mxu0 0.0
    %536 = vmatprep.subr.mxu0 0.0
    %537 = vmatpush1.msra.mxu0 0.0
    %538 = vmatprep.subr.mxu0 0.0
    %539 = vmatpush1.msra.mxu0 0.0
    %540 = vmatprep.subr.mxu0 0.0
    %541 = vmatpush1.msra.mxu0 0.0
    %542 = vmatprep.subr.mxu0 0.0
    %543 = vmatpush1.msra.mxu0 0.0
    %544 = vmatprep.subr.mxu0 0.0
    %545 = vmatpush1.msra.mxu0 0.0
    %546 = vmatprep.subr.mxu0 0.0
    %547 = vmatpush1.msra.mxu0 0.0
    %548 = vmatprep.subr.mxu0 0.0
    %549 = vmatpush1.msra.mxu0 0.0
    %550 = vmatprep.subr.mxu0 0.0
    %551 = vmatpush1.msra.mxu0 0.0
    %552 = vmatprep.subr.mxu0 0.0
    %553 = vmatpush1.msra.mxu0 0.0
    %554 = vmatprep.subr.mxu0 0.0
    %555 = vmatpush1.msra.mxu0 0.0
    %556 = vmatprep.subr.mxu0 0.0
    %557 = vmatpush1.msra.mxu0 0.0
    %558 = vmatprep.subr.mxu0 0.0
    %559 = vmatpush1.msra.mxu0 0.0
    %560 = vmatprep.subr.mxu0 0.0
    %561 = vmatpush1.msra.mxu0 0.0
    %562 = vmatprep.subr.mxu0 0.0
    %563 = vmatpush1.msra.mxu0 0.0
    %564 = vmatprep.subr.mxu0 0.0
    %565 = vmatpush1.msra.mxu0 0.0
    %566 = vmatprep.subr.mxu0 0.0
    %567 = vmatpush1.msra.mxu0 0.0
    %568 = vmatprep.subr.mxu0 0.0
    %569 = vmatpush1.msra.mxu0 0.0
    %570 = vmatprep.subr.mxu0 0.0
    %571 = vmatpush1.msra.mxu0 0.0
    %572 = vmatprep.subr.mxu0 0.0
    %573 = vmatpush1.msra.mxu0 0.0
    %574 = vmatprep.subr.mxu0 0.0
    %575 = vmatpush1.msra.mxu0 0.0
    %576 = vmatprep.subr.mxu0 0.0
    %577 = vmatpush1.msra.mxu0 0.0
    %578 = vmatprep.subr.mxu0 0.0
    %579 = vmatpush1.msra.mxu0 0.0
    %580 = vmatprep.mubr.f32.mxu0 0.0
    %v581 = vand.u32 %v181, 4294901760
    %v582 = vsub.f32 %v181, %v581
    %583 = vmatmul.mubr.f32.gmra.mrb[0].mxu0 %v582
    %v584 = vpop.f32.mrb[0].mxu0
    %v585 = vadd.f32 %v455, %v584
    %v586 = vpop.f32.mrb[0].mxu0
    %587 = vmatprep.mubr.f32.mxu0 0.0
    %v588 = vand.u32 %v184, 4294901760
    %v589 = vsub.f32 %v184, %v588
    %590 = vmatmul.mubr.f32.gmra.mrb[0].mxu0 %v589
    %v591 = vpop.f32.mrb[0].mxu0
    %v592 = vadd.f32 %v461, %v591
    %v593 = vpop.f32.mrb[0].mxu0
    %594 = vmatprep.mubr.f32.mxu0 0.0
    %v595 = vand.u32 %v187, 4294901760
    %v596 = vsub.f32 %v187, %v595
    %597 = vmatmul.mubr.f32.gmra.mrb[0].mxu0 %v596
    %v598 = vpop.f32.mrb[0].mxu0
    %v599 = vadd.f32 %v467, %v598
    %v600 = vpop.f32.mrb[0].mxu0
    %601 = vmatprep.mubr.f32.mxu0 0.0
    %v602 = vand.u32 %v190, 4294901760
    %v603 = vsub.f32 %v190, %v602
    %604 = vmatmul.mubr.f32.gmra.mrb[0].mxu0 %v603
    %v605 = vpop.f32.mrb[0].mxu0
    %v606 = vadd.f32 %v473, %v605
    %v607 = vpop.f32.mrb[0].mxu0
    %608 = vmatprep.mubr.f32.mxu0 0.0
    %v609 = vand.u32 %v193, 4294901760
    %v610 = vsub.f32 %v193, %v609
    %611 = vmatmul.mubr.f32.gmra.mrb[0].mxu0 %v610
    %v612 = vpop.f32.mrb[0].mxu0
    %v613 = vadd.f32 %v479, %v612
    %v614 = vpop.f32.mrb[0].mxu0
    %615 = vmatprep.mubr.f32.mxu0 0.0
    %v616 = vand.u32 %v196, 4294901760
    %v617 = vsub.f32 %v196, %v616
    %618 = vmatmul.mubr.f32.gmra.mrb[0].mxu0 %v617
    %v619 = vpop.f32.mrb[0].mxu0
    %v620 = vadd.f32 %v485, %v619
    %v621 = vpop.f32.mrb[0].mxu0
    %622 = vmatprep.mubr.f32.mxu0 0.0
    %v623 = vand.u32 %v199, 4294901760
    %v624 = vsub.f32 %v199, %v623
    %625 = vmatmul.mubr.f32.gmra.mrb[0].mxu0 %v624
    %v626 = vpop.f32.mrb[0].mxu0
    %v627 = vadd.f32 %v491, %v626
    %v628 = vpop.f32.mrb[0].mxu0
    %629 = vmatprep.mubr.f32.mxu0 0.0
    %v630 = vand.u32 %v202, 4294901760
    %v631 = vsub.f32 %v202, %v630
    %632 = vmatmul.mubr.f32.gmra.mrb[0].mxu0 %v631
    %v633 = vpop.f32.mrb[0].mxu0
    %v634 = vadd.f32 %v497, %v633
    %v635 = vpop.f32.mrb[0].mxu0
    %636 = vmatprep.mubr.f32.mxu0 0.0
    %v637 = vand.u32 %v205, 4294901760
    %v638 = vsub.f32 %v205, %v637
    %639 = vmatmul.mubr.f32.gmra.mrb[0].mxu0 %v638
    %v640 = vpop.f32.mrb[0].mxu0
    %v641 = vadd.f32 %v503, %v640
    %v642 = vpop.f32.mrb[0].mxu0
    %643 = vmatprep.mubr.f32.mxu0 0.0
    %v644 = vand.u32 %v208, 4294901760
    %v645 = vsub.f32 %v208, %v644
    %646 = vmatmul.mubr.f32.gmra.mrb[0].mxu0 %v645
    %v647 = vpop.f32.mrb[0].mxu0
    %v648 = vadd.f32 %v509, %v647
    %v649 = vpop.f32.mrb[0].mxu0
    %650 = vdwg.mxu0
    %651 = vmatprep.subr.mxu0 0.0
    %v652 = vand.u32 %v75, 4294901760
    %653 = vmatpush1.msra.mxu0 %v652
    %654 = vmatprep.subr.mxu0 0.0
    %v655 = vand.u32 %v76, 4294901760
    %656 = vmatpush1.msra.mxu0 %v655
    %657 = vmatprep.subr.mxu0 0.0
    %658 = vmatpush1.msra.mxu0 0.0
    %659 = vmatprep.subr.mxu0 0.0
    %660 = vmatpush1.msra.mxu0 0.0
    %661 = vmatprep.subr.mxu0 0.0
    %662 = vmatpush1.msra.mxu0 0.0
    %663 = vmatprep.subr.mxu0 0.0
    %664 = vmatpush1.msra.mxu0 0.0
    %665 = vmatprep.subr.mxu0 0.0
    %666 = vmatpush1.msra.mxu0 0.0
    %667 = vmatprep.subr.mxu0 0.0
    %668 = vmatpush1.msra.mxu0 0.0
    %669 = vmatprep.subr.mxu0 0.0
    %670 = vmatpush1.msra.mxu0 0.0
    %671 = vmatprep.subr.mxu0 0.0
    %672 = vmatpush1.msra.mxu0 0.0
    %673 = vmatprep.subr.mxu0 0.0
    %674 = vmatpush1.msra.mxu0 0.0
    %675 = vmatprep.subr.mxu0 0.0
    %676 = vmatpush1.msra.mxu0 0.0
    %677 = vmatprep.subr.mxu0 0.0
    %678 = vmatpush1.msra.mxu0 0.0
    %679 = vmatprep.subr.mxu0 0.0
    %680 = vmatpush1.msra.mxu0 0.0
    %681 = vmatprep.subr.mxu0 0.0
    %682 = vmatpush1.msra.mxu0 0.0
    %683 = vmatprep.subr.mxu0 0.0
    %684 = vmatpush1.msra.mxu0 0.0
    %685 = vmatprep.subr.mxu0 0.0
    %686 = vmatpush1.msra.mxu0 0.0
    %687 = vmatprep.subr.mxu0 0.0
    %688 = vmatpush1.msra.mxu0 0.0
    %689 = vmatprep.subr.mxu0 0.0
    %690 = vmatpush1.msra.mxu0 0.0
    %691 = vmatprep.subr.mxu0 0.0
    %692 = vmatpush1.msra.mxu0 0.0
    %693 = vmatprep.subr.mxu0 0.0
    %694 = vmatpush1.msra.mxu0 0.0
    %695 = vmatprep.subr.mxu0 0.0
    %696 = vmatpush1.msra.mxu0 0.0
    %697 = vmatprep.subr.mxu0 0.0
    %698 = vmatpush1.msra.mxu0 0.0
    %699 = vmatprep.subr.mxu0 0.0
    %700 = vmatpush1.msra.mxu0 0.0
    %701 = vmatprep.subr.mxu0 0.0
    %702 = vmatpush1.msra.mxu0 0.0
    %703 = vmatprep.subr.mxu0 0.0
    %704 = vmatpush1.msra.mxu0 0.0
    %705 = vmatprep.subr.mxu0 0.0
    %706 = vmatpush1.msra.mxu0 0.0
    %707 = vmatprep.subr.mxu0 0.0
    %708 = vmatpush1.msra.mxu0 0.0
    %709 = vmatprep.subr.mxu0 0.0
    %710 = vmatpush1.msra.mxu0 0.0
    %711 = vmatprep.subr.mxu0 0.0
    %712 = vmatpush1.msra.mxu0 0.0
    %713 = vmatprep.subr.mxu0 0.0
    %714 = vmatpush1.msra.mxu0 0.0
    %715 = vmatprep.subr.mxu0 0.0
    %716 = vmatpush1.msra.mxu0 0.0
    %717 = vmatprep.mubr.f32.mxu0 0.0
    %v718 = vand.u32 %v181, 4294901760
    %v719 = vsub.f32 %v181, %v718
    %v720 = vand.u32 %v719, 4294901760
    %721 = vmatmul.mubr.f32.gmra.mrb[0].mxu0 %v720
    %v722 = vpop.f32.mrb[0].mxu0
    %v723 = vadd.f32 %v585, %v722
    %v724 = vpop.f32.mrb[0].mxu0
    %725 = vmatprep.mubr.f32.mxu0 0.0
    %v726 = vand.u32 %v184, 4294901760
    %v727 = vsub.f32 %v184, %v726
    %v728 = vand.u32 %v727, 4294901760
    %729 = vmatmul.mubr.f32.gmra.mrb[0].mxu0 %v728
    %v730 = vpop.f32.mrb[0].mxu0
    %v731 = vadd.f32 %v592, %v730
    %v732 = vpop.f32.mrb[0].mxu0
    %733 = vmatprep.mubr.f32.mxu0 0.0
    %v734 = vand.u32 %v187, 4294901760
    %v735 = vsub.f32 %v187, %v734
    %v736 = vand.u32 %v735, 4294901760
    %737 = vmatmul.mubr.f32.gmra.mrb[0].mxu0 %v736
    %v738 = vpop.f32.mrb[0].mxu0
    %v739 = vadd.f32 %v599, %v738
    %v740 = vpop.f32.mrb[0].mxu0
    %741 = vmatprep.mubr.f32.mxu0 0.0
    %v742 = vand.u32 %v190, 4294901760
    %v743 = vsub.f32 %v190, %v742
    %v744 = vand.u32 %v743, 4294901760
    %745 = vmatmul.mubr.f32.gmra.mrb[0].mxu0 %v744
    %v746 = vpop.f32.mrb[0].mxu0
    %v747 = vadd.f32 %v606, %v746
    %v748 = vpop.f32.mrb[0].mxu0
    %749 = vmatprep.mubr.f32.mxu0 0.0
    %v750 = vand.u32 %v193, 4294901760
    %v751 = vsub.f32 %v193, %v750
    %v752 = vand.u32 %v751, 4294901760
    %753 = vmatmul.mubr.f32.gmra.mrb[0].mxu0 %v752
    %v754 = vpop.f32.mrb[0].mxu0
    %v755 = vadd.f32 %v613, %v754
    %v756 = vpop.f32.mrb[0].mxu0
    %757 = vmatprep.mubr.f32.mxu0 0.0
    %v758 = vand.u32 %v196, 4294901760
    %v759 = vsub.f32 %v196, %v758
    %v760 = vand.u32 %v759, 4294901760
    %761 = vmatmul.mubr.f32.gmra.mrb[0].mxu0 %v760
    %v762 = vpop.f32.mrb[0].mxu0
    %v763 = vadd.f32 %v620, %v762
    %v764 = vpop.f32.mrb[0].mxu0
    %765 = vmatprep.mubr.f32.mxu0 0.0
    %v766 = vand.u32 %v199, 4294901760
    %v767 = vsub.f32 %v199, %v766
    %v768 = vand.u32 %v767, 4294901760
    %769 = vmatmul.mubr.f32.gmra.mrb[0].mxu0 %v768
    %v770 = vpop.f32.mrb[0].mxu0
    %v771 = vadd.f32 %v627, %v770
    %v772 = vpop.f32.mrb[0].mxu0
    %773 = vmatprep.mubr.f32.mxu0 0.0
    %v774 = vand.u32 %v202, 4294901760
    %v775 = vsub.f32 %v202, %v774
    %v776 = vand.u32 %v775, 4294901760
    %777 = vmatmul.mubr.f32.gmra.mrb[0].mxu0 %v776
    %v778 = vpop.f32.mrb[0].mxu0
    %v779 = vadd.f32 %v634, %v778
    %v780 = vpop.f32.mrb[0].mxu0
    %781 = vmatprep.mubr.f32.mxu0 0.0
    %v782 = vand.u32 %v205, 4294901760
    %v783 = vsub.f32 %v205, %v782
    %v784 = vand.u32 %v783, 4294901760
    %785 = vmatmul.mubr.f32.gmra.mrb[0].mxu0 %v784
    %v786 = vpop.f32.mrb[0].mxu0
    %v787 = vadd.f32 %v641, %v786
    %v788 = vpop.f32.mrb[0].mxu0
    %789 = vmatprep.mubr.f32.mxu0 0.0
    %v790 = vand.u32 %v208, 4294901760
    %v791 = vsub.f32 %v208, %v790
    %v792 = vand.u32 %v791, 4294901760
    %793 = vmatmul.mubr.f32.gmra.mrb[0].mxu0 %v792
    %v794 = vpop.f32.mrb[0].mxu0
    %v795 = vadd.f32 %v648, %v794
    %v796 = vpop.f32.mrb[0].mxu0
    %797 = vdwg.mxu0
    %798 = vmatprep.subr.mxu0 0.0
    %v799 = vand.u32 %v75, 4294901760
    %v800 = vsub.f32 %v75, %v799
    %v801 = vand.u32 %v800, 4294901760
    %802 = vmatpush1.msra.mxu0 %v801
    %803 = vmatprep.subr.mxu0 0.0
    %v804 = vand.u32 %v76, 4294901760
    %v805 = vsub.f32 %v76, %v804
    %v806 = vand.u32 %v805, 4294901760
    %807 = vmatpush1.msra.mxu0 %v806
    %808 = vmatprep.subr.mxu0 0.0
    %809 = vmatpush1.msra.mxu0 0.0
    %810 = vmatprep.subr.mxu0 0.0
    %811 = vmatpush1.msra.mxu0 0.0
    %812 = vmatprep.subr.mxu0 0.0
    %813 = vmatpush1.msra.mxu0 0.0
    %814 = vmatprep.subr.mxu0 0.0
    %815 = vmatpush1.msra.mxu0 0.0
    %816 = vmatprep.subr.mxu0 0.0
    %817 = vmatpush1.msra.mxu0 0.0
    %818 = vmatprep.subr.mxu0 0.0
    %819 = vmatpush1.msra.mxu0 0.0
    %820 = vmatprep.subr.mxu0 0.0
    %821 = vmatpush1.msra.mxu0 0.0
    %822 = vmatprep.subr.mxu0 0.0
    %823 = vmatpush1.msra.mxu0 0.0
    %824 = vmatprep.subr.mxu0 0.0
    %825 = vmatpush1.msra.mxu0 0.0
    %826 = vmatprep.subr.mxu0 0.0
    %827 = vmatpush1.msra.mxu0 0.0
    %828 = vmatprep.subr.mxu0 0.0
    %829 = vmatpush1.msra.mxu0 0.0
    %830 = vmatprep.subr.mxu0 0.0
    %831 = vmatpush1.msra.mxu0 0.0
    %832 = vmatprep.subr.mxu0 0.0
    %833 = vmatpush1.msra.mxu0 0.0
    %834 = vmatprep.subr.mxu0 0.0
    %835 = vmatpush1.msra.mxu0 0.0
    %836 = vmatprep.subr.mxu0 0.0
    %837 = vmatpush1.msra.mxu0 0.0
    %838 = vmatprep.subr.mxu0 0.0
    %839 = vmatpush1.msra.mxu0 0.0
    %840 = vmatprep.subr.mxu0 0.0
    %841 = vmatpush1.msra.mxu0 0.0
    %842 = vmatprep.subr.mxu0 0.0
    %843 = vmatpush1.msra.mxu0 0.0
    %844 = vmatprep.subr.mxu0 0.0
    %845 = vmatpush1.msra.mxu0 0.0
    %846 = vmatprep.subr.mxu0 0.0
    %847 = vmatpush1.msra.mxu0 0.0
    %848 = vmatprep.subr.mxu0 0.0
    %849 = vmatpush1.msra.mxu0 0.0
    %850 = vmatprep.subr.mxu0 0.0
    %851 = vmatpush1.msra.mxu0 0.0
    %852 = vmatprep.subr.mxu0 0.0
    %853 = vmatpush1.msra.mxu0 0.0
    %854 = vmatprep.subr.mxu0 0.0
    %855 = vmatpush1.msra.mxu0 0.0
    %856 = vmatprep.subr.mxu0 0.0
    %857 = vmatpush1.msra.mxu0 0.0
    %858 = vmatprep.subr.mxu0 0.0
    %859 = vmatpush1.msra.mxu0 0.0
    %860 = vmatprep.subr.mxu0 0.0
    %861 = vmatpush1.msra.mxu0 0.0
    %862 = vmatprep.subr.mxu0 0.0
    %863 = vmatpush1.msra.mxu0 0.0
    %864 = vmatprep.subr.mxu0 0.0
    %865 = vmatpush1.msra.mxu0 0.0
    %866 = vmatprep.subr.mxu0 0.0
    %867 = vmatpush1.msra.mxu0 0.0
    %868 = vmatprep.mubr.f32.mxu0 0.0
    %v869 = vand.u32 %v181, 4294901760
    %870 = vmatmul.mubr.f32.gmra.mrb[0].mxu0 %v869
    %v871 = vpop.f32.mrb[0].mxu0
    %v872 = vadd.f32 %v723, %v871
    %v873 = vpop.f32.mrb[0].mxu0
    %874 = vmatprep.mubr.f32.mxu0 0.0
    %v875 = vand.u32 %v184, 4294901760
    %876 = vmatmul.mubr.f32.gmra.mrb[0].mxu0 %v875
    %v877 = vpop.f32.mrb[0].mxu0
    %v878 = vadd.f32 %v731, %v877
    %v879 = vpop.f32.mrb[0].mxu0
    %880 = vmatprep.mubr.f32.mxu0 0.0
    %v881 = vand.u32 %v187, 4294901760
    %882 = vmatmul.mubr.f32.gmra.mrb[0].mxu0 %v881
    %v883 = vpop.f32.mrb[0].mxu0
    %v884 = vadd.f32 %v739, %v883
    %v885 = vpop.f32.mrb[0].mxu0
    %886 = vmatprep.mubr.f32.mxu0 0.0
    %v887 = vand.u32 %v190, 4294901760
    %888 = vmatmul.mubr.f32.gmra.mrb[0].mxu0 %v887
    %v889 = vpop.f32.mrb[0].mxu0
    %v890 = vadd.f32 %v747, %v889
    %v891 = vpop.f32.mrb[0].mxu0
    %892 = vmatprep.mubr.f32.mxu0 0.0
    %v893 = vand.u32 %v193, 4294901760
    %894 = vmatmul.mubr.f32.gmra.mrb[0].mxu0 %v893
    %v895 = vpop.f32.mrb[0].mxu0
    %v896 = vadd.f32 %v755, %v895
    %v897 = vpop.f32.mrb[0].mxu0
    %898 = vmatprep.mubr.f32.mxu0 0.0
    %v899 = vand.u32 %v196, 4294901760
    %900 = vmatmul.mubr.f32.gmra.mrb[0].mxu0 %v899
    %v901 = vpop.f32.mrb[0].mxu0
    %v902 = vadd.f32 %v763, %v901
    %v903 = vpop.f32.mrb[0].mxu0
    %904 = vmatprep.mubr.f32.mxu0 0.0
    %v905 = vand.u32 %v199, 4294901760
    %906 = vmatmul.mubr.f32.gmra.mrb[0].mxu0 %v905
    %v907 = vpop.f32.mrb[0].mxu0
    %v908 = vadd.f32 %v771, %v907
    %v909 = vpop.f32.mrb[0].mxu0
    %910 = vmatprep.mubr.f32.mxu0 0.0
    %v911 = vand.u32 %v202, 4294901760
    %912 = vmatmul.mubr.f32.gmra.mrb[0].mxu0 %v911
    %v913 = vpop.f32.mrb[0].mxu0
    %v914 = vadd.f32 %v779, %v913
    %v915 = vpop.f32.mrb[0].mxu0
    %916 = vmatprep.mubr.f32.mxu0 0.0
    %v917 = vand.u32 %v205, 4294901760
    %918 = vmatmul.mubr.f32.gmra.mrb[0].mxu0 %v917
    %v919 = vpop.f32.mrb[0].mxu0
    %v920 = vadd.f32 %v787, %v919
    %v921 = vpop.f32.mrb[0].mxu0
    %922 = vmatprep.mubr.f32.mxu0 0.0
    %v923 = vand.u32 %v208, 4294901760
    %924 = vmatmul.mubr.f32.gmra.mrb[0].mxu0 %v923
    %v925 = vpop.f32.mrb[0].mxu0
    %v926 = vadd.f32 %v795, %v925
    %v927 = vpop.f32.mrb[0].mxu0
    %928 = vdwg.mxu0
    %929 = vmatprep.subr.mxu0 0.0
    %v930 = vand.u32 %v75, 4294901760
    %931 = vmatpush1.msra.mxu0 %v930
    %932 = vmatprep.subr.mxu0 0.0
    %v933 = vand.u32 %v76, 4294901760
    %934 = vmatpush1.msra.mxu0 %v933
    %935 = vmatprep.subr.mxu0 0.0
    %936 = vmatpush1.msra.mxu0 0.0
    %937 = vmatprep.subr.mxu0 0.0
    %938 = vmatpush1.msra.mxu0 0.0
    %939 = vmatprep.subr.mxu0 0.0
    %940 = vmatpush1.msra.mxu0 0.0
    %941 = vmatprep.subr.mxu0 0.0
    %942 = vmatpush1.msra.mxu0 0.0
    %943 = vmatprep.subr.mxu0 0.0
    %944 = vmatpush1.msra.mxu0 0.0
    %945 = vmatprep.subr.mxu0 0.0
    %946 = vmatpush1.msra.mxu0 0.0
    %947 = vmatprep.subr.mxu0 0.0
    %948 = vmatpush1.msra.mxu0 0.0
    %949 = vmatprep.subr.mxu0 0.0
    %950 = vmatpush1.msra.mxu0 0.0
    %951 = vmatprep.subr.mxu0 0.0
    %952 = vmatpush1.msra.mxu0 0.0
    %953 = vmatprep.subr.mxu0 0.0
    %954 = vmatpush1.msra.mxu0 0.0
    %955 = vmatprep.subr.mxu0 0.0
    %956 = vmatpush1.msra.mxu0 0.0
    %957 = vmatprep.subr.mxu0 0.0
    %958 = vmatpush1.msra.mxu0 0.0
    %959 = vmatprep.subr.mxu0 0.0
    %960 = vmatpush1.msra.mxu0 0.0
    %961 = vmatprep.subr.mxu0 0.0
    %962 = vmatpush1.msra.mxu0 0.0
    %963 = vmatprep.subr.mxu0 0.0
    %964 = vmatpush1.msra.mxu0 0.0
    %965 = vmatprep.subr.mxu0 0.0
    %966 = vmatpush1.msra.mxu0 0.0
    %967 = vmatprep.subr.mxu0 0.0
    %968 = vmatpush1.msra.mxu0 0.0
    %969 = vmatprep.subr.mxu0 0.0
    %970 = vmatpush1.msra.mxu0 0.0
    %971 = vmatprep.subr.mxu0 0.0
    %972 = vmatpush1.msra.mxu0 0.0
    %973 = vmatprep.subr.mxu0 0.0
    %974 = vmatpush1.msra.mxu0 0.0
    %975 = vmatprep.subr.mxu0 0.0
    %976 = vmatpush1.msra.mxu0 0.0
    %977 = vmatprep.subr.mxu0 0.0
    %978 = vmatpush1.msra.mxu0 0.0
    %979 = vmatprep.subr.mxu0 0.0
    %980 = vmatpush1.msra.mxu0 0.0
    %981 = vmatprep.subr.mxu0 0.0
    %982 = vmatpush1.msra.mxu0 0.0
    %983 = vmatprep.subr.mxu0 0.0
    %984 = vmatpush1.msra.mxu0 0.0
    %985 = vmatprep.subr.mxu0 0.0
    %986 = vmatpush1.msra.mxu0 0.0
    %987 = vmatprep.subr.mxu0 0.0
    %988 = vmatpush1.msra.mxu0 0.0
    %989 = vmatprep.subr.mxu0 0.0
    %990 = vmatpush1.msra.mxu0 0.0
    %991 = vmatprep.subr.mxu0 0.0
    %992 = vmatpush1.msra.mxu0 0.0
    %993 = vmatprep.subr.mxu0 0.0
    %994 = vmatpush1.msra.mxu0 0.0
    %995 = vmatprep.mubr.f32.mxu0 0.0
    %v996 = vand.u32 %v181, 4294901760
    %997 = vmatmul.mubr.f32.gmra.mrb[0].mxu0 %v996
    %v998 = vpop.f32.mrb[0].mxu0
    %v999 = vadd.f32 %v872, %v998
    %v1000 = vpop.f32.mrb[0].mxu0
    %1001 = vmatprep.mubr.f32.mxu0 0.0
    %v1002 = vand.u32 %v184, 4294901760
    %1003 = vmatmul.mubr.f32.gmra.mrb[0].mxu0 %v1002
    %v1004 = vpop.f32.mrb[0].mxu0
    %v1005 = vadd.f32 %v878, %v1004
    %v1006 = vpop.f32.mrb[0].mxu0
    %1007 = vmatprep.mubr.f32.mxu0 0.0
    %v1008 = vand.u32 %v187, 4294901760
    %1009 = vmatmul.mubr.f32.gmra.mrb[0].mxu0 %v1008
    %v1010 = vpop.f32.mrb[0].mxu0
    %v1011 = vadd.f32 %v884, %v1010
    %v1012 = vpop.f32.mrb[0].mxu0
    %1013 = vmatprep.mubr.f32.mxu0 0.0
    %v1014 = vand.u32 %v190, 4294901760
    %1015 = vmatmul.mubr.f32.gmra.mrb[0].mxu0 %v1014
    %v1016 = vpop.f32.mrb[0].mxu0
    %v1017 = vadd.f32 %v890, %v1016
    %v1018 = vpop.f32.mrb[0].mxu0
    %1019 = vmatprep.mubr.f32.mxu0 0.0
    %v1020 = vand.u32 %v193, 4294901760
    %1021 = vmatmul.mubr.f32.gmra.mrb[0].mxu0 %v1020
    %v1022 = vpop.f32.mrb[0].mxu0
    %v1023 = vadd.f32 %v896, %v1022
    %v1024 = vpop.f32.mrb[0].mxu0
    %1025 = vmatprep.mubr.f32.mxu0 0.0
    %v1026 = vand.u32 %v196, 4294901760
    %1027 = vmatmul.mubr.f32.gmra.mrb[0].mxu0 %v1026
    %v1028 = vpop.f32.mrb[0].mxu0
    %v1029 = vadd.f32 %v902, %v1028
    %v1030 = vpop.f32.mrb[0].mxu0
    %1031 = vmatprep.mubr.f32.mxu0 0.0
    %v1032 = vand.u32 %v199, 4294901760
    %1033 = vmatmul.mubr.f32.gmra.mrb[0].mxu0 %v1032
    %v1034 = vpop.f32.mrb[0].mxu0
    %v1035 = vadd.f32 %v908, %v1034
    %v1036 = vpop.f32.mrb[0].mxu0
    %1037 = vmatprep.mubr.f32.mxu0 0.0
    %v1038 = vand.u32 %v202, 4294901760
    %1039 = vmatmul.mubr.f32.gmra.mrb[0].mxu0 %v1038
    %v1040 = vpop.f32.mrb[0].mxu0
    %v1041 = vadd.f32 %v914, %v1040
    %v1042 = vpop.f32.mrb[0].mxu0
    %1043 = vmatprep.mubr.f32.mxu0 0.0
    %v1044 = vand.u32 %v205, 4294901760
    %1045 = vmatmul.mubr.f32.gmra.mrb[0].mxu0 %v1044
    %v1046 = vpop.f32.mrb[0].mxu0
    %v1047 = vadd.f32 %v920, %v1046
    %v1048 = vpop.f32.mrb[0].mxu0
    %1049 = vmatprep.mubr.f32.mxu0 0.0
    %v1050 = vand.u32 %v208, 4294901760
    %1051 = vmatmul.mubr.f32.gmra.mrb[0].mxu0 %v1050
    %v1052 = vpop.f32.mrb[0].mxu0
    %v1053 = vadd.f32 %v926, %v1052
    %v1054 = vpop.f32.mrb[0].mxu0
    %1055 = vdwg.mxu0
    %v1057 = vsel %vm179, %v99, 0
    %v1060 = vsel %vm179, %v100, 0
    %v1063 = vsel %vm179, %v115, 0
    %v1066 = vsel %vm179, %v116, 0
    %v1069 = vsel %vm179, %v131, 0
    %v1072 = vsel %vm179, %v132, 0
    %v1075 = vsel %vm179, %v147, 0
    %v1078 = vsel %vm179, %v148, 0
    %v1081 = vsel %vm179, %v163, 0
    %v1084 = vsel %vm179, %v164, 0
    %1086 = vmatprep.subr.mxu0 0.0
    %v1087 = vand.u32 %v73, 4294901760
    %1088 = vmatpush1.msra.mxu0 %v1087
    %1089 = vmatprep.subr.mxu0 0.0
    %v1090 = vand.u32 %v74, 4294901760
    %1091 = vmatpush1.msra.mxu0 %v1090
    %1092 = vmatprep.subr.mxu0 0.0
    %1093 = vmatpush1.msra.mxu0 0.0
    %1094 = vmatprep.subr.mxu0 0.0
    %1095 = vmatpush1.msra.mxu0 0.0
    %1096 = vmatprep.subr.mxu0 0.0
    %1097 = vmatpush1.msra.mxu0 0.0
    %1098 = vmatprep.subr.mxu0 0.0
    %1099 = vmatpush1.msra.mxu0 0.0
    %1100 = vmatprep.subr.mxu0 0.0
    %1101 = vmatpush1.msra.mxu0 0.0
    %1102 = vmatprep.subr.mxu0 0.0
    %1103 = vmatpush1.msra.mxu0 0.0
    %1104 = vmatprep.subr.mxu0 0.0
    %1105 = vmatpush1.msra.mxu0 0.0
    %1106 = vmatprep.subr.mxu0 0.0
    %1107 = vmatpush1.msra.mxu0 0.0
    %1108 = vmatprep.subr.mxu0 0.0
    %1109 = vmatpush1.msra.mxu0 0.0
    %1110 = vmatprep.subr.mxu0 0.0
    %1111 = vmatpush1.msra.mxu0 0.0
    %1112 = vmatprep.subr.mxu0 0.0
    %1113 = vmatpush1.msra.mxu0 0.0
    %1114 = vmatprep.subr.mxu0 0.0
    %1115 = vmatpush1.msra.mxu0 0.0
    %1116 = vmatprep.subr.mxu0 0.0
    %1117 = vmatpush1.msra.mxu0 0.0
    %1118 = vmatprep.subr.mxu0 0.0
    %1119 = vmatpush1.msra.mxu0 0.0
    %1120 = vmatprep.subr.mxu0 0.0
    %1121 = vmatpush1.msra.mxu0 0.0
    %1122 = vmatprep.subr.mxu0 0.0
    %1123 = vmatpush1.msra.mxu0 0.0
    %1124 = vmatprep.subr.mxu0 0.0
    %1125 = vmatpush1.msra.mxu0 0.0
    %1126 = vmatprep.subr.mxu0 0.0
    %1127 = vmatpush1.msra.mxu0 0.0
    %1128 = vmatprep.subr.mxu0 0.0
    %1129 = vmatpush1.msra.mxu0 0.0
    %1130 = vmatprep.subr.mxu0 0.0
    %1131 = vmatpush1.msra.mxu0 0.0
    %1132 = vmatprep.subr.mxu0 0.0
    %1133 = vmatpush1.msra.mxu0 0.0
    %1134 = vmatprep.subr.mxu0 0.0
    %1135 = vmatpush1.msra.mxu0 0.0
    %1136 = vmatprep.subr.mxu0 0.0
    %1137 = vmatpush1.msra.mxu0 0.0
    %1138 = vmatprep.subr.mxu0 0.0
    %1139 = vmatpush1.msra.mxu0 0.0
    %1140 = vmatprep.subr.mxu0 0.0
    %1141 = vmatpush1.msra.mxu0 0.0
    %1142 = vmatprep.subr.mxu0 0.0
    %1143 = vmatpush1.msra.mxu0 0.0
    %1144 = vmatprep.subr.mxu0 0.0
    %1145 = vmatpush1.msra.mxu0 0.0
    %1146 = vmatprep.subr.mxu0 0.0
    %1147 = vmatpush1.msra.mxu0 0.0
    %1148 = vmatprep.subr.mxu0 0.0
    %1149 = vmatpush1.msra.mxu0 0.0
    %1150 = vmatprep.subr.mxu0 0.0
    %1151 = vmatpush1.msra.mxu0 0.0
    %1152 = vmatprep.mubr.f32.mxu0 0.0
    %v1153 = vand.u32 %v1057, 4294901760
    %v1154 = vsub.f32 %v1057, %v1153
    %v1155 = vand.u32 %v1154, 4294901760
    %v1156 = vsub.f32 %v1154, %v1155
    %v1157 = vand.u32 %v1156, 4294901760
    %1158 = vmatmul.mubr.f32.gmra.mrb[0].mxu0 %v1157
    %v1159 = vpop.f32.mrb[0].mxu0
    %v1160 = vadd.f32 %v999, %v1159
    %v1161 = vpop.f32.mrb[0].mxu0
    %1162 = vmatprep.mubr.f32.mxu0 0.0
    %v1163 = vand.u32 %v1060, 4294901760
    %v1164 = vsub.f32 %v1060, %v1163
    %v1165 = vand.u32 %v1164, 4294901760
    %v1166 = vsub.f32 %v1164, %v1165
    %v1167 = vand.u32 %v1166, 4294901760
    %1168 = vmatmul.mubr.f32.gmra.mrb[0].mxu0 %v1167
    %v1169 = vpop.f32.mrb[0].mxu0
    %v1170 = vadd.f32 %v1005, %v1169
    %v1171 = vpop.f32.mrb[0].mxu0
    %1172 = vmatprep.mubr.f32.mxu0 0.0
    %v1173 = vand.u32 %v1063, 4294901760
    %v1174 = vsub.f32 %v1063, %v1173
    %v1175 = vand.u32 %v1174, 4294901760
    %v1176 = vsub.f32 %v1174, %v1175
    %v1177 = vand.u32 %v1176, 4294901760
    %1178 = vmatmul.mubr.f32.gmra.mrb[0].mxu0 %v1177
    %v1179 = vpop.f32.mrb[0].mxu0
    %v1180 = vadd.f32 %v1011, %v1179
    %v1181 = vpop.f32.mrb[0].mxu0
    %1182 = vmatprep.mubr.f32.mxu0 0.0
    %v1183 = vand.u32 %v1066, 4294901760
    %v1184 = vsub.f32 %v1066, %v1183
    %v1185 = vand.u32 %v1184, 4294901760
    %v1186 = vsub.f32 %v1184, %v1185
    %v1187 = vand.u32 %v1186, 4294901760
    %1188 = vmatmul.mubr.f32.gmra.mrb[0].mxu0 %v1187
    %v1189 = vpop.f32.mrb[0].mxu0
    %v1190 = vadd.f32 %v1017, %v1189
    %v1191 = vpop.f32.mrb[0].mxu0
    %1192 = vmatprep.mubr.f32.mxu0 0.0
    %v1193 = vand.u32 %v1069, 4294901760
    %v1194 = vsub.f32 %v1069, %v1193
    %v1195 = vand.u32 %v1194, 4294901760
    %v1196 = vsub.f32 %v1194, %v1195
    %v1197 = vand.u32 %v1196, 4294901760
    %1198 = vmatmul.mubr.f32.gmra.mrb[0].mxu0 %v1197
    %v1199 = vpop.f32.mrb[0].mxu0
    %v1200 = vadd.f32 %v1023, %v1199
    %v1201 = vpop.f32.mrb[0].mxu0
    %1202 = vmatprep.mubr.f32.mxu0 0.0
    %v1203 = vand.u32 %v1072, 4294901760
    %v1204 = vsub.f32 %v1072, %v1203
    %v1205 = vand.u32 %v1204, 4294901760
    %v1206 = vsub.f32 %v1204, %v1205
    %v1207 = vand.u32 %v1206, 4294901760
    %1208 = vmatmul.mubr.f32.gmra.mrb[0].mxu0 %v1207
    %v1209 = vpop.f32.mrb[0].mxu0
    %v1210 = vadd.f32 %v1029, %v1209
    %v1211 = vpop.f32.mrb[0].mxu0
    %1212 = vmatprep.mubr.f32.mxu0 0.0
    %v1213 = vand.u32 %v1075, 4294901760
    %v1214 = vsub.f32 %v1075, %v1213
    %v1215 = vand.u32 %v1214, 4294901760
    %v1216 = vsub.f32 %v1214, %v1215
    %v1217 = vand.u32 %v1216, 4294901760
    %1218 = vmatmul.mubr.f32.gmra.mrb[0].mxu0 %v1217
    %v1219 = vpop.f32.mrb[0].mxu0
    %v1220 = vadd.f32 %v1035, %v1219
    %v1221 = vpop.f32.mrb[0].mxu0
    %1222 = vmatprep.mubr.f32.mxu0 0.0
    %v1223 = vand.u32 %v1078, 4294901760
    %v1224 = vsub.f32 %v1078, %v1223
    %v1225 = vand.u32 %v1224, 4294901760
    %v1226 = vsub.f32 %v1224, %v1225
    %v1227 = vand.u32 %v1226, 4294901760
    %1228 = vmatmul.mubr.f32.gmra.mrb[0].mxu0 %v1227
    %v1229 = vpop.f32.mrb[0].mxu0
    %v1230 = vadd.f32 %v1041, %v1229
    %v1231 = vpop.f32.mrb[0].mxu0
    %1232 = vmatprep.mubr.f32.mxu0 0.0
    %v1233 = vand.u32 %v1081, 4294901760
    %v1234 = vsub.f32 %v1081, %v1233
    %v1235 = vand.u32 %v1234, 4294901760
    %v1236 = vsub.f32 %v1234, %v1235
    %v1237 = vand.u32 %v1236, 4294901760
    %1238 = vmatmul.mubr.f32.gmra.mrb[0].mxu0 %v1237
    %v1239 = vpop.f32.mrb[0].mxu0
    %v1240 = vadd.f32 %v1047, %v1239
    %v1241 = vpop.f32.mrb[0].mxu0
    %1242 = vmatprep.mubr.f32.mxu0 0.0
    %v1243 = vand.u32 %v1084, 4294901760
    %v1244 = vsub.f32 %v1084, %v1243
    %v1245 = vand.u32 %v1244, 4294901760
    %v1246 = vsub.f32 %v1244, %v1245
    %v1247 = vand.u32 %v1246, 4294901760
    %1248 = vmatmul.mubr.f32.gmra.mrb[0].mxu0 %v1247
    %v1249 = vpop.f32.mrb[0].mxu0
    %v1250 = vadd.f32 %v1053, %v1249
    %v1251 = vpop.f32.mrb[0].mxu0
    %1252 = vdwg.mxu0
    %1253 = vmatprep.subr.mxu0 0.0
    %v1254 = vand.u32 %v73, 4294901760
    %v1255 = vsub.f32 %v73, %v1254
    %v1256 = vand.u32 %v1255, 4294901760
    %v1257 = vsub.f32 %v1255, %v1256
    %v1258 = vand.u32 %v1257, 4294901760
    %1259 = vmatpush1.msra.mxu0 %v1258
    %1260 = vmatprep.subr.mxu0 0.0
    %v1261 = vand.u32 %v74, 4294901760
    %v1262 = vsub.f32 %v74, %v1261
    %v1263 = vand.u32 %v1262, 4294901760
    %v1264 = vsub.f32 %v1262, %v1263
    %v1265 = vand.u32 %v1264, 4294901760
    %1266 = vmatpush1.msra.mxu0 %v1265
    %1267 = vmatprep.subr.mxu0 0.0
    %1268 = vmatpush1.msra.mxu0 0.0
    %1269 = vmatprep.subr.mxu0 0.0
    %1270 = vmatpush1.msra.mxu0 0.0
    %1271 = vmatprep.subr.mxu0 0.0
    %1272 = vmatpush1.msra.mxu0 0.0
    %1273 = vmatprep.subr.mxu0 0.0
    %1274 = vmatpush1.msra.mxu0 0.0
    %1275 = vmatprep.subr.mxu0 0.0
    %1276 = vmatpush1.msra.mxu0 0.0
    %1277 = vmatprep.subr.mxu0 0.0
    %1278 = vmatpush1.msra.mxu0 0.0
    %1279 = vmatprep.subr.mxu0 0.0
    %1280 = vmatpush1.msra.mxu0 0.0
    %1281 = vmatprep.subr.mxu0 0.0
    %1282 = vmatpush1.msra.mxu0 0.0
    %1283 = vmatprep.subr.mxu0 0.0
    %1284 = vmatpush1.msra.mxu0 0.0
    %1285 = vmatprep.subr.mxu0 0.0
    %1286 = vmatpush1.msra.mxu0 0.0
    %1287 = vmatprep.subr.mxu0 0.0
    %1288 = vmatpush1.msra.mxu0 0.0
    %1289 = vmatprep.subr.mxu0 0.0
    %1290 = vmatpush1.msra.mxu0 0.0
    %1291 = vmatprep.subr.mxu0 0.0
    %1292 = vmatpush1.msra.mxu0 0.0
    %1293 = vmatprep.subr.mxu0 0.0
    %1294 = vmatpush1.msra.mxu0 0.0
    %1295 = vmatprep.subr.mxu0 0.0
    %1296 = vmatpush1.msra.mxu0 0.0
    %1297 = vmatprep.subr.mxu0 0.0
    %1298 = vmatpush1.msra.mxu0 0.0
    %1299 = vmatprep.subr.mxu0 0.0
    %1300 = vmatpush1.msra.mxu0 0.0
    %1301 = vmatprep.subr.mxu0 0.0
    %1302 = vmatpush1.msra.mxu0 0.0
    %1303 = vmatprep.subr.mxu0 0.0
    %1304 = vmatpush1.msra.mxu0 0.0
    %1305 = vmatprep.subr.mxu0 0.0
    %1306 = vmatpush1.msra.mxu0 0.0
    %1307 = vmatprep.subr.mxu0 0.0
    %1308 = vmatpush1.msra.mxu0 0.0
    %1309 = vmatprep.subr.mxu0 0.0
    %1310 = vmatpush1.msra.mxu0 0.0
    %1311 = vmatprep.subr.mxu0 0.0
    %1312 = vmatpush1.msra.mxu0 0.0
    %1313 = vmatprep.subr.mxu0 0.0
    %1314 = vmatpush1.msra.mxu0 0.0
    %1315 = vmatprep.subr.mxu0 0.0
    %1316 = vmatpush1.msra.mxu0 0.0
    %1317 = vmatprep.subr.mxu0 0.0
    %1318 = vmatpush1.msra.mxu0 0.0
    %1319 = vmatprep.subr.mxu0 0.0
    %1320 = vmatpush1.msra.mxu0 0.0
    %1321 = vmatprep.subr.mxu0 0.0
    %1322 = vmatpush1.msra.mxu0 0.0
    %1323 = vmatprep.subr.mxu0 0.0
    %1324 = vmatpush1.msra.mxu0 0.0
    %1325 = vmatprep.subr.mxu0 0.0
    %1326 = vmatpush1.msra.mxu0 0.0
    %1327 = vmatprep.mubr.f32.mxu0 0.0
    %v1328 = vand.u32 %v1057, 4294901760
    %1329 = vmatmul.mubr.f32.gmra.mrb[0].mxu0 %v1328
    %v1330 = vpop.f32.mrb[0].mxu0
    %v1331 = vadd.f32 %v1160, %v1330
    %v1332 = vpop.f32.mrb[0].mxu0
    %1333 = vmatprep.mubr.f32.mxu0 0.0
    %v1334 = vand.u32 %v1060, 4294901760
    %1335 = vmatmul.mubr.f32.gmra.mrb[0].mxu0 %v1334
    %v1336 = vpop.f32.mrb[0].mxu0
    %v1337 = vadd.f32 %v1170, %v1336
    %v1338 = vpop.f32.mrb[0].mxu0
    %1339 = vmatprep.mubr.f32.mxu0 0.0
    %v1340 = vand.u32 %v1063, 4294901760
    %1341 = vmatmul.mubr.f32.gmra.mrb[0].mxu0 %v1340
    %v1342 = vpop.f32.mrb[0].mxu0
    %v1343 = vadd.f32 %v1180, %v1342
    %v1344 = vpop.f32.mrb[0].mxu0
    %1345 = vmatprep.mubr.f32.mxu0 0.0
    %v1346 = vand.u32 %v1066, 4294901760
    %1347 = vmatmul.mubr.f32.gmra.mrb[0].mxu0 %v1346
    %v1348 = vpop.f32.mrb[0].mxu0
    %v1349 = vadd.f32 %v1190, %v1348
    %v1350 = vpop.f32.mrb[0].mxu0
    %1351 = vmatprep.mubr.f32.mxu0 0.0
    %v1352 = vand.u32 %v1069, 4294901760
    %1353 = vmatmul.mubr.f32.gmra.mrb[0].mxu0 %v1352
    %v1354 = vpop.f32.mrb[0].mxu0
    %v1355 = vadd.f32 %v1200, %v1354
    %v1356 = vpop.f32.mrb[0].mxu0
    %1357 = vmatprep.mubr.f32.mxu0 0.0
    %v1358 = vand.u32 %v1072, 4294901760
    %1359 = vmatmul.mubr.f32.gmra.mrb[0].mxu0 %v1358
    %v1360 = vpop.f32.mrb[0].mxu0
    %v1361 = vadd.f32 %v1210, %v1360
    %v1362 = vpop.f32.mrb[0].mxu0
    %1363 = vmatprep.mubr.f32.mxu0 0.0
    %v1364 = vand.u32 %v1075, 4294901760
    %1365 = vmatmul.mubr.f32.gmra.mrb[0].mxu0 %v1364
    %v1366 = vpop.f32.mrb[0].mxu0
    %v1367 = vadd.f32 %v1220, %v1366
    %v1368 = vpop.f32.mrb[0].mxu0
    %1369 = vmatprep.mubr.f32.mxu0 0.0
    %v1370 = vand.u32 %v1078, 4294901760
    %1371 = vmatmul.mubr.f32.gmra.mrb[0].mxu0 %v1370
    %v1372 = vpop.f32.mrb[0].mxu0
    %v1373 = vadd.f32 %v1230, %v1372
    %v1374 = vpop.f32.mrb[0].mxu0
    %1375 = vmatprep.mubr.f32.mxu0 0.0
    %v1376 = vand.u32 %v1081, 4294901760
    %1377 = vmatmul.mubr.f32.gmra.mrb[0].mxu0 %v1376
    %v1378 = vpop.f32.mrb[0].mxu0
    %v1379 = vadd.f32 %v1240, %v1378
    %v1380 = vpop.f32.mrb[0].mxu0
    %1381 = vmatprep.mubr.f32.mxu0 0.0
    %v1382 = vand.u32 %v1084, 4294901760
    %1383 = vmatmul.mubr.f32.gmra.mrb[0].mxu0 %v1382
    %v1384 = vpop.f32.mrb[0].mxu0
    %v1385 = vadd.f32 %v1250, %v1384
    %v1386 = vpop.f32.mrb[0].mxu0
    %1387 = vdwg.mxu0
    %1388 = vmatprep.subr.mxu0 0.0
    %v1389 = vand.u32 %v73, 4294901760
    %v1390 = vsub.f32 %v73, %v1389
    %1391 = vmatpush1.msra.mxu0 %v1390
    %1392 = vmatprep.subr.mxu0 0.0
    %v1393 = vand.u32 %v74, 4294901760
    %v1394 = vsub.f32 %v74, %v1393
    %1395 = vmatpush1.msra.mxu0 %v1394
    %1396 = vmatprep.subr.mxu0 0.0
    %1397 = vmatpush1.msra.mxu0 0.0
    %1398 = vmatprep.subr.mxu0 0.0
    %1399 = vmatpush1.msra.mxu0 0.0
    %1400 = vmatprep.subr.mxu0 0.0
    %1401 = vmatpush1.msra.mxu0 0.0
    %1402 = vmatprep.subr.mxu0 0.0
    %1403 = vmatpush1.msra.mxu0 0.0
    %1404 = vmatprep.subr.mxu0 0.0
    %1405 = vmatpush1.msra.mxu0 0.0
    %1406 = vmatprep.subr.mxu0 0.0
    %1407 = vmatpush1.msra.mxu0 0.0
    %1408 = vmatprep.subr.mxu0 0.0
    %1409 = vmatpush1.msra.mxu0 0.0
    %1410 = vmatprep.subr.mxu0 0.0
    %1411 = vmatpush1.msra.mxu0 0.0
    %1412 = vmatprep.subr.mxu0 0.0
    %1413 = vmatpush1.msra.mxu0 0.0
    %1414 = vmatprep.subr.mxu0 0.0
    %1415 = vmatpush1.msra.mxu0 0.0
    %1416 = vmatprep.subr.mxu0 0.0
    %1417 = vmatpush1.msra.mxu0 0.0
    %1418 = vmatprep.subr.mxu0 0.0
    %1419 = vmatpush1.msra.mxu0 0.0
    %1420 = vmatprep.subr.mxu0 0.0
    %1421 = vmatpush1.msra.mxu0 0.0
    %1422 = vmatprep.subr.mxu0 0.0
    %1423 = vmatpush1.msra.mxu0 0.0
    %1424 = vmatprep.subr.mxu0 0.0
    %1425 = vmatpush1.msra.mxu0 0.0
    %1426 = vmatprep.subr.mxu0 0.0
    %1427 = vmatpush1.msra.mxu0 0.0
    %1428 = vmatprep.subr.mxu0 0.0
    %1429 = vmatpush1.msra.mxu0 0.0
    %1430 = vmatprep.subr.mxu0 0.0
    %1431 = vmatpush1.msra.mxu0 0.0
    %1432 = vmatprep.subr.mxu0 0.0
    %1433 = vmatpush1.msra.mxu0 0.0
    %1434 = vmatprep.subr.mxu0 0.0
    %1435 = vmatpush1.msra.mxu0 0.0
    %1436 = vmatprep.subr.mxu0 0.0
    %1437 = vmatpush1.msra.mxu0 0.0
    %1438 = vmatprep.subr.mxu0 0.0
    %1439 = vmatpush1.msra.mxu0 0.0
    %1440 = vmatprep.subr.mxu0 0.0
    %1441 = vmatpush1.msra.mxu0 0.0
    %1442 = vmatprep.subr.mxu0 0.0
    %1443 = vmatpush1.msra.mxu0 0.0
    %1444 = vmatprep.subr.mxu0 0.0
    %1445 = vmatpush1.msra.mxu0 0.0
    %1446 = vmatprep.subr.mxu0 0.0
    %1447 = vmatpush1.msra.mxu0 0.0
    %1448 = vmatprep.subr.mxu0 0.0
    %1449 = vmatpush1.msra.mxu0 0.0
    %1450 = vmatprep.subr.mxu0 0.0
    %1451 = vmatpush1.msra.mxu0 0.0
    %1452 = vmatprep.subr.mxu0 0.0
    %1453 = vmatpush1.msra.mxu0 0.0
    %1454 = vmatprep.subr.mxu0 0.0
    %1455 = vmatpush1.msra.mxu0 0.0
    %1456 = vmatprep.mubr.f32.mxu0 0.0
    %v1457 = vand.u32 %v1057, 4294901760
    %v1458 = vsub.f32 %v1057, %v1457
    %1459 = vmatmul.mubr.f32.gmra.mrb[0].mxu0 %v1458
    %v1460 = vpop.f32.mrb[0].mxu0
    %v1461 = vadd.f32 %v1331, %v1460
    %v1462 = vpop.f32.mrb[0].mxu0
    %1463 = vmatprep.mubr.f32.mxu0 0.0
    %v1464 = vand.u32 %v1060, 4294901760
    %v1465 = vsub.f32 %v1060, %v1464
    %1466 = vmatmul.mubr.f32.gmra.mrb[0].mxu0 %v1465
    %v1467 = vpop.f32.mrb[0].mxu0
    %v1468 = vadd.f32 %v1337, %v1467
    %v1469 = vpop.f32.mrb[0].mxu0
    %1470 = vmatprep.mubr.f32.mxu0 0.0
    %v1471 = vand.u32 %v1063, 4294901760
    %v1472 = vsub.f32 %v1063, %v1471
    %1473 = vmatmul.mubr.f32.gmra.mrb[0].mxu0 %v1472
    %v1474 = vpop.f32.mrb[0].mxu0
    %v1475 = vadd.f32 %v1343, %v1474
    %v1476 = vpop.f32.mrb[0].mxu0
    %1477 = vmatprep.mubr.f32.mxu0 0.0
    %v1478 = vand.u32 %v1066, 4294901760
    %v1479 = vsub.f32 %v1066, %v1478
    %1480 = vmatmul.mubr.f32.gmra.mrb[0].mxu0 %v1479
    %v1481 = vpop.f32.mrb[0].mxu0
    %v1482 = vadd.f32 %v1349, %v1481
    %v1483 = vpop.f32.mrb[0].mxu0
    %1484 = vmatprep.mubr.f32.mxu0 0.0
    %v1485 = vand.u32 %v1069, 4294901760
    %v1486 = vsub.f32 %v1069, %v1485
    %1487 = vmatmul.mubr.f32.gmra.mrb[0].mxu0 %v1486
    %v1488 = vpop.f32.mrb[0].mxu0
    %v1489 = vadd.f32 %v1355, %v1488
    %v1490 = vpop.f32.mrb[0].mxu0
    %1491 = vmatprep.mubr.f32.mxu0 0.0
    %v1492 = vand.u32 %v1072, 4294901760
    %v1493 = vsub.f32 %v1072, %v1492
    %1494 = vmatmul.mubr.f32.gmra.mrb[0].mxu0 %v1493
    %v1495 = vpop.f32.mrb[0].mxu0
    %v1496 = vadd.f32 %v1361, %v1495
    %v1497 = vpop.f32.mrb[0].mxu0
    %1498 = vmatprep.mubr.f32.mxu0 0.0
    %v1499 = vand.u32 %v1075, 4294901760
    %v1500 = vsub.f32 %v1075, %v1499
    %1501 = vmatmul.mubr.f32.gmra.mrb[0].mxu0 %v1500
    %v1502 = vpop.f32.mrb[0].mxu0
    %v1503 = vadd.f32 %v1367, %v1502
    %v1504 = vpop.f32.mrb[0].mxu0
    %1505 = vmatprep.mubr.f32.mxu0 0.0
    %v1506 = vand.u32 %v1078, 4294901760
    %v1507 = vsub.f32 %v1078, %v1506
    %1508 = vmatmul.mubr.f32.gmra.mrb[0].mxu0 %v1507
    %v1509 = vpop.f32.mrb[0].mxu0
    %v1510 = vadd.f32 %v1373, %v1509
    %v1511 = vpop.f32.mrb[0].mxu0
    %1512 = vmatprep.mubr.f32.mxu0 0.0
    %v1513 = vand.u32 %v1081, 4294901760
    %v1514 = vsub.f32 %v1081, %v1513
    %1515 = vmatmul.mubr.f32.gmra.mrb[0].mxu0 %v1514
    %v1516 = vpop.f32.mrb[0].mxu0
    %v1517 = vadd.f32 %v1379, %v1516
    %v1518 = vpop.f32.mrb[0].mxu0
    %1519 = vmatprep.mubr.f32.mxu0 0.0
    %v1520 = vand.u32 %v1084, 4294901760
    %v1521 = vsub.f32 %v1084, %v1520
    %1522 = vmatmul.mubr.f32.gmra.mrb[0].mxu0 %v1521
    %v1523 = vpop.f32.mrb[0].mxu0
    %v1524 = vadd.f32 %v1385, %v1523
    %v1525 = vpop.f32.mrb[0].mxu0
    %1526 = vdwg.mxu0
    %1527 = vmatprep.subr.mxu0 0.0
    %v1528 = vand.u32 %v73, 4294901760
    %1529 = vmatpush1.msra.mxu0 %v1528
    %1530 = vmatprep.subr.mxu0 0.0
    %v1531 = vand.u32 %v74, 4294901760
    %1532 = vmatpush1.msra.mxu0 %v1531
    %1533 = vmatprep.subr.mxu0 0.0
    %1534 = vmatpush1.msra.mxu0 0.0
    %1535 = vmatprep.subr.mxu0 0.0
    %1536 = vmatpush1.msra.mxu0 0.0
    %1537 = vmatprep.subr.mxu0 0.0
    %1538 = vmatpush1.msra.mxu0 0.0
    %1539 = vmatprep.subr.mxu0 0.0
    %1540 = vmatpush1.msra.mxu0 0.0
    %1541 = vmatprep.subr.mxu0 0.0
    %1542 = vmatpush1.msra.mxu0 0.0
    %1543 = vmatprep.subr.mxu0 0.0
    %1544 = vmatpush1.msra.mxu0 0.0
    %1545 = vmatprep.subr.mxu0 0.0
    %1546 = vmatpush1.msra.mxu0 0.0
    %1547 = vmatprep.subr.mxu0 0.0
    %1548 = vmatpush1.msra.mxu0 0.0
    %1549 = vmatprep.subr.mxu0 0.0
    %1550 = vmatpush1.msra.mxu0 0.0
    %1551 = vmatprep.subr.mxu0 0.0
    %1552 = vmatpush1.msra.mxu0 0.0
    %1553 = vmatprep.subr.mxu0 0.0
    %1554 = vmatpush1.msra.mxu0 0.0
    %1555 = vmatprep.subr.mxu0 0.0
    %1556 = vmatpush1.msra.mxu0 0.0
    %1557 = vmatprep.subr.mxu0 0.0
    %1558 = vmatpush1.msra.mxu0 0.0
    %1559 = vmatprep.subr.mxu0 0.0
    %1560 = vmatpush1.msra.mxu0 0.0
    %1561 = vmatprep.subr.mxu0 0.0
    %1562 = vmatpush1.msra.mxu0 0.0
    %1563 = vmatprep.subr.mxu0 0.0
    %1564 = vmatpush1.msra.mxu0 0.0
    %1565 = vmatprep.subr.mxu0 0.0
    %1566 = vmatpush1.msra.mxu0 0.0
    %1567 = vmatprep.subr.mxu0 0.0
    %1568 = vmatpush1.msra.mxu0 0.0
    %1569 = vmatprep.subr.mxu0 0.0
    %1570 = vmatpush1.msra.mxu0 0.0
    %1571 = vmatprep.subr.mxu0 0.0
    %1572 = vmatpush1.msra.mxu0 0.0
    %1573 = vmatprep.subr.mxu0 0.0
    %1574 = vmatpush1.msra.mxu0 0.0
    %1575 = vmatprep.subr.mxu0 0.0
    %1576 = vmatpush1.msra.mxu0 0.0
    %1577 = vmatprep.subr.mxu0 0.0
    %1578 = vmatpush1.msra.mxu0 0.0
    %1579 = vmatprep.subr.mxu0 0.0
    %1580 = vmatpush1.msra.mxu0 0.0
    %1581 = vmatprep.subr.mxu0 0.0
    %1582 = vmatpush1.msra.mxu0 0.0
    %1583 = vmatprep.subr.mxu0 0.0
    %1584 = vmatpush1.msra.mxu0 0.0
    %1585 = vmatprep.subr.mxu0 0.0
    %1586 = vmatpush1.msra.mxu0 0.0
    %1587 = vmatprep.subr.mxu0 0.0
    %1588 = vmatpush1.msra.mxu0 0.0
    %1589 = vmatprep.subr.mxu0 0.0
    %1590 = vmatpush1.msra.mxu0 0.0
    %1591 = vmatprep.subr.mxu0 0.0
    %1592 = vmatpush1.msra.mxu0 0.0
    %1593 = vmatprep.mubr.f32.mxu0 0.0
    %v1594 = vand.u32 %v1057, 4294901760
    %v1595 = vsub.f32 %v1057, %v1594
    %v1596 = vand.u32 %v1595, 4294901760
    %1597 = vmatmul.mubr.f32.gmra.mrb[0].mxu0 %v1596
    %v1598 = vpop.f32.mrb[0].mxu0
    %v1599 = vadd.f32 %v1461, %v1598
    %v1600 = vpop.f32.mrb[0].mxu0
    %1601 = vmatprep.mubr.f32.mxu0 0.0
    %v1602 = vand.u32 %v1060, 4294901760
    %v1603 = vsub.f32 %v1060, %v1602
    %v1604 = vand.u32 %v1603, 4294901760
    %1605 = vmatmul.mubr.f32.gmra.mrb[0].mxu0 %v1604
    %v1606 = vpop.f32.mrb[0].mxu0
    %v1607 = vadd.f32 %v1468, %v1606
    %v1608 = vpop.f32.mrb[0].mxu0
    %1609 = vmatprep.mubr.f32.mxu0 0.0
    %v1610 = vand.u32 %v1063, 4294901760
    %v1611 = vsub.f32 %v1063, %v1610
    %v1612 = vand.u32 %v1611, 4294901760
    %1613 = vmatmul.mubr.f32.gmra.mrb[0].mxu0 %v1612
    %v1614 = vpop.f32.mrb[0].mxu0
    %v1615 = vadd.f32 %v1475, %v1614
    %v1616 = vpop.f32.mrb[0].mxu0
    %1617 = vmatprep.mubr.f32.mxu0 0.0
    %v1618 = vand.u32 %v1066, 4294901760
    %v1619 = vsub.f32 %v1066, %v1618
    %v1620 = vand.u32 %v1619, 4294901760
    %1621 = vmatmul.mubr.f32.gmra.mrb[0].mxu0 %v1620
    %v1622 = vpop.f32.mrb[0].mxu0
    %v1623 = vadd.f32 %v1482, %v1622
    %v1624 = vpop.f32.mrb[0].mxu0
    %1625 = vmatprep.mubr.f32.mxu0 0.0
    %v1626 = vand.u32 %v1069, 4294901760
    %v1627 = vsub.f32 %v1069, %v1626
    %v1628 = vand.u32 %v1627, 4294901760
    %1629 = vmatmul.mubr.f32.gmra.mrb[0].mxu0 %v1628
    %v1630 = vpop.f32.mrb[0].mxu0
    %v1631 = vadd.f32 %v1489, %v1630
    %v1632 = vpop.f32.mrb[0].mxu0
    %1633 = vmatprep.mubr.f32.mxu0 0.0
    %v1634 = vand.u32 %v1072, 4294901760
    %v1635 = vsub.f32 %v1072, %v1634
    %v1636 = vand.u32 %v1635, 4294901760
    %1637 = vmatmul.mubr.f32.gmra.mrb[0].mxu0 %v1636
    %v1638 = vpop.f32.mrb[0].mxu0
    %v1639 = vadd.f32 %v1496, %v1638
    %v1640 = vpop.f32.mrb[0].mxu0
    %1641 = vmatprep.mubr.f32.mxu0 0.0
    %v1642 = vand.u32 %v1075, 4294901760
    %v1643 = vsub.f32 %v1075, %v1642
    %v1644 = vand.u32 %v1643, 4294901760
    %1645 = vmatmul.mubr.f32.gmra.mrb[0].mxu0 %v1644
    %v1646 = vpop.f32.mrb[0].mxu0
    %v1647 = vadd.f32 %v1503, %v1646
    %v1648 = vpop.f32.mrb[0].mxu0
    %1649 = vmatprep.mubr.f32.mxu0 0.0
    %v1650 = vand.u32 %v1078, 4294901760
    %v1651 = vsub.f32 %v1078, %v1650
    %v1652 = vand.u32 %v1651, 4294901760
    %1653 = vmatmul.mubr.f32.gmra.mrb[0].mxu0 %v1652
    %v1654 = vpop.f32.mrb[0].mxu0
    %v1655 = vadd.f32 %v1510, %v1654
    %v1656 = vpop.f32.mrb[0].mxu0
    %1657 = vmatprep.mubr.f32.mxu0 0.0
    %v1658 = vand.u32 %v1081, 4294901760
    %v1659 = vsub.f32 %v1081, %v1658
    %v1660 = vand.u32 %v1659, 4294901760
    %1661 = vmatmul.mubr.f32.gmra.mrb[0].mxu0 %v1660
    %v1662 = vpop.f32.mrb[0].mxu0
    %v1663 = vadd.f32 %v1517, %v1662
    %v1664 = vpop.f32.mrb[0].mxu0
    %1665 = vmatprep.mubr.f32.mxu0 0.0
    %v1666 = vand.u32 %v1084, 4294901760
    %v1667 = vsub.f32 %v1084, %v1666
    %v1668 = vand.u32 %v1667, 4294901760
    %1669 = vmatmul.mubr.f32.gmra.mrb[0].mxu0 %v1668
    %v1670 = vpop.f32.mrb[0].mxu0
    %v1671 = vadd.f32 %v1524, %v1670
    %v1672 = vpop.f32.mrb[0].mxu0
    %1673 = vdwg.mxu0
    %1674 = vmatprep.subr.mxu0 0.0
    %v1675 = vand.u32 %v73, 4294901760
    %v1676 = vsub.f32 %v73, %v1675
    %v1677 = vand.u32 %v1676, 4294901760
    %1678 = vmatpush1.msra.mxu0 %v1677
    %1679 = vmatprep.subr.mxu0 0.0
    %v1680 = vand.u32 %v74, 4294901760
    %v1681 = vsub.f32 %v74, %v1680
    %v1682 = vand.u32 %v1681, 4294901760
    %1683 = vmatpush1.msra.mxu0 %v1682
    %1684 = vmatprep.subr.mxu0 0.0
    %1685 = vmatpush1.msra.mxu0 0.0
    %1686 = vmatprep.subr.mxu0 0.0
    %1687 = vmatpush1.msra.mxu0 0.0
    %1688 = vmatprep.subr.mxu0 0.0
    %1689 = vmatpush1.msra.mxu0 0.0
    %1690 = vmatprep.subr.mxu0 0.0
    %1691 = vmatpush1.msra.mxu0 0.0
    %1692 = vmatprep.subr.mxu0 0.0
    %1693 = vmatpush1.msra.mxu0 0.0
    %1694 = vmatprep.subr.mxu0 0.0
    %1695 = vmatpush1.msra.mxu0 0.0
    %1696 = vmatprep.subr.mxu0 0.0
    %1697 = vmatpush1.msra.mxu0 0.0
    %1698 = vmatprep.subr.mxu0 0.0
    %1699 = vmatpush1.msra.mxu0 0.0
    %1700 = vmatprep.subr.mxu0 0.0
    %1701 = vmatpush1.msra.mxu0 0.0
    %1702 = vmatprep.subr.mxu0 0.0
    %1703 = vmatpush1.msra.mxu0 0.0
    %1704 = vmatprep.subr.mxu0 0.0
    %1705 = vmatpush1.msra.mxu0 0.0
    %1706 = vmatprep.subr.mxu0 0.0
    %1707 = vmatpush1.msra.mxu0 0.0
    %1708 = vmatprep.subr.mxu0 0.0
    %1709 = vmatpush1.msra.mxu0 0.0
    %1710 = vmatprep.subr.mxu0 0.0
    %1711 = vmatpush1.msra.mxu0 0.0
    %1712 = vmatprep.subr.mxu0 0.0
    %1713 = vmatpush1.msra.mxu0 0.0
    %1714 = vmatprep.subr.mxu0 0.0
    %1715 = vmatpush1.msra.mxu0 0.0
    %1716 = vmatprep.subr.mxu0 0.0
    %1717 = vmatpush1.msra.mxu0 0.0
    %1718 = vmatprep.subr.mxu0 0.0
    %1719 = vmatpush1.msra.mxu0 0.0
    %1720 = vmatprep.subr.mxu0 0.0
    %1721 = vmatpush1.msra.mxu0 0.0
    %1722 = vmatprep.subr.mxu0 0.0
    %1723 = vmatpush1.msra.mxu0 0.0
    %1724 = vmatprep.subr.mxu0 0.0
    %1725 = vmatpush1.msra.mxu0 0.0
    %1726 = vmatprep.subr.mxu0 0.0
    %1727 = vmatpush1.msra.mxu0 0.0
    %1728 = vmatprep.subr.mxu0 0.0
    %1729 = vmatpush1.msra.mxu0 0.0
    %1730 = vmatprep.subr.mxu0 0.0
    %1731 = vmatpush1.msra.mxu0 0.0
    %1732 = vmatprep.subr.mxu0 0.0
    %1733 = vmatpush1.msra.mxu0 0.0
    %1734 = vmatprep.subr.mxu0 0.0
    %1735 = vmatpush1.msra.mxu0 0.0
    %1736 = vmatprep.subr.mxu0 0.0
    %1737 = vmatpush1.msra.mxu0 0.0
    %1738 = vmatprep.subr.mxu0 0.0
    %1739 = vmatpush1.msra.mxu0 0.0
    %1740 = vmatprep.subr.mxu0 0.0
    %1741 = vmatpush1.msra.mxu0 0.0
    %1742 = vmatprep.subr.mxu0 0.0
    %1743 = vmatpush1.msra.mxu0 0.0
    %1744 = vmatprep.mubr.f32.mxu0 0.0
    %v1745 = vand.u32 %v1057, 4294901760
    %1746 = vmatmul.mubr.f32.gmra.mrb[0].mxu0 %v1745
    %v1747 = vpop.f32.mrb[0].mxu0
    %v1748 = vadd.f32 %v1599, %v1747
    %v1749 = vpop.f32.mrb[0].mxu0
    %1750 = vmatprep.mubr.f32.mxu0 0.0
    %v1751 = vand.u32 %v1060, 4294901760
    %1752 = vmatmul.mubr.f32.gmra.mrb[0].mxu0 %v1751
    %v1753 = vpop.f32.mrb[0].mxu0
    %v1754 = vadd.f32 %v1607, %v1753
    %v1755 = vpop.f32.mrb[0].mxu0
    %1756 = vmatprep.mubr.f32.mxu0 0.0
    %v1757 = vand.u32 %v1063, 4294901760
    %1758 = vmatmul.mubr.f32.gmra.mrb[0].mxu0 %v1757
    %v1759 = vpop.f32.mrb[0].mxu0
    %v1760 = vadd.f32 %v1615, %v1759
    %v1761 = vpop.f32.mrb[0].mxu0
    %1762 = vmatprep.mubr.f32.mxu0 0.0
    %v1763 = vand.u32 %v1066, 4294901760
    %1764 = vmatmul.mubr.f32.gmra.mrb[0].mxu0 %v1763
    %v1765 = vpop.f32.mrb[0].mxu0
    %v1766 = vadd.f32 %v1623, %v1765
    %v1767 = vpop.f32.mrb[0].mxu0
    %1768 = vmatprep.mubr.f32.mxu0 0.0
    %v1769 = vand.u32 %v1069, 4294901760
    %1770 = vmatmul.mubr.f32.gmra.mrb[0].mxu0 %v1769
    %v1771 = vpop.f32.mrb[0].mxu0
    %v1772 = vadd.f32 %v1631, %v1771
    %v1773 = vpop.f32.mrb[0].mxu0
    %1774 = vmatprep.mubr.f32.mxu0 0.0
    %v1775 = vand.u32 %v1072, 4294901760
    %1776 = vmatmul.mubr.f32.gmra.mrb[0].mxu0 %v1775
    %v1777 = vpop.f32.mrb[0].mxu0
    %v1778 = vadd.f32 %v1639, %v1777
    %v1779 = vpop.f32.mrb[0].mxu0
    %1780 = vmatprep.mubr.f32.mxu0 0.0
    %v1781 = vand.u32 %v1075, 4294901760
    %1782 = vmatmul.mubr.f32.gmra.mrb[0].mxu0 %v1781
    %v1783 = vpop.f32.mrb[0].mxu0
    %v1784 = vadd.f32 %v1647, %v1783
    %v1785 = vpop.f32.mrb[0].mxu0
    %1786 = vmatprep.mubr.f32.mxu0 0.0
    %v1787 = vand.u32 %v1078, 4294901760
    %1788 = vmatmul.mubr.f32.gmra.mrb[0].mxu0 %v1787
    %v1789 = vpop.f32.mrb[0].mxu0
    %v1790 = vadd.f32 %v1655, %v1789
    %v1791 = vpop.f32.mrb[0].mxu0
    %1792 = vmatprep.mubr.f32.mxu0 0.0
    %v1793 = vand.u32 %v1081, 4294901760
    %1794 = vmatmul.mubr.f32.gmra.mrb[0].mxu0 %v1793
    %v1795 = vpop.f32.mrb[0].mxu0
    %v1796 = vadd.f32 %v1663, %v1795
    %v1797 = vpop.f32.mrb[0].mxu0
    %1798 = vmatprep.mubr.f32.mxu0 0.0
    %v1799 = vand.u32 %v1084, 4294901760
    %1800 = vmatmul.mubr.f32.gmra.mrb[0].mxu0 %v1799
    %v1801 = vpop.f32.mrb[0].mxu0
    %v1802 = vadd.f32 %v1671, %v1801
    %v1803 = vpop.f32.mrb[0].mxu0
    %1804 = vdwg.mxu0
    %1805 = vmatprep.subr.mxu0 0.0
    %v1806 = vand.u32 %v73, 4294901760
    %1807 = vmatpush1.msra.mxu0 %v1806
    %1808 = vmatprep.subr.mxu0 0.0
    %v1809 = vand.u32 %v74, 4294901760
    %1810 = vmatpush1.msra.mxu0 %v1809
    %1811 = vmatprep.subr.mxu0 0.0
    %1812 = vmatpush1.msra.mxu0 0.0
    %1813 = vmatprep.subr.mxu0 0.0
    %1814 = vmatpush1.msra.mxu0 0.0
    %1815 = vmatprep.subr.mxu0 0.0
    %1816 = vmatpush1.msra.mxu0 0.0
    %1817 = vmatprep.subr.mxu0 0.0
    %1818 = vmatpush1.msra.mxu0 0.0
    %1819 = vmatprep.subr.mxu0 0.0
    %1820 = vmatpush1.msra.mxu0 0.0
    %1821 = vmatprep.subr.mxu0 0.0
    %1822 = vmatpush1.msra.mxu0 0.0
    %1823 = vmatprep.subr.mxu0 0.0
    %1824 = vmatpush1.msra.mxu0 0.0
    %1825 = vmatprep.subr.mxu0 0.0
    %1826 = vmatpush1.msra.mxu0 0.0
    %1827 = vmatprep.subr.mxu0 0.0
    %1828 = vmatpush1.msra.mxu0 0.0
    %1829 = vmatprep.subr.mxu0 0.0
    %1830 = vmatpush1.msra.mxu0 0.0
    %1831 = vmatprep.subr.mxu0 0.0
    %1832 = vmatpush1.msra.mxu0 0.0
    %1833 = vmatprep.subr.mxu0 0.0
    %1834 = vmatpush1.msra.mxu0 0.0
    %1835 = vmatprep.subr.mxu0 0.0
    %1836 = vmatpush1.msra.mxu0 0.0
    %1837 = vmatprep.subr.mxu0 0.0
    %1838 = vmatpush1.msra.mxu0 0.0
    %1839 = vmatprep.subr.mxu0 0.0
    %1840 = vmatpush1.msra.mxu0 0.0
    %1841 = vmatprep.subr.mxu0 0.0
    %1842 = vmatpush1.msra.mxu0 0.0
    %1843 = vmatprep.subr.mxu0 0.0
    %1844 = vmatpush1.msra.mxu0 0.0
    %1845 = vmatprep.subr.mxu0 0.0
    %1846 = vmatpush1.msra.mxu0 0.0
    %1847 = vmatprep.subr.mxu0 0.0
    %1848 = vmatpush1.msra.mxu0 0.0
    %1849 = vmatprep.subr.mxu0 0.0
    %1850 = vmatpush1.msra.mxu0 0.0
    %1851 = vmatprep.subr.mxu0 0.0
    %1852 = vmatpush1.msra.mxu0 0.0
    %1853 = vmatprep.subr.mxu0 0.0
    %1854 = vmatpush1.msra.mxu0 0.0
    %1855 = vmatprep.subr.mxu0 0.0
    %1856 = vmatpush1.msra.mxu0 0.0
    %1857 = vmatprep.subr.mxu0 0.0
    %1858 = vmatpush1.msra.mxu0 0.0
    %1859 = vmatprep.subr.mxu0 0.0
    %1860 = vmatpush1.msra.mxu0 0.0
    %1861 = vmatprep.subr.mxu0 0.0
    %1862 = vmatpush1.msra.mxu0 0.0
    %1863 = vmatprep.subr.mxu0 0.0
    %1864 = vmatpush1.msra.mxu0 0.0
    %1865 = vmatprep.subr.mxu0 0.0
    %1866 = vmatpush1.msra.mxu0 0.0
    %1867 = vmatprep.subr.mxu0 0.0
    %1868 = vmatpush1.msra.mxu0 0.0
    %1869 = vmatprep.subr.mxu0 0.0
    %1870 = vmatpush1.msra.mxu0 0.0
    %1871 = vmatprep.mubr.f32.mxu0 0.0
    %v1872 = vand.u32 %v1057, 4294901760
    %1873 = vmatmul.mubr.f32.gmra.mrb[0].mxu0 %v1872
    %v1874 = vpop.f32.mrb[0].mxu0
    %v1875 = vadd.f32 %v1748, %v1874
    %v1876 = vpop.f32.mrb[0].mxu0
    %1877 = vmatprep.mubr.f32.mxu0 0.0
    %v1878 = vand.u32 %v1060, 4294901760
    %1879 = vmatmul.mubr.f32.gmra.mrb[0].mxu0 %v1878
    %v1880 = vpop.f32.mrb[0].mxu0
    %v1881 = vadd.f32 %v1754, %v1880
    %v1882 = vpop.f32.mrb[0].mxu0
    %1883 = vmatprep.mubr.f32.mxu0 0.0
    %v1884 = vand.u32 %v1063, 4294901760
    %1885 = vmatmul.mubr.f32.gmra.mrb[0].mxu0 %v1884
    %v1886 = vpop.f32.mrb[0].mxu0
    %v1887 = vadd.f32 %v1760, %v1886
    %v1888 = vpop.f32.mrb[0].mxu0
    %1889 = vmatprep.mubr.f32.mxu0 0.0
    %v1890 = vand.u32 %v1066, 4294901760
    %1891 = vmatmul.mubr.f32.gmra.mrb[0].mxu0 %v1890
    %v1892 = vpop.f32.mrb[0].mxu0
    %v1893 = vadd.f32 %v1766, %v1892
    %v1894 = vpop.f32.mrb[0].mxu0
    %1895 = vmatprep.mubr.f32.mxu0 0.0
    %v1896 = vand.u32 %v1069, 4294901760
    %1897 = vmatmul.mubr.f32.gmra.mrb[0].mxu0 %v1896
    %v1898 = vpop.f32.mrb[0].mxu0
    %v1899 = vadd.f32 %v1772, %v1898
    %v1900 = vpop.f32.mrb[0].mxu0
    %1901 = vmatprep.mubr.f32.mxu0 0.0
    %v1902 = vand.u32 %v1072, 4294901760
    %1903 = vmatmul.mubr.f32.gmra.mrb[0].mxu0 %v1902
    %v1904 = vpop.f32.mrb[0].mxu0
    %v1905 = vadd.f32 %v1778, %v1904
    %v1906 = vpop.f32.mrb[0].mxu0
    %1907 = vmatprep.mubr.f32.mxu0 0.0
    %v1908 = vand.u32 %v1075, 4294901760
    %1909 = vmatmul.mubr.f32.gmra.mrb[0].mxu0 %v1908
    %v1910 = vpop.f32.mrb[0].mxu0
    %v1911 = vadd.f32 %v1784, %v1910
    %v1912 = vpop.f32.mrb[0].mxu0
    %1913 = vmatprep.mubr.f32.mxu0 0.0
    %v1914 = vand.u32 %v1078, 4294901760
    %1915 = vmatmul.mubr.f32.gmra.mrb[0].mxu0 %v1914
    %v1916 = vpop.f32.mrb[0].mxu0
    %v1917 = vadd.f32 %v1790, %v1916
    %v1918 = vpop.f32.mrb[0].mxu0
    %1919 = vmatprep.mubr.f32.mxu0 0.0
    %v1920 = vand.u32 %v1081, 4294901760
    %1921 = vmatmul.mubr.f32.gmra.mrb[0].mxu0 %v1920
    %v1922 = vpop.f32.mrb[0].mxu0
    %v1923 = vadd.f32 %v1796, %v1922
    %v1924 = vpop.f32.mrb[0].mxu0
    %1925 = vmatprep.mubr.f32.mxu0 0.0
    %v1926 = vand.u32 %v1084, 4294901760
    %1927 = vmatmul.mubr.f32.gmra.mrb[0].mxu0 %v1926
    %v1928 = vpop.f32.mrb[0].mxu0
    %v1929 = vadd.f32 %v1802, %v1928
    %v1930 = vpop.f32.mrb[0].mxu0
    %1931 = vdwg.mxu0
    %v1933 = vsel %vm179, %v103, 0
    %v1936 = vsel %vm179, %v104, 0
    %v1939 = vsel %vm179, %v119, 0
    %v1942 = vsel %vm179, %v120, 0
    %v1945 = vsel %vm179, %v135, 0
    %v1948 = vsel %vm179, %v136, 0
    %v1951 = vsel %vm179, %v151, 0
    %v1954 = vsel %vm179, %v152, 0
    %v1957 = vsel %vm179, %v167, 0
    %v1960 = vsel %vm179, %v168, 0
    %1962 = vmatprep.subr.mxu0 0.0
    %v1963 = vand.u32 %v77, 4294901760
    %1964 = vmatpush1.msra.mxu0 %v1963
    %1965 = vmatprep.subr.mxu0 0.0
    %v1966 = vand.u32 %v78, 4294901760
    %1967 = vmatpush1.msra.mxu0 %v1966
    %1968 = vmatprep.subr.mxu0 0.0
    %1969 = vmatpush1.msra.mxu0 0.0
    %1970 = vmatprep.subr.mxu0 0.0
    %1971 = vmatpush1.msra.mxu0 0.0
    %1972 = vmatprep.subr.mxu0 0.0
    %1973 = vmatpush1.msra.mxu0 0.0
    %1974 = vmatprep.subr.mxu0 0.0
    %1975 = vmatpush1.msra.mxu0 0.0
    %1976 = vmatprep.subr.mxu0 0.0
    %1977 = vmatpush1.msra.mxu0 0.0
    %1978 = vmatprep.subr.mxu0 0.0
    %1979 = vmatpush1.msra.mxu0 0.0
    %1980 = vmatprep.subr.mxu0 0.0
    %1981 = vmatpush1.msra.mxu0 0.0
    %1982 = vmatprep.subr.mxu0 0.0
    %1983 = vmatpush1.msra.mxu0 0.0
    %1984 = vmatprep.subr.mxu0 0.0
    %1985 = vmatpush1.msra.mxu0 0.0
    %1986 = vmatprep.subr.mxu0 0.0
    %1987 = vmatpush1.msra.mxu0 0.0
    %1988 = vmatprep.subr.mxu0 0.0
    %1989 = vmatpush1.msra.mxu0 0.0
    %1990 = vmatprep.subr.mxu0 0.0
    %1991 = vmatpush1.msra.mxu0 0.0
    %1992 = vmatprep.subr.mxu0 0.0
    %1993 = vmatpush1.msra.mxu0 0.0
    %1994 = vmatprep.subr.mxu0 0.0
    %1995 = vmatpush1.msra.mxu0 0.0
    %1996 = vmatprep.subr.mxu0 0.0
    %1997 = vmatpush1.msra.mxu0 0.0
    %1998 = vmatprep.subr.mxu0 0.0
    %1999 = vmatpush1.msra.mxu0 0.0
    %2000 = vmatprep.subr.mxu0 0.0
    %2001 = vmatpush1.msra.mxu0 0.0
    %2002 = vmatprep.subr.mxu0 0.0
    %2003 = vmatpush1.msra.mxu0 0.0
    %2004 = vmatprep.subr.mxu0 0.0
    %2005 = vmatpush1.msra.mxu0 0.0
    %2006 = vmatprep.subr.mxu0 0.0
    %2007 = vmatpush1.msra.mxu0 0.0
    %2008 = vmatprep.subr.mxu0 0.0
    %2009 = vmatpush1.msra.mxu0 0.0
    %2010 = vmatprep.subr.mxu0 0.0
    %2011 = vmatpush1.msra.mxu0 0.0
    %2012 = vmatprep.subr.mxu0 0.0
    %2013 = vmatpush1.msra.mxu0 0.0
    %2014 = vmatprep.subr.mxu0 0.0
    %2015 = vmatpush1.msra.mxu0 0.0
    %2016 = vmatprep.subr.mxu0 0.0
    %2017 = vmatpush1.msra.mxu0 0.0
    %2018 = vmatprep.subr.mxu0 0.0
    %2019 = vmatpush1.msra.mxu0 0.0
    %2020 = vmatprep.subr.mxu0 0.0
    %2021 = vmatpush1.msra.mxu0 0.0
    %2022 = vmatprep.subr.mxu0 0.0
    %2023 = vmatpush1.msra.mxu0 0.0
    %2024 = vmatprep.subr.mxu0 0.0
    %2025 = vmatpush1.msra.mxu0 0.0
    %2026 = vmatprep.subr.mxu0 0.0
    %2027 = vmatpush1.msra.mxu0 0.0
    %2028 = vmatprep.mubr.f32.mxu0 0.0
    %v2029 = vand.u32 %v1933, 4294901760
    %v2030 = vsub.f32 %v1933, %v2029
    %v2031 = vand.u32 %v2030, 4294901760
    %v2032 = vsub.f32 %v2030, %v2031
    %v2033 = vand.u32 %v2032, 4294901760
    %2034 = vmatmul.mubr.f32.gmra.mrb[0].mxu0 %v2033
    %v2035 = vpop.f32.mrb[0].mxu0
    %v2036 = vadd.f32 0.0, %v2035
    %v2037 = vpop.f32.mrb[0].mxu0
    %2038 = vmatprep.mubr.f32.mxu0 0.0
    %v2039 = vand.u32 %v1936, 4294901760
    %v2040 = vsub.f32 %v1936, %v2039
    %v2041 = vand.u32 %v2040, 4294901760
    %v2042 = vsub.f32 %v2040, %v2041
    %v2043 = vand.u32 %v2042, 4294901760
    %2044 = vmatmul.mubr.f32.gmra.mrb[0].mxu0 %v2043
    %v2045 = vpop.f32.mrb[0].mxu0
    %v2046 = vadd.f32 0.0, %v2045
    %v2047 = vpop.f32.mrb[0].mxu0
    %2048 = vmatprep.mubr.f32.mxu0 0.0
    %v2049 = vand.u32 %v1939, 4294901760
    %v2050 = vsub.f32 %v1939, %v2049
    %v2051 = vand.u32 %v2050, 4294901760
    %v2052 = vsub.f32 %v2050, %v2051
    %v2053 = vand.u32 %v2052, 4294901760
    %2054 = vmatmul.mubr.f32.gmra.mrb[0].mxu0 %v2053
    %v2055 = vpop.f32.mrb[0].mxu0
    %v2056 = vadd.f32 0.0, %v2055
    %v2057 = vpop.f32.mrb[0].mxu0
    %2058 = vmatprep.mubr.f32.mxu0 0.0
    %v2059 = vand.u32 %v1942, 4294901760
    %v2060 = vsub.f32 %v1942, %v2059
    %v2061 = vand.u32 %v2060, 4294901760
    %v2062 = vsub.f32 %v2060, %v2061
    %v2063 = vand.u32 %v2062, 4294901760
    %2064 = vmatmul.mubr.f32.gmra.mrb[0].mxu0 %v2063
    %v2065 = vpop.f32.mrb[0].mxu0
    %v2066 = vadd.f32 0.0, %v2065
    %v2067 = vpop.f32.mrb[0].mxu0
    %2068 = vmatprep.mubr.f32.mxu0 0.0
    %v2069 = vand.u32 %v1945, 4294901760
    %v2070 = vsub.f32 %v1945, %v2069
    %v2071 = vand.u32 %v2070, 4294901760
    %v2072 = vsub.f32 %v2070, %v2071
    %v2073 = vand.u32 %v2072, 4294901760
    %2074 = vmatmul.mubr.f32.gmra.mrb[0].mxu0 %v2073
    %v2075 = vpop.f32.mrb[0].mxu0
    %v2076 = vadd.f32 0.0, %v2075
    %v2077 = vpop.f32.mrb[0].mxu0
    %2078 = vmatprep.mubr.f32.mxu0 0.0
    %v2079 = vand.u32 %v1948, 4294901760
    %v2080 = vsub.f32 %v1948, %v2079
    %v2081 = vand.u32 %v2080, 4294901760
    %v2082 = vsub.f32 %v2080, %v2081
    %v2083 = vand.u32 %v2082, 4294901760
    %2084 = vmatmul.mubr.f32.gmra.mrb[0].mxu0 %v2083
    %v2085 = vpop.f32.mrb[0].mxu0
    %v2086 = vadd.f32 0.0, %v2085
    %v2087 = vpop.f32.mrb[0].mxu0
    %2088 = vmatprep.mubr.f32.mxu0 0.0
    %v2089 = vand.u32 %v1951, 4294901760
    %v2090 = vsub.f32 %v1951, %v2089
    %v2091 = vand.u32 %v2090, 4294901760
    %v2092 = vsub.f32 %v2090, %v2091
    %v2093 = vand.u32 %v2092, 4294901760
    %2094 = vmatmul.mubr.f32.gmra.mrb[0].mxu0 %v2093
    %v2095 = vpop.f32.mrb[0].mxu0
    %v2096 = vadd.f32 0.0, %v2095
    %v2097 = vpop.f32.mrb[0].mxu0
    %2098 = vmatprep.mubr.f32.mxu0 0.0
    %v2099 = vand.u32 %v1954, 4294901760
    %v2100 = vsub.f32 %v1954, %v2099
    %v2101 = vand.u32 %v2100, 4294901760
    %v2102 = vsub.f32 %v2100, %v2101
    %v2103 = vand.u32 %v2102, 4294901760
    %2104 = vmatmul.mubr.f32.gmra.mrb[0].mxu0 %v2103
    %v2105 = vpop.f32.mrb[0].mxu0
    %v2106 = vadd.f32 0.0, %v2105
    %v2107 = vpop.f32.mrb[0].mxu0
    %2108 = vmatprep.mubr.f32.mxu0 0.0
    %v2109 = vand.u32 %v1957, 4294901760
    %v2110 = vsub.f32 %v1957, %v2109
    %v2111 = vand.u32 %v2110, 4294901760
    %v2112 = vsub.f32 %v2110, %v2111
    %v2113 = vand.u32 %v2112, 4294901760
    %2114 = vmatmul.mubr.f32.gmra.mrb[0].mxu0 %v2113
    %v2115 = vpop.f32.mrb[0].mxu0
    %v2116 = vadd.f32 0.0, %v2115
    %v2117 = vpop.f32.mrb[0].mxu0
    %2118 = vmatprep.mubr.f32.mxu0 0.0
    %v2119 = vand.u32 %v1960, 4294901760
    %v2120 = vsub.f32 %v1960, %v2119
    %v2121 = vand.u32 %v2120, 4294901760
    %v2122 = vsub.f32 %v2120, %v2121
    %v2123 = vand.u32 %v2122, 4294901760
    %2124 = vmatmul.mubr.f32.gmra.mrb[0].mxu0 %v2123
    %v2125 = vpop.f32.mrb[0].mxu0
    %v2126 = vadd.f32 0.0, %v2125
    %v2127 = vpop.f32.mrb[0].mxu0
    %2128 = vdwg.mxu0
    %2129 = vmatprep.subr.mxu0 0.0
    %v2130 = vand.u32 %v77, 4294901760
    %v2131 = vsub.f32 %v77, %v2130
    %v2132 = vand.u32 %v2131, 4294901760
    %v2133 = vsub.f32 %v2131, %v2132
    %v2134 = vand.u32 %v2133, 4294901760
    %2135 = vmatpush1.msra.mxu0 %v2134
    %2136 = vmatprep.subr.mxu0 0.0
    %v2137 = vand.u32 %v78, 4294901760
    %v2138 = vsub.f32 %v78, %v2137
    %v2139 = vand.u32 %v2138, 4294901760
    %v2140 = vsub.f32 %v2138, %v2139
    %v2141 = vand.u32 %v2140, 4294901760
    %2142 = vmatpush1.msra.mxu0 %v2141
    %2143 = vmatprep.subr.mxu0 0.0
    %2144 = vmatpush1.msra.mxu0 0.0
    %2145 = vmatprep.subr.mxu0 0.0
    %2146 = vmatpush1.msra.mxu0 0.0
    %2147 = vmatprep.subr.mxu0 0.0
    %2148 = vmatpush1.msra.mxu0 0.0
    %2149 = vmatprep.subr.mxu0 0.0
    %2150 = vmatpush1.msra.mxu0 0.0
    %2151 = vmatprep.subr.mxu0 0.0
    %2152 = vmatpush1.msra.mxu0 0.0
    %2153 = vmatprep.subr.mxu0 0.0
    %2154 = vmatpush1.msra.mxu0 0.0
    %2155 = vmatprep.subr.mxu0 0.0
    %2156 = vmatpush1.msra.mxu0 0.0
    %2157 = vmatprep.subr.mxu0 0.0
    %2158 = vmatpush1.msra.mxu0 0.0
    %2159 = vmatprep.subr.mxu0 0.0
    %2160 = vmatpush1.msra.mxu0 0.0
    %2161 = vmatprep.subr.mxu0 0.0
    %2162 = vmatpush1.msra.mxu0 0.0
    %2163 = vmatprep.subr.mxu0 0.0
    %2164 = vmatpush1.msra.mxu0 0.0
    %2165 = vmatprep.subr.mxu0 0.0
    %2166 = vmatpush1.msra.mxu0 0.0
    %2167 = vmatprep.subr.mxu0 0.0
    %2168 = vmatpush1.msra.mxu0 0.0
    %2169 = vmatprep.subr.mxu0 0.0
    %2170 = vmatpush1.msra.mxu0 0.0
    %2171 = vmatprep.subr.mxu0 0.0
    %2172 = vmatpush1.msra.mxu0 0.0
    %2173 = vmatprep.subr.mxu0 0.0
    %2174 = vmatpush1.msra.mxu0 0.0
    %2175 = vmatprep.subr.mxu0 0.0
    %2176 = vmatpush1.msra.mxu0 0.0
    %2177 = vmatprep.subr.mxu0 0.0
    %2178 = vmatpush1.msra.mxu0 0.0
    %2179 = vmatprep.subr.mxu0 0.0
    %2180 = vmatpush1.msra.mxu0 0.0
    %2181 = vmatprep.subr.mxu0 0.0
    %2182 = vmatpush1.msra.mxu0 0.0
    %2183 = vmatprep.subr.mxu0 0.0
    %2184 = vmatpush1.msra.mxu0 0.0
    %2185 = vmatprep.subr.mxu0 0.0
    %2186 = vmatpush1.msra.mxu0 0.0
    %2187 = vmatprep.subr.mxu0 0.0
    %2188 = vmatpush1.msra.mxu0 0.0
    %2189 = vmatprep.subr.mxu0 0.0
    %2190 = vmatpush1.msra.mxu0 0.0
    %2191 = vmatprep.subr.mxu0 0.0
    %2192 = vmatpush1.msra.mxu0 0.0
    %2193 = vmatprep.subr.mxu0 0.0
    %2194 = vmatpush1.msra.mxu0 0.0
    %2195 = vmatprep.subr.mxu0 0.0
    %2196 = vmatpush1.msra.mxu0 0.0
    %2197 = vmatprep.subr.mxu0 0.0
    %2198 = vmatpush1.msra.mxu0 0.0
    %2199 = vmatprep.subr.mxu0 0.0
    %2200 = vmatpush1.msra.mxu0 0.0
    %2201 = vmatprep.subr.mxu0 0.0
    %2202 = vmatpush1.msra.mxu0 0.0
    %2203 = vmatprep.mubr.f32.mxu0 0.0
    %v2204 = vand.u32 %v1933, 4294901760
    %2205 = vmatmul.mubr.f32.gmra.mrb[0].mxu0 %v2204
    %v2206 = vpop.f32.mrb[0].mxu0
    %v2207 = vadd.f32 %v2036, %v2206
    %v2208 = vpop.f32.mrb[0].mxu0
    %2209 = vmatprep.mubr.f32.mxu0 0.0
    %v2210 = vand.u32 %v1936, 4294901760
    %2211 = vmatmul.mubr.f32.gmra.mrb[0].mxu0 %v2210
    %v2212 = vpop.f32.mrb[0].mxu0
    %v2213 = vadd.f32 %v2046, %v2212
    %v2214 = vpop.f32.mrb[0].mxu0
    %2215 = vmatprep.mubr.f32.mxu0 0.0
    %v2216 = vand.u32 %v1939, 4294901760
    %2217 = vmatmul.mubr.f32.gmra.mrb[0].mxu0 %v2216
    %v2218 = vpop.f32.mrb[0].mxu0
    %v2219 = vadd.f32 %v2056, %v2218
    %v2220 = vpop.f32.mrb[0].mxu0
    %2221 = vmatprep.mubr.f32.mxu0 0.0
    %v2222 = vand.u32 %v1942, 4294901760
    %2223 = vmatmul.mubr.f32.gmra.mrb[0].mxu0 %v2222
    %v2224 = vpop.f32.mrb[0].mxu0
    %v2225 = vadd.f32 %v2066, %v2224
    %v2226 = vpop.f32.mrb[0].mxu0
    %2227 = vmatprep.mubr.f32.mxu0 0.0
    %v2228 = vand.u32 %v1945, 4294901760
    %2229 = vmatmul.mubr.f32.gmra.mrb[0].mxu0 %v2228
    %v2230 = vpop.f32.mrb[0].mxu0
    %v2231 = vadd.f32 %v2076, %v2230
    %v2232 = vpop.f32.mrb[0].mxu0
    %2233 = vmatprep.mubr.f32.mxu0 0.0
    %v2234 = vand.u32 %v1948, 4294901760
    %2235 = vmatmul.mubr.f32.gmra.mrb[0].mxu0 %v2234
    %v2236 = vpop.f32.mrb[0].mxu0
    %v2237 = vadd.f32 %v2086, %v2236
    %v2238 = vpop.f32.mrb[0].mxu0
    %2239 = vmatprep.mubr.f32.mxu0 0.0
    %v2240 = vand.u32 %v1951, 4294901760
    %2241 = vmatmul.mubr.f32.gmra.mrb[0].mxu0 %v2240
    %v2242 = vpop.f32.mrb[0].mxu0
    %v2243 = vadd.f32 %v2096, %v2242
    %v2244 = vpop.f32.mrb[0].mxu0
    %2245 = vmatprep.mubr.f32.mxu0 0.0
    %v2246 = vand.u32 %v1954, 4294901760
    %2247 = vmatmul.mubr.f32.gmra.mrb[0].mxu0 %v2246
    %v2248 = vpop.f32.mrb[0].mxu0
    %v2249 = vadd.f32 %v2106, %v2248
    %v2250 = vpop.f32.mrb[0].mxu0
    %2251 = vmatprep.mubr.f32.mxu0 0.0
    %v2252 = vand.u32 %v1957, 4294901760
    %2253 = vmatmul.mubr.f32.gmra.mrb[0].mxu0 %v2252
    %v2254 = vpop.f32.mrb[0].mxu0
    %v2255 = vadd.f32 %v2116, %v2254
    %v2256 = vpop.f32.mrb[0].mxu0
    %2257 = vmatprep.mubr.f32.mxu0 0.0
    %v2258 = vand.u32 %v1960, 4294901760
    %2259 = vmatmul.mubr.f32.gmra.mrb[0].mxu0 %v2258
    %v2260 = vpop.f32.mrb[0].mxu0
    %v2261 = vadd.f32 %v2126, %v2260
    %v2262 = vpop.f32.mrb[0].mxu0
    %2263 = vdwg.mxu0
    %2264 = vmatprep.subr.mxu0 0.0
    %v2265 = vand.u32 %v77, 4294901760
    %v2266 = vsub.f32 %v77, %v2265
    %2267 = vmatpush1.msra.mxu0 %v2266
    %2268 = vmatprep.subr.mxu0 0.0
    %v2269 = vand.u32 %v78, 4294901760
    %v2270 = vsub.f32 %v78, %v2269
    %2271 = vmatpush1.msra.mxu0 %v2270
    %2272 = vmatprep.subr.mxu0 0.0
    %2273 = vmatpush1.msra.mxu0 0.0
    %2274 = vmatprep.subr.mxu0 0.0
    %2275 = vmatpush1.msra.mxu0 0.0
    %2276 = vmatprep.subr.mxu0 0.0
    %2277 = vmatpush1.msra.mxu0 0.0
    %2278 = vmatprep.subr.mxu0 0.0
    %2279 = vmatpush1.msra.mxu0 0.0
    %2280 = vmatprep.subr.mxu0 0.0
    %2281 = vmatpush1.msra.mxu0 0.0
    %2282 = vmatprep.subr.mxu0 0.0
    %2283 = vmatpush1.msra.mxu0 0.0
    %2284 = vmatprep.subr.mxu0 0.0
    %2285 = vmatpush1.msra.mxu0 0.0
    %2286 = vmatprep.subr.mxu0 0.0
    %2287 = vmatpush1.msra.mxu0 0.0
    %2288 = vmatprep.subr.mxu0 0.0
    %2289 = vmatpush1.msra.mxu0 0.0
    %2290 = vmatprep.subr.mxu0 0.0
    %2291 = vmatpush1.msra.mxu0 0.0
    %2292 = vmatprep.subr.mxu0 0.0
    %2293 = vmatpush1.msra.mxu0 0.0
    %2294 = vmatprep.subr.mxu0 0.0
    %2295 = vmatpush1.msra.mxu0 0.0
    %2296 = vmatprep.subr.mxu0 0.0
    %2297 = vmatpush1.msra.mxu0 0.0
    %2298 = vmatprep.subr.mxu0 0.0
    %2299 = vmatpush1.msra.mxu0 0.0
    %2300 = vmatprep.subr.mxu0 0.0
    %2301 = vmatpush1.msra.mxu0 0.0
    %2302 = vmatprep.subr.mxu0 0.0
    %2303 = vmatpush1.msra.mxu0 0.0
    %2304 = vmatprep.subr.mxu0 0.0
    %2305 = vmatpush1.msra.mxu0 0.0
    %2306 = vmatprep.subr.mxu0 0.0
    %2307 = vmatpush1.msra.mxu0 0.0
    %2308 = vmatprep.subr.mxu0 0.0
    %2309 = vmatpush1.msra.mxu0 0.0
    %2310 = vmatprep.subr.mxu0 0.0
    %2311 = vmatpush1.msra.mxu0 0.0
    %2312 = vmatprep.subr.mxu0 0.0
    %2313 = vmatpush1.msra.mxu0 0.0
    %2314 = vmatprep.subr.mxu0 0.0
    %2315 = vmatpush1.msra.mxu0 0.0
    %2316 = vmatprep.subr.mxu0 0.0
    %2317 = vmatpush1.msra.mxu0 0.0
    %2318 = vmatprep.subr.mxu0 0.0
    %2319 = vmatpush1.msra.mxu0 0.0
    %2320 = vmatprep.subr.mxu0 0.0
    %2321 = vmatpush1.msra.mxu0 0.0
    %2322 = vmatprep.subr.mxu0 0.0
    %2323 = vmatpush1.msra.mxu0 0.0
    %2324 = vmatprep.subr.mxu0 0.0
    %2325 = vmatpush1.msra.mxu0 0.0
    %2326 = vmatprep.subr.mxu0 0.0
    %2327 = vmatpush1.msra.mxu0 0.0
    %2328 = vmatprep.subr.mxu0 0.0
    %2329 = vmatpush1.msra.mxu0 0.0
    %2330 = vmatprep.subr.mxu0 0.0
    %2331 = vmatpush1.msra.mxu0 0.0
    %2332 = vmatprep.mubr.f32.mxu0 0.0
    %v2333 = vand.u32 %v1933, 4294901760
    %v2334 = vsub.f32 %v1933, %v2333
    %2335 = vmatmul.mubr.f32.gmra.mrb[0].mxu0 %v2334
    %v2336 = vpop.f32.mrb[0].mxu0
    %v2337 = vadd.f32 %v2207, %v2336
    %v2338 = vpop.f32.mrb[0].mxu0
    %2339 = vmatprep.mubr.f32.mxu0 0.0
    %v2340 = vand.u32 %v1936, 4294901760
    %v2341 = vsub.f32 %v1936, %v2340
    %2342 = vmatmul.mubr.f32.gmra.mrb[0].mxu0 %v2341
    %v2343 = vpop.f32.mrb[0].mxu0
    %v2344 = vadd.f32 %v2213, %v2343
    %v2345 = vpop.f32.mrb[0].mxu0
    %2346 = vmatprep.mubr.f32.mxu0 0.0
    %v2347 = vand.u32 %v1939, 4294901760
    %v2348 = vsub.f32 %v1939, %v2347
    %2349 = vmatmul.mubr.f32.gmra.mrb[0].mxu0 %v2348
    %v2350 = vpop.f32.mrb[0].mxu0
    %v2351 = vadd.f32 %v2219, %v2350
    %v2352 = vpop.f32.mrb[0].mxu0
    %2353 = vmatprep.mubr.f32.mxu0 0.0
    %v2354 = vand.u32 %v1942, 4294901760
    %v2355 = vsub.f32 %v1942, %v2354
    %2356 = vmatmul.mubr.f32.gmra.mrb[0].mxu0 %v2355
    %v2357 = vpop.f32.mrb[0].mxu0
    %v2358 = vadd.f32 %v2225, %v2357
    %v2359 = vpop.f32.mrb[0].mxu0
    %2360 = vmatprep.mubr.f32.mxu0 0.0
    %v2361 = vand.u32 %v1945, 4294901760
    %v2362 = vsub.f32 %v1945, %v2361
    %2363 = vmatmul.mubr.f32.gmra.mrb[0].mxu0 %v2362
    %v2364 = vpop.f32.mrb[0].mxu0
    %v2365 = vadd.f32 %v2231, %v2364
    %v2366 = vpop.f32.mrb[0].mxu0
    %2367 = vmatprep.mubr.f32.mxu0 0.0
    %v2368 = vand.u32 %v1948, 4294901760
    %v2369 = vsub.f32 %v1948, %v2368
    %2370 = vmatmul.mubr.f32.gmra.mrb[0].mxu0 %v2369
    %v2371 = vpop.f32.mrb[0].mxu0
    %v2372 = vadd.f32 %v2237, %v2371
    %v2373 = vpop.f32.mrb[0].mxu0
    %2374 = vmatprep.mubr.f32.mxu0 0.0
    %v2375 = vand.u32 %v1951, 4294901760
    %v2376 = vsub.f32 %v1951, %v2375
    %2377 = vmatmul.mubr.f32.gmra.mrb[0].mxu0 %v2376
    %v2378 = vpop.f32.mrb[0].mxu0
    %v2379 = vadd.f32 %v2243, %v2378
    %v2380 = vpop.f32.mrb[0].mxu0
    %2381 = vmatprep.mubr.f32.mxu0 0.0
    %v2382 = vand.u32 %v1954, 4294901760
    %v2383 = vsub.f32 %v1954, %v2382
    %2384 = vmatmul.mubr.f32.gmra.mrb[0].mxu0 %v2383
    %v2385 = vpop.f32.mrb[0].mxu0
    %v2386 = vadd.f32 %v2249, %v2385
    %v2387 = vpop.f32.mrb[0].mxu0
    %2388 = vmatprep.mubr.f32.mxu0 0.0
    %v2389 = vand.u32 %v1957, 4294901760
    %v2390 = vsub.f32 %v1957, %v2389
    %2391 = vmatmul.mubr.f32.gmra.mrb[0].mxu0 %v2390
    %v2392 = vpop.f32.mrb[0].mxu0
    %v2393 = vadd.f32 %v2255, %v2392
    %v2394 = vpop.f32.mrb[0].mxu0
    %2395 = vmatprep.mubr.f32.mxu0 0.0
    %v2396 = vand.u32 %v1960, 4294901760
    %v2397 = vsub.f32 %v1960, %v2396
    %2398 = vmatmul.mubr.f32.gmra.mrb[0].mxu0 %v2397
    %v2399 = vpop.f32.mrb[0].mxu0
    %v2400 = vadd.f32 %v2261, %v2399
    %v2401 = vpop.f32.mrb[0].mxu0
    %2402 = vdwg.mxu0
    %2403 = vmatprep.subr.mxu0 0.0
    %v2404 = vand.u32 %v77, 4294901760
    %2405 = vmatpush1.msra.mxu0 %v2404
    %2406 = vmatprep.subr.mxu0 0.0
    %v2407 = vand.u32 %v78, 4294901760
    %2408 = vmatpush1.msra.mxu0 %v2407
    %2409 = vmatprep.subr.mxu0 0.0
    %2410 = vmatpush1.msra.mxu0 0.0
    %2411 = vmatprep.subr.mxu0 0.0
    %2412 = vmatpush1.msra.mxu0 0.0
    %2413 = vmatprep.subr.mxu0 0.0
    %2414 = vmatpush1.msra.mxu0 0.0
    %2415 = vmatprep.subr.mxu0 0.0
    %2416 = vmatpush1.msra.mxu0 0.0
    %2417 = vmatprep.subr.mxu0 0.0
    %2418 = vmatpush1.msra.mxu0 0.0
    %2419 = vmatprep.subr.mxu0 0.0
    %2420 = vmatpush1.msra.mxu0 0.0
    %2421 = vmatprep.subr.mxu0 0.0
    %2422 = vmatpush1.msra.mxu0 0.0
    %2423 = vmatprep.subr.mxu0 0.0
    %2424 = vmatpush1.msra.mxu0 0.0
    %2425 = vmatprep.subr.mxu0 0.0
    %2426 = vmatpush1.msra.mxu0 0.0
    %2427 = vmatprep.subr.mxu0 0.0
    %2428 = vmatpush1.msra.mxu0 0.0
    %2429 = vmatprep.subr.mxu0 0.0
    %2430 = vmatpush1.msra.mxu0 0.0
    %2431 = vmatprep.subr.mxu0 0.0
    %2432 = vmatpush1.msra.mxu0 0.0
    %2433 = vmatprep.subr.mxu0 0.0
    %2434 = vmatpush1.msra.mxu0 0.0
    %2435 = vmatprep.subr.mxu0 0.0
    %2436 = vmatpush1.msra.mxu0 0.0
    %2437 = vmatprep.subr.mxu0 0.0
    %2438 = vmatpush1.msra.mxu0 0.0
    %2439 = vmatprep.subr.mxu0 0.0
    %2440 = vmatpush1.msra.mxu0 0.0
    %2441 = vmatprep.subr.mxu0 0.0
    %2442 = vmatpush1.msra.mxu0 0.0
    %2443 = vmatprep.subr.mxu0 0.0
    %2444 = vmatpush1.msra.mxu0 0.0
    %2445 = vmatprep.subr.mxu0 0.0
    %2446 = vmatpush1.msra.mxu0 0.0
    %2447 = vmatprep.subr.mxu0 0.0
    %2448 = vmatpush1.msra.mxu0 0.0
    %2449 = vmatprep.subr.mxu0 0.0
    %2450 = vmatpush1.msra.mxu0 0.0
    %2451 = vmatprep.subr.mxu0 0.0
    %2452 = vmatpush1.msra.mxu0 0.0
    %2453 = vmatprep.subr.mxu0 0.0
    %2454 = vmatpush1.msra.mxu0 0.0
    %2455 = vmatprep.subr.mxu0 0.0
    %2456 = vmatpush1.msra.mxu0 0.0
    %2457 = vmatprep.subr.mxu0 0.0
    %2458 = vmatpush1.msra.mxu0 0.0
    %2459 = vmatprep.subr.mxu0 0.0
    %2460 = vmatpush1.msra.mxu0 0.0
    %2461 = vmatprep.subr.mxu0 0.0
    %2462 = vmatpush1.msra.mxu0 0.0
    %2463 = vmatprep.subr.mxu0 0.0
    %2464 = vmatpush1.msra.mxu0 0.0
    %2465 = vmatprep.subr.mxu0 0.0
    %2466 = vmatpush1.msra.mxu0 0.0
    %2467 = vmatprep.subr.mxu0 0.0
    %2468 = vmatpush1.msra.mxu0 0.0
    %2469 = vmatprep.mubr.f32.mxu0 0.0
    %v2470 = vand.u32 %v1933, 4294901760
    %v2471 = vsub.f32 %v1933, %v2470
    %v2472 = vand.u32 %v2471, 4294901760
    %2473 = vmatmul.mubr.f32.gmra.mrb[0].mxu0 %v2472
    %v2474 = vpop.f32.mrb[0].mxu0
    %v2475 = vadd.f32 %v2337, %v2474
    %v2476 = vpop.f32.mrb[0].mxu0
    %2477 = vmatprep.mubr.f32.mxu0 0.0
    %v2478 = vand.u32 %v1936, 4294901760
    %v2479 = vsub.f32 %v1936, %v2478
    %v2480 = vand.u32 %v2479, 4294901760
    %2481 = vmatmul.mubr.f32.gmra.mrb[0].mxu0 %v2480
    %v2482 = vpop.f32.mrb[0].mxu0
    %v2483 = vadd.f32 %v2344, %v2482
    %v2484 = vpop.f32.mrb[0].mxu0
    %2485 = vmatprep.mubr.f32.mxu0 0.0
    %v2486 = vand.u32 %v1939, 4294901760
    %v2487 = vsub.f32 %v1939, %v2486
    %v2488 = vand.u32 %v2487, 4294901760
    %2489 = vmatmul.mubr.f32.gmra.mrb[0].mxu0 %v2488
    %v2490 = vpop.f32.mrb[0].mxu0
    %v2491 = vadd.f32 %v2351, %v2490
    %v2492 = vpop.f32.mrb[0].mxu0
    %2493 = vmatprep.mubr.f32.mxu0 0.0
    %v2494 = vand.u32 %v1942, 4294901760
    %v2495 = vsub.f32 %v1942, %v2494
    %v2496 = vand.u32 %v2495, 4294901760
    %2497 = vmatmul.mubr.f32.gmra.mrb[0].mxu0 %v2496
    %v2498 = vpop.f32.mrb[0].mxu0
    %v2499 = vadd.f32 %v2358, %v2498
    %v2500 = vpop.f32.mrb[0].mxu0
    %2501 = vmatprep.mubr.f32.mxu0 0.0
    %v2502 = vand.u32 %v1945, 4294901760
    %v2503 = vsub.f32 %v1945, %v2502
    %v2504 = vand.u32 %v2503, 4294901760
    %2505 = vmatmul.mubr.f32.gmra.mrb[0].mxu0 %v2504
    %v2506 = vpop.f32.mrb[0].mxu0
    %v2507 = vadd.f32 %v2365, %v2506
    %v2508 = vpop.f32.mrb[0].mxu0
    %2509 = vmatprep.mubr.f32.mxu0 0.0
    %v2510 = vand.u32 %v1948, 4294901760
    %v2511 = vsub.f32 %v1948, %v2510
    %v2512 = vand.u32 %v2511, 4294901760
    %2513 = vmatmul.mubr.f32.gmra.mrb[0].mxu0 %v2512
    %v2514 = vpop.f32.mrb[0].mxu0
    %v2515 = vadd.f32 %v2372, %v2514
    %v2516 = vpop.f32.mrb[0].mxu0
    %2517 = vmatprep.mubr.f32.mxu0 0.0
    %v2518 = vand.u32 %v1951, 4294901760
    %v2519 = vsub.f32 %v1951, %v2518
    %v2520 = vand.u32 %v2519, 4294901760
    %2521 = vmatmul.mubr.f32.gmra.mrb[0].mxu0 %v2520
    %v2522 = vpop.f32.mrb[0].mxu0
    %v2523 = vadd.f32 %v2379, %v2522
    %v2524 = vpop.f32.mrb[0].mxu0
    %2525 = vmatprep.mubr.f32.mxu0 0.0
    %v2526 = vand.u32 %v1954, 4294901760
    %v2527 = vsub.f32 %v1954, %v2526
    %v2528 = vand.u32 %v2527, 4294901760
    %2529 = vmatmul.mubr.f32.gmra.mrb[0].mxu0 %v2528
    %v2530 = vpop.f32.mrb[0].mxu0
    %v2531 = vadd.f32 %v2386, %v2530
    %v2532 = vpop.f32.mrb[0].mxu0
    %2533 = vmatprep.mubr.f32.mxu0 0.0
    %v2534 = vand.u32 %v1957, 4294901760
    %v2535 = vsub.f32 %v1957, %v2534
    %v2536 = vand.u32 %v2535, 4294901760
    %2537 = vmatmul.mubr.f32.gmra.mrb[0].mxu0 %v2536
    %v2538 = vpop.f32.mrb[0].mxu0
    %v2539 = vadd.f32 %v2393, %v2538
    %v2540 = vpop.f32.mrb[0].mxu0
    %2541 = vmatprep.mubr.f32.mxu0 0.0
    %v2542 = vand.u32 %v1960, 4294901760
    %v2543 = vsub.f32 %v1960, %v2542
    %v2544 = vand.u32 %v2543, 4294901760
    %2545 = vmatmul.mubr.f32.gmra.mrb[0].mxu0 %v2544
    %v2546 = vpop.f32.mrb[0].mxu0
    %v2547 = vadd.f32 %v2400, %v2546
    %v2548 = vpop.f32.mrb[0].mxu0
    %2549 = vdwg.mxu0
    %2550 = vmatprep.subr.mxu0 0.0
    %v2551 = vand.u32 %v77, 4294901760
    %v2552 = vsub.f32 %v77, %v2551
    %v2553 = vand.u32 %v2552, 4294901760
    %2554 = vmatpush1.msra.mxu0 %v2553
    %2555 = vmatprep.subr.mxu0 0.0
    %v2556 = vand.u32 %v78, 4294901760
    %v2557 = vsub.f32 %v78, %v2556
    %v2558 = vand.u32 %v2557, 4294901760
    %2559 = vmatpush1.msra.mxu0 %v2558
    %2560 = vmatprep.subr.mxu0 0.0
    %2561 = vmatpush1.msra.mxu0 0.0
    %2562 = vmatprep.subr.mxu0 0.0
    %2563 = vmatpush1.msra.mxu0 0.0
    %2564 = vmatprep.subr.mxu0 0.0
    %2565 = vmatpush1.msra.mxu0 0.0
    %2566 = vmatprep.subr.mxu0 0.0
    %2567 = vmatpush1.msra.mxu0 0.0
    %2568 = vmatprep.subr.mxu0 0.0
    %2569 = vmatpush1.msra.mxu0 0.0
    %2570 = vmatprep.subr.mxu0 0.0
    %2571 = vmatpush1.msra.mxu0 0.0
    %2572 = vmatprep.subr.mxu0 0.0
    %2573 = vmatpush1.msra.mxu0 0.0
    %2574 = vmatprep.subr.mxu0 0.0
    %2575 = vmatpush1.msra.mxu0 0.0
    %2576 = vmatprep.subr.mxu0 0.0
    %2577 = vmatpush1.msra.mxu0 0.0
    %2578 = vmatprep.subr.mxu0 0.0
    %2579 = vmatpush1.msra.mxu0 0.0
    %2580 = vmatprep.subr.mxu0 0.0
    %2581 = vmatpush1.msra.mxu0 0.0
    %2582 = vmatprep.subr.mxu0 0.0
    %2583 = vmatpush1.msra.mxu0 0.0
    %2584 = vmatprep.subr.mxu0 0.0
    %2585 = vmatpush1.msra.mxu0 0.0
    %2586 = vmatprep.subr.mxu0 0.0
    %2587 = vmatpush1.msra.mxu0 0.0
    %2588 = vmatprep.subr.mxu0 0.0
    %2589 = vmatpush1.msra.mxu0 0.0
    %2590 = vmatprep.subr.mxu0 0.0
    %2591 = vmatpush1.msra.mxu0 0.0
    %2592 = vmatprep.subr.mxu0 0.0
    %2593 = vmatpush1.msra.mxu0 0.0
    %2594 = vmatprep.subr.mxu0 0.0
    %2595 = vmatpush1.msra.mxu0 0.0
    %2596 = vmatprep.subr.mxu0 0.0
    %2597 = vmatpush1.msra.mxu0 0.0
    %2598 = vmatprep.subr.mxu0 0.0
    %2599 = vmatpush1.msra.mxu0 0.0
    %2600 = vmatprep.subr.mxu0 0.0
    %2601 = vmatpush1.msra.mxu0 0.0
    %2602 = vmatprep.subr.mxu0 0.0
    %2603 = vmatpush1.msra.mxu0 0.0
    %2604 = vmatprep.subr.mxu0 0.0
    %2605 = vmatpush1.msra.mxu0 0.0
    %2606 = vmatprep.subr.mxu0 0.0
    %2607 = vmatpush1.msra.mxu0 0.0
    %2608 = vmatprep.subr.mxu0 0.0
    %2609 = vmatpush1.msra.mxu0 0.0
    %2610 = vmatprep.subr.mxu0 0.0
    %2611 = vmatpush1.msra.mxu0 0.0
    %2612 = vmatprep.subr.mxu0 0.0
    %2613 = vmatpush1.msra.mxu0 0.0
    %2614 = vmatprep.subr.mxu0 0.0
    %2615 = vmatpush1.msra.mxu0 0.0
    %2616 = vmatprep.subr.mxu0 0.0
    %2617 = vmatpush1.msra.mxu0 0.0
    %2618 = vmatprep.subr.mxu0 0.0
    %2619 = vmatpush1.msra.mxu0 0.0
    %2620 = vmatprep.mubr.f32.mxu0 0.0
    %v2621 = vand.u32 %v1933, 4294901760
    %2622 = vmatmul.mubr.f32.gmra.mrb[0].mxu0 %v2621
    %v2623 = vpop.f32.mrb[0].mxu0
    %v2624 = vadd.f32 %v2475, %v2623
    %v2625 = vpop.f32.mrb[0].mxu0
    %2626 = vmatprep.mubr.f32.mxu0 0.0
    %v2627 = vand.u32 %v1936, 4294901760
    %2628 = vmatmul.mubr.f32.gmra.mrb[0].mxu0 %v2627
    %v2629 = vpop.f32.mrb[0].mxu0
    %v2630 = vadd.f32 %v2483, %v2629
    %v2631 = vpop.f32.mrb[0].mxu0
    %2632 = vmatprep.mubr.f32.mxu0 0.0
    %v2633 = vand.u32 %v1939, 4294901760
    %2634 = vmatmul.mubr.f32.gmra.mrb[0].mxu0 %v2633
    %v2635 = vpop.f32.mrb[0].mxu0
    %v2636 = vadd.f32 %v2491, %v2635
    %v2637 = vpop.f32.mrb[0].mxu0
    %2638 = vmatprep.mubr.f32.mxu0 0.0
    %v2639 = vand.u32 %v1942, 4294901760
    %2640 = vmatmul.mubr.f32.gmra.mrb[0].mxu0 %v2639
    %v2641 = vpop.f32.mrb[0].mxu0
    %v2642 = vadd.f32 %v2499, %v2641
    %v2643 = vpop.f32.mrb[0].mxu0
    %2644 = vmatprep.mubr.f32.mxu0 0.0
    %v2645 = vand.u32 %v1945, 4294901760
    %2646 = vmatmul.mubr.f32.gmra.mrb[0].mxu0 %v2645
    %v2647 = vpop.f32.mrb[0].mxu0
    %v2648 = vadd.f32 %v2507, %v2647
    %v2649 = vpop.f32.mrb[0].mxu0
    %2650 = vmatprep.mubr.f32.mxu0 0.0
    %v2651 = vand.u32 %v1948, 4294901760
    %2652 = vmatmul.mubr.f32.gmra.mrb[0].mxu0 %v2651
    %v2653 = vpop.f32.mrb[0].mxu0
    %v2654 = vadd.f32 %v2515, %v2653
    %v2655 = vpop.f32.mrb[0].mxu0
    %2656 = vmatprep.mubr.f32.mxu0 0.0
    %v2657 = vand.u32 %v1951, 4294901760
    %2658 = vmatmul.mubr.f32.gmra.mrb[0].mxu0 %v2657
    %v2659 = vpop.f32.mrb[0].mxu0
    %v2660 = vadd.f32 %v2523, %v2659
    %v2661 = vpop.f32.mrb[0].mxu0
    %2662 = vmatprep.mubr.f32.mxu0 0.0
    %v2663 = vand.u32 %v1954, 4294901760
    %2664 = vmatmul.mubr.f32.gmra.mrb[0].mxu0 %v2663
    %v2665 = vpop.f32.mrb[0].mxu0
    %v2666 = vadd.f32 %v2531, %v2665
    %v2667 = vpop.f32.mrb[0].mxu0
    %2668 = vmatprep.mubr.f32.mxu0 0.0
    %v2669 = vand.u32 %v1957, 4294901760
    %2670 = vmatmul.mubr.f32.gmra.mrb[0].mxu0 %v2669
    %v2671 = vpop.f32.mrb[0].mxu0
    %v2672 = vadd.f32 %v2539, %v2671
    %v2673 = vpop.f32.mrb[0].mxu0
    %2674 = vmatprep.mubr.f32.mxu0 0.0
    %v2675 = vand.u32 %v1960, 4294901760
    %2676 = vmatmul.mubr.f32.gmra.mrb[0].mxu0 %v2675
    %v2677 = vpop.f32.mrb[0].mxu0
    %v2678 = vadd.f32 %v2547, %v2677
    %v2679 = vpop.f32.mrb[0].mxu0
    %2680 = vdwg.mxu0
    %2681 = vmatprep.subr.mxu0 0.0
    %v2682 = vand.u32 %v77, 4294901760
    %2683 = vmatpush1.msra.mxu0 %v2682
    %2684 = vmatprep.subr.mxu0 0.0
    %v2685 = vand.u32 %v78, 4294901760
    %2686 = vmatpush1.msra.mxu0 %v2685
    %2687 = vmatprep.subr.mxu0 0.0
    %2688 = vmatpush1.msra.mxu0 0.0
    %2689 = vmatprep.subr.mxu0 0.0
    %2690 = vmatpush1.msra.mxu0 0.0
    %2691 = vmatprep.subr.mxu0 0.0
    %2692 = vmatpush1.msra.mxu0 0.0
    %2693 = vmatprep.subr.mxu0 0.0
    %2694 = vmatpush1.msra.mxu0 0.0
    %2695 = vmatprep.subr.mxu0 0.0
    %2696 = vmatpush1.msra.mxu0 0.0
    %2697 = vmatprep.subr.mxu0 0.0
    %2698 = vmatpush1.msra.mxu0 0.0
    %2699 = vmatprep.subr.mxu0 0.0
    %2700 = vmatpush1.msra.mxu0 0.0
    %2701 = vmatprep.subr.mxu0 0.0
    %2702 = vmatpush1.msra.mxu0 0.0
    %2703 = vmatprep.subr.mxu0 0.0
    %2704 = vmatpush1.msra.mxu0 0.0
    %2705 = vmatprep.subr.mxu0 0.0
    %2706 = vmatpush1.msra.mxu0 0.0
    %2707 = vmatprep.subr.mxu0 0.0
    %2708 = vmatpush1.msra.mxu0 0.0
    %2709 = vmatprep.subr.mxu0 0.0
    %2710 = vmatpush1.msra.mxu0 0.0
    %2711 = vmatprep.subr.mxu0 0.0
    %2712 = vmatpush1.msra.mxu0 0.0
    %2713 = vmatprep.subr.mxu0 0.0
    %2714 = vmatpush1.msra.mxu0 0.0
    %2715 = vmatprep.subr.mxu0 0.0
    %2716 = vmatpush1.msra.mxu0 0.0
    %2717 = vmatprep.subr.mxu0 0.0
    %2718 = vmatpush1.msra.mxu0 0.0
    %2719 = vmatprep.subr.mxu0 0.0
    %2720 = vmatpush1.msra.mxu0 0.0
    %2721 = vmatprep.subr.mxu0 0.0
    %2722 = vmatpush1.msra.mxu0 0.0
    %2723 = vmatprep.subr.mxu0 0.0
    %2724 = vmatpush1.msra.mxu0 0.0
    %2725 = vmatprep.subr.mxu0 0.0
    %2726 = vmatpush1.msra.mxu0 0.0
    %2727 = vmatprep.subr.mxu0 0.0
    %2728 = vmatpush1.msra.mxu0 0.0
    %2729 = vmatprep.subr.mxu0 0.0
    %2730 = vmatpush1.msra.mxu0 0.0
    %2731 = vmatprep.subr.mxu0 0.0
    %2732 = vmatpush1.msra.mxu0 0.0
    %2733 = vmatprep.subr.mxu0 0.0
    %2734 = vmatpush1.msra.mxu0 0.0
    %2735 = vmatprep.subr.mxu0 0.0
    %2736 = vmatpush1.msra.mxu0 0.0
    %2737 = vmatprep.subr.mxu0 0.0
    %2738 = vmatpush1.msra.mxu0 0.0
    %2739 = vmatprep.subr.mxu0 0.0
    %2740 = vmatpush1.msra.mxu0 0.0
    %2741 = vmatprep.subr.mxu0 0.0
    %2742 = vmatpush1.msra.mxu0 0.0
    %2743 = vmatprep.subr.mxu0 0.0
    %2744 = vmatpush1.msra.mxu0 0.0
    %2745 = vmatprep.subr.mxu0 0.0
    %2746 = vmatpush1.msra.mxu0 0.0
    %2747 = vmatprep.mubr.f32.mxu0 0.0
    %v2748 = vand.u32 %v1933, 4294901760
    %2749 = vmatmul.mubr.f32.gmra.mrb[0].mxu0 %v2748
    %v2750 = vpop.f32.mrb[0].mxu0
    %v2751 = vadd.f32 %v2624, %v2750
    %v2752 = vpop.f32.mrb[0].mxu0
    %2753 = vmatprep.mubr.f32.mxu0 0.0
    %v2754 = vand.u32 %v1936, 4294901760
    %2755 = vmatmul.mubr.f32.gmra.mrb[0].mxu0 %v2754
    %v2756 = vpop.f32.mrb[0].mxu0
    %v2757 = vadd.f32 %v2630, %v2756
    %v2758 = vpop.f32.mrb[0].mxu0
    %2759 = vmatprep.mubr.f32.mxu0 0.0
    %v2760 = vand.u32 %v1939, 4294901760
    %2761 = vmatmul.mubr.f32.gmra.mrb[0].mxu0 %v2760
    %v2762 = vpop.f32.mrb[0].mxu0
    %v2763 = vadd.f32 %v2636, %v2762
    %v2764 = vpop.f32.mrb[0].mxu0
    %2765 = vmatprep.mubr.f32.mxu0 0.0
    %v2766 = vand.u32 %v1942, 4294901760
    %2767 = vmatmul.mubr.f32.gmra.mrb[0].mxu0 %v2766
    %v2768 = vpop.f32.mrb[0].mxu0
    %v2769 = vadd.f32 %v2642, %v2768
    %v2770 = vpop.f32.mrb[0].mxu0
    %2771 = vmatprep.mubr.f32.mxu0 0.0
    %v2772 = vand.u32 %v1945, 4294901760
    %2773 = vmatmul.mubr.f32.gmra.mrb[0].mxu0 %v2772
    %v2774 = vpop.f32.mrb[0].mxu0
    %v2775 = vadd.f32 %v2648, %v2774
    %v2776 = vpop.f32.mrb[0].mxu0
    %2777 = vmatprep.mubr.f32.mxu0 0.0
    %v2778 = vand.u32 %v1948, 4294901760
    %2779 = vmatmul.mubr.f32.gmra.mrb[0].mxu0 %v2778
    %v2780 = vpop.f32.mrb[0].mxu0
    %v2781 = vadd.f32 %v2654, %v2780
    %v2782 = vpop.f32.mrb[0].mxu0
    %2783 = vmatprep.mubr.f32.mxu0 0.0
    %v2784 = vand.u32 %v1951, 4294901760
    %2785 = vmatmul.mubr.f32.gmra.mrb[0].mxu0 %v2784
    %v2786 = vpop.f32.mrb[0].mxu0
    %v2787 = vadd.f32 %v2660, %v2786
    %v2788 = vpop.f32.mrb[0].mxu0
    %2789 = vmatprep.mubr.f32.mxu0 0.0
    %v2790 = vand.u32 %v1954, 4294901760
    %2791 = vmatmul.mubr.f32.gmra.mrb[0].mxu0 %v2790
    %v2792 = vpop.f32.mrb[0].mxu0
    %v2793 = vadd.f32 %v2666, %v2792
    %v2794 = vpop.f32.mrb[0].mxu0
    %2795 = vmatprep.mubr.f32.mxu0 0.0
    %v2796 = vand.u32 %v1957, 4294901760
    %2797 = vmatmul.mubr.f32.gmra.mrb[0].mxu0 %v2796
    %v2798 = vpop.f32.mrb[0].mxu0
    %v2799 = vadd.f32 %v2672, %v2798
    %v2800 = vpop.f32.mrb[0].mxu0
    %2801 = vmatprep.mubr.f32.mxu0 0.0
    %v2802 = vand.u32 %v1960, 4294901760
    %2803 = vmatmul.mubr.f32.gmra.mrb[0].mxu0 %v2802
    %v2804 = vpop.f32.mrb[0].mxu0
    %v2805 = vadd.f32 %v2678, %v2804
    %v2806 = vpop.f32.mrb[0].mxu0
    %2807 = vdwg.mxu0
    %v2808 = vadd.f32 %v1875, %v2751
    %v2809 = vadd.f32 %v1881, %v2757
    %v2810 = vadd.f32 %v1887, %v2763
    %v2811 = vadd.f32 %v1893, %v2769
    %v2812 = vadd.f32 %v1899, %v2775
    %v2813 = vadd.f32 %v1905, %v2781
    %v2814 = vadd.f32 %v1911, %v2787
    %v2815 = vadd.f32 %v1917, %v2793
    %v2816 = vadd.f32 %v1923, %v2799
    %v2817 = vadd.f32 %v1929, %v2805
    %v2819 = vsel %vm179, %v105, 0
    %v2822 = vsel %vm179, %v106, 0
    %v2825 = vsel %vm179, %v121, 0
    %v2828 = vsel %vm179, %v122, 0
    %v2831 = vsel %vm179, %v137, 0
    %v2834 = vsel %vm179, %v138, 0
    %v2837 = vsel %vm179, %v153, 0
    %v2840 = vsel %vm179, %v154, 0
    %v2843 = vsel %vm179, %v169, 0
    %v2846 = vsel %vm179, %v170, 0
    %2848 = vmatprep.subr.mxu0 0.0
    %v2849 = vand.u32 %v79, 4294901760
    %2850 = vmatpush1.msra.mxu0 %v2849
    %2851 = vmatprep.subr.mxu0 0.0
    %v2852 = vand.u32 %v80, 4294901760
    %2853 = vmatpush1.msra.mxu0 %v2852
    %2854 = vmatprep.subr.mxu0 0.0
    %2855 = vmatpush1.msra.mxu0 0.0
    %2856 = vmatprep.subr.mxu0 0.0
    %2857 = vmatpush1.msra.mxu0 0.0
    %2858 = vmatprep.subr.mxu0 0.0
    %2859 = vmatpush1.msra.mxu0 0.0
    %2860 = vmatprep.subr.mxu0 0.0
    %2861 = vmatpush1.msra.mxu0 0.0
    %2862 = vmatprep.subr.mxu0 0.0
    %2863 = vmatpush1.msra.mxu0 0.0
    %2864 = vmatprep.subr.mxu0 0.0
    %2865 = vmatpush1.msra.mxu0 0.0
    %2866 = vmatprep.subr.mxu0 0.0
    %2867 = vmatpush1.msra.mxu0 0.0
    %2868 = vmatprep.subr.mxu0 0.0
    %2869 = vmatpush1.msra.mxu0 0.0
    %2870 = vmatprep.subr.mxu0 0.0
    %2871 = vmatpush1.msra.mxu0 0.0
    %2872 = vmatprep.subr.mxu0 0.0
    %2873 = vmatpush1.msra.mxu0 0.0
    %2874 = vmatprep.subr.mxu0 0.0
    %2875 = vmatpush1.msra.mxu0 0.0
    %2876 = vmatprep.subr.mxu0 0.0
    %2877 = vmatpush1.msra.mxu0 0.0
    %2878 = vmatprep.subr.mxu0 0.0
    %2879 = vmatpush1.msra.mxu0 0.0
    %2880 = vmatprep.subr.mxu0 0.0
    %2881 = vmatpush1.msra.mxu0 0.0
    %2882 = vmatprep.subr.mxu0 0.0
    %2883 = vmatpush1.msra.mxu0 0.0
    %2884 = vmatprep.subr.mxu0 0.0
    %2885 = vmatpush1.msra.mxu0 0.0
    %2886 = vmatprep.subr.mxu0 0.0
    %2887 = vmatpush1.msra.mxu0 0.0
    %2888 = vmatprep.subr.mxu0 0.0
    %2889 = vmatpush1.msra.mxu0 0.0
    %2890 = vmatprep.subr.mxu0 0.0
    %2891 = vmatpush1.msra.mxu0 0.0
    %2892 = vmatprep.subr.mxu0 0.0
    %2893 = vmatpush1.msra.mxu0 0.0
    %2894 = vmatprep.subr.mxu0 0.0
    %2895 = vmatpush1.msra.mxu0 0.0
    %2896 = vmatprep.subr.mxu0 0.0
    %2897 = vmatpush1.msra.mxu0 0.0
    %2898 = vmatprep.subr.mxu0 0.0
    %2899 = vmatpush1.msra.mxu0 0.0
    %2900 = vmatprep.subr.mxu0 0.0
    %2901 = vmatpush1.msra.mxu0 0.0
    %2902 = vmatprep.subr.mxu0 0.0
    %2903 = vmatpush1.msra.mxu0 0.0
    %2904 = vmatprep.subr.mxu0 0.0
    %2905 = vmatpush1.msra.mxu0 0.0
    %2906 = vmatprep.subr.mxu0 0.0
    %2907 = vmatpush1.msra.mxu0 0.0
    %2908 = vmatprep.subr.mxu0 0.0
    %2909 = vmatpush1.msra.mxu0 0.0
    %2910 = vmatprep.subr.mxu0 0.0
    %2911 = vmatpush1.msra.mxu0 0.0
    %2912 = vmatprep.subr.mxu0 0.0
    %2913 = vmatpush1.msra.mxu0 0.0
    %2914 = vmatprep.mubr.f32.mxu0 0.0
    %v2915 = vand.u32 %v2819, 4294901760
    %v2916 = vsub.f32 %v2819, %v2915
    %v2917 = vand.u32 %v2916, 4294901760
    %v2918 = vsub.f32 %v2916, %v2917
    %v2919 = vand.u32 %v2918, 4294901760
    %2920 = vmatmul.mubr.f32.gmra.mrb[0].mxu0 %v2919
    %v2921 = vpop.f32.mrb[0].mxu0
    %v2922 = vadd.f32 0.0, %v2921
    %v2923 = vpop.f32.mrb[0].mxu0
    %2924 = vmatprep.mubr.f32.mxu0 0.0
    %v2925 = vand.u32 %v2822, 4294901760
    %v2926 = vsub.f32 %v2822, %v2925
    %v2927 = vand.u32 %v2926, 4294901760
    %v2928 = vsub.f32 %v2926, %v2927
    %v2929 = vand.u32 %v2928, 4294901760
    %2930 = vmatmul.mubr.f32.gmra.mrb[0].mxu0 %v2929
    %v2931 = vpop.f32.mrb[0].mxu0
    %v2932 = vadd.f32 0.0, %v2931
    %v2933 = vpop.f32.mrb[0].mxu0
    %2934 = vmatprep.mubr.f32.mxu0 0.0
    %v2935 = vand.u32 %v2825, 4294901760
    %v2936 = vsub.f32 %v2825, %v2935
    %v2937 = vand.u32 %v2936, 4294901760
    %v2938 = vsub.f32 %v2936, %v2937
    %v2939 = vand.u32 %v2938, 4294901760
    %2940 = vmatmul.mubr.f32.gmra.mrb[0].mxu0 %v2939
    %v2941 = vpop.f32.mrb[0].mxu0
    %v2942 = vadd.f32 0.0, %v2941
    %v2943 = vpop.f32.mrb[0].mxu0
    %2944 = vmatprep.mubr.f32.mxu0 0.0
    %v2945 = vand.u32 %v2828, 4294901760
    %v2946 = vsub.f32 %v2828, %v2945
    %v2947 = vand.u32 %v2946, 4294901760
    %v2948 = vsub.f32 %v2946, %v2947
    %v2949 = vand.u32 %v2948, 4294901760
    %2950 = vmatmul.mubr.f32.gmra.mrb[0].mxu0 %v2949
    %v2951 = vpop.f32.mrb[0].mxu0
    %v2952 = vadd.f32 0.0, %v2951
    %v2953 = vpop.f32.mrb[0].mxu0
    %2954 = vmatprep.mubr.f32.mxu0 0.0
    %v2955 = vand.u32 %v2831, 4294901760
    %v2956 = vsub.f32 %v2831, %v2955
    %v2957 = vand.u32 %v2956, 4294901760
    %v2958 = vsub.f32 %v2956, %v2957
    %v2959 = vand.u32 %v2958, 4294901760
    %2960 = vmatmul.mubr.f32.gmra.mrb[0].mxu0 %v2959
    %v2961 = vpop.f32.mrb[0].mxu0
    %v2962 = vadd.f32 0.0, %v2961
    %v2963 = vpop.f32.mrb[0].mxu0
    %2964 = vmatprep.mubr.f32.mxu0 0.0
    %v2965 = vand.u32 %v2834, 4294901760
    %v2966 = vsub.f32 %v2834, %v2965
    %v2967 = vand.u32 %v2966, 4294901760
    %v2968 = vsub.f32 %v2966, %v2967
    %v2969 = vand.u32 %v2968, 4294901760
    %2970 = vmatmul.mubr.f32.gmra.mrb[0].mxu0 %v2969
    %v2971 = vpop.f32.mrb[0].mxu0
    %v2972 = vadd.f32 0.0, %v2971
    %v2973 = vpop.f32.mrb[0].mxu0
    %2974 = vmatprep.mubr.f32.mxu0 0.0
    %v2975 = vand.u32 %v2837, 4294901760
    %v2976 = vsub.f32 %v2837, %v2975
    %v2977 = vand.u32 %v2976, 4294901760
    %v2978 = vsub.f32 %v2976, %v2977
    %v2979 = vand.u32 %v2978, 4294901760
    %2980 = vmatmul.mubr.f32.gmra.mrb[0].mxu0 %v2979
    %v2981 = vpop.f32.mrb[0].mxu0
    %v2982 = vadd.f32 0.0, %v2981
    %v2983 = vpop.f32.mrb[0].mxu0
    %2984 = vmatprep.mubr.f32.mxu0 0.0
    %v2985 = vand.u32 %v2840, 4294901760
    %v2986 = vsub.f32 %v2840, %v2985
    %v2987 = vand.u32 %v2986, 4294901760
    %v2988 = vsub.f32 %v2986, %v2987
    %v2989 = vand.u32 %v2988, 4294901760
    %2990 = vmatmul.mubr.f32.gmra.mrb[0].mxu0 %v2989
    %v2991 = vpop.f32.mrb[0].mxu0
    %v2992 = vadd.f32 0.0, %v2991
    %v2993 = vpop.f32.mrb[0].mxu0
    %2994 = vmatprep.mubr.f32.mxu0 0.0
    %v2995 = vand.u32 %v2843, 4294901760
    %v2996 = vsub.f32 %v2843, %v2995
    %v2997 = vand.u32 %v2996, 4294901760
    %v2998 = vsub.f32 %v2996, %v2997
    %v2999 = vand.u32 %v2998, 4294901760
    %3000 = vmatmul.mubr.f32.gmra.mrb[0].mxu0 %v2999
    %v3001 = vpop.f32.mrb[0].mxu0
    %v3002 = vadd.f32 0.0, %v3001
    %v3003 = vpop.f32.mrb[0].mxu0
    %3004 = vmatprep.mubr.f32.mxu0 0.0
    %v3005 = vand.u32 %v2846, 4294901760
    %v3006 = vsub.f32 %v2846, %v3005
    %v3007 = vand.u32 %v3006, 4294901760
    %v3008 = vsub.f32 %v3006, %v3007
    %v3009 = vand.u32 %v3008, 4294901760
    %3010 = vmatmul.mubr.f32.gmra.mrb[0].mxu0 %v3009
    %v3011 = vpop.f32.mrb[0].mxu0
    %v3012 = vadd.f32 0.0, %v3011
    %v3013 = vpop.f32.mrb[0].mxu0
    %3014 = vdwg.mxu0
    %3015 = vmatprep.subr.mxu0 0.0
    %v3016 = vand.u32 %v79, 4294901760
    %v3017 = vsub.f32 %v79, %v3016
    %v3018 = vand.u32 %v3017, 4294901760
    %v3019 = vsub.f32 %v3017, %v3018
    %v3020 = vand.u32 %v3019, 4294901760
    %3021 = vmatpush1.msra.mxu0 %v3020
    %3022 = vmatprep.subr.mxu0 0.0
    %v3023 = vand.u32 %v80, 4294901760
    %v3024 = vsub.f32 %v80, %v3023
    %v3025 = vand.u32 %v3024, 4294901760
    %v3026 = vsub.f32 %v3024, %v3025
    %v3027 = vand.u32 %v3026, 4294901760
    %3028 = vmatpush1.msra.mxu0 %v3027
    %3029 = vmatprep.subr.mxu0 0.0
    %3030 = vmatpush1.msra.mxu0 0.0
    %3031 = vmatprep.subr.mxu0 0.0
    %3032 = vmatpush1.msra.mxu0 0.0
    %3033 = vmatprep.subr.mxu0 0.0
    %3034 = vmatpush1.msra.mxu0 0.0
    %3035 = vmatprep.subr.mxu0 0.0
    %3036 = vmatpush1.msra.mxu0 0.0
    %3037 = vmatprep.subr.mxu0 0.0
    %3038 = vmatpush1.msra.mxu0 0.0
    %3039 = vmatprep.subr.mxu0 0.0
    %3040 = vmatpush1.msra.mxu0 0.0
    %3041 = vmatprep.subr.mxu0 0.0
    %3042 = vmatpush1.msra.mxu0 0.0
    %3043 = vmatprep.subr.mxu0 0.0
    %3044 = vmatpush1.msra.mxu0 0.0
    %3045 = vmatprep.subr.mxu0 0.0
    %3046 = vmatpush1.msra.mxu0 0.0
    %3047 = vmatprep.subr.mxu0 0.0
    %3048 = vmatpush1.msra.mxu0 0.0
    %3049 = vmatprep.subr.mxu0 0.0
    %3050 = vmatpush1.msra.mxu0 0.0
    %3051 = vmatprep.subr.mxu0 0.0
    %3052 = vmatpush1.msra.mxu0 0.0
    %3053 = vmatprep.subr.mxu0 0.0
    %3054 = vmatpush1.msra.mxu0 0.0
    %3055 = vmatprep.subr.mxu0 0.0
    %3056 = vmatpush1.msra.mxu0 0.0
    %3057 = vmatprep.subr.mxu0 0.0
    %3058 = vmatpush1.msra.mxu0 0.0
    %3059 = vmatprep.subr.mxu0 0.0
    %3060 = vmatpush1.msra.mxu0 0.0
    %3061 = vmatprep.subr.mxu0 0.0
    %3062 = vmatpush1.msra.mxu0 0.0
    %3063 = vmatprep.subr.mxu0 0.0
    %3064 = vmatpush1.msra.mxu0 0.0
    %3065 = vmatprep.subr.mxu0 0.0
    %3066 = vmatpush1.msra.mxu0 0.0
    %3067 = vmatprep.subr.mxu0 0.0
    %3068 = vmatpush1.msra.mxu0 0.0
    %3069 = vmatprep.subr.mxu0 0.0
    %3070 = vmatpush1.msra.mxu0 0.0
    %3071 = vmatprep.subr.mxu0 0.0
    %3072 = vmatpush1.msra.mxu0 0.0
    %3073 = vmatprep.subr.mxu0 0.0
    %3074 = vmatpush1.msra.mxu0 0.0
    %3075 = vmatprep.subr.mxu0 0.0
    %3076 = vmatpush1.msra.mxu0 0.0
    %3077 = vmatprep.subr.mxu0 0.0
    %3078 = vmatpush1.msra.mxu0 0.0
    %3079 = vmatprep.subr.mxu0 0.0
    %3080 = vmatpush1.msra.mxu0 0.0
    %3081 = vmatprep.subr.mxu0 0.0
    %3082 = vmatpush1.msra.mxu0 0.0
    %3083 = vmatprep.subr.mxu0 0.0
    %3084 = vmatpush1.msra.mxu0 0.0
    %3085 = vmatprep.subr.mxu0 0.0
    %3086 = vmatpush1.msra.mxu0 0.0
    %3087 = vmatprep.subr.mxu0 0.0
    %3088 = vmatpush1.msra.mxu0 0.0
    %3089 = vmatprep.mubr.f32.mxu0 0.0
    %v3090 = vand.u32 %v2819, 4294901760
    %3091 = vmatmul.mubr.f32.gmra.mrb[0].mxu0 %v3090
    %v3092 = vpop.f32.mrb[0].mxu0
    %v3093 = vadd.f32 %v2922, %v3092
    %v3094 = vpop.f32.mrb[0].mxu0
    %3095 = vmatprep.mubr.f32.mxu0 0.0
    %v3096 = vand.u32 %v2822, 4294901760
    %3097 = vmatmul.mubr.f32.gmra.mrb[0].mxu0 %v3096
    %v3098 = vpop.f32.mrb[0].mxu0
    %v3099 = vadd.f32 %v2932, %v3098
    %v3100 = vpop.f32.mrb[0].mxu0
    %3101 = vmatprep.mubr.f32.mxu0 0.0
    %v3102 = vand.u32 %v2825, 4294901760
    %3103 = vmatmul.mubr.f32.gmra.mrb[0].mxu0 %v3102
    %v3104 = vpop.f32.mrb[0].mxu0
    %v3105 = vadd.f32 %v2942, %v3104
    %v3106 = vpop.f32.mrb[0].mxu0
    %3107 = vmatprep.mubr.f32.mxu0 0.0
    %v3108 = vand.u32 %v2828, 4294901760
    %3109 = vmatmul.mubr.f32.gmra.mrb[0].mxu0 %v3108
    %v3110 = vpop.f32.mrb[0].mxu0
    %v3111 = vadd.f32 %v2952, %v3110
    %v3112 = vpop.f32.mrb[0].mxu0
    %3113 = vmatprep.mubr.f32.mxu0 0.0
    %v3114 = vand.u32 %v2831, 4294901760
    %3115 = vmatmul.mubr.f32.gmra.mrb[0].mxu0 %v3114
    %v3116 = vpop.f32.mrb[0].mxu0
    %v3117 = vadd.f32 %v2962, %v3116
    %v3118 = vpop.f32.mrb[0].mxu0
    %3119 = vmatprep.mubr.f32.mxu0 0.0
    %v3120 = vand.u32 %v2834, 4294901760
    %3121 = vmatmul.mubr.f32.gmra.mrb[0].mxu0 %v3120
    %v3122 = vpop.f32.mrb[0].mxu0
    %v3123 = vadd.f32 %v2972, %v3122
    %v3124 = vpop.f32.mrb[0].mxu0
    %3125 = vmatprep.mubr.f32.mxu0 0.0
    %v3126 = vand.u32 %v2837, 4294901760
    %3127 = vmatmul.mubr.f32.gmra.mrb[0].mxu0 %v3126
    %v3128 = vpop.f32.mrb[0].mxu0
    %v3129 = vadd.f32 %v2982, %v3128
    %v3130 = vpop.f32.mrb[0].mxu0
    %3131 = vmatprep.mubr.f32.mxu0 0.0
    %v3132 = vand.u32 %v2840, 4294901760
    %3133 = vmatmul.mubr.f32.gmra.mrb[0].mxu0 %v3132
    %v3134 = vpop.f32.mrb[0].mxu0
    %v3135 = vadd.f32 %v2992, %v3134
    %v3136 = vpop.f32.mrb[0].mxu0
    %3137 = vmatprep.mubr.f32.mxu0 0.0
    %v3138 = vand.u32 %v2843, 4294901760
    %3139 = vmatmul.mubr.f32.gmra.mrb[0].mxu0 %v3138
    %v3140 = vpop.f32.mrb[0].mxu0
    %v3141 = vadd.f32 %v3002, %v3140
    %v3142 = vpop.f32.mrb[0].mxu0
    %3143 = vmatprep.mubr.f32.mxu0 0.0
    %v3144 = vand.u32 %v2846, 4294901760
    %3145 = vmatmul.mubr.f32.gmra.mrb[0].mxu0 %v3144
    %v3146 = vpop.f32.mrb[0].mxu0
    %v3147 = vadd.f32 %v3012, %v3146
    %v3148 = vpop.f32.mrb[0].mxu0
    %3149 = vdwg.mxu0
    %3150 = vmatprep.subr.mxu0 0.0
    %v3151 = vand.u32 %v79, 4294901760
    %v3152 = vsub.f32 %v79, %v3151
    %3153 = vmatpush1.msra.mxu0 %v3152
    %3154 = vmatprep.subr.mxu0 0.0
    %v3155 = vand.u32 %v80, 4294901760
    %v3156 = vsub.f32 %v80, %v3155
    %3157 = vmatpush1.msra.mxu0 %v3156
    %3158 = vmatprep.subr.mxu0 0.0
    %3159 = vmatpush1.msra.mxu0 0.0
    %3160 = vmatprep.subr.mxu0 0.0
    %3161 = vmatpush1.msra.mxu0 0.0
    %3162 = vmatprep.subr.mxu0 0.0
    %3163 = vmatpush1.msra.mxu0 0.0
    %3164 = vmatprep.subr.mxu0 0.0
    %3165 = vmatpush1.msra.mxu0 0.0
    %3166 = vmatprep.subr.mxu0 0.0
    %3167 = vmatpush1.msra.mxu0 0.0
    %3168 = vmatprep.subr.mxu0 0.0
    %3169 = vmatpush1.msra.mxu0 0.0
    %3170 = vmatprep.subr.mxu0 0.0
    %3171 = vmatpush1.msra.mxu0 0.0
    %3172 = vmatprep.subr.mxu0 0.0
    %3173 = vmatpush1.msra.mxu0 0.0
    %3174 = vmatprep.subr.mxu0 0.0
    %3175 = vmatpush1.msra.mxu0 0.0
    %3176 = vmatprep.subr.mxu0 0.0
    %3177 = vmatpush1.msra.mxu0 0.0
    %3178 = vmatprep.subr.mxu0 0.0
    %3179 = vmatpush1.msra.mxu0 0.0
    %3180 = vmatprep.subr.mxu0 0.0
    %3181 = vmatpush1.msra.mxu0 0.0
    %3182 = vmatprep.subr.mxu0 0.0
    %3183 = vmatpush1.msra.mxu0 0.0
    %3184 = vmatprep.subr.mxu0 0.0
    %3185 = vmatpush1.msra.mxu0 0.0
    %3186 = vmatprep.subr.mxu0 0.0
    %3187 = vmatpush1.msra.mxu0 0.0
    %3188 = vmatprep.subr.mxu0 0.0
    %3189 = vmatpush1.msra.mxu0 0.0
    %3190 = vmatprep.subr.mxu0 0.0
    %3191 = vmatpush1.msra.mxu0 0.0
    %3192 = vmatprep.subr.mxu0 0.0
    %3193 = vmatpush1.msra.mxu0 0.0
    %3194 = vmatprep.subr.mxu0 0.0
    %3195 = vmatpush1.msra.mxu0 0.0
    %3196 = vmatprep.subr.mxu0 0.0
    %3197 = vmatpush1.msra.mxu0 0.0
    %3198 = vmatprep.subr.mxu0 0.0
    %3199 = vmatpush1.msra.mxu0 0.0
    %3200 = vmatprep.subr.mxu0 0.0
    %3201 = vmatpush1.msra.mxu0 0.0
    %3202 = vmatprep.subr.mxu0 0.0
    %3203 = vmatpush1.msra.mxu0 0.0
    %3204 = vmatprep.subr.mxu0 0.0
    %3205 = vmatpush1.msra.mxu0 0.0
    %3206 = vmatprep.subr.mxu0 0.0
    %3207 = vmatpush1.msra.mxu0 0.0
    %3208 = vmatprep.subr.mxu0 0.0
    %3209 = vmatpush1.msra.mxu0 0.0
    %3210 = vmatprep.subr.mxu0 0.0
    %3211 = vmatpush1.msra.mxu0 0.0
    %3212 = vmatprep.subr.mxu0 0.0
    %3213 = vmatpush1.msra.mxu0 0.0
    %3214 = vmatprep.subr.mxu0 0.0
    %3215 = vmatpush1.msra.mxu0 0.0
    %3216 = vmatprep.subr.mxu0 0.0
    %3217 = vmatpush1.msra.mxu0 0.0
    %3218 = vmatprep.mubr.f32.mxu0 0.0
    %v3219 = vand.u32 %v2819, 4294901760
    %v3220 = vsub.f32 %v2819, %v3219
    %3221 = vmatmul.mubr.f32.gmra.mrb[0].mxu0 %v3220
    %v3222 = vpop.f32.mrb[0].mxu0
    %v3223 = vadd.f32 %v3093, %v3222
    %v3224 = vpop.f32.mrb[0].mxu0
    %3225 = vmatprep.mubr.f32.mxu0 0.0
    %v3226 = vand.u32 %v2822, 4294901760
    %v3227 = vsub.f32 %v2822, %v3226
    %3228 = vmatmul.mubr.f32.gmra.mrb[0].mxu0 %v3227
    %v3229 = vpop.f32.mrb[0].mxu0
    %v3230 = vadd.f32 %v3099, %v3229
    %v3231 = vpop.f32.mrb[0].mxu0
    %3232 = vmatprep.mubr.f32.mxu0 0.0
    %v3233 = vand.u32 %v2825, 4294901760
    %v3234 = vsub.f32 %v2825, %v3233
    %3235 = vmatmul.mubr.f32.gmra.mrb[0].mxu0 %v3234
    %v3236 = vpop.f32.mrb[0].mxu0
    %v3237 = vadd.f32 %v3105, %v3236
    %v3238 = vpop.f32.mrb[0].mxu0
    %3239 = vmatprep.mubr.f32.mxu0 0.0
    %v3240 = vand.u32 %v2828, 4294901760
    %v3241 = vsub.f32 %v2828, %v3240
    %3242 = vmatmul.mubr.f32.gmra.mrb[0].mxu0 %v3241
    %v3243 = vpop.f32.mrb[0].mxu0
    %v3244 = vadd.f32 %v3111, %v3243
    %v3245 = vpop.f32.mrb[0].mxu0
    %3246 = vmatprep.mubr.f32.mxu0 0.0
    %v3247 = vand.u32 %v2831, 4294901760
    %v3248 = vsub.f32 %v2831, %v3247
    %3249 = vmatmul.mubr.f32.gmra.mrb[0].mxu0 %v3248
    %v3250 = vpop.f32.mrb[0].mxu0
    %v3251 = vadd.f32 %v3117, %v3250
    %v3252 = vpop.f32.mrb[0].mxu0
    %3253 = vmatprep.mubr.f32.mxu0 0.0
    %v3254 = vand.u32 %v2834, 4294901760
    %v3255 = vsub.f32 %v2834, %v3254
    %3256 = vmatmul.mubr.f32.gmra.mrb[0].mxu0 %v3255
    %v3257 = vpop.f32.mrb[0].mxu0
    %v3258 = vadd.f32 %v3123, %v3257
    %v3259 = vpop.f32.mrb[0].mxu0
    %3260 = vmatprep.mubr.f32.mxu0 0.0
    %v3261 = vand.u32 %v2837, 4294901760
    %v3262 = vsub.f32 %v2837, %v3261
    %3263 = vmatmul.mubr.f32.gmra.mrb[0].mxu0 %v3262
    %v3264 = vpop.f32.mrb[0].mxu0
    %v3265 = vadd.f32 %v3129, %v3264
    %v3266 = vpop.f32.mrb[0].mxu0
    %3267 = vmatprep.mubr.f32.mxu0 0.0
    %v3268 = vand.u32 %v2840, 4294901760
    %v3269 = vsub.f32 %v2840, %v3268
    %3270 = vmatmul.mubr.f32.gmra.mrb[0].mxu0 %v3269
    %v3271 = vpop.f32.mrb[0].mxu0
    %v3272 = vadd.f32 %v3135, %v3271
    %v3273 = vpop.f32.mrb[0].mxu0
    %3274 = vmatprep.mubr.f32.mxu0 0.0
    %v3275 = vand.u32 %v2843, 4294901760
    %v3276 = vsub.f32 %v2843, %v3275
    %3277 = vmatmul.mubr.f32.gmra.mrb[0].mxu0 %v3276
    %v3278 = vpop.f32.mrb[0].mxu0
    %v3279 = vadd.f32 %v3141, %v3278
    %v3280 = vpop.f32.mrb[0].mxu0
    %3281 = vmatprep.mubr.f32.mxu0 0.0
    %v3282 = vand.u32 %v2846, 4294901760
    %v3283 = vsub.f32 %v2846, %v3282
    %3284 = vmatmul.mubr.f32.gmra.mrb[0].mxu0 %v3283
    %v3285 = vpop.f32.mrb[0].mxu0
    %v3286 = vadd.f32 %v3147, %v3285
    %v3287 = vpop.f32.mrb[0].mxu0
    %3288 = vdwg.mxu0
    %3289 = vmatprep.subr.mxu0 0.0
    %v3290 = vand.u32 %v79, 4294901760
    %3291 = vmatpush1.msra.mxu0 %v3290
    %3292 = vmatprep.subr.mxu0 0.0
    %v3293 = vand.u32 %v80, 4294901760
    %3294 = vmatpush1.msra.mxu0 %v3293
    %3295 = vmatprep.subr.mxu0 0.0
    %3296 = vmatpush1.msra.mxu0 0.0
    %3297 = vmatprep.subr.mxu0 0.0
    %3298 = vmatpush1.msra.mxu0 0.0
    %3299 = vmatprep.subr.mxu0 0.0
    %3300 = vmatpush1.msra.mxu0 0.0
    %3301 = vmatprep.subr.mxu0 0.0
    %3302 = vmatpush1.msra.mxu0 0.0
    %3303 = vmatprep.subr.mxu0 0.0
    %3304 = vmatpush1.msra.mxu0 0.0
    %3305 = vmatprep.subr.mxu0 0.0
    %3306 = vmatpush1.msra.mxu0 0.0
    %3307 = vmatprep.subr.mxu0 0.0
    %3308 = vmatpush1.msra.mxu0 0.0
    %3309 = vmatprep.subr.mxu0 0.0
    %3310 = vmatpush1.msra.mxu0 0.0
    %3311 = vmatprep.subr.mxu0 0.0
    %3312 = vmatpush1.msra.mxu0 0.0
    %3313 = vmatprep.subr.mxu0 0.0
    %3314 = vmatpush1.msra.mxu0 0.0
    %3315 = vmatprep.subr.mxu0 0.0
    %3316 = vmatpush1.msra.mxu0 0.0
    %3317 = vmatprep.subr.mxu0 0.0
    %3318 = vmatpush1.msra.mxu0 0.0
    %3319 = vmatprep.subr.mxu0 0.0
    %3320 = vmatpush1.msra.mxu0 0.0
    %3321 = vmatprep.subr.mxu0 0.0
    %3322 = vmatpush1.msra.mxu0 0.0
    %3323 = vmatprep.subr.mxu0 0.0
    %3324 = vmatpush1.msra.mxu0 0.0
    %3325 = vmatprep.subr.mxu0 0.0
    %3326 = vmatpush1.msra.mxu0 0.0
    %3327 = vmatprep.subr.mxu0 0.0
    %3328 = vmatpush1.msra.mxu0 0.0
    %3329 = vmatprep.subr.mxu0 0.0
    %3330 = vmatpush1.msra.mxu0 0.0
    %3331 = vmatprep.subr.mxu0 0.0
    %3332 = vmatpush1.msra.mxu0 0.0
    %3333 = vmatprep.subr.mxu0 0.0
    %3334 = vmatpush1.msra.mxu0 0.0
    %3335 = vmatprep.subr.mxu0 0.0
    %3336 = vmatpush1.msra.mxu0 0.0
    %3337 = vmatprep.subr.mxu0 0.0
    %3338 = vmatpush1.msra.mxu0 0.0
    %3339 = vmatprep.subr.mxu0 0.0
    %3340 = vmatpush1.msra.mxu0 0.0
    %3341 = vmatprep.subr.mxu0 0.0
    %3342 = vmatpush1.msra.mxu0 0.0
    %3343 = vmatprep.subr.mxu0 0.0
    %3344 = vmatpush1.msra.mxu0 0.0
    %3345 = vmatprep.subr.mxu0 0.0
    %3346 = vmatpush1.msra.mxu0 0.0
    %3347 = vmatprep.subr.mxu0 0.0
    %3348 = vmatpush1.msra.mxu0 0.0
    %3349 = vmatprep.subr.mxu0 0.0
    %3350 = vmatpush1.msra.mxu0 0.0
    %3351 = vmatprep.subr.mxu0 0.0
    %3352 = vmatpush1.msra.mxu0 0.0
    %3353 = vmatprep.subr.mxu0 0.0
    %3354 = vmatpush1.msra.mxu0 0.0
    %3355 = vmatprep.mubr.f32.mxu0 0.0
    %v3356 = vand.u32 %v2819, 4294901760
    %v3357 = vsub.f32 %v2819, %v3356
    %v3358 = vand.u32 %v3357, 4294901760
    %3359 = vmatmul.mubr.f32.gmra.mrb[0].mxu0 %v3358
    %v3360 = vpop.f32.mrb[0].mxu0
    %v3361 = vadd.f32 %v3223, %v3360
    %v3362 = vpop.f32.mrb[0].mxu0
    %3363 = vmatprep.mubr.f32.mxu0 0.0
    %v3364 = vand.u32 %v2822, 4294901760
    %v3365 = vsub.f32 %v2822, %v3364
    %v3366 = vand.u32 %v3365, 4294901760
    %3367 = vmatmul.mubr.f32.gmra.mrb[0].mxu0 %v3366
    %v3368 = vpop.f32.mrb[0].mxu0
    %v3369 = vadd.f32 %v3230, %v3368
    %v3370 = vpop.f32.mrb[0].mxu0
    %3371 = vmatprep.mubr.f32.mxu0 0.0
    %v3372 = vand.u32 %v2825, 4294901760
    %v3373 = vsub.f32 %v2825, %v3372
    %v3374 = vand.u32 %v3373, 4294901760
    %3375 = vmatmul.mubr.f32.gmra.mrb[0].mxu0 %v3374
    %v3376 = vpop.f32.mrb[0].mxu0
    %v3377 = vadd.f32 %v3237, %v3376
    %v3378 = vpop.f32.mrb[0].mxu0
    %3379 = vmatprep.mubr.f32.mxu0 0.0
    %v3380 = vand.u32 %v2828, 4294901760
    %v3381 = vsub.f32 %v2828, %v3380
    %v3382 = vand.u32 %v3381, 4294901760
    %3383 = vmatmul.mubr.f32.gmra.mrb[0].mxu0 %v3382
    %v3384 = vpop.f32.mrb[0].mxu0
    %v3385 = vadd.f32 %v3244, %v3384
    %v3386 = vpop.f32.mrb[0].mxu0
    %3387 = vmatprep.mubr.f32.mxu0 0.0
    %v3388 = vand.u32 %v2831, 4294901760
    %v3389 = vsub.f32 %v2831, %v3388
    %v3390 = vand.u32 %v3389, 4294901760
    %3391 = vmatmul.mubr.f32.gmra.mrb[0].mxu0 %v3390
    %v3392 = vpop.f32.mrb[0].mxu0
    %v3393 = vadd.f32 %v3251, %v3392
    %v3394 = vpop.f32.mrb[0].mxu0
    %3395 = vmatprep.mubr.f32.mxu0 0.0
    %v3396 = vand.u32 %v2834, 4294901760
    %v3397 = vsub.f32 %v2834, %v3396
    %v3398 = vand.u32 %v3397, 4294901760
    %3399 = vmatmul.mubr.f32.gmra.mrb[0].mxu0 %v3398
    %v3400 = vpop.f32.mrb[0].mxu0
    %v3401 = vadd.f32 %v3258, %v3400
    %v3402 = vpop.f32.mrb[0].mxu0
    %3403 = vmatprep.mubr.f32.mxu0 0.0
    %v3404 = vand.u32 %v2837, 4294901760
    %v3405 = vsub.f32 %v2837, %v3404
    %v3406 = vand.u32 %v3405, 4294901760
    %3407 = vmatmul.mubr.f32.gmra.mrb[0].mxu0 %v3406
    %v3408 = vpop.f32.mrb[0].mxu0
    %v3409 = vadd.f32 %v3265, %v3408
    %v3410 = vpop.f32.mrb[0].mxu0
    %3411 = vmatprep.mubr.f32.mxu0 0.0
    %v3412 = vand.u32 %v2840, 4294901760
    %v3413 = vsub.f32 %v2840, %v3412
    %v3414 = vand.u32 %v3413, 4294901760
    %3415 = vmatmul.mubr.f32.gmra.mrb[0].mxu0 %v3414
    %v3416 = vpop.f32.mrb[0].mxu0
    %v3417 = vadd.f32 %v3272, %v3416
    %v3418 = vpop.f32.mrb[0].mxu0
    %3419 = vmatprep.mubr.f32.mxu0 0.0
    %v3420 = vand.u32 %v2843, 4294901760
    %v3421 = vsub.f32 %v2843, %v3420
    %v3422 = vand.u32 %v3421, 4294901760
    %3423 = vmatmul.mubr.f32.gmra.mrb[0].mxu0 %v3422
    %v3424 = vpop.f32.mrb[0].mxu0
    %v3425 = vadd.f32 %v3279, %v3424
    %v3426 = vpop.f32.mrb[0].mxu0
    %3427 = vmatprep.mubr.f32.mxu0 0.0
    %v3428 = vand.u32 %v2846, 4294901760
    %v3429 = vsub.f32 %v2846, %v3428
    %v3430 = vand.u32 %v3429, 4294901760
    %3431 = vmatmul.mubr.f32.gmra.mrb[0].mxu0 %v3430
    %v3432 = vpop.f32.mrb[0].mxu0
    %v3433 = vadd.f32 %v3286, %v3432
    %v3434 = vpop.f32.mrb[0].mxu0
    %3435 = vdwg.mxu0
    %3436 = vmatprep.subr.mxu0 0.0
    %v3437 = vand.u32 %v79, 4294901760
    %v3438 = vsub.f32 %v79, %v3437
    %v3439 = vand.u32 %v3438, 4294901760
    %3440 = vmatpush1.msra.mxu0 %v3439
    %3441 = vmatprep.subr.mxu0 0.0
    %v3442 = vand.u32 %v80, 4294901760
    %v3443 = vsub.f32 %v80, %v3442
    %v3444 = vand.u32 %v3443, 4294901760
    %3445 = vmatpush1.msra.mxu0 %v3444
    %3446 = vmatprep.subr.mxu0 0.0
    %3447 = vmatpush1.msra.mxu0 0.0
    %3448 = vmatprep.subr.mxu0 0.0
    %3449 = vmatpush1.msra.mxu0 0.0
    %3450 = vmatprep.subr.mxu0 0.0
    %3451 = vmatpush1.msra.mxu0 0.0
    %3452 = vmatprep.subr.mxu0 0.0
    %3453 = vmatpush1.msra.mxu0 0.0
    %3454 = vmatprep.subr.mxu0 0.0
    %3455 = vmatpush1.msra.mxu0 0.0
    %3456 = vmatprep.subr.mxu0 0.0
    %3457 = vmatpush1.msra.mxu0 0.0
    %3458 = vmatprep.subr.mxu0 0.0
    %3459 = vmatpush1.msra.mxu0 0.0
    %3460 = vmatprep.subr.mxu0 0.0
    %3461 = vmatpush1.msra.mxu0 0.0
    %3462 = vmatprep.subr.mxu0 0.0
    %3463 = vmatpush1.msra.mxu0 0.0
    %3464 = vmatprep.subr.mxu0 0.0
    %3465 = vmatpush1.msra.mxu0 0.0
    %3466 = vmatprep.subr.mxu0 0.0
    %3467 = vmatpush1.msra.mxu0 0.0
    %3468 = vmatprep.subr.mxu0 0.0
    %3469 = vmatpush1.msra.mxu0 0.0
    %3470 = vmatprep.subr.mxu0 0.0
    %3471 = vmatpush1.msra.mxu0 0.0
    %3472 = vmatprep.subr.mxu0 0.0
    %3473 = vmatpush1.msra.mxu0 0.0
    %3474 = vmatprep.subr.mxu0 0.0
    %3475 = vmatpush1.msra.mxu0 0.0
    %3476 = vmatprep.subr.mxu0 0.0
    %3477 = vmatpush1.msra.mxu0 0.0
    %3478 = vmatprep.subr.mxu0 0.0
    %3479 = vmatpush1.msra.mxu0 0.0
    %3480 = vmatprep.subr.mxu0 0.0
    %3481 = vmatpush1.msra.mxu0 0.0
    %3482 = vmatprep.subr.mxu0 0.0
    %3483 = vmatpush1.msra.mxu0 0.0
    %3484 = vmatprep.subr.mxu0 0.0
    %3485 = vmatpush1.msra.mxu0 0.0
    %3486 = vmatprep.subr.mxu0 0.0
    %3487 = vmatpush1.msra.mxu0 0.0
    %3488 = vmatprep.subr.mxu0 0.0
    %3489 = vmatpush1.msra.mxu0 0.0
    %3490 = vmatprep.subr.mxu0 0.0
    %3491 = vmatpush1.msra.mxu0 0.0
    %3492 = vmatprep.subr.mxu0 0.0
    %3493 = vmatpush1.msra.mxu0 0.0
    %3494 = vmatprep.subr.mxu0 0.0
    %3495 = vmatpush1.msra.mxu0 0.0
    %3496 = vmatprep.subr.mxu0 0.0
    %3497 = vmatpush1.msra.mxu0 0.0
    %3498 = vmatprep.subr.mxu0 0.0
    %3499 = vmatpush1.msra.mxu0 0.0
    %3500 = vmatprep.subr.mxu0 0.0
    %3501 = vmatpush1.msra.mxu0 0.0
    %3502 = vmatprep.subr.mxu0 0.0
    %3503 = vmatpush1.msra.mxu0 0.0
    %3504 = vmatprep.subr.mxu0 0.0
    %3505 = vmatpush1.msra.mxu0 0.0
    %3506 = vmatprep.mubr.f32.mxu0 0.0
    %v3507 = vand.u32 %v2819, 4294901760
    %3508 = vmatmul.mubr.f32.gmra.mrb[0].mxu0 %v3507
    %v3509 = vpop.f32.mrb[0].mxu0
    %v3510 = vadd.f32 %v3361, %v3509
    %v3511 = vpop.f32.mrb[0].mxu0
    %3512 = vmatprep.mubr.f32.mxu0 0.0
    %v3513 = vand.u32 %v2822, 4294901760
    %3514 = vmatmul.mubr.f32.gmra.mrb[0].mxu0 %v3513
    %v3515 = vpop.f32.mrb[0].mxu0
    %v3516 = vadd.f32 %v3369, %v3515
    %v3517 = vpop.f32.mrb[0].mxu0
    %3518 = vmatprep.mubr.f32.mxu0 0.0
    %v3519 = vand.u32 %v2825, 4294901760
    %3520 = vmatmul.mubr.f32.gmra.mrb[0].mxu0 %v3519
    %v3521 = vpop.f32.mrb[0].mxu0
    %v3522 = vadd.f32 %v3377, %v3521
    %v3523 = vpop.f32.mrb[0].mxu0
    %3524 = vmatprep.mubr.f32.mxu0 0.0
    %v3525 = vand.u32 %v2828, 4294901760
    %3526 = vmatmul.mubr.f32.gmra.mrb[0].mxu0 %v3525
    %v3527 = vpop.f32.mrb[0].mxu0
    %v3528 = vadd.f32 %v3385, %v3527
    %v3529 = vpop.f32.mrb[0].mxu0
    %3530 = vmatprep.mubr.f32.mxu0 0.0
    %v3531 = vand.u32 %v2831, 4294901760
    %3532 = vmatmul.mubr.f32.gmra.mrb[0].mxu0 %v3531
    %v3533 = vpop.f32.mrb[0].mxu0
    %v3534 = vadd.f32 %v3393, %v3533
    %v3535 = vpop.f32.mrb[0].mxu0
    %3536 = vmatprep.mubr.f32.mxu0 0.0
    %v3537 = vand.u32 %v2834, 4294901760
    %3538 = vmatmul.mubr.f32.gmra.mrb[0].mxu0 %v3537
    %v3539 = vpop.f32.mrb[0].mxu0
    %v3540 = vadd.f32 %v3401, %v3539
    %v3541 = vpop.f32.mrb[0].mxu0
    %3542 = vmatprep.mubr.f32.mxu0 0.0
    %v3543 = vand.u32 %v2837, 4294901760
    %3544 = vmatmul.mubr.f32.gmra.mrb[0].mxu0 %v3543
    %v3545 = vpop.f32.mrb[0].mxu0
    %v3546 = vadd.f32 %v3409, %v3545
    %v3547 = vpop.f32.mrb[0].mxu0
    %3548 = vmatprep.mubr.f32.mxu0 0.0
    %v3549 = vand.u32 %v2840, 4294901760
    %3550 = vmatmul.mubr.f32.gmra.mrb[0].mxu0 %v3549
    %v3551 = vpop.f32.mrb[0].mxu0
    %v3552 = vadd.f32 %v3417, %v3551
    %v3553 = vpop.f32.mrb[0].mxu0
    %3554 = vmatprep.mubr.f32.mxu0 0.0
    %v3555 = vand.u32 %v2843, 4294901760
    %3556 = vmatmul.mubr.f32.gmra.mrb[0].mxu0 %v3555
    %v3557 = vpop.f32.mrb[0].mxu0
    %v3558 = vadd.f32 %v3425, %v3557
    %v3559 = vpop.f32.mrb[0].mxu0
    %3560 = vmatprep.mubr.f32.mxu0 0.0
    %v3561 = vand.u32 %v2846, 4294901760
    %3562 = vmatmul.mubr.f32.gmra.mrb[0].mxu0 %v3561
    %v3563 = vpop.f32.mrb[0].mxu0
    %v3564 = vadd.f32 %v3433, %v3563
    %v3565 = vpop.f32.mrb[0].mxu0
    %3566 = vdwg.mxu0
    %3567 = vmatprep.subr.mxu0 0.0
    %v3568 = vand.u32 %v79, 4294901760
    %3569 = vmatpush1.msra.mxu0 %v3568
    %3570 = vmatprep.subr.mxu0 0.0
    %v3571 = vand.u32 %v80, 4294901760
    %3572 = vmatpush1.msra.mxu0 %v3571
    %3573 = vmatprep.subr.mxu0 0.0
    %3574 = vmatpush1.msra.mxu0 0.0
    %3575 = vmatprep.subr.mxu0 0.0
    %3576 = vmatpush1.msra.mxu0 0.0
    %3577 = vmatprep.subr.mxu0 0.0
    %3578 = vmatpush1.msra.mxu0 0.0
    %3579 = vmatprep.subr.mxu0 0.0
    %3580 = vmatpush1.msra.mxu0 0.0
    %3581 = vmatprep.subr.mxu0 0.0
    %3582 = vmatpush1.msra.mxu0 0.0
    %3583 = vmatprep.subr.mxu0 0.0
    %3584 = vmatpush1.msra.mxu0 0.0
    %3585 = vmatprep.subr.mxu0 0.0
    %3586 = vmatpush1.msra.mxu0 0.0
    %3587 = vmatprep.subr.mxu0 0.0
    %3588 = vmatpush1.msra.mxu0 0.0
    %3589 = vmatprep.subr.mxu0 0.0
    %3590 = vmatpush1.msra.mxu0 0.0
    %3591 = vmatprep.subr.mxu0 0.0
    %3592 = vmatpush1.msra.mxu0 0.0
    %3593 = vmatprep.subr.mxu0 0.0
    %3594 = vmatpush1.msra.mxu0 0.0
    %3595 = vmatprep.subr.mxu0 0.0
    %3596 = vmatpush1.msra.mxu0 0.0
    %3597 = vmatprep.subr.mxu0 0.0
    %3598 = vmatpush1.msra.mxu0 0.0
    %3599 = vmatprep.subr.mxu0 0.0
    %3600 = vmatpush1.msra.mxu0 0.0
    %3601 = vmatprep.subr.mxu0 0.0
    %3602 = vmatpush1.msra.mxu0 0.0
    %3603 = vmatprep.subr.mxu0 0.0
    %3604 = vmatpush1.msra.mxu0 0.0
    %3605 = vmatprep.subr.mxu0 0.0
    %3606 = vmatpush1.msra.mxu0 0.0
    %3607 = vmatprep.subr.mxu0 0.0
    %3608 = vmatpush1.msra.mxu0 0.0
    %3609 = vmatprep.subr.mxu0 0.0
    %3610 = vmatpush1.msra.mxu0 0.0
    %3611 = vmatprep.subr.mxu0 0.0
    %3612 = vmatpush1.msra.mxu0 0.0
    %3613 = vmatprep.subr.mxu0 0.0
    %3614 = vmatpush1.msra.mxu0 0.0
    %3615 = vmatprep.subr.mxu0 0.0
    %3616 = vmatpush1.msra.mxu0 0.0
    %3617 = vmatprep.subr.mxu0 0.0
    %3618 = vmatpush1.msra.mxu0 0.0
    %3619 = vmatprep.subr.mxu0 0.0
    %3620 = vmatpush1.msra.mxu0 0.0
    %3621 = vmatprep.subr.mxu0 0.0
    %3622 = vmatpush1.msra.mxu0 0.0
    %3623 = vmatprep.subr.mxu0 0.0
    %3624 = vmatpush1.msra.mxu0 0.0
    %3625 = vmatprep.subr.mxu0 0.0
    %3626 = vmatpush1.msra.mxu0 0.0
    %3627 = vmatprep.subr.mxu0 0.0
    %3628 = vmatpush1.msra.mxu0 0.0
    %3629 = vmatprep.subr.mxu0 0.0
    %3630 = vmatpush1.msra.mxu0 0.0
    %3631 = vmatprep.subr.mxu0 0.0
    %3632 = vmatpush1.msra.mxu0 0.0
    %3633 = vmatprep.mubr.f32.mxu0 0.0
    %v3634 = vand.u32 %v2819, 4294901760
    %3635 = vmatmul.mubr.f32.gmra.mrb[0].mxu0 %v3634
    %v3636 = vpop.f32.mrb[0].mxu0
    %v3637 = vadd.f32 %v3510, %v3636
    %v3638 = vpop.f32.mrb[0].mxu0
    %3639 = vmatprep.mubr.f32.mxu0 0.0
    %v3640 = vand.u32 %v2822, 4294901760
    %3641 = vmatmul.mubr.f32.gmra.mrb[0].mxu0 %v3640
    %v3642 = vpop.f32.mrb[0].mxu0
    %v3643 = vadd.f32 %v3516, %v3642
    %v3644 = vpop.f32.mrb[0].mxu0
    %3645 = vmatprep.mubr.f32.mxu0 0.0
    %v3646 = vand.u32 %v2825, 4294901760
    %3647 = vmatmul.mubr.f32.gmra.mrb[0].mxu0 %v3646
    %v3648 = vpop.f32.mrb[0].mxu0
    %v3649 = vadd.f32 %v3522, %v3648
    %v3650 = vpop.f32.mrb[0].mxu0
    %3651 = vmatprep.mubr.f32.mxu0 0.0
    %v3652 = vand.u32 %v2828, 4294901760
    %3653 = vmatmul.mubr.f32.gmra.mrb[0].mxu0 %v3652
    %v3654 = vpop.f32.mrb[0].mxu0
    %v3655 = vadd.f32 %v3528, %v3654
    %v3656 = vpop.f32.mrb[0].mxu0
    %3657 = vmatprep.mubr.f32.mxu0 0.0
    %v3658 = vand.u32 %v2831, 4294901760
    %3659 = vmatmul.mubr.f32.gmra.mrb[0].mxu0 %v3658
    %v3660 = vpop.f32.mrb[0].mxu0
    %v3661 = vadd.f32 %v3534, %v3660
    %v3662 = vpop.f32.mrb[0].mxu0
    %3663 = vmatprep.mubr.f32.mxu0 0.0
    %v3664 = vand.u32 %v2834, 4294901760
    %3665 = vmatmul.mubr.f32.gmra.mrb[0].mxu0 %v3664
    %v3666 = vpop.f32.mrb[0].mxu0
    %v3667 = vadd.f32 %v3540, %v3666
    %v3668 = vpop.f32.mrb[0].mxu0
    %3669 = vmatprep.mubr.f32.mxu0 0.0
    %v3670 = vand.u32 %v2837, 4294901760
    %3671 = vmatmul.mubr.f32.gmra.mrb[0].mxu0 %v3670
    %v3672 = vpop.f32.mrb[0].mxu0
    %v3673 = vadd.f32 %v3546, %v3672
    %v3674 = vpop.f32.mrb[0].mxu0
    %3675 = vmatprep.mubr.f32.mxu0 0.0
    %v3676 = vand.u32 %v2840, 4294901760
    %3677 = vmatmul.mubr.f32.gmra.mrb[0].mxu0 %v3676
    %v3678 = vpop.f32.mrb[0].mxu0
    %v3679 = vadd.f32 %v3552, %v3678
    %v3680 = vpop.f32.mrb[0].mxu0
    %3681 = vmatprep.mubr.f32.mxu0 0.0
    %v3682 = vand.u32 %v2843, 4294901760
    %3683 = vmatmul.mubr.f32.gmra.mrb[0].mxu0 %v3682
    %v3684 = vpop.f32.mrb[0].mxu0
    %v3685 = vadd.f32 %v3558, %v3684
    %v3686 = vpop.f32.mrb[0].mxu0
    %3687 = vmatprep.mubr.f32.mxu0 0.0
    %v3688 = vand.u32 %v2846, 4294901760
    %3689 = vmatmul.mubr.f32.gmra.mrb[0].mxu0 %v3688
    %v3690 = vpop.f32.mrb[0].mxu0
    %v3691 = vadd.f32 %v3564, %v3690
    %v3692 = vpop.f32.mrb[0].mxu0
    %3693 = vdwg.mxu0
    %v3694 = vadd.f32 %v2808, %v3637
    %v3695 = vadd.f32 %v2809, %v3643
    %v3696 = vadd.f32 %v2810, %v3649
    %v3697 = vadd.f32 %v2811, %v3655
    %v3698 = vadd.f32 %v2812, %v3661
    %v3699 = vadd.f32 %v2813, %v3667
    %v3700 = vadd.f32 %v2814, %v3673
    %v3701 = vadd.f32 %v2815, %v3679
    %v3702 = vadd.f32 %v2816, %v3685
    %v3703 = vadd.f32 %v2817, %v3691
    %v3705 = vsel %vm179, %v107, 0
    %v3708 = vsel %vm179, %v108, 0
    %v3711 = vsel %vm179, %v123, 0
    %v3714 = vsel %vm179, %v124, 0
    %v3717 = vsel %vm179, %v139, 0
    %v3720 = vsel %vm179, %v140, 0
    %v3723 = vsel %vm179, %v155, 0
    %v3726 = vsel %vm179, %v156, 0
    %v3729 = vsel %vm179, %v171, 0
    %v3732 = vsel %vm179, %v172, 0
    %3734 = vmatprep.subr.mxu0 0.0
    %v3735 = vand.u32 %v81, 4294901760
    %3736 = vmatpush1.msra.mxu0 %v3735
    %3737 = vmatprep.subr.mxu0 0.0
    %v3738 = vand.u32 %v82, 4294901760
    %3739 = vmatpush1.msra.mxu0 %v3738
    %3740 = vmatprep.subr.mxu0 0.0
    %3741 = vmatpush1.msra.mxu0 0.0
    %3742 = vmatprep.subr.mxu0 0.0
    %3743 = vmatpush1.msra.mxu0 0.0
    %3744 = vmatprep.subr.mxu0 0.0
    %3745 = vmatpush1.msra.mxu0 0.0
    %3746 = vmatprep.subr.mxu0 0.0
    %3747 = vmatpush1.msra.mxu0 0.0
    %3748 = vmatprep.subr.mxu0 0.0
    %3749 = vmatpush1.msra.mxu0 0.0
    %3750 = vmatprep.subr.mxu0 0.0
    %3751 = vmatpush1.msra.mxu0 0.0
    %3752 = vmatprep.subr.mxu0 0.0
    %3753 = vmatpush1.msra.mxu0 0.0
    %3754 = vmatprep.subr.mxu0 0.0
    %3755 = vmatpush1.msra.mxu0 0.0
    %3756 = vmatprep.subr.mxu0 0.0
    %3757 = vmatpush1.msra.mxu0 0.0
    %3758 = vmatprep.subr.mxu0 0.0
    %3759 = vmatpush1.msra.mxu0 0.0
    %3760 = vmatprep.subr.mxu0 0.0
    %3761 = vmatpush1.msra.mxu0 0.0
    %3762 = vmatprep.subr.mxu0 0.0
    %3763 = vmatpush1.msra.mxu0 0.0
    %3764 = vmatprep.subr.mxu0 0.0
    %3765 = vmatpush1.msra.mxu0 0.0
    %3766 = vmatprep.subr.mxu0 0.0
    %3767 = vmatpush1.msra.mxu0 0.0
    %3768 = vmatprep.subr.mxu0 0.0
    %3769 = vmatpush1.msra.mxu0 0.0
    %3770 = vmatprep.subr.mxu0 0.0
    %3771 = vmatpush1.msra.mxu0 0.0
    %3772 = vmatprep.subr.mxu0 0.0
    %3773 = vmatpush1.msra.mxu0 0.0
    %3774 = vmatprep.subr.mxu0 0.0
    %3775 = vmatpush1.msra.mxu0 0.0
    %3776 = vmatprep.subr.mxu0 0.0
    %3777 = vmatpush1.msra.mxu0 0.0
    %3778 = vmatprep.subr.mxu0 0.0
    %3779 = vmatpush1.msra.mxu0 0.0
    %3780 = vmatprep.subr.mxu0 0.0
    %3781 = vmatpush1.msra.mxu0 0.0
    %3782 = vmatprep.subr.mxu0 0.0
    %3783 = vmatpush1.msra.mxu0 0.0
    %3784 = vmatprep.subr.mxu0 0.0
    %3785 = vmatpush1.msra.mxu0 0.0
    %3786 = vmatprep.subr.mxu0 0.0
    %3787 = vmatpush1.msra.mxu0 0.0
    %3788 = vmatprep.subr.mxu0 0.0
    %3789 = vmatpush1.msra.mxu0 0.0
    %3790 = vmatprep.subr.mxu0 0.0
    %3791 = vmatpush1.msra.mxu0 0.0
    %3792 = vmatprep.subr.mxu0 0.0
    %3793 = vmatpush1.msra.mxu0 0.0
    %3794 = vmatprep.subr.mxu0 0.0
    %3795 = vmatpush1.msra.mxu0 0.0
    %3796 = vmatprep.subr.mxu0 0.0
    %3797 = vmatpush1.msra.mxu0 0.0
    %3798 = vmatprep.subr.mxu0 0.0
    %3799 = vmatpush1.msra.mxu0 0.0
    %3800 = vmatprep.mubr.f32.mxu0 0.0
    %v3801 = vand.u32 %v3705, 4294901760
    %v3802 = vsub.f32 %v3705, %v3801
    %v3803 = vand.u32 %v3802, 4294901760
    %v3804 = vsub.f32 %v3802, %v3803
    %v3805 = vand.u32 %v3804, 4294901760
    %3806 = vmatmul.mubr.f32.gmra.mrb[0].mxu0 %v3805
    %v3807 = vpop.f32.mrb[0].mxu0
    %v3808 = vadd.f32 0.0, %v3807
    %v3809 = vpop.f32.mrb[0].mxu0
    %3810 = vmatprep.mubr.f32.mxu0 0.0
    %v3811 = vand.u32 %v3708, 4294901760
    %v3812 = vsub.f32 %v3708, %v3811
    %v3813 = vand.u32 %v3812, 4294901760
    %v3814 = vsub.f32 %v3812, %v3813
    %v3815 = vand.u32 %v3814, 4294901760
    %3816 = vmatmul.mubr.f32.gmra.mrb[0].mxu0 %v3815
    %v3817 = vpop.f32.mrb[0].mxu0
    %v3818 = vadd.f32 0.0, %v3817
    %v3819 = vpop.f32.mrb[0].mxu0
    %3820 = vmatprep.mubr.f32.mxu0 0.0
    %v3821 = vand.u32 %v3711, 4294901760
    %v3822 = vsub.f32 %v3711, %v3821
    %v3823 = vand.u32 %v3822, 4294901760
    %v3824 = vsub.f32 %v3822, %v3823
    %v3825 = vand.u32 %v3824, 4294901760
    %3826 = vmatmul.mubr.f32.gmra.mrb[0].mxu0 %v3825
    %v3827 = vpop.f32.mrb[0].mxu0
    %v3828 = vadd.f32 0.0, %v3827
    %v3829 = vpop.f32.mrb[0].mxu0
    %3830 = vmatprep.mubr.f32.mxu0 0.0
    %v3831 = vand.u32 %v3714, 4294901760
    %v3832 = vsub.f32 %v3714, %v3831
    %v3833 = vand.u32 %v3832, 4294901760
    %v3834 = vsub.f32 %v3832, %v3833
    %v3835 = vand.u32 %v3834, 4294901760
    %3836 = vmatmul.mubr.f32.gmra.mrb[0].mxu0 %v3835
    %v3837 = vpop.f32.mrb[0].mxu0
    %v3838 = vadd.f32 0.0, %v3837
    %v3839 = vpop.f32.mrb[0].mxu0
    %3840 = vmatprep.mubr.f32.mxu0 0.0
    %v3841 = vand.u32 %v3717, 4294901760
    %v3842 = vsub.f32 %v3717, %v3841
    %v3843 = vand.u32 %v3842, 4294901760
    %v3844 = vsub.f32 %v3842, %v3843
    %v3845 = vand.u32 %v3844, 4294901760
    %3846 = vmatmul.mubr.f32.gmra.mrb[0].mxu0 %v3845
    %v3847 = vpop.f32.mrb[0].mxu0
    %v3848 = vadd.f32 0.0, %v3847
    %v3849 = vpop.f32.mrb[0].mxu0
    %3850 = vmatprep.mubr.f32.mxu0 0.0
    %v3851 = vand.u32 %v3720, 4294901760
    %v3852 = vsub.f32 %v3720, %v3851
    %v3853 = vand.u32 %v3852, 4294901760
    %v3854 = vsub.f32 %v3852, %v3853
    %v3855 = vand.u32 %v3854, 4294901760
    %3856 = vmatmul.mubr.f32.gmra.mrb[0].mxu0 %v3855
    %v3857 = vpop.f32.mrb[0].mxu0
    %v3858 = vadd.f32 0.0, %v3857
    %v3859 = vpop.f32.mrb[0].mxu0
    %3860 = vmatprep.mubr.f32.mxu0 0.0
    %v3861 = vand.u32 %v3723, 4294901760
    %v3862 = vsub.f32 %v3723, %v3861
    %v3863 = vand.u32 %v3862, 4294901760
    %v3864 = vsub.f32 %v3862, %v3863
    %v3865 = vand.u32 %v3864, 4294901760
    %3866 = vmatmul.mubr.f32.gmra.mrb[0].mxu0 %v3865
    %v3867 = vpop.f32.mrb[0].mxu0
    %v3868 = vadd.f32 0.0, %v3867
    %v3869 = vpop.f32.mrb[0].mxu0
    %3870 = vmatprep.mubr.f32.mxu0 0.0
    %v3871 = vand.u32 %v3726, 4294901760
    %v3872 = vsub.f32 %v3726, %v3871
    %v3873 = vand.u32 %v3872, 4294901760
    %v3874 = vsub.f32 %v3872, %v3873
    %v3875 = vand.u32 %v3874, 4294901760
    %3876 = vmatmul.mubr.f32.gmra.mrb[0].mxu0 %v3875
    %v3877 = vpop.f32.mrb[0].mxu0
    %v3878 = vadd.f32 0.0, %v3877
    %v3879 = vpop.f32.mrb[0].mxu0
    %3880 = vmatprep.mubr.f32.mxu0 0.0
    %v3881 = vand.u32 %v3729, 4294901760
    %v3882 = vsub.f32 %v3729, %v3881
    %v3883 = vand.u32 %v3882, 4294901760
    %v3884 = vsub.f32 %v3882, %v3883
    %v3885 = vand.u32 %v3884, 4294901760
    %3886 = vmatmul.mubr.f32.gmra.mrb[0].mxu0 %v3885
    %v3887 = vpop.f32.mrb[0].mxu0
    %v3888 = vadd.f32 0.0, %v3887
    %v3889 = vpop.f32.mrb[0].mxu0
    %3890 = vmatprep.mubr.f32.mxu0 0.0
    %v3891 = vand.u32 %v3732, 4294901760
    %v3892 = vsub.f32 %v3732, %v3891
    %v3893 = vand.u32 %v3892, 4294901760
    %v3894 = vsub.f32 %v3892, %v3893
    %v3895 = vand.u32 %v3894, 4294901760
    %3896 = vmatmul.mubr.f32.gmra.mrb[0].mxu0 %v3895
    %v3897 = vpop.f32.mrb[0].mxu0
    %v3898 = vadd.f32 0.0, %v3897
    %v3899 = vpop.f32.mrb[0].mxu0
    %3900 = vdwg.mxu0
    %3901 = vmatprep.subr.mxu0 0.0
    %v3902 = vand.u32 %v81, 4294901760
    %v3903 = vsub.f32 %v81, %v3902
    %v3904 = vand.u32 %v3903, 4294901760
    %v3905 = vsub.f32 %v3903, %v3904
    %v3906 = vand.u32 %v3905, 4294901760
    %3907 = vmatpush1.msra.mxu0 %v3906
    %3908 = vmatprep.subr.mxu0 0.0
    %v3909 = vand.u32 %v82, 4294901760
    %v3910 = vsub.f32 %v82, %v3909
    %v3911 = vand.u32 %v3910, 4294901760
    %v3912 = vsub.f32 %v3910, %v3911
    %v3913 = vand.u32 %v3912, 4294901760
    %3914 = vmatpush1.msra.mxu0 %v3913
    %3915 = vmatprep.subr.mxu0 0.0
    %3916 = vmatpush1.msra.mxu0 0.0
    %3917 = vmatprep.subr.mxu0 0.0
    %3918 = vmatpush1.msra.mxu0 0.0
    %3919 = vmatprep.subr.mxu0 0.0
    %3920 = vmatpush1.msra.mxu0 0.0
    %3921 = vmatprep.subr.mxu0 0.0
    %3922 = vmatpush1.msra.mxu0 0.0
    %3923 = vmatprep.subr.mxu0 0.0
    %3924 = vmatpush1.msra.mxu0 0.0
    %3925 = vmatprep.subr.mxu0 0.0
    %3926 = vmatpush1.msra.mxu0 0.0
    %3927 = vmatprep.subr.mxu0 0.0
    %3928 = vmatpush1.msra.mxu0 0.0
    %3929 = vmatprep.subr.mxu0 0.0
    %3930 = vmatpush1.msra.mxu0 0.0
    %3931 = vmatprep.subr.mxu0 0.0
    %3932 = vmatpush1.msra.mxu0 0.0
    %3933 = vmatprep.subr.mxu0 0.0
    %3934 = vmatpush1.msra.mxu0 0.0
    %3935 = vmatprep.subr.mxu0 0.0
    %3936 = vmatpush1.msra.mxu0 0.0
    %3937 = vmatprep.subr.mxu0 0.0
    %3938 = vmatpush1.msra.mxu0 0.0
    %3939 = vmatprep.subr.mxu0 0.0
    %3940 = vmatpush1.msra.mxu0 0.0
    %3941 = vmatprep.subr.mxu0 0.0
    %3942 = vmatpush1.msra.mxu0 0.0
    %3943 = vmatprep.subr.mxu0 0.0
    %3944 = vmatpush1.msra.mxu0 0.0
    %3945 = vmatprep.subr.mxu0 0.0
    %3946 = vmatpush1.msra.mxu0 0.0
    %3947 = vmatprep.subr.mxu0 0.0
    %3948 = vmatpush1.msra.mxu0 0.0
    %3949 = vmatprep.subr.mxu0 0.0
    %3950 = vmatpush1.msra.mxu0 0.0
    %3951 = vmatprep.subr.mxu0 0.0
    %3952 = vmatpush1.msra.mxu0 0.0
    %3953 = vmatprep.subr.mxu0 0.0
    %3954 = vmatpush1.msra.mxu0 0.0
    %3955 = vmatprep.subr.mxu0 0.0
    %3956 = vmatpush1.msra.mxu0 0.0
    %3957 = vmatprep.subr.mxu0 0.0
    %3958 = vmatpush1.msra.mxu0 0.0
    %3959 = vmatprep.subr.mxu0 0.0
    %3960 = vmatpush1.msra.mxu0 0.0
    %3961 = vmatprep.subr.mxu0 0.0
    %3962 = vmatpush1.msra.mxu0 0.0
    %3963 = vmatprep.subr.mxu0 0.0
    %3964 = vmatpush1.msra.mxu0 0.0
    %3965 = vmatprep.subr.mxu0 0.0
    %3966 = vmatpush1.msra.mxu0 0.0
    %3967 = vmatprep.subr.mxu0 0.0
    %3968 = vmatpush1.msra.mxu0 0.0
    %3969 = vmatprep.subr.mxu0 0.0
    %3970 = vmatpush1.msra.mxu0 0.0
    %3971 = vmatprep.subr.mxu0 0.0
    %3972 = vmatpush1.msra.mxu0 0.0
    %3973 = vmatprep.subr.mxu0 0.0
    %3974 = vmatpush1.msra.mxu0 0.0
    %3975 = vmatprep.mubr.f32.mxu0 0.0
    %v3976 = vand.u32 %v3705, 4294901760
    %3977 = vmatmul.mubr.f32.gmra.mrb[0].mxu0 %v3976
    %v3978 = vpop.f32.mrb[0].mxu0
    %v3979 = vadd.f32 %v3808, %v3978
    %v3980 = vpop.f32.mrb[0].mxu0
    %3981 = vmatprep.mubr.f32.mxu0 0.0
    %v3982 = vand.u32 %v3708, 4294901760
    %3983 = vmatmul.mubr.f32.gmra.mrb[0].mxu0 %v3982
    %v3984 = vpop.f32.mrb[0].mxu0
    %v3985 = vadd.f32 %v3818, %v3984
    %v3986 = vpop.f32.mrb[0].mxu0
    %3987 = vmatprep.mubr.f32.mxu0 0.0
    %v3988 = vand.u32 %v3711, 4294901760
    %3989 = vmatmul.mubr.f32.gmra.mrb[0].mxu0 %v3988
    %v3990 = vpop.f32.mrb[0].mxu0
    %v3991 = vadd.f32 %v3828, %v3990
    %v3992 = vpop.f32.mrb[0].mxu0
    %3993 = vmatprep.mubr.f32.mxu0 0.0
    %v3994 = vand.u32 %v3714, 4294901760
    %3995 = vmatmul.mubr.f32.gmra.mrb[0].mxu0 %v3994
    %v3996 = vpop.f32.mrb[0].mxu0
    %v3997 = vadd.f32 %v3838, %v3996
    %v3998 = vpop.f32.mrb[0].mxu0
    %3999 = vmatprep.mubr.f32.mxu0 0.0
    %v4000 = vand.u32 %v3717, 4294901760
    %4001 = vmatmul.mubr.f32.gmra.mrb[0].mxu0 %v4000
    %v4002 = vpop.f32.mrb[0].mxu0
    %v4003 = vadd.f32 %v3848, %v4002
    %v4004 = vpop.f32.mrb[0].mxu0
    %4005 = vmatprep.mubr.f32.mxu0 0.0
    %v4006 = vand.u32 %v3720, 4294901760
    %4007 = vmatmul.mubr.f32.gmra.mrb[0].mxu0 %v4006
    %v4008 = vpop.f32.mrb[0].mxu0
    %v4009 = vadd.f32 %v3858, %v4008
    %v4010 = vpop.f32.mrb[0].mxu0
    %4011 = vmatprep.mubr.f32.mxu0 0.0
    %v4012 = vand.u32 %v3723, 4294901760
    %4013 = vmatmul.mubr.f32.gmra.mrb[0].mxu0 %v4012
    %v4014 = vpop.f32.mrb[0].mxu0
    %v4015 = vadd.f32 %v3868, %v4014
    %v4016 = vpop.f32.mrb[0].mxu0
    %4017 = vmatprep.mubr.f32.mxu0 0.0
    %v4018 = vand.u32 %v3726, 4294901760
    %4019 = vmatmul.mubr.f32.gmra.mrb[0].mxu0 %v4018
    %v4020 = vpop.f32.mrb[0].mxu0
    %v4021 = vadd.f32 %v3878, %v4020
    %v4022 = vpop.f32.mrb[0].mxu0
    %4023 = vmatprep.mubr.f32.mxu0 0.0
    %v4024 = vand.u32 %v3729, 4294901760
    %4025 = vmatmul.mubr.f32.gmra.mrb[0].mxu0 %v4024
    %v4026 = vpop.f32.mrb[0].mxu0
    %v4027 = vadd.f32 %v3888, %v4026
    %v4028 = vpop.f32.mrb[0].mxu0
    %4029 = vmatprep.mubr.f32.mxu0 0.0
    %v4030 = vand.u32 %v3732, 4294901760
    %4031 = vmatmul.mubr.f32.gmra.mrb[0].mxu0 %v4030
    %v4032 = vpop.f32.mrb[0].mxu0
    %v4033 = vadd.f32 %v3898, %v4032
    %v4034 = vpop.f32.mrb[0].mxu0
    %4035 = vdwg.mxu0
    %4036 = vmatprep.subr.mxu0 0.0
    %v4037 = vand.u32 %v81, 4294901760
    %v4038 = vsub.f32 %v81, %v4037
    %4039 = vmatpush1.msra.mxu0 %v4038
    %4040 = vmatprep.subr.mxu0 0.0
    %v4041 = vand.u32 %v82, 4294901760
    %v4042 = vsub.f32 %v82, %v4041
    %4043 = vmatpush1.msra.mxu0 %v4042
    %4044 = vmatprep.subr.mxu0 0.0
    %4045 = vmatpush1.msra.mxu0 0.0
    %4046 = vmatprep.subr.mxu0 0.0
    %4047 = vmatpush1.msra.mxu0 0.0
    %4048 = vmatprep.subr.mxu0 0.0
    %4049 = vmatpush1.msra.mxu0 0.0
    %4050 = vmatprep.subr.mxu0 0.0
    %4051 = vmatpush1.msra.mxu0 0.0
    %4052 = vmatprep.subr.mxu0 0.0
    %4053 = vmatpush1.msra.mxu0 0.0
    %4054 = vmatprep.subr.mxu0 0.0
    %4055 = vmatpush1.msra.mxu0 0.0
    %4056 = vmatprep.subr.mxu0 0.0
    %4057 = vmatpush1.msra.mxu0 0.0
    %4058 = vmatprep.subr.mxu0 0.0
    %4059 = vmatpush1.msra.mxu0 0.0
    %4060 = vmatprep.subr.mxu0 0.0
    %4061 = vmatpush1.msra.mxu0 0.0
    %4062 = vmatprep.subr.mxu0 0.0
    %4063 = vmatpush1.msra.mxu0 0.0
    %4064 = vmatprep.subr.mxu0 0.0
    %4065 = vmatpush1.msra.mxu0 0.0
    %4066 = vmatprep.subr.mxu0 0.0
    %4067 = vmatpush1.msra.mxu0 0.0
    %4068 = vmatprep.subr.mxu0 0.0
    %4069 = vmatpush1.msra.mxu0 0.0
    %4070 = vmatprep.subr.mxu0 0.0
    %4071 = vmatpush1.msra.mxu0 0.0
    %4072 = vmatprep.subr.mxu0 0.0
    %4073 = vmatpush1.msra.mxu0 0.0
    %4074 = vmatprep.subr.mxu0 0.0
    %4075 = vmatpush1.msra.mxu0 0.0
    %4076 = vmatprep.subr.mxu0 0.0
    %4077 = vmatpush1.msra.mxu0 0.0
    %4078 = vmatprep.subr.mxu0 0.0
    %4079 = vmatpush1.msra.mxu0 0.0
    %4080 = vmatprep.subr.mxu0 0.0
    %4081 = vmatpush1.msra.mxu0 0.0
    %4082 = vmatprep.subr.mxu0 0.0
    %4083 = vmatpush1.msra.mxu0 0.0
    %4084 = vmatprep.subr.mxu0 0.0
    %4085 = vmatpush1.msra.mxu0 0.0
    %4086 = vmatprep.subr.mxu0 0.0
    %4087 = vmatpush1.msra.mxu0 0.0
    %4088 = vmatprep.subr.mxu0 0.0
    %4089 = vmatpush1.msra.mxu0 0.0
    %4090 = vmatprep.subr.mxu0 0.0
    %4091 = vmatpush1.msra.mxu0 0.0
    %4092 = vmatprep.subr.mxu0 0.0
    %4093 = vmatpush1.msra.mxu0 0.0
    %4094 = vmatprep.subr.mxu0 0.0
    %4095 = vmatpush1.msra.mxu0 0.0
    %4096 = vmatprep.subr.mxu0 0.0
    %4097 = vmatpush1.msra.mxu0 0.0
    %4098 = vmatprep.subr.mxu0 0.0
    %4099 = vmatpush1.msra.mxu0 0.0
    %4100 = vmatprep.subr.mxu0 0.0
    %4101 = vmatpush1.msra.mxu0 0.0
    %4102 = vmatprep.subr.mxu0 0.0
    %4103 = vmatpush1.msra.mxu0 0.0
    %4104 = vmatprep.mubr.f32.mxu0 0.0
    %v4105 = vand.u32 %v3705, 4294901760
    %v4106 = vsub.f32 %v3705, %v4105
    %4107 = vmatmul.mubr.f32.gmra.mrb[0].mxu0 %v4106
    %v4108 = vpop.f32.mrb[0].mxu0
    %v4109 = vadd.f32 %v3979, %v4108
    %v4110 = vpop.f32.mrb[0].mxu0
    %4111 = vmatprep.mubr.f32.mxu0 0.0
    %v4112 = vand.u32 %v3708, 4294901760
    %v4113 = vsub.f32 %v3708, %v4112
    %4114 = vmatmul.mubr.f32.gmra.mrb[0].mxu0 %v4113
    %v4115 = vpop.f32.mrb[0].mxu0
    %v4116 = vadd.f32 %v3985, %v4115
    %v4117 = vpop.f32.mrb[0].mxu0
    %4118 = vmatprep.mubr.f32.mxu0 0.0
    %v4119 = vand.u32 %v3711, 4294901760
    %v4120 = vsub.f32 %v3711, %v4119
    %4121 = vmatmul.mubr.f32.gmra.mrb[0].mxu0 %v4120
    %v4122 = vpop.f32.mrb[0].mxu0
    %v4123 = vadd.f32 %v3991, %v4122
    %v4124 = vpop.f32.mrb[0].mxu0
    %4125 = vmatprep.mubr.f32.mxu0 0.0
    %v4126 = vand.u32 %v3714, 4294901760
    %v4127 = vsub.f32 %v3714, %v4126
    %4128 = vmatmul.mubr.f32.gmra.mrb[0].mxu0 %v4127
    %v4129 = vpop.f32.mrb[0].mxu0
    %v4130 = vadd.f32 %v3997, %v4129
    %v4131 = vpop.f32.mrb[0].mxu0
    %4132 = vmatprep.mubr.f32.mxu0 0.0
    %v4133 = vand.u32 %v3717, 4294901760
    %v4134 = vsub.f32 %v3717, %v4133
    %4135 = vmatmul.mubr.f32.gmra.mrb[0].mxu0 %v4134
    %v4136 = vpop.f32.mrb[0].mxu0
    %v4137 = vadd.f32 %v4003, %v4136
    %v4138 = vpop.f32.mrb[0].mxu0
    %4139 = vmatprep.mubr.f32.mxu0 0.0
    %v4140 = vand.u32 %v3720, 4294901760
    %v4141 = vsub.f32 %v3720, %v4140
    %4142 = vmatmul.mubr.f32.gmra.mrb[0].mxu0 %v4141
    %v4143 = vpop.f32.mrb[0].mxu0
    %v4144 = vadd.f32 %v4009, %v4143
    %v4145 = vpop.f32.mrb[0].mxu0
    %4146 = vmatprep.mubr.f32.mxu0 0.0
    %v4147 = vand.u32 %v3723, 4294901760
    %v4148 = vsub.f32 %v3723, %v4147
    %4149 = vmatmul.mubr.f32.gmra.mrb[0].mxu0 %v4148
    %v4150 = vpop.f32.mrb[0].mxu0
    %v4151 = vadd.f32 %v4015, %v4150
    %v4152 = vpop.f32.mrb[0].mxu0
    %4153 = vmatprep.mubr.f32.mxu0 0.0
    %v4154 = vand.u32 %v3726, 4294901760
    %v4155 = vsub.f32 %v3726, %v4154
    %4156 = vmatmul.mubr.f32.gmra.mrb[0].mxu0 %v4155
    %v4157 = vpop.f32.mrb[0].mxu0
    %v4158 = vadd.f32 %v4021, %v4157
    %v4159 = vpop.f32.mrb[0].mxu0
    %4160 = vmatprep.mubr.f32.mxu0 0.0
    %v4161 = vand.u32 %v3729, 4294901760
    %v4162 = vsub.f32 %v3729, %v4161
    %4163 = vmatmul.mubr.f32.gmra.mrb[0].mxu0 %v4162
    %v4164 = vpop.f32.mrb[0].mxu0
    %v4165 = vadd.f32 %v4027, %v4164
    %v4166 = vpop.f32.mrb[0].mxu0
    %4167 = vmatprep.mubr.f32.mxu0 0.0
    %v4168 = vand.u32 %v3732, 4294901760
    %v4169 = vsub.f32 %v3732, %v4168
    %4170 = vmatmul.mubr.f32.gmra.mrb[0].mxu0 %v4169
    %v4171 = vpop.f32.mrb[0].mxu0
    %v4172 = vadd.f32 %v4033, %v4171
    %v4173 = vpop.f32.mrb[0].mxu0
    %4174 = vdwg.mxu0
    %4175 = vmatprep.subr.mxu0 0.0
    %v4176 = vand.u32 %v81, 4294901760
    %4177 = vmatpush1.msra.mxu0 %v4176
    %4178 = vmatprep.subr.mxu0 0.0
    %v4179 = vand.u32 %v82, 4294901760
    %4180 = vmatpush1.msra.mxu0 %v4179
    %4181 = vmatprep.subr.mxu0 0.0
    %4182 = vmatpush1.msra.mxu0 0.0
    %4183 = vmatprep.subr.mxu0 0.0
    %4184 = vmatpush1.msra.mxu0 0.0
    %4185 = vmatprep.subr.mxu0 0.0
    %4186 = vmatpush1.msra.mxu0 0.0
    %4187 = vmatprep.subr.mxu0 0.0
    %4188 = vmatpush1.msra.mxu0 0.0
    %4189 = vmatprep.subr.mxu0 0.0
    %4190 = vmatpush1.msra.mxu0 0.0
    %4191 = vmatprep.subr.mxu0 0.0
    %4192 = vmatpush1.msra.mxu0 0.0
    %4193 = vmatprep.subr.mxu0 0.0
    %4194 = vmatpush1.msra.mxu0 0.0
    %4195 = vmatprep.subr.mxu0 0.0
    %4196 = vmatpush1.msra.mxu0 0.0
    %4197 = vmatprep.subr.mxu0 0.0
    %4198 = vmatpush1.msra.mxu0 0.0
    %4199 = vmatprep.subr.mxu0 0.0
    %4200 = vmatpush1.msra.mxu0 0.0
    %4201 = vmatprep.subr.mxu0 0.0
    %4202 = vmatpush1.msra.mxu0 0.0
    %4203 = vmatprep.subr.mxu0 0.0
    %4204 = vmatpush1.msra.mxu0 0.0
    %4205 = vmatprep.subr.mxu0 0.0
    %4206 = vmatpush1.msra.mxu0 0.0
    %4207 = vmatprep.subr.mxu0 0.0
    %4208 = vmatpush1.msra.mxu0 0.0
    %4209 = vmatprep.subr.mxu0 0.0
    %4210 = vmatpush1.msra.mxu0 0.0
    %4211 = vmatprep.subr.mxu0 0.0
    %4212 = vmatpush1.msra.mxu0 0.0
    %4213 = vmatprep.subr.mxu0 0.0
    %4214 = vmatpush1.msra.mxu0 0.0
    %4215 = vmatprep.subr.mxu0 0.0
    %4216 = vmatpush1.msra.mxu0 0.0
    %4217 = vmatprep.subr.mxu0 0.0
    %4218 = vmatpush1.msra.mxu0 0.0
    %4219 = vmatprep.subr.mxu0 0.0
    %4220 = vmatpush1.msra.mxu0 0.0
    %4221 = vmatprep.subr.mxu0 0.0
    %4222 = vmatpush1.msra.mxu0 0.0
    %4223 = vmatprep.subr.mxu0 0.0
    %4224 = vmatpush1.msra.mxu0 0.0
    %4225 = vmatprep.subr.mxu0 0.0
    %4226 = vmatpush1.msra.mxu0 0.0
    %4227 = vmatprep.subr.mxu0 0.0
    %4228 = vmatpush1.msra.mxu0 0.0
    %4229 = vmatprep.subr.mxu0 0.0
    %4230 = vmatpush1.msra.mxu0 0.0
    %4231 = vmatprep.subr.mxu0 0.0
    %4232 = vmatpush1.msra.mxu0 0.0
    %4233 = vmatprep.subr.mxu0 0.0
    %4234 = vmatpush1.msra.mxu0 0.0
    %4235 = vmatprep.subr.mxu0 0.0
    %4236 = vmatpush1.msra.mxu0 0.0
    %4237 = vmatprep.subr.mxu0 0.0
    %4238 = vmatpush1.msra.mxu0 0.0
    %4239 = vmatprep.subr.mxu0 0.0
    %4240 = vmatpush1.msra.mxu0 0.0
    %4241 = vmatprep.mubr.f32.mxu0 0.0
    %v4242 = vand.u32 %v3705, 4294901760
    %v4243 = vsub.f32 %v3705, %v4242
    %v4244 = vand.u32 %v4243, 4294901760
    %4245 = vmatmul.mubr.f32.gmra.mrb[0].mxu0 %v4244
    %v4246 = vpop.f32.mrb[0].mxu0
    %v4247 = vadd.f32 %v4109, %v4246
    %v4248 = vpop.f32.mrb[0].mxu0
    %4249 = vmatprep.mubr.f32.mxu0 0.0
    %v4250 = vand.u32 %v3708, 4294901760
    %v4251 = vsub.f32 %v3708, %v4250
    %v4252 = vand.u32 %v4251, 4294901760
    %4253 = vmatmul.mubr.f32.gmra.mrb[0].mxu0 %v4252
    %v4254 = vpop.f32.mrb[0].mxu0
    %v4255 = vadd.f32 %v4116, %v4254
    %v4256 = vpop.f32.mrb[0].mxu0
    %4257 = vmatprep.mubr.f32.mxu0 0.0
    %v4258 = vand.u32 %v3711, 4294901760
    %v4259 = vsub.f32 %v3711, %v4258
    %v4260 = vand.u32 %v4259, 4294901760
    %4261 = vmatmul.mubr.f32.gmra.mrb[0].mxu0 %v4260
    %v4262 = vpop.f32.mrb[0].mxu0
    %v4263 = vadd.f32 %v4123, %v4262
    %v4264 = vpop.f32.mrb[0].mxu0
    %4265 = vmatprep.mubr.f32.mxu0 0.0
    %v4266 = vand.u32 %v3714, 4294901760
    %v4267 = vsub.f32 %v3714, %v4266
    %v4268 = vand.u32 %v4267, 4294901760
    %4269 = vmatmul.mubr.f32.gmra.mrb[0].mxu0 %v4268
    %v4270 = vpop.f32.mrb[0].mxu0
    %v4271 = vadd.f32 %v4130, %v4270
    %v4272 = vpop.f32.mrb[0].mxu0
    %4273 = vmatprep.mubr.f32.mxu0 0.0
    %v4274 = vand.u32 %v3717, 4294901760
    %v4275 = vsub.f32 %v3717, %v4274
    %v4276 = vand.u32 %v4275, 4294901760
    %4277 = vmatmul.mubr.f32.gmra.mrb[0].mxu0 %v4276
    %v4278 = vpop.f32.mrb[0].mxu0
    %v4279 = vadd.f32 %v4137, %v4278
    %v4280 = vpop.f32.mrb[0].mxu0
    %4281 = vmatprep.mubr.f32.mxu0 0.0
    %v4282 = vand.u32 %v3720, 4294901760
    %v4283 = vsub.f32 %v3720, %v4282
    %v4284 = vand.u32 %v4283, 4294901760
    %4285 = vmatmul.mubr.f32.gmra.mrb[0].mxu0 %v4284
    %v4286 = vpop.f32.mrb[0].mxu0
    %v4287 = vadd.f32 %v4144, %v4286
    %v4288 = vpop.f32.mrb[0].mxu0
    %4289 = vmatprep.mubr.f32.mxu0 0.0
    %v4290 = vand.u32 %v3723, 4294901760
    %v4291 = vsub.f32 %v3723, %v4290
    %v4292 = vand.u32 %v4291, 4294901760
    %4293 = vmatmul.mubr.f32.gmra.mrb[0].mxu0 %v4292
    %v4294 = vpop.f32.mrb[0].mxu0
    %v4295 = vadd.f32 %v4151, %v4294
    %v4296 = vpop.f32.mrb[0].mxu0
    %4297 = vmatprep.mubr.f32.mxu0 0.0
    %v4298 = vand.u32 %v3726, 4294901760
    %v4299 = vsub.f32 %v3726, %v4298
    %v4300 = vand.u32 %v4299, 4294901760
    %4301 = vmatmul.mubr.f32.gmra.mrb[0].mxu0 %v4300
    %v4302 = vpop.f32.mrb[0].mxu0
    %v4303 = vadd.f32 %v4158, %v4302
    %v4304 = vpop.f32.mrb[0].mxu0
    %4305 = vmatprep.mubr.f32.mxu0 0.0
    %v4306 = vand.u32 %v3729, 4294901760
    %v4307 = vsub.f32 %v3729, %v4306
    %v4308 = vand.u32 %v4307, 4294901760
    %4309 = vmatmul.mubr.f32.gmra.mrb[0].mxu0 %v4308
    %v4310 = vpop.f32.mrb[0].mxu0
    %v4311 = vadd.f32 %v4165, %v4310
    %v4312 = vpop.f32.mrb[0].mxu0
    %4313 = vmatprep.mubr.f32.mxu0 0.0
    %v4314 = vand.u32 %v3732, 4294901760
    %v4315 = vsub.f32 %v3732, %v4314
    %v4316 = vand.u32 %v4315, 4294901760
    %4317 = vmatmul.mubr.f32.gmra.mrb[0].mxu0 %v4316
    %v4318 = vpop.f32.mrb[0].mxu0
    %v4319 = vadd.f32 %v4172, %v4318
    %v4320 = vpop.f32.mrb[0].mxu0
    %4321 = vdwg.mxu0
    %4322 = vmatprep.subr.mxu0 0.0
    %v4323 = vand.u32 %v81, 4294901760
    %v4324 = vsub.f32 %v81, %v4323
    %v4325 = vand.u32 %v4324, 4294901760
    %4326 = vmatpush1.msra.mxu0 %v4325
    %4327 = vmatprep.subr.mxu0 0.0
    %v4328 = vand.u32 %v82, 4294901760
    %v4329 = vsub.f32 %v82, %v4328
    %v4330 = vand.u32 %v4329, 4294901760
    %4331 = vmatpush1.msra.mxu0 %v4330
    %4332 = vmatprep.subr.mxu0 0.0
    %4333 = vmatpush1.msra.mxu0 0.0
    %4334 = vmatprep.subr.mxu0 0.0
    %4335 = vmatpush1.msra.mxu0 0.0
    %4336 = vmatprep.subr.mxu0 0.0
    %4337 = vmatpush1.msra.mxu0 0.0
    %4338 = vmatprep.subr.mxu0 0.0
    %4339 = vmatpush1.msra.mxu0 0.0
    %4340 = vmatprep.subr.mxu0 0.0
    %4341 = vmatpush1.msra.mxu0 0.0
    %4342 = vmatprep.subr.mxu0 0.0
    %4343 = vmatpush1.msra.mxu0 0.0
    %4344 = vmatprep.subr.mxu0 0.0
    %4345 = vmatpush1.msra.mxu0 0.0
    %4346 = vmatprep.subr.mxu0 0.0
    %4347 = vmatpush1.msra.mxu0 0.0
    %4348 = vmatprep.subr.mxu0 0.0
    %4349 = vmatpush1.msra.mxu0 0.0
    %4350 = vmatprep.subr.mxu0 0.0
    %4351 = vmatpush1.msra.mxu0 0.0
    %4352 = vmatprep.subr.mxu0 0.0
    %4353 = vmatpush1.msra.mxu0 0.0
    %4354 = vmatprep.subr.mxu0 0.0
    %4355 = vmatpush1.msra.mxu0 0.0
    %4356 = vmatprep.subr.mxu0 0.0
    %4357 = vmatpush1.msra.mxu0 0.0
    %4358 = vmatprep.subr.mxu0 0.0
    %4359 = vmatpush1.msra.mxu0 0.0
    %4360 = vmatprep.subr.mxu0 0.0
    %4361 = vmatpush1.msra.mxu0 0.0
    %4362 = vmatprep.subr.mxu0 0.0
    %4363 = vmatpush1.msra.mxu0 0.0
    %4364 = vmatprep.subr.mxu0 0.0
    %4365 = vmatpush1.msra.mxu0 0.0
    %4366 = vmatprep.subr.mxu0 0.0
    %4367 = vmatpush1.msra.mxu0 0.0
    %4368 = vmatprep.subr.mxu0 0.0
    %4369 = vmatpush1.msra.mxu0 0.0
    %4370 = vmatprep.subr.mxu0 0.0
    %4371 = vmatpush1.msra.mxu0 0.0
    %4372 = vmatprep.subr.mxu0 0.0
    %4373 = vmatpush1.msra.mxu0 0.0
    %4374 = vmatprep.subr.mxu0 0.0
    %4375 = vmatpush1.msra.mxu0 0.0
    %4376 = vmatprep.subr.mxu0 0.0
    %4377 = vmatpush1.msra.mxu0 0.0
    %4378 = vmatprep.subr.mxu0 0.0
    %4379 = vmatpush1.msra.mxu0 0.0
    %4380 = vmatprep.subr.mxu0 0.0
    %4381 = vmatpush1.msra.mxu0 0.0
    %4382 = vmatprep.subr.mxu0 0.0
    %4383 = vmatpush1.msra.mxu0 0.0
    %4384 = vmatprep.subr.mxu0 0.0
    %4385 = vmatpush1.msra.mxu0 0.0
    %4386 = vmatprep.subr.mxu0 0.0
    %4387 = vmatpush1.msra.mxu0 0.0
    %4388 = vmatprep.subr.mxu0 0.0
    %4389 = vmatpush1.msra.mxu0 0.0
    %4390 = vmatprep.subr.mxu0 0.0
    %4391 = vmatpush1.msra.mxu0 0.0
    %4392 = vmatprep.mubr.f32.mxu0 0.0
    %v4393 = vand.u32 %v3705, 4294901760
    %4394 = vmatmul.mubr.f32.gmra.mrb[0].mxu0 %v4393
    %v4395 = vpop.f32.mrb[0].mxu0
    %v4396 = vadd.f32 %v4247, %v4395
    %v4397 = vpop.f32.mrb[0].mxu0
    %4398 = vmatprep.mubr.f32.mxu0 0.0
    %v4399 = vand.u32 %v3708, 4294901760
    %4400 = vmatmul.mubr.f32.gmra.mrb[0].mxu0 %v4399
    %v4401 = vpop.f32.mrb[0].mxu0
    %v4402 = vadd.f32 %v4255, %v4401
    %v4403 = vpop.f32.mrb[0].mxu0
    %4404 = vmatprep.mubr.f32.mxu0 0.0
    %v4405 = vand.u32 %v3711, 4294901760
    %4406 = vmatmul.mubr.f32.gmra.mrb[0].mxu0 %v4405
    %v4407 = vpop.f32.mrb[0].mxu0
    %v4408 = vadd.f32 %v4263, %v4407
    %v4409 = vpop.f32.mrb[0].mxu0
    %4410 = vmatprep.mubr.f32.mxu0 0.0
    %v4411 = vand.u32 %v3714, 4294901760
    %4412 = vmatmul.mubr.f32.gmra.mrb[0].mxu0 %v4411
    %v4413 = vpop.f32.mrb[0].mxu0
    %v4414 = vadd.f32 %v4271, %v4413
    %v4415 = vpop.f32.mrb[0].mxu0
    %4416 = vmatprep.mubr.f32.mxu0 0.0
    %v4417 = vand.u32 %v3717, 4294901760
    %4418 = vmatmul.mubr.f32.gmra.mrb[0].mxu0 %v4417
    %v4419 = vpop.f32.mrb[0].mxu0
    %v4420 = vadd.f32 %v4279, %v4419
    %v4421 = vpop.f32.mrb[0].mxu0
    %4422 = vmatprep.mubr.f32.mxu0 0.0
    %v4423 = vand.u32 %v3720, 4294901760
    %4424 = vmatmul.mubr.f32.gmra.mrb[0].mxu0 %v4423
    %v4425 = vpop.f32.mrb[0].mxu0
    %v4426 = vadd.f32 %v4287, %v4425
    %v4427 = vpop.f32.mrb[0].mxu0
    %4428 = vmatprep.mubr.f32.mxu0 0.0
    %v4429 = vand.u32 %v3723, 4294901760
    %4430 = vmatmul.mubr.f32.gmra.mrb[0].mxu0 %v4429
    %v4431 = vpop.f32.mrb[0].mxu0
    %v4432 = vadd.f32 %v4295, %v4431
    %v4433 = vpop.f32.mrb[0].mxu0
    %4434 = vmatprep.mubr.f32.mxu0 0.0
    %v4435 = vand.u32 %v3726, 4294901760
    %4436 = vmatmul.mubr.f32.gmra.mrb[0].mxu0 %v4435
    %v4437 = vpop.f32.mrb[0].mxu0
    %v4438 = vadd.f32 %v4303, %v4437
    %v4439 = vpop.f32.mrb[0].mxu0
    %4440 = vmatprep.mubr.f32.mxu0 0.0
    %v4441 = vand.u32 %v3729, 4294901760
    %4442 = vmatmul.mubr.f32.gmra.mrb[0].mxu0 %v4441
    %v4443 = vpop.f32.mrb[0].mxu0
    %v4444 = vadd.f32 %v4311, %v4443
    %v4445 = vpop.f32.mrb[0].mxu0
    %4446 = vmatprep.mubr.f32.mxu0 0.0
    %v4447 = vand.u32 %v3732, 4294901760
    %4448 = vmatmul.mubr.f32.gmra.mrb[0].mxu0 %v4447
    %v4449 = vpop.f32.mrb[0].mxu0
    %v4450 = vadd.f32 %v4319, %v4449
    %v4451 = vpop.f32.mrb[0].mxu0
    %4452 = vdwg.mxu0
    %4453 = vmatprep.subr.mxu0 0.0
    %v4454 = vand.u32 %v81, 4294901760
    %4455 = vmatpush1.msra.mxu0 %v4454
    %4456 = vmatprep.subr.mxu0 0.0
    %v4457 = vand.u32 %v82, 4294901760
    %4458 = vmatpush1.msra.mxu0 %v4457
    %4459 = vmatprep.subr.mxu0 0.0
    %4460 = vmatpush1.msra.mxu0 0.0
    %4461 = vmatprep.subr.mxu0 0.0
    %4462 = vmatpush1.msra.mxu0 0.0
    %4463 = vmatprep.subr.mxu0 0.0
    %4464 = vmatpush1.msra.mxu0 0.0
    %4465 = vmatprep.subr.mxu0 0.0
    %4466 = vmatpush1.msra.mxu0 0.0
    %4467 = vmatprep.subr.mxu0 0.0
    %4468 = vmatpush1.msra.mxu0 0.0
    %4469 = vmatprep.subr.mxu0 0.0
    %4470 = vmatpush1.msra.mxu0 0.0
    %4471 = vmatprep.subr.mxu0 0.0
    %4472 = vmatpush1.msra.mxu0 0.0
    %4473 = vmatprep.subr.mxu0 0.0
    %4474 = vmatpush1.msra.mxu0 0.0
    %4475 = vmatprep.subr.mxu0 0.0
    %4476 = vmatpush1.msra.mxu0 0.0
    %4477 = vmatprep.subr.mxu0 0.0
    %4478 = vmatpush1.msra.mxu0 0.0
    %4479 = vmatprep.subr.mxu0 0.0
    %4480 = vmatpush1.msra.mxu0 0.0
    %4481 = vmatprep.subr.mxu0 0.0
    %4482 = vmatpush1.msra.mxu0 0.0
    %4483 = vmatprep.subr.mxu0 0.0
    %4484 = vmatpush1.msra.mxu0 0.0
    %4485 = vmatprep.subr.mxu0 0.0
    %4486 = vmatpush1.msra.mxu0 0.0
    %4487 = vmatprep.subr.mxu0 0.0
    %4488 = vmatpush1.msra.mxu0 0.0
    %4489 = vmatprep.subr.mxu0 0.0
    %4490 = vmatpush1.msra.mxu0 0.0
    %4491 = vmatprep.subr.mxu0 0.0
    %4492 = vmatpush1.msra.mxu0 0.0
    %4493 = vmatprep.subr.mxu0 0.0
    %4494 = vmatpush1.msra.mxu0 0.0
    %4495 = vmatprep.subr.mxu0 0.0
    %4496 = vmatpush1.msra.mxu0 0.0
    %4497 = vmatprep.subr.mxu0 0.0
    %4498 = vmatpush1.msra.mxu0 0.0
    %4499 = vmatprep.subr.mxu0 0.0
    %4500 = vmatpush1.msra.mxu0 0.0
    %4501 = vmatprep.subr.mxu0 0.0
    %4502 = vmatpush1.msra.mxu0 0.0
    %4503 = vmatprep.subr.mxu0 0.0
    %4504 = vmatpush1.msra.mxu0 0.0
    %4505 = vmatprep.subr.mxu0 0.0
    %4506 = vmatpush1.msra.mxu0 0.0
    %4507 = vmatprep.subr.mxu0 0.0
    %4508 = vmatpush1.msra.mxu0 0.0
    %4509 = vmatprep.subr.mxu0 0.0
    %4510 = vmatpush1.msra.mxu0 0.0
    %4511 = vmatprep.subr.mxu0 0.0
    %4512 = vmatpush1.msra.mxu0 0.0
    %4513 = vmatprep.subr.mxu0 0.0
    %4514 = vmatpush1.msra.mxu0 0.0
    %4515 = vmatprep.subr.mxu0 0.0
    %4516 = vmatpush1.msra.mxu0 0.0
    %4517 = vmatprep.subr.mxu0 0.0
    %4518 = vmatpush1.msra.mxu0 0.0
    %4519 = vmatprep.mubr.f32.mxu0 0.0
    %v4520 = vand.u32 %v3705, 4294901760
    %4521 = vmatmul.mubr.f32.gmra.mrb[0].mxu0 %v4520
    %v4522 = vpop.f32.mrb[0].mxu0
    %v4523 = vadd.f32 %v4396, %v4522
    %v4524 = vpop.f32.mrb[0].mxu0
    %4525 = vmatprep.mubr.f32.mxu0 0.0
    %v4526 = vand.u32 %v3708, 4294901760
    %4527 = vmatmul.mubr.f32.gmra.mrb[0].mxu0 %v4526
    %v4528 = vpop.f32.mrb[0].mxu0
    %v4529 = vadd.f32 %v4402, %v4528
    %v4530 = vpop.f32.mrb[0].mxu0
    %4531 = vmatprep.mubr.f32.mxu0 0.0
    %v4532 = vand.u32 %v3711, 4294901760
    %4533 = vmatmul.mubr.f32.gmra.mrb[0].mxu0 %v4532
    %v4534 = vpop.f32.mrb[0].mxu0
    %v4535 = vadd.f32 %v4408, %v4534
    %v4536 = vpop.f32.mrb[0].mxu0
    %4537 = vmatprep.mubr.f32.mxu0 0.0
    %v4538 = vand.u32 %v3714, 4294901760
    %4539 = vmatmul.mubr.f32.gmra.mrb[0].mxu0 %v4538
    %v4540 = vpop.f32.mrb[0].mxu0
    %v4541 = vadd.f32 %v4414, %v4540
    %v4542 = vpop.f32.mrb[0].mxu0
    %4543 = vmatprep.mubr.f32.mxu0 0.0
    %v4544 = vand.u32 %v3717, 4294901760
    %4545 = vmatmul.mubr.f32.gmra.mrb[0].mxu0 %v4544
    %v4546 = vpop.f32.mrb[0].mxu0
    %v4547 = vadd.f32 %v4420, %v4546
    %v4548 = vpop.f32.mrb[0].mxu0
    %4549 = vmatprep.mubr.f32.mxu0 0.0
    %v4550 = vand.u32 %v3720, 4294901760
    %4551 = vmatmul.mubr.f32.gmra.mrb[0].mxu0 %v4550
    %v4552 = vpop.f32.mrb[0].mxu0
    %v4553 = vadd.f32 %v4426, %v4552
    %v4554 = vpop.f32.mrb[0].mxu0
    %4555 = vmatprep.mubr.f32.mxu0 0.0
    %v4556 = vand.u32 %v3723, 4294901760
    %4557 = vmatmul.mubr.f32.gmra.mrb[0].mxu0 %v4556
    %v4558 = vpop.f32.mrb[0].mxu0
    %v4559 = vadd.f32 %v4432, %v4558
    %v4560 = vpop.f32.mrb[0].mxu0
    %4561 = vmatprep.mubr.f32.mxu0 0.0
    %v4562 = vand.u32 %v3726, 4294901760
    %4563 = vmatmul.mubr.f32.gmra.mrb[0].mxu0 %v4562
    %v4564 = vpop.f32.mrb[0].mxu0
    %v4565 = vadd.f32 %v4438, %v4564
    %v4566 = vpop.f32.mrb[0].mxu0
    %4567 = vmatprep.mubr.f32.mxu0 0.0
    %v4568 = vand.u32 %v3729, 4294901760
    %4569 = vmatmul.mubr.f32.gmra.mrb[0].mxu0 %v4568
    %v4570 = vpop.f32.mrb[0].mxu0
    %v4571 = vadd.f32 %v4444, %v4570
    %v4572 = vpop.f32.mrb[0].mxu0
    %4573 = vmatprep.mubr.f32.mxu0 0.0
    %v4574 = vand.u32 %v3732, 4294901760
    %4575 = vmatmul.mubr.f32.gmra.mrb[0].mxu0 %v4574
    %v4576 = vpop.f32.mrb[0].mxu0
    %v4577 = vadd.f32 %v4450, %v4576
    %v4578 = vpop.f32.mrb[0].mxu0
    %4579 = vdwg.mxu0
    %v4580 = vadd.f32 %v3694, %v4523
    %v4581 = vadd.f32 %v3695, %v4529
    %v4582 = vadd.f32 %v3696, %v4535
    %v4583 = vadd.f32 %v3697, %v4541
    %v4584 = vadd.f32 %v3698, %v4547
    %v4585 = vadd.f32 %v3699, %v4553
    %v4586 = vadd.f32 %v3700, %v4559
    %v4587 = vadd.f32 %v3701, %v4565
    %v4588 = vadd.f32 %v3702, %v4571
    %v4589 = vadd.f32 %v3703, %v4577
    %v4591 = vsel %vm179, %v109, 0
    %v4594 = vsel %vm179, %v110, 0
    %v4597 = vsel %vm179, %v125, 0
    %v4600 = vsel %vm179, %v126, 0
    %v4603 = vsel %vm179, %v141, 0
    %v4606 = vsel %vm179, %v142, 0
    %v4609 = vsel %vm179, %v157, 0
    %v4612 = vsel %vm179, %v158, 0
    %v4615 = vsel %vm179, %v173, 0
    %v4618 = vsel %vm179, %v174, 0
    %4620 = vmatprep.subr.mxu0 0.0
    %v4621 = vand.u32 %v83, 4294901760
    %4622 = vmatpush1.msra.mxu0 %v4621
    %4623 = vmatprep.subr.mxu0 0.0
    %v4624 = vand.u32 %v84, 4294901760
    %4625 = vmatpush1.msra.mxu0 %v4624
    %4626 = vmatprep.subr.mxu0 0.0
    %4627 = vmatpush1.msra.mxu0 0.0
    %4628 = vmatprep.subr.mxu0 0.0
    %4629 = vmatpush1.msra.mxu0 0.0
    %4630 = vmatprep.subr.mxu0 0.0
    %4631 = vmatpush1.msra.mxu0 0.0
    %4632 = vmatprep.subr.mxu0 0.0
    %4633 = vmatpush1.msra.mxu0 0.0
    %4634 = vmatprep.subr.mxu0 0.0
    %4635 = vmatpush1.msra.mxu0 0.0
    %4636 = vmatprep.subr.mxu0 0.0
    %4637 = vmatpush1.msra.mxu0 0.0
    %4638 = vmatprep.subr.mxu0 0.0
    %4639 = vmatpush1.msra.mxu0 0.0
    %4640 = vmatprep.subr.mxu0 0.0
    %4641 = vmatpush1.msra.mxu0 0.0
    %4642 = vmatprep.subr.mxu0 0.0
    %4643 = vmatpush1.msra.mxu0 0.0
    %4644 = vmatprep.subr.mxu0 0.0
    %4645 = vmatpush1.msra.mxu0 0.0
    %4646 = vmatprep.subr.mxu0 0.0
    %4647 = vmatpush1.msra.mxu0 0.0
    %4648 = vmatprep.subr.mxu0 0.0
    %4649 = vmatpush1.msra.mxu0 0.0
    %4650 = vmatprep.subr.mxu0 0.0
    %4651 = vmatpush1.msra.mxu0 0.0
    %4652 = vmatprep.subr.mxu0 0.0
    %4653 = vmatpush1.msra.mxu0 0.0
    %4654 = vmatprep.subr.mxu0 0.0
    %4655 = vmatpush1.msra.mxu0 0.0
    %4656 = vmatprep.subr.mxu0 0.0
    %4657 = vmatpush1.msra.mxu0 0.0
    %4658 = vmatprep.subr.mxu0 0.0
    %4659 = vmatpush1.msra.mxu0 0.0
    %4660 = vmatprep.subr.mxu0 0.0
    %4661 = vmatpush1.msra.mxu0 0.0
    %4662 = vmatprep.subr.mxu0 0.0
    %4663 = vmatpush1.msra.mxu0 0.0
    %4664 = vmatprep.subr.mxu0 0.0
    %4665 = vmatpush1.msra.mxu0 0.0
    %4666 = vmatprep.subr.mxu0 0.0
    %4667 = vmatpush1.msra.mxu0 0.0
    %4668 = vmatprep.subr.mxu0 0.0
    %4669 = vmatpush1.msra.mxu0 0.0
    %4670 = vmatprep.subr.mxu0 0.0
    %4671 = vmatpush1.msra.mxu0 0.0
    %4672 = vmatprep.subr.mxu0 0.0
    %4673 = vmatpush1.msra.mxu0 0.0
    %4674 = vmatprep.subr.mxu0 0.0
    %4675 = vmatpush1.msra.mxu0 0.0
    %4676 = vmatprep.subr.mxu0 0.0
    %4677 = vmatpush1.msra.mxu0 0.0
    %4678 = vmatprep.subr.mxu0 0.0
    %4679 = vmatpush1.msra.mxu0 0.0
    %4680 = vmatprep.subr.mxu0 0.0
    %4681 = vmatpush1.msra.mxu0 0.0
    %4682 = vmatprep.subr.mxu0 0.0
    %4683 = vmatpush1.msra.mxu0 0.0
    %4684 = vmatprep.subr.mxu0 0.0
    %4685 = vmatpush1.msra.mxu0 0.0
    %4686 = vmatprep.mubr.f32.mxu0 0.0
    %v4687 = vand.u32 %v4591, 4294901760
    %v4688 = vsub.f32 %v4591, %v4687
    %v4689 = vand.u32 %v4688, 4294901760
    %v4690 = vsub.f32 %v4688, %v4689
    %v4691 = vand.u32 %v4690, 4294901760
    %4692 = vmatmul.mubr.f32.gmra.mrb[0].mxu0 %v4691
    %v4693 = vpop.f32.mrb[0].mxu0
    %v4694 = vadd.f32 0.0, %v4693
    %v4695 = vpop.f32.mrb[0].mxu0
    %4696 = vmatprep.mubr.f32.mxu0 0.0
    %v4697 = vand.u32 %v4594, 4294901760
    %v4698 = vsub.f32 %v4594, %v4697
    %v4699 = vand.u32 %v4698, 4294901760
    %v4700 = vsub.f32 %v4698, %v4699
    %v4701 = vand.u32 %v4700, 4294901760
    %4702 = vmatmul.mubr.f32.gmra.mrb[0].mxu0 %v4701
    %v4703 = vpop.f32.mrb[0].mxu0
    %v4704 = vadd.f32 0.0, %v4703
    %v4705 = vpop.f32.mrb[0].mxu0
    %4706 = vmatprep.mubr.f32.mxu0 0.0
    %v4707 = vand.u32 %v4597, 4294901760
    %v4708 = vsub.f32 %v4597, %v4707
    %v4709 = vand.u32 %v4708, 4294901760
    %v4710 = vsub.f32 %v4708, %v4709
    %v4711 = vand.u32 %v4710, 4294901760
    %4712 = vmatmul.mubr.f32.gmra.mrb[0].mxu0 %v4711
    %v4713 = vpop.f32.mrb[0].mxu0
    %v4714 = vadd.f32 0.0, %v4713
    %v4715 = vpop.f32.mrb[0].mxu0
    %4716 = vmatprep.mubr.f32.mxu0 0.0
    %v4717 = vand.u32 %v4600, 4294901760
    %v4718 = vsub.f32 %v4600, %v4717
    %v4719 = vand.u32 %v4718, 4294901760
    %v4720 = vsub.f32 %v4718, %v4719
    %v4721 = vand.u32 %v4720, 4294901760
    %4722 = vmatmul.mubr.f32.gmra.mrb[0].mxu0 %v4721
    %v4723 = vpop.f32.mrb[0].mxu0
    %v4724 = vadd.f32 0.0, %v4723
    %v4725 = vpop.f32.mrb[0].mxu0
    %4726 = vmatprep.mubr.f32.mxu0 0.0
    %v4727 = vand.u32 %v4603, 4294901760
    %v4728 = vsub.f32 %v4603, %v4727
    %v4729 = vand.u32 %v4728, 4294901760
    %v4730 = vsub.f32 %v4728, %v4729
    %v4731 = vand.u32 %v4730, 4294901760
    %4732 = vmatmul.mubr.f32.gmra.mrb[0].mxu0 %v4731
    %v4733 = vpop.f32.mrb[0].mxu0
    %v4734 = vadd.f32 0.0, %v4733
    %v4735 = vpop.f32.mrb[0].mxu0
    %4736 = vmatprep.mubr.f32.mxu0 0.0
    %v4737 = vand.u32 %v4606, 4294901760
    %v4738 = vsub.f32 %v4606, %v4737
    %v4739 = vand.u32 %v4738, 4294901760
    %v4740 = vsub.f32 %v4738, %v4739
    %v4741 = vand.u32 %v4740, 4294901760
    %4742 = vmatmul.mubr.f32.gmra.mrb[0].mxu0 %v4741
    %v4743 = vpop.f32.mrb[0].mxu0
    %v4744 = vadd.f32 0.0, %v4743
    %v4745 = vpop.f32.mrb[0].mxu0
    %4746 = vmatprep.mubr.f32.mxu0 0.0
    %v4747 = vand.u32 %v4609, 4294901760
    %v4748 = vsub.f32 %v4609, %v4747
    %v4749 = vand.u32 %v4748, 4294901760
    %v4750 = vsub.f32 %v4748, %v4749
    %v4751 = vand.u32 %v4750, 4294901760
    %4752 = vmatmul.mubr.f32.gmra.mrb[0].mxu0 %v4751
    %v4753 = vpop.f32.mrb[0].mxu0
    %v4754 = vadd.f32 0.0, %v4753
    %v4755 = vpop.f32.mrb[0].mxu0
    %4756 = vmatprep.mubr.f32.mxu0 0.0
    %v4757 = vand.u32 %v4612, 4294901760
    %v4758 = vsub.f32 %v4612, %v4757
    %v4759 = vand.u32 %v4758, 4294901760
    %v4760 = vsub.f32 %v4758, %v4759
    %v4761 = vand.u32 %v4760, 4294901760
    %4762 = vmatmul.mubr.f32.gmra.mrb[0].mxu0 %v4761
    %v4763 = vpop.f32.mrb[0].mxu0
    %v4764 = vadd.f32 0.0, %v4763
    %v4765 = vpop.f32.mrb[0].mxu0
    %4766 = vmatprep.mubr.f32.mxu0 0.0
    %v4767 = vand.u32 %v4615, 4294901760
    %v4768 = vsub.f32 %v4615, %v4767
    %v4769 = vand.u32 %v4768, 4294901760
    %v4770 = vsub.f32 %v4768, %v4769
    %v4771 = vand.u32 %v4770, 4294901760
    %4772 = vmatmul.mubr.f32.gmra.mrb[0].mxu0 %v4771
    %v4773 = vpop.f32.mrb[0].mxu0
    %v4774 = vadd.f32 0.0, %v4773
    %v4775 = vpop.f32.mrb[0].mxu0
    %4776 = vmatprep.mubr.f32.mxu0 0.0
    %v4777 = vand.u32 %v4618, 4294901760
    %v4778 = vsub.f32 %v4618, %v4777
    %v4779 = vand.u32 %v4778, 4294901760
    %v4780 = vsub.f32 %v4778, %v4779
    %v4781 = vand.u32 %v4780, 4294901760
    %4782 = vmatmul.mubr.f32.gmra.mrb[0].mxu0 %v4781
    %v4783 = vpop.f32.mrb[0].mxu0
    %v4784 = vadd.f32 0.0, %v4783
    %v4785 = vpop.f32.mrb[0].mxu0
    %4786 = vdwg.mxu0
    %4787 = vmatprep.subr.mxu0 0.0
    %v4788 = vand.u32 %v83, 4294901760
    %v4789 = vsub.f32 %v83, %v4788
    %v4790 = vand.u32 %v4789, 4294901760
    %v4791 = vsub.f32 %v4789, %v4790
    %v4792 = vand.u32 %v4791, 4294901760
    %4793 = vmatpush1.msra.mxu0 %v4792
    %4794 = vmatprep.subr.mxu0 0.0
    %v4795 = vand.u32 %v84, 4294901760
    %v4796 = vsub.f32 %v84, %v4795
    %v4797 = vand.u32 %v4796, 4294901760
    %v4798 = vsub.f32 %v4796, %v4797
    %v4799 = vand.u32 %v4798, 4294901760
    %4800 = vmatpush1.msra.mxu0 %v4799
    %4801 = vmatprep.subr.mxu0 0.0
    %4802 = vmatpush1.msra.mxu0 0.0
    %4803 = vmatprep.subr.mxu0 0.0
    %4804 = vmatpush1.msra.mxu0 0.0
    %4805 = vmatprep.subr.mxu0 0.0
    %4806 = vmatpush1.msra.mxu0 0.0
    %4807 = vmatprep.subr.mxu0 0.0
    %4808 = vmatpush1.msra.mxu0 0.0
    %4809 = vmatprep.subr.mxu0 0.0
    %4810 = vmatpush1.msra.mxu0 0.0
    %4811 = vmatprep.subr.mxu0 0.0
    %4812 = vmatpush1.msra.mxu0 0.0
    %4813 = vmatprep.subr.mxu0 0.0
    %4814 = vmatpush1.msra.mxu0 0.0
    %4815 = vmatprep.subr.mxu0 0.0
    %4816 = vmatpush1.msra.mxu0 0.0
    %4817 = vmatprep.subr.mxu0 0.0
    %4818 = vmatpush1.msra.mxu0 0.0
    %4819 = vmatprep.subr.mxu0 0.0
    %4820 = vmatpush1.msra.mxu0 0.0
    %4821 = vmatprep.subr.mxu0 0.0
    %4822 = vmatpush1.msra.mxu0 0.0
    %4823 = vmatprep.subr.mxu0 0.0
    %4824 = vmatpush1.msra.mxu0 0.0
    %4825 = vmatprep.subr.mxu0 0.0
    %4826 = vmatpush1.msra.mxu0 0.0
    %4827 = vmatprep.subr.mxu0 0.0
    %4828 = vmatpush1.msra.mxu0 0.0
    %4829 = vmatprep.subr.mxu0 0.0
    %4830 = vmatpush1.msra.mxu0 0.0
    %4831 = vmatprep.subr.mxu0 0.0
    %4832 = vmatpush1.msra.mxu0 0.0
    %4833 = vmatprep.subr.mxu0 0.0
    %4834 = vmatpush1.msra.mxu0 0.0
    %4835 = vmatprep.subr.mxu0 0.0
    %4836 = vmatpush1.msra.mxu0 0.0
    %4837 = vmatprep.subr.mxu0 0.0
    %4838 = vmatpush1.msra.mxu0 0.0
    %4839 = vmatprep.subr.mxu0 0.0
    %4840 = vmatpush1.msra.mxu0 0.0
    %4841 = vmatprep.subr.mxu0 0.0
    %4842 = vmatpush1.msra.mxu0 0.0
    %4843 = vmatprep.subr.mxu0 0.0
    %4844 = vmatpush1.msra.mxu0 0.0
    %4845 = vmatprep.subr.mxu0 0.0
    %4846 = vmatpush1.msra.mxu0 0.0
    %4847 = vmatprep.subr.mxu0 0.0
    %4848 = vmatpush1.msra.mxu0 0.0
    %4849 = vmatprep.subr.mxu0 0.0
    %4850 = vmatpush1.msra.mxu0 0.0
    %4851 = vmatprep.subr.mxu0 0.0
    %4852 = vmatpush1.msra.mxu0 0.0
    %4853 = vmatprep.subr.mxu0 0.0
    %4854 = vmatpush1.msra.mxu0 0.0
    %4855 = vmatprep.subr.mxu0 0.0
    %4856 = vmatpush1.msra.mxu0 0.0
    %4857 = vmatprep.subr.mxu0 0.0
    %4858 = vmatpush1.msra.mxu0 0.0
    %4859 = vmatprep.subr.mxu0 0.0
    %4860 = vmatpush1.msra.mxu0 0.0
    %4861 = vmatprep.mubr.f32.mxu0 0.0
    %v4862 = vand.u32 %v4591, 4294901760
    %4863 = vmatmul.mubr.f32.gmra.mrb[0].mxu0 %v4862
    %v4864 = vpop.f32.mrb[0].mxu0
    %v4865 = vadd.f32 %v4694, %v4864
    %v4866 = vpop.f32.mrb[0].mxu0
    %4867 = vmatprep.mubr.f32.mxu0 0.0
    %v4868 = vand.u32 %v4594, 4294901760
    %4869 = vmatmul.mubr.f32.gmra.mrb[0].mxu0 %v4868
    %v4870 = vpop.f32.mrb[0].mxu0
    %v4871 = vadd.f32 %v4704, %v4870
    %v4872 = vpop.f32.mrb[0].mxu0
    %4873 = vmatprep.mubr.f32.mxu0 0.0
    %v4874 = vand.u32 %v4597, 4294901760
    %4875 = vmatmul.mubr.f32.gmra.mrb[0].mxu0 %v4874
    %v4876 = vpop.f32.mrb[0].mxu0
    %v4877 = vadd.f32 %v4714, %v4876
    %v4878 = vpop.f32.mrb[0].mxu0
    %4879 = vmatprep.mubr.f32.mxu0 0.0
    %v4880 = vand.u32 %v4600, 4294901760
    %4881 = vmatmul.mubr.f32.gmra.mrb[0].mxu0 %v4880
    %v4882 = vpop.f32.mrb[0].mxu0
    %v4883 = vadd.f32 %v4724, %v4882
    %v4884 = vpop.f32.mrb[0].mxu0
    %4885 = vmatprep.mubr.f32.mxu0 0.0
    %v4886 = vand.u32 %v4603, 4294901760
    %4887 = vmatmul.mubr.f32.gmra.mrb[0].mxu0 %v4886
    %v4888 = vpop.f32.mrb[0].mxu0
    %v4889 = vadd.f32 %v4734, %v4888
    %v4890 = vpop.f32.mrb[0].mxu0
    %4891 = vmatprep.mubr.f32.mxu0 0.0
    %v4892 = vand.u32 %v4606, 4294901760
    %4893 = vmatmul.mubr.f32.gmra.mrb[0].mxu0 %v4892
    %v4894 = vpop.f32.mrb[0].mxu0
    %v4895 = vadd.f32 %v4744, %v4894
    %v4896 = vpop.f32.mrb[0].mxu0
    %4897 = vmatprep.mubr.f32.mxu0 0.0
    %v4898 = vand.u32 %v4609, 4294901760
    %4899 = vmatmul.mubr.f32.gmra.mrb[0].mxu0 %v4898
    %v4900 = vpop.f32.mrb[0].mxu0
    %v4901 = vadd.f32 %v4754, %v4900
    %v4902 = vpop.f32.mrb[0].mxu0
    %4903 = vmatprep.mubr.f32.mxu0 0.0
    %v4904 = vand.u32 %v4612, 4294901760
    %4905 = vmatmul.mubr.f32.gmra.mrb[0].mxu0 %v4904
    %v4906 = vpop.f32.mrb[0].mxu0
    %v4907 = vadd.f32 %v4764, %v4906
    %v4908 = vpop.f32.mrb[0].mxu0
    %4909 = vmatprep.mubr.f32.mxu0 0.0
    %v4910 = vand.u32 %v4615, 4294901760
    %4911 = vmatmul.mubr.f32.gmra.mrb[0].mxu0 %v4910
    %v4912 = vpop.f32.mrb[0].mxu0
    %v4913 = vadd.f32 %v4774, %v4912
    %v4914 = vpop.f32.mrb[0].mxu0
    %4915 = vmatprep.mubr.f32.mxu0 0.0
    %v4916 = vand.u32 %v4618, 4294901760
    %4917 = vmatmul.mubr.f32.gmra.mrb[0].mxu0 %v4916
    %v4918 = vpop.f32.mrb[0].mxu0
    %v4919 = vadd.f32 %v4784, %v4918
    %v4920 = vpop.f32.mrb[0].mxu0
    %4921 = vdwg.mxu0
    %4922 = vmatprep.subr.mxu0 0.0
    %v4923 = vand.u32 %v83, 4294901760
    %v4924 = vsub.f32 %v83, %v4923
    %4925 = vmatpush1.msra.mxu0 %v4924
    %4926 = vmatprep.subr.mxu0 0.0
    %v4927 = vand.u32 %v84, 4294901760
    %v4928 = vsub.f32 %v84, %v4927
    %4929 = vmatpush1.msra.mxu0 %v4928
    %4930 = vmatprep.subr.mxu0 0.0
    %4931 = vmatpush1.msra.mxu0 0.0
    %4932 = vmatprep.subr.mxu0 0.0
    %4933 = vmatpush1.msra.mxu0 0.0
    %4934 = vmatprep.subr.mxu0 0.0
    %4935 = vmatpush1.msra.mxu0 0.0
    %4936 = vmatprep.subr.mxu0 0.0
    %4937 = vmatpush1.msra.mxu0 0.0
    %4938 = vmatprep.subr.mxu0 0.0
    %4939 = vmatpush1.msra.mxu0 0.0
    %4940 = vmatprep.subr.mxu0 0.0
    %4941 = vmatpush1.msra.mxu0 0.0
    %4942 = vmatprep.subr.mxu0 0.0
    %4943 = vmatpush1.msra.mxu0 0.0
    %4944 = vmatprep.subr.mxu0 0.0
    %4945 = vmatpush1.msra.mxu0 0.0
    %4946 = vmatprep.subr.mxu0 0.0
    %4947 = vmatpush1.msra.mxu0 0.0
    %4948 = vmatprep.subr.mxu0 0.0
    %4949 = vmatpush1.msra.mxu0 0.0
    %4950 = vmatprep.subr.mxu0 0.0
    %4951 = vmatpush1.msra.mxu0 0.0
    %4952 = vmatprep.subr.mxu0 0.0
    %4953 = vmatpush1.msra.mxu0 0.0
    %4954 = vmatprep.subr.mxu0 0.0
    %4955 = vmatpush1.msra.mxu0 0.0
    %4956 = vmatprep.subr.mxu0 0.0
    %4957 = vmatpush1.msra.mxu0 0.0
    %4958 = vmatprep.subr.mxu0 0.0
    %4959 = vmatpush1.msra.mxu0 0.0
    %4960 = vmatprep.subr.mxu0 0.0
    %4961 = vmatpush1.msra.mxu0 0.0
    %4962 = vmatprep.subr.mxu0 0.0
    %4963 = vmatpush1.msra.mxu0 0.0
    %4964 = vmatprep.subr.mxu0 0.0
    %4965 = vmatpush1.msra.mxu0 0.0
    %4966 = vmatprep.subr.mxu0 0.0
    %4967 = vmatpush1.msra.mxu0 0.0
    %4968 = vmatprep.subr.mxu0 0.0
    %4969 = vmatpush1.msra.mxu0 0.0
    %4970 = vmatprep.subr.mxu0 0.0
    %4971 = vmatpush1.msra.mxu0 0.0
    %4972 = vmatprep.subr.mxu0 0.0
    %4973 = vmatpush1.msra.mxu0 0.0
    %4974 = vmatprep.subr.mxu0 0.0
    %4975 = vmatpush1.msra.mxu0 0.0
    %4976 = vmatprep.subr.mxu0 0.0
    %4977 = vmatpush1.msra.mxu0 0.0
    %4978 = vmatprep.subr.mxu0 0.0
    %4979 = vmatpush1.msra.mxu0 0.0
    %4980 = vmatprep.subr.mxu0 0.0
    %4981 = vmatpush1.msra.mxu0 0.0
    %4982 = vmatprep.subr.mxu0 0.0
    %4983 = vmatpush1.msra.mxu0 0.0
    %4984 = vmatprep.subr.mxu0 0.0
    %4985 = vmatpush1.msra.mxu0 0.0
    %4986 = vmatprep.subr.mxu0 0.0
    %4987 = vmatpush1.msra.mxu0 0.0
    %4988 = vmatprep.subr.mxu0 0.0
    %4989 = vmatpush1.msra.mxu0 0.0
    %4990 = vmatprep.mubr.f32.mxu0 0.0
    %v4991 = vand.u32 %v4591, 4294901760
    %v4992 = vsub.f32 %v4591, %v4991
    %4993 = vmatmul.mubr.f32.gmra.mrb[0].mxu0 %v4992
    %v4994 = vpop.f32.mrb[0].mxu0
    %v4995 = vadd.f32 %v4865, %v4994
    %v4996 = vpop.f32.mrb[0].mxu0
    %4997 = vmatprep.mubr.f32.mxu0 0.0
    %v4998 = vand.u32 %v4594, 4294901760
    %v4999 = vsub.f32 %v4594, %v4998
    %5000 = vmatmul.mubr.f32.gmra.mrb[0].mxu0 %v4999
    %v5001 = vpop.f32.mrb[0].mxu0
    %v5002 = vadd.f32 %v4871, %v5001
    %v5003 = vpop.f32.mrb[0].mxu0
    %5004 = vmatprep.mubr.f32.mxu0 0.0
    %v5005 = vand.u32 %v4597, 4294901760
    %v5006 = vsub.f32 %v4597, %v5005
    %5007 = vmatmul.mubr.f32.gmra.mrb[0].mxu0 %v5006
    %v5008 = vpop.f32.mrb[0].mxu0
    %v5009 = vadd.f32 %v4877, %v5008
    %v5010 = vpop.f32.mrb[0].mxu0
    %5011 = vmatprep.mubr.f32.mxu0 0.0
    %v5012 = vand.u32 %v4600, 4294901760
    %v5013 = vsub.f32 %v4600, %v5012
    %5014 = vmatmul.mubr.f32.gmra.mrb[0].mxu0 %v5013
    %v5015 = vpop.f32.mrb[0].mxu0
    %v5016 = vadd.f32 %v4883, %v5015
    %v5017 = vpop.f32.mrb[0].mxu0
    %5018 = vmatprep.mubr.f32.mxu0 0.0
    %v5019 = vand.u32 %v4603, 4294901760
    %v5020 = vsub.f32 %v4603, %v5019
    %5021 = vmatmul.mubr.f32.gmra.mrb[0].mxu0 %v5020
    %v5022 = vpop.f32.mrb[0].mxu0
    %v5023 = vadd.f32 %v4889, %v5022
    %v5024 = vpop.f32.mrb[0].mxu0
    %5025 = vmatprep.mubr.f32.mxu0 0.0
    %v5026 = vand.u32 %v4606, 4294901760
    %v5027 = vsub.f32 %v4606, %v5026
    %5028 = vmatmul.mubr.f32.gmra.mrb[0].mxu0 %v5027
    %v5029 = vpop.f32.mrb[0].mxu0
    %v5030 = vadd.f32 %v4895, %v5029
    %v5031 = vpop.f32.mrb[0].mxu0
    %5032 = vmatprep.mubr.f32.mxu0 0.0
    %v5033 = vand.u32 %v4609, 4294901760
    %v5034 = vsub.f32 %v4609, %v5033
    %5035 = vmatmul.mubr.f32.gmra.mrb[0].mxu0 %v5034
    %v5036 = vpop.f32.mrb[0].mxu0
    %v5037 = vadd.f32 %v4901, %v5036
    %v5038 = vpop.f32.mrb[0].mxu0
    %5039 = vmatprep.mubr.f32.mxu0 0.0
    %v5040 = vand.u32 %v4612, 4294901760
    %v5041 = vsub.f32 %v4612, %v5040
    %5042 = vmatmul.mubr.f32.gmra.mrb[0].mxu0 %v5041
    %v5043 = vpop.f32.mrb[0].mxu0
    %v5044 = vadd.f32 %v4907, %v5043
    %v5045 = vpop.f32.mrb[0].mxu0
    %5046 = vmatprep.mubr.f32.mxu0 0.0
    %v5047 = vand.u32 %v4615, 4294901760
    %v5048 = vsub.f32 %v4615, %v5047
    %5049 = vmatmul.mubr.f32.gmra.mrb[0].mxu0 %v5048
    %v5050 = vpop.f32.mrb[0].mxu0
    %v5051 = vadd.f32 %v4913, %v5050
    %v5052 = vpop.f32.mrb[0].mxu0
    %5053 = vmatprep.mubr.f32.mxu0 0.0
    %v5054 = vand.u32 %v4618, 4294901760
    %v5055 = vsub.f32 %v4618, %v5054
    %5056 = vmatmul.mubr.f32.gmra.mrb[0].mxu0 %v5055
    %v5057 = vpop.f32.mrb[0].mxu0
    %v5058 = vadd.f32 %v4919, %v5057
    %v5059 = vpop.f32.mrb[0].mxu0
    %5060 = vdwg.mxu0
    %5061 = vmatprep.subr.mxu0 0.0
    %v5062 = vand.u32 %v83, 4294901760
    %5063 = vmatpush1.msra.mxu0 %v5062
    %5064 = vmatprep.subr.mxu0 0.0
    %v5065 = vand.u32 %v84, 4294901760
    %5066 = vmatpush1.msra.mxu0 %v5065
    %5067 = vmatprep.subr.mxu0 0.0
    %5068 = vmatpush1.msra.mxu0 0.0
    %5069 = vmatprep.subr.mxu0 0.0
    %5070 = vmatpush1.msra.mxu0 0.0
    %5071 = vmatprep.subr.mxu0 0.0
    %5072 = vmatpush1.msra.mxu0 0.0
    %5073 = vmatprep.subr.mxu0 0.0
    %5074 = vmatpush1.msra.mxu0 0.0
    %5075 = vmatprep.subr.mxu0 0.0
    %5076 = vmatpush1.msra.mxu0 0.0
    %5077 = vmatprep.subr.mxu0 0.0
    %5078 = vmatpush1.msra.mxu0 0.0
    %5079 = vmatprep.subr.mxu0 0.0
    %5080 = vmatpush1.msra.mxu0 0.0
    %5081 = vmatprep.subr.mxu0 0.0
    %5082 = vmatpush1.msra.mxu0 0.0
    %5083 = vmatprep.subr.mxu0 0.0
    %5084 = vmatpush1.msra.mxu0 0.0
    %5085 = vmatprep.subr.mxu0 0.0
    %5086 = vmatpush1.msra.mxu0 0.0
    %5087 = vmatprep.subr.mxu0 0.0
    %5088 = vmatpush1.msra.mxu0 0.0
    %5089 = vmatprep.subr.mxu0 0.0
    %5090 = vmatpush1.msra.mxu0 0.0
    %5091 = vmatprep.subr.mxu0 0.0
    %5092 = vmatpush1.msra.mxu0 0.0
    %5093 = vmatprep.subr.mxu0 0.0
    %5094 = vmatpush1.msra.mxu0 0.0
    %5095 = vmatprep.subr.mxu0 0.0
    %5096 = vmatpush1.msra.mxu0 0.0
    %5097 = vmatprep.subr.mxu0 0.0
    %5098 = vmatpush1.msra.mxu0 0.0
    %5099 = vmatprep.subr.mxu0 0.0
    %5100 = vmatpush1.msra.mxu0 0.0
    %5101 = vmatprep.subr.mxu0 0.0
    %5102 = vmatpush1.msra.mxu0 0.0
    %5103 = vmatprep.subr.mxu0 0.0
    %5104 = vmatpush1.msra.mxu0 0.0
    %5105 = vmatprep.subr.mxu0 0.0
    %5106 = vmatpush1.msra.mxu0 0.0
    %5107 = vmatprep.subr.mxu0 0.0
    %5108 = vmatpush1.msra.mxu0 0.0
    %5109 = vmatprep.subr.mxu0 0.0
    %5110 = vmatpush1.msra.mxu0 0.0
    %5111 = vmatprep.subr.mxu0 0.0
    %5112 = vmatpush1.msra.mxu0 0.0
    %5113 = vmatprep.subr.mxu0 0.0
    %5114 = vmatpush1.msra.mxu0 0.0
    %5115 = vmatprep.subr.mxu0 0.0
    %5116 = vmatpush1.msra.mxu0 0.0
    %5117 = vmatprep.subr.mxu0 0.0
    %5118 = vmatpush1.msra.mxu0 0.0
    %5119 = vmatprep.subr.mxu0 0.0
    %5120 = vmatpush1.msra.mxu0 0.0
    %5121 = vmatprep.subr.mxu0 0.0
    %5122 = vmatpush1.msra.mxu0 0.0
    %5123 = vmatprep.subr.mxu0 0.0
    %5124 = vmatpush1.msra.mxu0 0.0
    %5125 = vmatprep.subr.mxu0 0.0
    %5126 = vmatpush1.msra.mxu0 0.0
    %5127 = vmatprep.mubr.f32.mxu0 0.0
    %v5128 = vand.u32 %v4591, 4294901760
    %v5129 = vsub.f32 %v4591, %v5128
    %v5130 = vand.u32 %v5129, 4294901760
    %5131 = vmatmul.mubr.f32.gmra.mrb[0].mxu0 %v5130
    %v5132 = vpop.f32.mrb[0].mxu0
    %v5133 = vadd.f32 %v4995, %v5132
    %v5134 = vpop.f32.mrb[0].mxu0
    %5135 = vmatprep.mubr.f32.mxu0 0.0
    %v5136 = vand.u32 %v4594, 4294901760
    %v5137 = vsub.f32 %v4594, %v5136
    %v5138 = vand.u32 %v5137, 4294901760
    %5139 = vmatmul.mubr.f32.gmra.mrb[0].mxu0 %v5138
    %v5140 = vpop.f32.mrb[0].mxu0
    %v5141 = vadd.f32 %v5002, %v5140
    %v5142 = vpop.f32.mrb[0].mxu0
    %5143 = vmatprep.mubr.f32.mxu0 0.0
    %v5144 = vand.u32 %v4597, 4294901760
    %v5145 = vsub.f32 %v4597, %v5144
    %v5146 = vand.u32 %v5145, 4294901760
    %5147 = vmatmul.mubr.f32.gmra.mrb[0].mxu0 %v5146
    %v5148 = vpop.f32.mrb[0].mxu0
    %v5149 = vadd.f32 %v5009, %v5148
    %v5150 = vpop.f32.mrb[0].mxu0
    %5151 = vmatprep.mubr.f32.mxu0 0.0
    %v5152 = vand.u32 %v4600, 4294901760
    %v5153 = vsub.f32 %v4600, %v5152
    %v5154 = vand.u32 %v5153, 4294901760
    %5155 = vmatmul.mubr.f32.gmra.mrb[0].mxu0 %v5154
    %v5156 = vpop.f32.mrb[0].mxu0
    %v5157 = vadd.f32 %v5016, %v5156
    %v5158 = vpop.f32.mrb[0].mxu0
    %5159 = vmatprep.mubr.f32.mxu0 0.0
    %v5160 = vand.u32 %v4603, 4294901760
    %v5161 = vsub.f32 %v4603, %v5160
    %v5162 = vand.u32 %v5161, 4294901760
    %5163 = vmatmul.mubr.f32.gmra.mrb[0].mxu0 %v5162
    %v5164 = vpop.f32.mrb[0].mxu0
    %v5165 = vadd.f32 %v5023, %v5164
    %v5166 = vpop.f32.mrb[0].mxu0
    %5167 = vmatprep.mubr.f32.mxu0 0.0
    %v5168 = vand.u32 %v4606, 4294901760
    %v5169 = vsub.f32 %v4606, %v5168
    %v5170 = vand.u32 %v5169, 4294901760
    %5171 = vmatmul.mubr.f32.gmra.mrb[0].mxu0 %v5170
    %v5172 = vpop.f32.mrb[0].mxu0
    %v5173 = vadd.f32 %v5030, %v5172
    %v5174 = vpop.f32.mrb[0].mxu0
    %5175 = vmatprep.mubr.f32.mxu0 0.0
    %v5176 = vand.u32 %v4609, 4294901760
    %v5177 = vsub.f32 %v4609, %v5176
    %v5178 = vand.u32 %v5177, 4294901760
    %5179 = vmatmul.mubr.f32.gmra.mrb[0].mxu0 %v5178
    %v5180 = vpop.f32.mrb[0].mxu0
    %v5181 = vadd.f32 %v5037, %v5180
    %v5182 = vpop.f32.mrb[0].mxu0
    %5183 = vmatprep.mubr.f32.mxu0 0.0
    %v5184 = vand.u32 %v4612, 4294901760
    %v5185 = vsub.f32 %v4612, %v5184
    %v5186 = vand.u32 %v5185, 4294901760
    %5187 = vmatmul.mubr.f32.gmra.mrb[0].mxu0 %v5186
    %v5188 = vpop.f32.mrb[0].mxu0
    %v5189 = vadd.f32 %v5044, %v5188
    %v5190 = vpop.f32.mrb[0].mxu0
    %5191 = vmatprep.mubr.f32.mxu0 0.0
    %v5192 = vand.u32 %v4615, 4294901760
    %v5193 = vsub.f32 %v4615, %v5192
    %v5194 = vand.u32 %v5193, 4294901760
    %5195 = vmatmul.mubr.f32.gmra.mrb[0].mxu0 %v5194
    %v5196 = vpop.f32.mrb[0].mxu0
    %v5197 = vadd.f32 %v5051, %v5196
    %v5198 = vpop.f32.mrb[0].mxu0
    %5199 = vmatprep.mubr.f32.mxu0 0.0
    %v5200 = vand.u32 %v4618, 4294901760
    %v5201 = vsub.f32 %v4618, %v5200
    %v5202 = vand.u32 %v5201, 4294901760
    %5203 = vmatmul.mubr.f32.gmra.mrb[0].mxu0 %v5202
    %v5204 = vpop.f32.mrb[0].mxu0
    %v5205 = vadd.f32 %v5058, %v5204
    %v5206 = vpop.f32.mrb[0].mxu0
    %5207 = vdwg.mxu0
    %5208 = vmatprep.subr.mxu0 0.0
    %v5209 = vand.u32 %v83, 4294901760
    %v5210 = vsub.f32 %v83, %v5209
    %v5211 = vand.u32 %v5210, 4294901760
    %5212 = vmatpush1.msra.mxu0 %v5211
    %5213 = vmatprep.subr.mxu0 0.0
    %v5214 = vand.u32 %v84, 4294901760
    %v5215 = vsub.f32 %v84, %v5214
    %v5216 = vand.u32 %v5215, 4294901760
    %5217 = vmatpush1.msra.mxu0 %v5216
    %5218 = vmatprep.subr.mxu0 0.0
    %5219 = vmatpush1.msra.mxu0 0.0
    %5220 = vmatprep.subr.mxu0 0.0
    %5221 = vmatpush1.msra.mxu0 0.0
    %5222 = vmatprep.subr.mxu0 0.0
    %5223 = vmatpush1.msra.mxu0 0.0
    %5224 = vmatprep.subr.mxu0 0.0
    %5225 = vmatpush1.msra.mxu0 0.0
    %5226 = vmatprep.subr.mxu0 0.0
    %5227 = vmatpush1.msra.mxu0 0.0
    %5228 = vmatprep.subr.mxu0 0.0
    %5229 = vmatpush1.msra.mxu0 0.0
    %5230 = vmatprep.subr.mxu0 0.0
    %5231 = vmatpush1.msra.mxu0 0.0
    %5232 = vmatprep.subr.mxu0 0.0
    %5233 = vmatpush1.msra.mxu0 0.0
    %5234 = vmatprep.subr.mxu0 0.0
    %5235 = vmatpush1.msra.mxu0 0.0
    %5236 = vmatprep.subr.mxu0 0.0
    %5237 = vmatpush1.msra.mxu0 0.0
    %5238 = vmatprep.subr.mxu0 0.0
    %5239 = vmatpush1.msra.mxu0 0.0
    %5240 = vmatprep.subr.mxu0 0.0
    %5241 = vmatpush1.msra.mxu0 0.0
    %5242 = vmatprep.subr.mxu0 0.0
    %5243 = vmatpush1.msra.mxu0 0.0
    %5244 = vmatprep.subr.mxu0 0.0
    %5245 = vmatpush1.msra.mxu0 0.0
    %5246 = vmatprep.subr.mxu0 0.0
    %5247 = vmatpush1.msra.mxu0 0.0
    %5248 = vmatprep.subr.mxu0 0.0
    %5249 = vmatpush1.msra.mxu0 0.0
    %5250 = vmatprep.subr.mxu0 0.0
    %5251 = vmatpush1.msra.mxu0 0.0
    %5252 = vmatprep.subr.mxu0 0.0
    %5253 = vmatpush1.msra.mxu0 0.0
    %5254 = vmatprep.subr.mxu0 0.0
    %5255 = vmatpush1.msra.mxu0 0.0
    %5256 = vmatprep.subr.mxu0 0.0
    %5257 = vmatpush1.msra.mxu0 0.0
    %5258 = vmatprep.subr.mxu0 0.0
    %5259 = vmatpush1.msra.mxu0 0.0
    %5260 = vmatprep.subr.mxu0 0.0
    %5261 = vmatpush1.msra.mxu0 0.0
    %5262 = vmatprep.subr.mxu0 0.0
    %5263 = vmatpush1.msra.mxu0 0.0
    %5264 = vmatprep.subr.mxu0 0.0
    %5265 = vmatpush1.msra.mxu0 0.0
    %5266 = vmatprep.subr.mxu0 0.0
    %5267 = vmatpush1.msra.mxu0 0.0
    %5268 = vmatprep.subr.mxu0 0.0
    %5269 = vmatpush1.msra.mxu0 0.0
    %5270 = vmatprep.subr.mxu0 0.0
    %5271 = vmatpush1.msra.mxu0 0.0
    %5272 = vmatprep.subr.mxu0 0.0
    %5273 = vmatpush1.msra.mxu0 0.0
    %5274 = vmatprep.subr.mxu0 0.0
    %5275 = vmatpush1.msra.mxu0 0.0
    %5276 = vmatprep.subr.mxu0 0.0
    %5277 = vmatpush1.msra.mxu0 0.0
    %5278 = vmatprep.mubr.f32.mxu0 0.0
    %v5279 = vand.u32 %v4591, 4294901760
    %5280 = vmatmul.mubr.f32.gmra.mrb[0].mxu0 %v5279
    %v5281 = vpop.f32.mrb[0].mxu0
    %v5282 = vadd.f32 %v5133, %v5281
    %v5283 = vpop.f32.mrb[0].mxu0
    %5284 = vmatprep.mubr.f32.mxu0 0.0
    %v5285 = vand.u32 %v4594, 4294901760
    %5286 = vmatmul.mubr.f32.gmra.mrb[0].mxu0 %v5285
    %v5287 = vpop.f32.mrb[0].mxu0
    %v5288 = vadd.f32 %v5141, %v5287
    %v5289 = vpop.f32.mrb[0].mxu0
    %5290 = vmatprep.mubr.f32.mxu0 0.0
    %v5291 = vand.u32 %v4597, 4294901760
    %5292 = vmatmul.mubr.f32.gmra.mrb[0].mxu0 %v5291
    %v5293 = vpop.f32.mrb[0].mxu0
    %v5294 = vadd.f32 %v5149, %v5293
    %v5295 = vpop.f32.mrb[0].mxu0
    %5296 = vmatprep.mubr.f32.mxu0 0.0
    %v5297 = vand.u32 %v4600, 4294901760
    %5298 = vmatmul.mubr.f32.gmra.mrb[0].mxu0 %v5297
    %v5299 = vpop.f32.mrb[0].mxu0
    %v5300 = vadd.f32 %v5157, %v5299
    %v5301 = vpop.f32.mrb[0].mxu0
    %5302 = vmatprep.mubr.f32.mxu0 0.0
    %v5303 = vand.u32 %v4603, 4294901760
    %5304 = vmatmul.mubr.f32.gmra.mrb[0].mxu0 %v5303
    %v5305 = vpop.f32.mrb[0].mxu0
    %v5306 = vadd.f32 %v5165, %v5305
    %v5307 = vpop.f32.mrb[0].mxu0
    %5308 = vmatprep.mubr.f32.mxu0 0.0
    %v5309 = vand.u32 %v4606, 4294901760
    %5310 = vmatmul.mubr.f32.gmra.mrb[0].mxu0 %v5309
    %v5311 = vpop.f32.mrb[0].mxu0
    %v5312 = vadd.f32 %v5173, %v5311
    %v5313 = vpop.f32.mrb[0].mxu0
    %5314 = vmatprep.mubr.f32.mxu0 0.0
    %v5315 = vand.u32 %v4609, 4294901760
    %5316 = vmatmul.mubr.f32.gmra.mrb[0].mxu0 %v5315
    %v5317 = vpop.f32.mrb[0].mxu0
    %v5318 = vadd.f32 %v5181, %v5317
    %v5319 = vpop.f32.mrb[0].mxu0
    %5320 = vmatprep.mubr.f32.mxu0 0.0
    %v5321 = vand.u32 %v4612, 4294901760
    %5322 = vmatmul.mubr.f32.gmra.mrb[0].mxu0 %v5321
    %v5323 = vpop.f32.mrb[0].mxu0
    %v5324 = vadd.f32 %v5189, %v5323
    %v5325 = vpop.f32.mrb[0].mxu0
    %5326 = vmatprep.mubr.f32.mxu0 0.0
    %v5327 = vand.u32 %v4615, 4294901760
    %5328 = vmatmul.mubr.f32.gmra.mrb[0].mxu0 %v5327
    %v5329 = vpop.f32.mrb[0].mxu0
    %v5330 = vadd.f32 %v5197, %v5329
    %v5331 = vpop.f32.mrb[0].mxu0
    %5332 = vmatprep.mubr.f32.mxu0 0.0
    %v5333 = vand.u32 %v4618, 4294901760
    %5334 = vmatmul.mubr.f32.gmra.mrb[0].mxu0 %v5333
    %v5335 = vpop.f32.mrb[0].mxu0
    %v5336 = vadd.f32 %v5205, %v5335
    %v5337 = vpop.f32.mrb[0].mxu0
    %5338 = vdwg.mxu0
    %5339 = vmatprep.subr.mxu0 0.0
    %v5340 = vand.u32 %v83, 4294901760
    %5341 = vmatpush1.msra.mxu0 %v5340
    %5342 = vmatprep.subr.mxu0 0.0
    %v5343 = vand.u32 %v84, 4294901760
    %5344 = vmatpush1.msra.mxu0 %v5343
    %5345 = vmatprep.subr.mxu0 0.0
    %5346 = vmatpush1.msra.mxu0 0.0
    %5347 = vmatprep.subr.mxu0 0.0
    %5348 = vmatpush1.msra.mxu0 0.0
    %5349 = vmatprep.subr.mxu0 0.0
    %5350 = vmatpush1.msra.mxu0 0.0
    %5351 = vmatprep.subr.mxu0 0.0
    %5352 = vmatpush1.msra.mxu0 0.0
    %5353 = vmatprep.subr.mxu0 0.0
    %5354 = vmatpush1.msra.mxu0 0.0
    %5355 = vmatprep.subr.mxu0 0.0
    %5356 = vmatpush1.msra.mxu0 0.0
    %5357 = vmatprep.subr.mxu0 0.0
    %5358 = vmatpush1.msra.mxu0 0.0
    %5359 = vmatprep.subr.mxu0 0.0
    %5360 = vmatpush1.msra.mxu0 0.0
    %5361 = vmatprep.subr.mxu0 0.0
    %5362 = vmatpush1.msra.mxu0 0.0
    %5363 = vmatprep.subr.mxu0 0.0
    %5364 = vmatpush1.msra.mxu0 0.0
    %5365 = vmatprep.subr.mxu0 0.0
    %5366 = vmatpush1.msra.mxu0 0.0
    %5367 = vmatprep.subr.mxu0 0.0
    %5368 = vmatpush1.msra.mxu0 0.0
    %5369 = vmatprep.subr.mxu0 0.0
    %5370 = vmatpush1.msra.mxu0 0.0
    %5371 = vmatprep.subr.mxu0 0.0
    %5372 = vmatpush1.msra.mxu0 0.0
    %5373 = vmatprep.subr.mxu0 0.0
    %5374 = vmatpush1.msra.mxu0 0.0
    %5375 = vmatprep.subr.mxu0 0.0
    %5376 = vmatpush1.msra.mxu0 0.0
    %5377 = vmatprep.subr.mxu0 0.0
    %5378 = vmatpush1.msra.mxu0 0.0
    %5379 = vmatprep.subr.mxu0 0.0
    %5380 = vmatpush1.msra.mxu0 0.0
    %5381 = vmatprep.subr.mxu0 0.0
    %5382 = vmatpush1.msra.mxu0 0.0
    %5383 = vmatprep.subr.mxu0 0.0
    %5384 = vmatpush1.msra.mxu0 0.0
    %5385 = vmatprep.subr.mxu0 0.0
    %5386 = vmatpush1.msra.mxu0 0.0
    %5387 = vmatprep.subr.mxu0 0.0
    %5388 = vmatpush1.msra.mxu0 0.0
    %5389 = vmatprep.subr.mxu0 0.0
    %5390 = vmatpush1.msra.mxu0 0.0
    %5391 = vmatprep.subr.mxu0 0.0
    %5392 = vmatpush1.msra.mxu0 0.0
    %5393 = vmatprep.subr.mxu0 0.0
    %5394 = vmatpush1.msra.mxu0 0.0
    %5395 = vmatprep.subr.mxu0 0.0
    %5396 = vmatpush1.msra.mxu0 0.0
    %5397 = vmatprep.subr.mxu0 0.0
    %5398 = vmatpush1.msra.mxu0 0.0
    %5399 = vmatprep.subr.mxu0 0.0
    %5400 = vmatpush1.msra.mxu0 0.0
    %5401 = vmatprep.subr.mxu0 0.0
    %5402 = vmatpush1.msra.mxu0 0.0
    %5403 = vmatprep.subr.mxu0 0.0
    %5404 = vmatpush1.msra.mxu0 0.0
    %5405 = vmatprep.mubr.f32.mxu0 0.0
    %v5406 = vand.u32 %v4591, 4294901760
    %5407 = vmatmul.mubr.f32.gmra.mrb[0].mxu0 %v5406
    %v5408 = vpop.f32.mrb[0].mxu0
    %v5409 = vadd.f32 %v5282, %v5408
    %v5410 = vpop.f32.mrb[0].mxu0
    %5411 = vmatprep.mubr.f32.mxu0 0.0
    %v5412 = vand.u32 %v4594, 4294901760
    %5413 = vmatmul.mubr.f32.gmra.mrb[0].mxu0 %v5412
    %v5414 = vpop.f32.mrb[0].mxu0
    %v5415 = vadd.f32 %v5288, %v5414
    %v5416 = vpop.f32.mrb[0].mxu0
    %5417 = vmatprep.mubr.f32.mxu0 0.0
    %v5418 = vand.u32 %v4597, 4294901760
    %5419 = vmatmul.mubr.f32.gmra.mrb[0].mxu0 %v5418
    %v5420 = vpop.f32.mrb[0].mxu0
    %v5421 = vadd.f32 %v5294, %v5420
    %v5422 = vpop.f32.mrb[0].mxu0
    %5423 = vmatprep.mubr.f32.mxu0 0.0
    %v5424 = vand.u32 %v4600, 4294901760
    %5425 = vmatmul.mubr.f32.gmra.mrb[0].mxu0 %v5424
    %v5426 = vpop.f32.mrb[0].mxu0
    %v5427 = vadd.f32 %v5300, %v5426
    %v5428 = vpop.f32.mrb[0].mxu0
    %5429 = vmatprep.mubr.f32.mxu0 0.0
    %v5430 = vand.u32 %v4603, 4294901760
    %5431 = vmatmul.mubr.f32.gmra.mrb[0].mxu0 %v5430
    %v5432 = vpop.f32.mrb[0].mxu0
    %v5433 = vadd.f32 %v5306, %v5432
    %v5434 = vpop.f32.mrb[0].mxu0
    %5435 = vmatprep.mubr.f32.mxu0 0.0
    %v5436 = vand.u32 %v4606, 4294901760
    %5437 = vmatmul.mubr.f32.gmra.mrb[0].mxu0 %v5436
    %v5438 = vpop.f32.mrb[0].mxu0
    %v5439 = vadd.f32 %v5312, %v5438
    %v5440 = vpop.f32.mrb[0].mxu0
    %5441 = vmatprep.mubr.f32.mxu0 0.0
    %v5442 = vand.u32 %v4609, 4294901760
    %5443 = vmatmul.mubr.f32.gmra.mrb[0].mxu0 %v5442
    %v5444 = vpop.f32.mrb[0].mxu0
    %v5445 = vadd.f32 %v5318, %v5444
    %v5446 = vpop.f32.mrb[0].mxu0
    %5447 = vmatprep.mubr.f32.mxu0 0.0
    %v5448 = vand.u32 %v4612, 4294901760
    %5449 = vmatmul.mubr.f32.gmra.mrb[0].mxu0 %v5448
    %v5450 = vpop.f32.mrb[0].mxu0
    %v5451 = vadd.f32 %v5324, %v5450
    %v5452 = vpop.f32.mrb[0].mxu0
    %5453 = vmatprep.mubr.f32.mxu0 0.0
    %v5454 = vand.u32 %v4615, 4294901760
    %5455 = vmatmul.mubr.f32.gmra.mrb[0].mxu0 %v5454
    %v5456 = vpop.f32.mrb[0].mxu0
    %v5457 = vadd.f32 %v5330, %v5456
    %v5458 = vpop.f32.mrb[0].mxu0
    %5459 = vmatprep.mubr.f32.mxu0 0.0
    %v5460 = vand.u32 %v4618, 4294901760
    %5461 = vmatmul.mubr.f32.gmra.mrb[0].mxu0 %v5460
    %v5462 = vpop.f32.mrb[0].mxu0
    %v5463 = vadd.f32 %v5336, %v5462
    %v5464 = vpop.f32.mrb[0].mxu0
    %5465 = vdwg.mxu0
    %v5466 = vadd.f32 %v4580, %v5409
    %v5467 = vadd.f32 %v4581, %v5415
    %v5468 = vadd.f32 %v4582, %v5421
    %v5469 = vadd.f32 %v4583, %v5427
    %v5470 = vadd.f32 %v4584, %v5433
    %v5471 = vadd.f32 %v4585, %v5439
    %v5472 = vadd.f32 %v4586, %v5445
    %v5473 = vadd.f32 %v4587, %v5451
    %v5474 = vadd.f32 %v4588, %v5457
    %v5475 = vadd.f32 %v4589, %v5463
    %v5477 = vsel %vm179, %v111, 0
    %v5480 = vsel %vm179, %v112, 0
    %v5483 = vsel %vm179, %v127, 0
    %v5486 = vsel %vm179, %v128, 0
    %v5489 = vsel %vm179, %v143, 0
    %v5492 = vsel %vm179, %v144, 0
    %v5495 = vsel %vm179, %v159, 0
    %v5498 = vsel %vm179, %v160, 0
    %v5501 = vsel %vm179, %v175, 0
    %v5504 = vsel %vm179, %v176, 0
    %5506 = vmatprep.subr.mxu0 0.0
    %v5507 = vand.u32 %v85, 4294901760
    %5508 = vmatpush1.msra.mxu0 %v5507
    %5509 = vmatprep.subr.mxu0 0.0
    %v5510 = vand.u32 %v86, 4294901760
    %5511 = vmatpush1.msra.mxu0 %v5510
    %5512 = vmatprep.subr.mxu0 0.0
    %5513 = vmatpush1.msra.mxu0 0.0
    %5514 = vmatprep.subr.mxu0 0.0
    %5515 = vmatpush1.msra.mxu0 0.0
    %5516 = vmatprep.subr.mxu0 0.0
    %5517 = vmatpush1.msra.mxu0 0.0
    %5518 = vmatprep.subr.mxu0 0.0
    %5519 = vmatpush1.msra.mxu0 0.0
    %5520 = vmatprep.subr.mxu0 0.0
    %5521 = vmatpush1.msra.mxu0 0.0
    %5522 = vmatprep.subr.mxu0 0.0
    %5523 = vmatpush1.msra.mxu0 0.0
    %5524 = vmatprep.subr.mxu0 0.0
    %5525 = vmatpush1.msra.mxu0 0.0
    %5526 = vmatprep.subr.mxu0 0.0
    %5527 = vmatpush1.msra.mxu0 0.0
    %5528 = vmatprep.subr.mxu0 0.0
    %5529 = vmatpush1.msra.mxu0 0.0
    %5530 = vmatprep.subr.mxu0 0.0
    %5531 = vmatpush1.msra.mxu0 0.0
    %5532 = vmatprep.subr.mxu0 0.0
    %5533 = vmatpush1.msra.mxu0 0.0
    %5534 = vmatprep.subr.mxu0 0.0
    %5535 = vmatpush1.msra.mxu0 0.0
    %5536 = vmatprep.subr.mxu0 0.0
    %5537 = vmatpush1.msra.mxu0 0.0
    %5538 = vmatprep.subr.mxu0 0.0
    %5539 = vmatpush1.msra.mxu0 0.0
    %5540 = vmatprep.subr.mxu0 0.0
    %5541 = vmatpush1.msra.mxu0 0.0
    %5542 = vmatprep.subr.mxu0 0.0
    %5543 = vmatpush1.msra.mxu0 0.0
    %5544 = vmatprep.subr.mxu0 0.0
    %5545 = vmatpush1.msra.mxu0 0.0
    %5546 = vmatprep.subr.mxu0 0.0
    %5547 = vmatpush1.msra.mxu0 0.0
    %5548 = vmatprep.subr.mxu0 0.0
    %5549 = vmatpush1.msra.mxu0 0.0
    %5550 = vmatprep.subr.mxu0 0.0
    %5551 = vmatpush1.msra.mxu0 0.0
    %5552 = vmatprep.subr.mxu0 0.0
    %5553 = vmatpush1.msra.mxu0 0.0
    %5554 = vmatprep.subr.mxu0 0.0
    %5555 = vmatpush1.msra.mxu0 0.0
    %5556 = vmatprep.subr.mxu0 0.0
    %5557 = vmatpush1.msra.mxu0 0.0
    %5558 = vmatprep.subr.mxu0 0.0
    %5559 = vmatpush1.msra.mxu0 0.0
    %5560 = vmatprep.subr.mxu0 0.0
    %5561 = vmatpush1.msra.mxu0 0.0
    %5562 = vmatprep.subr.mxu0 0.0
    %5563 = vmatpush1.msra.mxu0 0.0
    %5564 = vmatprep.subr.mxu0 0.0
    %5565 = vmatpush1.msra.mxu0 0.0
    %5566 = vmatprep.subr.mxu0 0.0
    %5567 = vmatpush1.msra.mxu0 0.0
    %5568 = vmatprep.subr.mxu0 0.0
    %5569 = vmatpush1.msra.mxu0 0.0
    %5570 = vmatprep.subr.mxu0 0.0
    %5571 = vmatpush1.msra.mxu0 0.0
    %5572 = vmatprep.mubr.f32.mxu0 0.0
    %v5573 = vand.u32 %v5477, 4294901760
    %v5574 = vsub.f32 %v5477, %v5573
    %v5575 = vand.u32 %v5574, 4294901760
    %v5576 = vsub.f32 %v5574, %v5575
    %v5577 = vand.u32 %v5576, 4294901760
    %5578 = vmatmul.mubr.f32.gmra.mrb[0].mxu0 %v5577
    %v5579 = vpop.f32.mrb[0].mxu0
    %v5580 = vadd.f32 0.0, %v5579
    %v5581 = vpop.f32.mrb[0].mxu0
    %5582 = vmatprep.mubr.f32.mxu0 0.0
    %v5583 = vand.u32 %v5480, 4294901760
    %v5584 = vsub.f32 %v5480, %v5583
    %v5585 = vand.u32 %v5584, 4294901760
    %v5586 = vsub.f32 %v5584, %v5585
    %v5587 = vand.u32 %v5586, 4294901760
    %5588 = vmatmul.mubr.f32.gmra.mrb[0].mxu0 %v5587
    %v5589 = vpop.f32.mrb[0].mxu0
    %v5590 = vadd.f32 0.0, %v5589
    %v5591 = vpop.f32.mrb[0].mxu0
    %5592 = vmatprep.mubr.f32.mxu0 0.0
    %v5593 = vand.u32 %v5483, 4294901760
    %v5594 = vsub.f32 %v5483, %v5593
    %v5595 = vand.u32 %v5594, 4294901760
    %v5596 = vsub.f32 %v5594, %v5595
    %v5597 = vand.u32 %v5596, 4294901760
    %5598 = vmatmul.mubr.f32.gmra.mrb[0].mxu0 %v5597
    %v5599 = vpop.f32.mrb[0].mxu0
    %v5600 = vadd.f32 0.0, %v5599
    %v5601 = vpop.f32.mrb[0].mxu0
    %5602 = vmatprep.mubr.f32.mxu0 0.0
    %v5603 = vand.u32 %v5486, 4294901760
    %v5604 = vsub.f32 %v5486, %v5603
    %v5605 = vand.u32 %v5604, 4294901760
    %v5606 = vsub.f32 %v5604, %v5605
    %v5607 = vand.u32 %v5606, 4294901760
    %5608 = vmatmul.mubr.f32.gmra.mrb[0].mxu0 %v5607
    %v5609 = vpop.f32.mrb[0].mxu0
    %v5610 = vadd.f32 0.0, %v5609
    %v5611 = vpop.f32.mrb[0].mxu0
    %5612 = vmatprep.mubr.f32.mxu0 0.0
    %v5613 = vand.u32 %v5489, 4294901760
    %v5614 = vsub.f32 %v5489, %v5613
    %v5615 = vand.u32 %v5614, 4294901760
    %v5616 = vsub.f32 %v5614, %v5615
    %v5617 = vand.u32 %v5616, 4294901760
    %5618 = vmatmul.mubr.f32.gmra.mrb[0].mxu0 %v5617
    %v5619 = vpop.f32.mrb[0].mxu0
    %v5620 = vadd.f32 0.0, %v5619
    %v5621 = vpop.f32.mrb[0].mxu0
    %5622 = vmatprep.mubr.f32.mxu0 0.0
    %v5623 = vand.u32 %v5492, 4294901760
    %v5624 = vsub.f32 %v5492, %v5623
    %v5625 = vand.u32 %v5624, 4294901760
    %v5626 = vsub.f32 %v5624, %v5625
    %v5627 = vand.u32 %v5626, 4294901760
    %5628 = vmatmul.mubr.f32.gmra.mrb[0].mxu0 %v5627
    %v5629 = vpop.f32.mrb[0].mxu0
    %v5630 = vadd.f32 0.0, %v5629
    %v5631 = vpop.f32.mrb[0].mxu0
    %5632 = vmatprep.mubr.f32.mxu0 0.0
    %v5633 = vand.u32 %v5495, 4294901760
    %v5634 = vsub.f32 %v5495, %v5633
    %v5635 = vand.u32 %v5634, 4294901760
    %v5636 = vsub.f32 %v5634, %v5635
    %v5637 = vand.u32 %v5636, 4294901760
    %5638 = vmatmul.mubr.f32.gmra.mrb[0].mxu0 %v5637
    %v5639 = vpop.f32.mrb[0].mxu0
    %v5640 = vadd.f32 0.0, %v5639
    %v5641 = vpop.f32.mrb[0].mxu0
    %5642 = vmatprep.mubr.f32.mxu0 0.0
    %v5643 = vand.u32 %v5498, 4294901760
    %v5644 = vsub.f32 %v5498, %v5643
    %v5645 = vand.u32 %v5644, 4294901760
    %v5646 = vsub.f32 %v5644, %v5645
    %v5647 = vand.u32 %v5646, 4294901760
    %5648 = vmatmul.mubr.f32.gmra.mrb[0].mxu0 %v5647
    %v5649 = vpop.f32.mrb[0].mxu0
    %v5650 = vadd.f32 0.0, %v5649
    %v5651 = vpop.f32.mrb[0].mxu0
    %5652 = vmatprep.mubr.f32.mxu0 0.0
    %v5653 = vand.u32 %v5501, 4294901760
    %v5654 = vsub.f32 %v5501, %v5653
    %v5655 = vand.u32 %v5654, 4294901760
    %v5656 = vsub.f32 %v5654, %v5655
    %v5657 = vand.u32 %v5656, 4294901760
    %5658 = vmatmul.mubr.f32.gmra.mrb[0].mxu0 %v5657
    %v5659 = vpop.f32.mrb[0].mxu0
    %v5660 = vadd.f32 0.0, %v5659
    %v5661 = vpop.f32.mrb[0].mxu0
    %5662 = vmatprep.mubr.f32.mxu0 0.0
    %v5663 = vand.u32 %v5504, 4294901760
    %v5664 = vsub.f32 %v5504, %v5663
    %v5665 = vand.u32 %v5664, 4294901760
    %v5666 = vsub.f32 %v5664, %v5665
    %v5667 = vand.u32 %v5666, 4294901760
    %5668 = vmatmul.mubr.f32.gmra.mrb[0].mxu0 %v5667
    %v5669 = vpop.f32.mrb[0].mxu0
    %v5670 = vadd.f32 0.0, %v5669
    %v5671 = vpop.f32.mrb[0].mxu0
    %5672 = vdwg.mxu0
    %5673 = vmatprep.subr.mxu0 0.0
    %v5674 = vand.u32 %v85, 4294901760
    %v5675 = vsub.f32 %v85, %v5674
    %v5676 = vand.u32 %v5675, 4294901760
    %v5677 = vsub.f32 %v5675, %v5676
    %v5678 = vand.u32 %v5677, 4294901760
    %5679 = vmatpush1.msra.mxu0 %v5678
    %5680 = vmatprep.subr.mxu0 0.0
    %v5681 = vand.u32 %v86, 4294901760
    %v5682 = vsub.f32 %v86, %v5681
    %v5683 = vand.u32 %v5682, 4294901760
    %v5684 = vsub.f32 %v5682, %v5683
    %v5685 = vand.u32 %v5684, 4294901760
    %5686 = vmatpush1.msra.mxu0 %v5685
    %5687 = vmatprep.subr.mxu0 0.0
    %5688 = vmatpush1.msra.mxu0 0.0
    %5689 = vmatprep.subr.mxu0 0.0
    %5690 = vmatpush1.msra.mxu0 0.0
    %5691 = vmatprep.subr.mxu0 0.0
    %5692 = vmatpush1.msra.mxu0 0.0
    %5693 = vmatprep.subr.mxu0 0.0
    %5694 = vmatpush1.msra.mxu0 0.0
    %5695 = vmatprep.subr.mxu0 0.0
    %5696 = vmatpush1.msra.mxu0 0.0
    %5697 = vmatprep.subr.mxu0 0.0
    %5698 = vmatpush1.msra.mxu0 0.0
    %5699 = vmatprep.subr.mxu0 0.0
    %5700 = vmatpush1.msra.mxu0 0.0
    %5701 = vmatprep.subr.mxu0 0.0
    %5702 = vmatpush1.msra.mxu0 0.0
    %5703 = vmatprep.subr.mxu0 0.0
    %5704 = vmatpush1.msra.mxu0 0.0
    %5705 = vmatprep.subr.mxu0 0.0
    %5706 = vmatpush1.msra.mxu0 0.0
    %5707 = vmatprep.subr.mxu0 0.0
    %5708 = vmatpush1.msra.mxu0 0.0
    %5709 = vmatprep.subr.mxu0 0.0
    %5710 = vmatpush1.msra.mxu0 0.0
    %5711 = vmatprep.subr.mxu0 0.0
    %5712 = vmatpush1.msra.mxu0 0.0
    %5713 = vmatprep.subr.mxu0 0.0
    %5714 = vmatpush1.msra.mxu0 0.0
    %5715 = vmatprep.subr.mxu0 0.0
    %5716 = vmatpush1.msra.mxu0 0.0
    %5717 = vmatprep.subr.mxu0 0.0
    %5718 = vmatpush1.msra.mxu0 0.0
    %5719 = vmatprep.subr.mxu0 0.0
    %5720 = vmatpush1.msra.mxu0 0.0
    %5721 = vmatprep.subr.mxu0 0.0
    %5722 = vmatpush1.msra.mxu0 0.0
    %5723 = vmatprep.subr.mxu0 0.0
    %5724 = vmatpush1.msra.mxu0 0.0
    %5725 = vmatprep.subr.mxu0 0.0
    %5726 = vmatpush1.msra.mxu0 0.0
    %5727 = vmatprep.subr.mxu0 0.0
    %5728 = vmatpush1.msra.mxu0 0.0
    %5729 = vmatprep.subr.mxu0 0.0
    %5730 = vmatpush1.msra.mxu0 0.0
    %5731 = vmatprep.subr.mxu0 0.0
    %5732 = vmatpush1.msra.mxu0 0.0
    %5733 = vmatprep.subr.mxu0 0.0
    %5734 = vmatpush1.msra.mxu0 0.0
    %5735 = vmatprep.subr.mxu0 0.0
    %5736 = vmatpush1.msra.mxu0 0.0
    %5737 = vmatprep.subr.mxu0 0.0
    %5738 = vmatpush1.msra.mxu0 0.0
    %5739 = vmatprep.subr.mxu0 0.0
    %5740 = vmatpush1.msra.mxu0 0.0
    %5741 = vmatprep.subr.mxu0 0.0
    %5742 = vmatpush1.msra.mxu0 0.0
    %5743 = vmatprep.subr.mxu0 0.0
    %5744 = vmatpush1.msra.mxu0 0.0
    %5745 = vmatprep.subr.mxu0 0.0
    %5746 = vmatpush1.msra.mxu0 0.0
    %5747 = vmatprep.mubr.f32.mxu0 0.0
    %v5748 = vand.u32 %v5477, 4294901760
    %5749 = vmatmul.mubr.f32.gmra.mrb[0].mxu0 %v5748
    %v5750 = vpop.f32.mrb[0].mxu0
    %v5751 = vadd.f32 %v5580, %v5750
    %v5752 = vpop.f32.mrb[0].mxu0
    %5753 = vmatprep.mubr.f32.mxu0 0.0
    %v5754 = vand.u32 %v5480, 4294901760
    %5755 = vmatmul.mubr.f32.gmra.mrb[0].mxu0 %v5754
    %v5756 = vpop.f32.mrb[0].mxu0
    %v5757 = vadd.f32 %v5590, %v5756
    %v5758 = vpop.f32.mrb[0].mxu0
    %5759 = vmatprep.mubr.f32.mxu0 0.0
    %v5760 = vand.u32 %v5483, 4294901760
    %5761 = vmatmul.mubr.f32.gmra.mrb[0].mxu0 %v5760
    %v5762 = vpop.f32.mrb[0].mxu0
    %v5763 = vadd.f32 %v5600, %v5762
    %v5764 = vpop.f32.mrb[0].mxu0
    %5765 = vmatprep.mubr.f32.mxu0 0.0
    %v5766 = vand.u32 %v5486, 4294901760
    %5767 = vmatmul.mubr.f32.gmra.mrb[0].mxu0 %v5766
    %v5768 = vpop.f32.mrb[0].mxu0
    %v5769 = vadd.f32 %v5610, %v5768
    %v5770 = vpop.f32.mrb[0].mxu0
    %5771 = vmatprep.mubr.f32.mxu0 0.0
    %v5772 = vand.u32 %v5489, 4294901760
    %5773 = vmatmul.mubr.f32.gmra.mrb[0].mxu0 %v5772
    %v5774 = vpop.f32.mrb[0].mxu0
    %v5775 = vadd.f32 %v5620, %v5774
    %v5776 = vpop.f32.mrb[0].mxu0
    %5777 = vmatprep.mubr.f32.mxu0 0.0
    %v5778 = vand.u32 %v5492, 4294901760
    %5779 = vmatmul.mubr.f32.gmra.mrb[0].mxu0 %v5778
    %v5780 = vpop.f32.mrb[0].mxu0
    %v5781 = vadd.f32 %v5630, %v5780
    %v5782 = vpop.f32.mrb[0].mxu0
    %5783 = vmatprep.mubr.f32.mxu0 0.0
    %v5784 = vand.u32 %v5495, 4294901760
    %5785 = vmatmul.mubr.f32.gmra.mrb[0].mxu0 %v5784
    %v5786 = vpop.f32.mrb[0].mxu0
    %v5787 = vadd.f32 %v5640, %v5786
    %v5788 = vpop.f32.mrb[0].mxu0
    %5789 = vmatprep.mubr.f32.mxu0 0.0
    %v5790 = vand.u32 %v5498, 4294901760
    %5791 = vmatmul.mubr.f32.gmra.mrb[0].mxu0 %v5790
    %v5792 = vpop.f32.mrb[0].mxu0
    %v5793 = vadd.f32 %v5650, %v5792
    %v5794 = vpop.f32.mrb[0].mxu0
    %5795 = vmatprep.mubr.f32.mxu0 0.0
    %v5796 = vand.u32 %v5501, 4294901760
    %5797 = vmatmul.mubr.f32.gmra.mrb[0].mxu0 %v5796
    %v5798 = vpop.f32.mrb[0].mxu0
    %v5799 = vadd.f32 %v5660, %v5798
    %v5800 = vpop.f32.mrb[0].mxu0
    %5801 = vmatprep.mubr.f32.mxu0 0.0
    %v5802 = vand.u32 %v5504, 4294901760
    %5803 = vmatmul.mubr.f32.gmra.mrb[0].mxu0 %v5802
    %v5804 = vpop.f32.mrb[0].mxu0
    %v5805 = vadd.f32 %v5670, %v5804
    %v5806 = vpop.f32.mrb[0].mxu0
    %5807 = vdwg.mxu0
    %5808 = vmatprep.subr.mxu0 0.0
    %v5809 = vand.u32 %v85, 4294901760
    %v5810 = vsub.f32 %v85, %v5809
    %5811 = vmatpush1.msra.mxu0 %v5810
    %5812 = vmatprep.subr.mxu0 0.0
    %v5813 = vand.u32 %v86, 4294901760
    %v5814 = vsub.f32 %v86, %v5813
    %5815 = vmatpush1.msra.mxu0 %v5814
    %5816 = vmatprep.subr.mxu0 0.0
    %5817 = vmatpush1.msra.mxu0 0.0
    %5818 = vmatprep.subr.mxu0 0.0
    %5819 = vmatpush1.msra.mxu0 0.0
    %5820 = vmatprep.subr.mxu0 0.0
    %5821 = vmatpush1.msra.mxu0 0.0
    %5822 = vmatprep.subr.mxu0 0.0
    %5823 = vmatpush1.msra.mxu0 0.0
    %5824 = vmatprep.subr.mxu0 0.0
    %5825 = vmatpush1.msra.mxu0 0.0
    %5826 = vmatprep.subr.mxu0 0.0
    %5827 = vmatpush1.msra.mxu0 0.0
    %5828 = vmatprep.subr.mxu0 0.0
    %5829 = vmatpush1.msra.mxu0 0.0
    %5830 = vmatprep.subr.mxu0 0.0
    %5831 = vmatpush1.msra.mxu0 0.0
    %5832 = vmatprep.subr.mxu0 0.0
    %5833 = vmatpush1.msra.mxu0 0.0
    %5834 = vmatprep.subr.mxu0 0.0
    %5835 = vmatpush1.msra.mxu0 0.0
    %5836 = vmatprep.subr.mxu0 0.0
    %5837 = vmatpush1.msra.mxu0 0.0
    %5838 = vmatprep.subr.mxu0 0.0
    %5839 = vmatpush1.msra.mxu0 0.0
    %5840 = vmatprep.subr.mxu0 0.0
    %5841 = vmatpush1.msra.mxu0 0.0
    %5842 = vmatprep.subr.mxu0 0.0
    %5843 = vmatpush1.msra.mxu0 0.0
    %5844 = vmatprep.subr.mxu0 0.0
    %5845 = vmatpush1.msra.mxu0 0.0
    %5846 = vmatprep.subr.mxu0 0.0
    %5847 = vmatpush1.msra.mxu0 0.0
    %5848 = vmatprep.subr.mxu0 0.0
    %5849 = vmatpush1.msra.mxu0 0.0
    %5850 = vmatprep.subr.mxu0 0.0
    %5851 = vmatpush1.msra.mxu0 0.0
    %5852 = vmatprep.subr.mxu0 0.0
    %5853 = vmatpush1.msra.mxu0 0.0
    %5854 = vmatprep.subr.mxu0 0.0
    %5855 = vmatpush1.msra.mxu0 0.0
    %5856 = vmatprep.subr.mxu0 0.0
    %5857 = vmatpush1.msra.mxu0 0.0
    %5858 = vmatprep.subr.mxu0 0.0
    %5859 = vmatpush1.msra.mxu0 0.0
    %5860 = vmatprep.subr.mxu0 0.0
    %5861 = vmatpush1.msra.mxu0 0.0
    %5862 = vmatprep.subr.mxu0 0.0
    %5863 = vmatpush1.msra.mxu0 0.0
    %5864 = vmatprep.subr.mxu0 0.0
    %5865 = vmatpush1.msra.mxu0 0.0
    %5866 = vmatprep.subr.mxu0 0.0
    %5867 = vmatpush1.msra.mxu0 0.0
    %5868 = vmatprep.subr.mxu0 0.0
    %5869 = vmatpush1.msra.mxu0 0.0
    %5870 = vmatprep.subr.mxu0 0.0
    %5871 = vmatpush1.msra.mxu0 0.0
    %5872 = vmatprep.subr.mxu0 0.0
    %5873 = vmatpush1.msra.mxu0 0.0
    %5874 = vmatprep.subr.mxu0 0.0
    %5875 = vmatpush1.msra.mxu0 0.0
    %5876 = vmatprep.mubr.f32.mxu0 0.0
    %v5877 = vand.u32 %v5477, 4294901760
    %v5878 = vsub.f32 %v5477, %v5877
    %5879 = vmatmul.mubr.f32.gmra.mrb[0].mxu0 %v5878
    %v5880 = vpop.f32.mrb[0].mxu0
    %v5881 = vadd.f32 %v5751, %v5880
    %v5882 = vpop.f32.mrb[0].mxu0
    %5883 = vmatprep.mubr.f32.mxu0 0.0
    %v5884 = vand.u32 %v5480, 4294901760
    %v5885 = vsub.f32 %v5480, %v5884
    %5886 = vmatmul.mubr.f32.gmra.mrb[0].mxu0 %v5885
    %v5887 = vpop.f32.mrb[0].mxu0
    %v5888 = vadd.f32 %v5757, %v5887
    %v5889 = vpop.f32.mrb[0].mxu0
    %5890 = vmatprep.mubr.f32.mxu0 0.0
    %v5891 = vand.u32 %v5483, 4294901760
    %v5892 = vsub.f32 %v5483, %v5891
    %5893 = vmatmul.mubr.f32.gmra.mrb[0].mxu0 %v5892
    %v5894 = vpop.f32.mrb[0].mxu0
    %v5895 = vadd.f32 %v5763, %v5894
    %v5896 = vpop.f32.mrb[0].mxu0
    %5897 = vmatprep.mubr.f32.mxu0 0.0
    %v5898 = vand.u32 %v5486, 4294901760
    %v5899 = vsub.f32 %v5486, %v5898
    %5900 = vmatmul.mubr.f32.gmra.mrb[0].mxu0 %v5899
    %v5901 = vpop.f32.mrb[0].mxu0
    %v5902 = vadd.f32 %v5769, %v5901
    %v5903 = vpop.f32.mrb[0].mxu0
    %5904 = vmatprep.mubr.f32.mxu0 0.0
    %v5905 = vand.u32 %v5489, 4294901760
    %v5906 = vsub.f32 %v5489, %v5905
    %5907 = vmatmul.mubr.f32.gmra.mrb[0].mxu0 %v5906
    %v5908 = vpop.f32.mrb[0].mxu0
    %v5909 = vadd.f32 %v5775, %v5908
    %v5910 = vpop.f32.mrb[0].mxu0
    %5911 = vmatprep.mubr.f32.mxu0 0.0
    %v5912 = vand.u32 %v5492, 4294901760
    %v5913 = vsub.f32 %v5492, %v5912
    %5914 = vmatmul.mubr.f32.gmra.mrb[0].mxu0 %v5913
    %v5915 = vpop.f32.mrb[0].mxu0
    %v5916 = vadd.f32 %v5781, %v5915
    %v5917 = vpop.f32.mrb[0].mxu0
    %5918 = vmatprep.mubr.f32.mxu0 0.0
    %v5919 = vand.u32 %v5495, 4294901760
    %v5920 = vsub.f32 %v5495, %v5919
    %5921 = vmatmul.mubr.f32.gmra.mrb[0].mxu0 %v5920
    %v5922 = vpop.f32.mrb[0].mxu0
    %v5923 = vadd.f32 %v5787, %v5922
    %v5924 = vpop.f32.mrb[0].mxu0
    %5925 = vmatprep.mubr.f32.mxu0 0.0
    %v5926 = vand.u32 %v5498, 4294901760
    %v5927 = vsub.f32 %v5498, %v5926
    %5928 = vmatmul.mubr.f32.gmra.mrb[0].mxu0 %v5927
    %v5929 = vpop.f32.mrb[0].mxu0
    %v5930 = vadd.f32 %v5793, %v5929
    %v5931 = vpop.f32.mrb[0].mxu0
    %5932 = vmatprep.mubr.f32.mxu0 0.0
    %v5933 = vand.u32 %v5501, 4294901760
    %v5934 = vsub.f32 %v5501, %v5933
    %5935 = vmatmul.mubr.f32.gmra.mrb[0].mxu0 %v5934
    %v5936 = vpop.f32.mrb[0].mxu0
    %v5937 = vadd.f32 %v5799, %v5936
    %v5938 = vpop.f32.mrb[0].mxu0
    %5939 = vmatprep.mubr.f32.mxu0 0.0
    %v5940 = vand.u32 %v5504, 4294901760
    %v5941 = vsub.f32 %v5504, %v5940
    %5942 = vmatmul.mubr.f32.gmra.mrb[0].mxu0 %v5941
    %v5943 = vpop.f32.mrb[0].mxu0
    %v5944 = vadd.f32 %v5805, %v5943
    %v5945 = vpop.f32.mrb[0].mxu0
    %5946 = vdwg.mxu0
    %5947 = vmatprep.subr.mxu0 0.0
    %v5948 = vand.u32 %v85, 4294901760
    %5949 = vmatpush1.msra.mxu0 %v5948
    %5950 = vmatprep.subr.mxu0 0.0
    %v5951 = vand.u32 %v86, 4294901760
    %5952 = vmatpush1.msra.mxu0 %v5951
    %5953 = vmatprep.subr.mxu0 0.0
    %5954 = vmatpush1.msra.mxu0 0.0
    %5955 = vmatprep.subr.mxu0 0.0
    %5956 = vmatpush1.msra.mxu0 0.0
    %5957 = vmatprep.subr.mxu0 0.0
    %5958 = vmatpush1.msra.mxu0 0.0
    %5959 = vmatprep.subr.mxu0 0.0
    %5960 = vmatpush1.msra.mxu0 0.0
    %5961 = vmatprep.subr.mxu0 0.0
    %5962 = vmatpush1.msra.mxu0 0.0
    %5963 = vmatprep.subr.mxu0 0.0
    %5964 = vmatpush1.msra.mxu0 0.0
    %5965 = vmatprep.subr.mxu0 0.0
    %5966 = vmatpush1.msra.mxu0 0.0
    %5967 = vmatprep.subr.mxu0 0.0
    %5968 = vmatpush1.msra.mxu0 0.0
    %5969 = vmatprep.subr.mxu0 0.0
    %5970 = vmatpush1.msra.mxu0 0.0
    %5971 = vmatprep.subr.mxu0 0.0
    %5972 = vmatpush1.msra.mxu0 0.0
    %5973 = vmatprep.subr.mxu0 0.0
    %5974 = vmatpush1.msra.mxu0 0.0
    %5975 = vmatprep.subr.mxu0 0.0
    %5976 = vmatpush1.msra.mxu0 0.0
    %5977 = vmatprep.subr.mxu0 0.0
    %5978 = vmatpush1.msra.mxu0 0.0
    %5979 = vmatprep.subr.mxu0 0.0
    %5980 = vmatpush1.msra.mxu0 0.0
    %5981 = vmatprep.subr.mxu0 0.0
    %5982 = vmatpush1.msra.mxu0 0.0
    %5983 = vmatprep.subr.mxu0 0.0
    %5984 = vmatpush1.msra.mxu0 0.0
    %5985 = vmatprep.subr.mxu0 0.0
    %5986 = vmatpush1.msra.mxu0 0.0
    %5987 = vmatprep.subr.mxu0 0.0
    %5988 = vmatpush1.msra.mxu0 0.0
    %5989 = vmatprep.subr.mxu0 0.0
    %5990 = vmatpush1.msra.mxu0 0.0
    %5991 = vmatprep.subr.mxu0 0.0
    %5992 = vmatpush1.msra.mxu0 0.0
    %5993 = vmatprep.subr.mxu0 0.0
    %5994 = vmatpush1.msra.mxu0 0.0
    %5995 = vmatprep.subr.mxu0 0.0
    %5996 = vmatpush1.msra.mxu0 0.0
    %5997 = vmatprep.subr.mxu0 0.0
    %5998 = vmatpush1.msra.mxu0 0.0
    %5999 = vmatprep.subr.mxu0 0.0
    %6000 = vmatpush1.msra.mxu0 0.0
    %6001 = vmatprep.subr.mxu0 0.0
    %6002 = vmatpush1.msra.mxu0 0.0
    %6003 = vmatprep.subr.mxu0 0.0
    %6004 = vmatpush1.msra.mxu0 0.0
    %6005 = vmatprep.subr.mxu0 0.0
    %6006 = vmatpush1.msra.mxu0 0.0
    %6007 = vmatprep.subr.mxu0 0.0
    %6008 = vmatpush1.msra.mxu0 0.0
    %6009 = vmatprep.subr.mxu0 0.0
    %6010 = vmatpush1.msra.mxu0 0.0
    %6011 = vmatprep.subr.mxu0 0.0
    %6012 = vmatpush1.msra.mxu0 0.0
    %6013 = vmatprep.mubr.f32.mxu0 0.0
    %v6014 = vand.u32 %v5477, 4294901760
    %v6015 = vsub.f32 %v5477, %v6014
    %v6016 = vand.u32 %v6015, 4294901760
    %6017 = vmatmul.mubr.f32.gmra.mrb[0].mxu0 %v6016
    %v6018 = vpop.f32.mrb[0].mxu0
    %v6019 = vadd.f32 %v5881, %v6018
    %v6020 = vpop.f32.mrb[0].mxu0
    %6021 = vmatprep.mubr.f32.mxu0 0.0
    %v6022 = vand.u32 %v5480, 4294901760
    %v6023 = vsub.f32 %v5480, %v6022
    %v6024 = vand.u32 %v6023, 4294901760
    %6025 = vmatmul.mubr.f32.gmra.mrb[0].mxu0 %v6024
    %v6026 = vpop.f32.mrb[0].mxu0
    %v6027 = vadd.f32 %v5888, %v6026
    %v6028 = vpop.f32.mrb[0].mxu0
    %6029 = vmatprep.mubr.f32.mxu0 0.0
    %v6030 = vand.u32 %v5483, 4294901760
    %v6031 = vsub.f32 %v5483, %v6030
    %v6032 = vand.u32 %v6031, 4294901760
    %6033 = vmatmul.mubr.f32.gmra.mrb[0].mxu0 %v6032
    %v6034 = vpop.f32.mrb[0].mxu0
    %v6035 = vadd.f32 %v5895, %v6034
    %v6036 = vpop.f32.mrb[0].mxu0
    %6037 = vmatprep.mubr.f32.mxu0 0.0
    %v6038 = vand.u32 %v5486, 4294901760
    %v6039 = vsub.f32 %v5486, %v6038
    %v6040 = vand.u32 %v6039, 4294901760
    %6041 = vmatmul.mubr.f32.gmra.mrb[0].mxu0 %v6040
    %v6042 = vpop.f32.mrb[0].mxu0
    %v6043 = vadd.f32 %v5902, %v6042
    %v6044 = vpop.f32.mrb[0].mxu0
    %6045 = vmatprep.mubr.f32.mxu0 0.0
    %v6046 = vand.u32 %v5489, 4294901760
    %v6047 = vsub.f32 %v5489, %v6046
    %v6048 = vand.u32 %v6047, 4294901760
    %6049 = vmatmul.mubr.f32.gmra.mrb[0].mxu0 %v6048
    %v6050 = vpop.f32.mrb[0].mxu0
    %v6051 = vadd.f32 %v5909, %v6050
    %v6052 = vpop.f32.mrb[0].mxu0
    %6053 = vmatprep.mubr.f32.mxu0 0.0
    %v6054 = vand.u32 %v5492, 4294901760
    %v6055 = vsub.f32 %v5492, %v6054
    %v6056 = vand.u32 %v6055, 4294901760
    %6057 = vmatmul.mubr.f32.gmra.mrb[0].mxu0 %v6056
    %v6058 = vpop.f32.mrb[0].mxu0
    %v6059 = vadd.f32 %v5916, %v6058
    %v6060 = vpop.f32.mrb[0].mxu0
    %6061 = vmatprep.mubr.f32.mxu0 0.0
    %v6062 = vand.u32 %v5495, 4294901760
    %v6063 = vsub.f32 %v5495, %v6062
    %v6064 = vand.u32 %v6063, 4294901760
    %6065 = vmatmul.mubr.f32.gmra.mrb[0].mxu0 %v6064
    %v6066 = vpop.f32.mrb[0].mxu0
    %v6067 = vadd.f32 %v5923, %v6066
    %v6068 = vpop.f32.mrb[0].mxu0
    %6069 = vmatprep.mubr.f32.mxu0 0.0
    %v6070 = vand.u32 %v5498, 4294901760
    %v6071 = vsub.f32 %v5498, %v6070
    %v6072 = vand.u32 %v6071, 4294901760
    %6073 = vmatmul.mubr.f32.gmra.mrb[0].mxu0 %v6072
    %v6074 = vpop.f32.mrb[0].mxu0
    %v6075 = vadd.f32 %v5930, %v6074
    %v6076 = vpop.f32.mrb[0].mxu0
    %6077 = vmatprep.mubr.f32.mxu0 0.0
    %v6078 = vand.u32 %v5501, 4294901760
    %v6079 = vsub.f32 %v5501, %v6078
    %v6080 = vand.u32 %v6079, 4294901760
    %6081 = vmatmul.mubr.f32.gmra.mrb[0].mxu0 %v6080
    %v6082 = vpop.f32.mrb[0].mxu0
    %v6083 = vadd.f32 %v5937, %v6082
    %v6084 = vpop.f32.mrb[0].mxu0
    %6085 = vmatprep.mubr.f32.mxu0 0.0
    %v6086 = vand.u32 %v5504, 4294901760
    %v6087 = vsub.f32 %v5504, %v6086
    %v6088 = vand.u32 %v6087, 4294901760
    %6089 = vmatmul.mubr.f32.gmra.mrb[0].mxu0 %v6088
    %v6090 = vpop.f32.mrb[0].mxu0
    %v6091 = vadd.f32 %v5944, %v6090
    %v6092 = vpop.f32.mrb[0].mxu0
    %6093 = vdwg.mxu0
    %6094 = vmatprep.subr.mxu0 0.0
    %v6095 = vand.u32 %v85, 4294901760
    %v6096 = vsub.f32 %v85, %v6095
    %v6097 = vand.u32 %v6096, 4294901760
    %6098 = vmatpush1.msra.mxu0 %v6097
    %6099 = vmatprep.subr.mxu0 0.0
    %v6100 = vand.u32 %v86, 4294901760
    %v6101 = vsub.f32 %v86, %v6100
    %v6102 = vand.u32 %v6101, 4294901760
    %6103 = vmatpush1.msra.mxu0 %v6102
    %6104 = vmatprep.subr.mxu0 0.0
    %6105 = vmatpush1.msra.mxu0 0.0
    %6106 = vmatprep.subr.mxu0 0.0
    %6107 = vmatpush1.msra.mxu0 0.0
    %6108 = vmatprep.subr.mxu0 0.0
    %6109 = vmatpush1.msra.mxu0 0.0
    %6110 = vmatprep.subr.mxu0 0.0
    %6111 = vmatpush1.msra.mxu0 0.0
    %6112 = vmatprep.subr.mxu0 0.0
    %6113 = vmatpush1.msra.mxu0 0.0
    %6114 = vmatprep.subr.mxu0 0.0
    %6115 = vmatpush1.msra.mxu0 0.0
    %6116 = vmatprep.subr.mxu0 0.0
    %6117 = vmatpush1.msra.mxu0 0.0
    %6118 = vmatprep.subr.mxu0 0.0
    %6119 = vmatpush1.msra.mxu0 0.0
    %6120 = vmatprep.subr.mxu0 0.0
    %6121 = vmatpush1.msra.mxu0 0.0
    %6122 = vmatprep.subr.mxu0 0.0
    %6123 = vmatpush1.msra.mxu0 0.0
    %6124 = vmatprep.subr.mxu0 0.0
    %6125 = vmatpush1.msra.mxu0 0.0
    %6126 = vmatprep.subr.mxu0 0.0
    %6127 = vmatpush1.msra.mxu0 0.0
    %6128 = vmatprep.subr.mxu0 0.0
    %6129 = vmatpush1.msra.mxu0 0.0
    %6130 = vmatprep.subr.mxu0 0.0
    %6131 = vmatpush1.msra.mxu0 0.0
    %6132 = vmatprep.subr.mxu0 0.0
    %6133 = vmatpush1.msra.mxu0 0.0
    %6134 = vmatprep.subr.mxu0 0.0
    %6135 = vmatpush1.msra.mxu0 0.0
    %6136 = vmatprep.subr.mxu0 0.0
    %6137 = vmatpush1.msra.mxu0 0.0
    %6138 = vmatprep.subr.mxu0 0.0
    %6139 = vmatpush1.msra.mxu0 0.0
    %6140 = vmatprep.subr.mxu0 0.0
    %6141 = vmatpush1.msra.mxu0 0.0
    %6142 = vmatprep.subr.mxu0 0.0
    %6143 = vmatpush1.msra.mxu0 0.0
    %6144 = vmatprep.subr.mxu0 0.0
    %6145 = vmatpush1.msra.mxu0 0.0
    %6146 = vmatprep.subr.mxu0 0.0
    %6147 = vmatpush1.msra.mxu0 0.0
    %6148 = vmatprep.subr.mxu0 0.0
    %6149 = vmatpush1.msra.mxu0 0.0
    %6150 = vmatprep.subr.mxu0 0.0
    %6151 = vmatpush1.msra.mxu0 0.0
    %6152 = vmatprep.subr.mxu0 0.0
    %6153 = vmatpush1.msra.mxu0 0.0
    %6154 = vmatprep.subr.mxu0 0.0
    %6155 = vmatpush1.msra.mxu0 0.0
    %6156 = vmatprep.subr.mxu0 0.0
    %6157 = vmatpush1.msra.mxu0 0.0
    %6158 = vmatprep.subr.mxu0 0.0
    %6159 = vmatpush1.msra.mxu0 0.0
    %6160 = vmatprep.subr.mxu0 0.0
    %6161 = vmatpush1.msra.mxu0 0.0
    %6162 = vmatprep.subr.mxu0 0.0
    %6163 = vmatpush1.msra.mxu0 0.0
    %6164 = vmatprep.mubr.f32.mxu0 0.0
    %v6165 = vand.u32 %v5477, 4294901760
    %6166 = vmatmul.mubr.f32.gmra.mrb[0].mxu0 %v6165
    %v6167 = vpop.f32.mrb[0].mxu0
    %v6168 = vadd.f32 %v6019, %v6167
    %v6169 = vpop.f32.mrb[0].mxu0
    %6170 = vmatprep.mubr.f32.mxu0 0.0
    %v6171 = vand.u32 %v5480, 4294901760
    %6172 = vmatmul.mubr.f32.gmra.mrb[0].mxu0 %v6171
    %v6173 = vpop.f32.mrb[0].mxu0
    %v6174 = vadd.f32 %v6027, %v6173
    %v6175 = vpop.f32.mrb[0].mxu0
    %6176 = vmatprep.mubr.f32.mxu0 0.0
    %v6177 = vand.u32 %v5483, 4294901760
    %6178 = vmatmul.mubr.f32.gmra.mrb[0].mxu0 %v6177
    %v6179 = vpop.f32.mrb[0].mxu0
    %v6180 = vadd.f32 %v6035, %v6179
    %v6181 = vpop.f32.mrb[0].mxu0
    %6182 = vmatprep.mubr.f32.mxu0 0.0
    %v6183 = vand.u32 %v5486, 4294901760
    %6184 = vmatmul.mubr.f32.gmra.mrb[0].mxu0 %v6183
    %v6185 = vpop.f32.mrb[0].mxu0
    %v6186 = vadd.f32 %v6043, %v6185
    %v6187 = vpop.f32.mrb[0].mxu0
    %6188 = vmatprep.mubr.f32.mxu0 0.0
    %v6189 = vand.u32 %v5489, 4294901760
    %6190 = vmatmul.mubr.f32.gmra.mrb[0].mxu0 %v6189
    %v6191 = vpop.f32.mrb[0].mxu0
    %v6192 = vadd.f32 %v6051, %v6191
    %v6193 = vpop.f32.mrb[0].mxu0
    %6194 = vmatprep.mubr.f32.mxu0 0.0
    %v6195 = vand.u32 %v5492, 4294901760
    %6196 = vmatmul.mubr.f32.gmra.mrb[0].mxu0 %v6195
    %v6197 = vpop.f32.mrb[0].mxu0
    %v6198 = vadd.f32 %v6059, %v6197
    %v6199 = vpop.f32.mrb[0].mxu0
    %6200 = vmatprep.mubr.f32.mxu0 0.0
    %v6201 = vand.u32 %v5495, 4294901760
    %6202 = vmatmul.mubr.f32.gmra.mrb[0].mxu0 %v6201
    %v6203 = vpop.f32.mrb[0].mxu0
    %v6204 = vadd.f32 %v6067, %v6203
    %v6205 = vpop.f32.mrb[0].mxu0
    %6206 = vmatprep.mubr.f32.mxu0 0.0
    %v6207 = vand.u32 %v5498, 4294901760
    %6208 = vmatmul.mubr.f32.gmra.mrb[0].mxu0 %v6207
    %v6209 = vpop.f32.mrb[0].mxu0
    %v6210 = vadd.f32 %v6075, %v6209
    %v6211 = vpop.f32.mrb[0].mxu0
    %6212 = vmatprep.mubr.f32.mxu0 0.0
    %v6213 = vand.u32 %v5501, 4294901760
    %6214 = vmatmul.mubr.f32.gmra.mrb[0].mxu0 %v6213
    %v6215 = vpop.f32.mrb[0].mxu0
    %v6216 = vadd.f32 %v6083, %v6215
    %v6217 = vpop.f32.mrb[0].mxu0
    %6218 = vmatprep.mubr.f32.mxu0 0.0
    %v6219 = vand.u32 %v5504, 4294901760
    %6220 = vmatmul.mubr.f32.gmra.mrb[0].mxu0 %v6219
    %v6221 = vpop.f32.mrb[0].mxu0
    %v6222 = vadd.f32 %v6091, %v6221
    %v6223 = vpop.f32.mrb[0].mxu0
    %6224 = vdwg.mxu0
    %6225 = vmatprep.subr.mxu0 0.0
    %v6226 = vand.u32 %v85, 4294901760
    %6227 = vmatpush1.msra.mxu0 %v6226
    %6228 = vmatprep.subr.mxu0 0.0
    %v6229 = vand.u32 %v86, 4294901760
    %6230 = vmatpush1.msra.mxu0 %v6229
    %6231 = vmatprep.subr.mxu0 0.0
    %6232 = vmatpush1.msra.mxu0 0.0
    %6233 = vmatprep.subr.mxu0 0.0
    %6234 = vmatpush1.msra.mxu0 0.0
    %6235 = vmatprep.subr.mxu0 0.0
    %6236 = vmatpush1.msra.mxu0 0.0
    %6237 = vmatprep.subr.mxu0 0.0
    %6238 = vmatpush1.msra.mxu0 0.0
    %6239 = vmatprep.subr.mxu0 0.0
    %6240 = vmatpush1.msra.mxu0 0.0
    %6241 = vmatprep.subr.mxu0 0.0
    %6242 = vmatpush1.msra.mxu0 0.0
    %6243 = vmatprep.subr.mxu0 0.0
    %6244 = vmatpush1.msra.mxu0 0.0
    %6245 = vmatprep.subr.mxu0 0.0
    %6246 = vmatpush1.msra.mxu0 0.0
    %6247 = vmatprep.subr.mxu0 0.0
    %6248 = vmatpush1.msra.mxu0 0.0
    %6249 = vmatprep.subr.mxu0 0.0
    %6250 = vmatpush1.msra.mxu0 0.0
    %6251 = vmatprep.subr.mxu0 0.0
    %6252 = vmatpush1.msra.mxu0 0.0
    %6253 = vmatprep.subr.mxu0 0.0
    %6254 = vmatpush1.msra.mxu0 0.0
    %6255 = vmatprep.subr.mxu0 0.0
    %6256 = vmatpush1.msra.mxu0 0.0
    %6257 = vmatprep.subr.mxu0 0.0
    %6258 = vmatpush1.msra.mxu0 0.0
    %6259 = vmatprep.subr.mxu0 0.0
    %6260 = vmatpush1.msra.mxu0 0.0
    %6261 = vmatprep.subr.mxu0 0.0
    %6262 = vmatpush1.msra.mxu0 0.0
    %6263 = vmatprep.subr.mxu0 0.0
    %6264 = vmatpush1.msra.mxu0 0.0
    %6265 = vmatprep.subr.mxu0 0.0
    %6266 = vmatpush1.msra.mxu0 0.0
    %6267 = vmatprep.subr.mxu0 0.0
    %6268 = vmatpush1.msra.mxu0 0.0
    %6269 = vmatprep.subr.mxu0 0.0
    %6270 = vmatpush1.msra.mxu0 0.0
    %6271 = vmatprep.subr.mxu0 0.0
    %6272 = vmatpush1.msra.mxu0 0.0
    %6273 = vmatprep.subr.mxu0 0.0
    %6274 = vmatpush1.msra.mxu0 0.0
    %6275 = vmatprep.subr.mxu0 0.0
    %6276 = vmatpush1.msra.mxu0 0.0
    %6277 = vmatprep.subr.mxu0 0.0
    %6278 = vmatpush1.msra.mxu0 0.0
    %6279 = vmatprep.subr.mxu0 0.0
    %6280 = vmatpush1.msra.mxu0 0.0
    %6281 = vmatprep.subr.mxu0 0.0
    %6282 = vmatpush1.msra.mxu0 0.0
    %6283 = vmatprep.subr.mxu0 0.0
    %6284 = vmatpush1.msra.mxu0 0.0
    %6285 = vmatprep.subr.mxu0 0.0
    %6286 = vmatpush1.msra.mxu0 0.0
    %6287 = vmatprep.subr.mxu0 0.0
    %6288 = vmatpush1.msra.mxu0 0.0
    %6289 = vmatprep.subr.mxu0 0.0
    %6290 = vmatpush1.msra.mxu0 0.0
    %6291 = vmatprep.mubr.f32.mxu0 0.0
    %v6292 = vand.u32 %v5477, 4294901760
    %6293 = vmatmul.mubr.f32.gmra.mrb[0].mxu0 %v6292
    %v6294 = vpop.f32.mrb[0].mxu0
    %v6295 = vadd.f32 %v6168, %v6294
    %v6296 = vpop.f32.mrb[0].mxu0
    %6297 = vmatprep.mubr.f32.mxu0 0.0
    %v6298 = vand.u32 %v5480, 4294901760
    %6299 = vmatmul.mubr.f32.gmra.mrb[0].mxu0 %v6298
    %v6300 = vpop.f32.mrb[0].mxu0
    %v6301 = vadd.f32 %v6174, %v6300
    %v6302 = vpop.f32.mrb[0].mxu0
    %6303 = vmatprep.mubr.f32.mxu0 0.0
    %v6304 = vand.u32 %v5483, 4294901760
    %6305 = vmatmul.mubr.f32.gmra.mrb[0].mxu0 %v6304
    %v6306 = vpop.f32.mrb[0].mxu0
    %v6307 = vadd.f32 %v6180, %v6306
    %v6308 = vpop.f32.mrb[0].mxu0
    %6309 = vmatprep.mubr.f32.mxu0 0.0
    %v6310 = vand.u32 %v5486, 4294901760
    %6311 = vmatmul.mubr.f32.gmra.mrb[0].mxu0 %v6310
    %v6312 = vpop.f32.mrb[0].mxu0
    %v6313 = vadd.f32 %v6186, %v6312
    %v6314 = vpop.f32.mrb[0].mxu0
    %6315 = vmatprep.mubr.f32.mxu0 0.0
    %v6316 = vand.u32 %v5489, 4294901760
    %6317 = vmatmul.mubr.f32.gmra.mrb[0].mxu0 %v6316
    %v6318 = vpop.f32.mrb[0].mxu0
    %v6319 = vadd.f32 %v6192, %v6318
    %v6320 = vpop.f32.mrb[0].mxu0
    %6321 = vmatprep.mubr.f32.mxu0 0.0
    %v6322 = vand.u32 %v5492, 4294901760
    %6323 = vmatmul.mubr.f32.gmra.mrb[0].mxu0 %v6322
    %v6324 = vpop.f32.mrb[0].mxu0
    %v6325 = vadd.f32 %v6198, %v6324
    %v6326 = vpop.f32.mrb[0].mxu0
    %6327 = vmatprep.mubr.f32.mxu0 0.0
    %v6328 = vand.u32 %v5495, 4294901760
    %6329 = vmatmul.mubr.f32.gmra.mrb[0].mxu0 %v6328
    %v6330 = vpop.f32.mrb[0].mxu0
    %v6331 = vadd.f32 %v6204, %v6330
    %v6332 = vpop.f32.mrb[0].mxu0
    %6333 = vmatprep.mubr.f32.mxu0 0.0
    %v6334 = vand.u32 %v5498, 4294901760
    %6335 = vmatmul.mubr.f32.gmra.mrb[0].mxu0 %v6334
    %v6336 = vpop.f32.mrb[0].mxu0
    %v6337 = vadd.f32 %v6210, %v6336
    %v6338 = vpop.f32.mrb[0].mxu0
    %6339 = vmatprep.mubr.f32.mxu0 0.0
    %v6340 = vand.u32 %v5501, 4294901760
    %6341 = vmatmul.mubr.f32.gmra.mrb[0].mxu0 %v6340
    %v6342 = vpop.f32.mrb[0].mxu0
    %v6343 = vadd.f32 %v6216, %v6342
    %v6344 = vpop.f32.mrb[0].mxu0
    %6345 = vmatprep.mubr.f32.mxu0 0.0
    %v6346 = vand.u32 %v5504, 4294901760
    %6347 = vmatmul.mubr.f32.gmra.mrb[0].mxu0 %v6346
    %v6348 = vpop.f32.mrb[0].mxu0
    %v6349 = vadd.f32 %v6222, %v6348
    %v6350 = vpop.f32.mrb[0].mxu0
    %6351 = vdwg.mxu0
    %v6352 = vadd.f32 %v5466, %v6295
    %v6353 = vadd.f32 %v5467, %v6301
    %v6354 = vadd.f32 %v5468, %v6307
    %v6355 = vadd.f32 %v5469, %v6313
    %v6356 = vadd.f32 %v5470, %v6319
    %v6357 = vadd.f32 %v5471, %v6325
    %v6358 = vadd.f32 %v5472, %v6331
    %v6359 = vadd.f32 %v5473, %v6337
    %v6360 = vadd.f32 %v5474, %v6343
    %v6361 = vadd.f32 %v5475, %v6349
    %v6363 = vsel %vm179, %v113, 0
    %v6366 = vsel %vm179, %v114, 0
    %v6369 = vsel %vm179, %v129, 0
    %v6372 = vsel %vm179, %v130, 0
    %v6375 = vsel %vm179, %v145, 0
    %v6378 = vsel %vm179, %v146, 0
    %v6381 = vsel %vm179, %v161, 0
    %v6384 = vsel %vm179, %v162, 0
    %v6387 = vsel %vm179, %v177, 0
    %v6390 = vsel %vm179, %v178, 0
    %6392 = vmatprep.subr.mxu0 0.0
    %v6393 = vand.u32 %v87, 4294901760
    %6394 = vmatpush1.msra.mxu0 %v6393
    %6395 = vmatprep.subr.mxu0 0.0
    %v6396 = vand.u32 %v88, 4294901760
    %6397 = vmatpush1.msra.mxu0 %v6396
    %6398 = vmatprep.subr.mxu0 0.0
    %6399 = vmatpush1.msra.mxu0 0.0
    %6400 = vmatprep.subr.mxu0 0.0
    %6401 = vmatpush1.msra.mxu0 0.0
    %6402 = vmatprep.subr.mxu0 0.0
    %6403 = vmatpush1.msra.mxu0 0.0
    %6404 = vmatprep.subr.mxu0 0.0
    %6405 = vmatpush1.msra.mxu0 0.0
    %6406 = vmatprep.subr.mxu0 0.0
    %6407 = vmatpush1.msra.mxu0 0.0
    %6408 = vmatprep.subr.mxu0 0.0
    %6409 = vmatpush1.msra.mxu0 0.0
    %6410 = vmatprep.subr.mxu0 0.0
    %6411 = vmatpush1.msra.mxu0 0.0
    %6412 = vmatprep.subr.mxu0 0.0
    %6413 = vmatpush1.msra.mxu0 0.0
    %6414 = vmatprep.subr.mxu0 0.0
    %6415 = vmatpush1.msra.mxu0 0.0
    %6416 = vmatprep.subr.mxu0 0.0
    %6417 = vmatpush1.msra.mxu0 0.0
    %6418 = vmatprep.subr.mxu0 0.0
    %6419 = vmatpush1.msra.mxu0 0.0
    %6420 = vmatprep.subr.mxu0 0.0
    %6421 = vmatpush1.msra.mxu0 0.0
    %6422 = vmatprep.subr.mxu0 0.0
    %6423 = vmatpush1.msra.mxu0 0.0
    %6424 = vmatprep.subr.mxu0 0.0
    %6425 = vmatpush1.msra.mxu0 0.0
    %6426 = vmatprep.subr.mxu0 0.0
    %6427 = vmatpush1.msra.mxu0 0.0
    %6428 = vmatprep.subr.mxu0 0.0
    %6429 = vmatpush1.msra.mxu0 0.0
    %6430 = vmatprep.subr.mxu0 0.0
    %6431 = vmatpush1.msra.mxu0 0.0
    %6432 = vmatprep.subr.mxu0 0.0
    %6433 = vmatpush1.msra.mxu0 0.0
    %6434 = vmatprep.subr.mxu0 0.0
    %6435 = vmatpush1.msra.mxu0 0.0
    %6436 = vmatprep.subr.mxu0 0.0
    %6437 = vmatpush1.msra.mxu0 0.0
    %6438 = vmatprep.subr.mxu0 0.0
    %6439 = vmatpush1.msra.mxu0 0.0
    %6440 = vmatprep.subr.mxu0 0.0
    %6441 = vmatpush1.msra.mxu0 0.0
    %6442 = vmatprep.subr.mxu0 0.0
    %6443 = vmatpush1.msra.mxu0 0.0
    %6444 = vmatprep.subr.mxu0 0.0
    %6445 = vmatpush1.msra.mxu0 0.0
    %6446 = vmatprep.subr.mxu0 0.0
    %6447 = vmatpush1.msra.mxu0 0.0
    %6448 = vmatprep.subr.mxu0 0.0
    %6449 = vmatpush1.msra.mxu0 0.0
    %6450 = vmatprep.subr.mxu0 0.0
    %6451 = vmatpush1.msra.mxu0 0.0
    %6452 = vmatprep.subr.mxu0 0.0
    %6453 = vmatpush1.msra.mxu0 0.0
    %6454 = vmatprep.subr.mxu0 0.0
    %6455 = vmatpush1.msra.mxu0 0.0
    %6456 = vmatprep.subr.mxu0 0.0
    %6457 = vmatpush1.msra.mxu0 0.0
    %6458 = vmatprep.mubr.f32.mxu0 0.0
    %v6459 = vand.u32 %v6363, 4294901760
    %v6460 = vsub.f32 %v6363, %v6459
    %v6461 = vand.u32 %v6460, 4294901760
    %v6462 = vsub.f32 %v6460, %v6461
    %v6463 = vand.u32 %v6462, 4294901760
    %6464 = vmatmul.mubr.f32.gmra.mrb[0].mxu0 %v6463
    %v6465 = vpop.f32.mrb[0].mxu0
    %v6466 = vadd.f32 0.0, %v6465
    %v6467 = vpop.f32.mrb[0].mxu0
    %6468 = vmatprep.mubr.f32.mxu0 0.0
    %v6469 = vand.u32 %v6366, 4294901760
    %v6470 = vsub.f32 %v6366, %v6469
    %v6471 = vand.u32 %v6470, 4294901760
    %v6472 = vsub.f32 %v6470, %v6471
    %v6473 = vand.u32 %v6472, 4294901760
    %6474 = vmatmul.mubr.f32.gmra.mrb[0].mxu0 %v6473
    %v6475 = vpop.f32.mrb[0].mxu0
    %v6476 = vadd.f32 0.0, %v6475
    %v6477 = vpop.f32.mrb[0].mxu0
    %6478 = vmatprep.mubr.f32.mxu0 0.0
    %v6479 = vand.u32 %v6369, 4294901760
    %v6480 = vsub.f32 %v6369, %v6479
    %v6481 = vand.u32 %v6480, 4294901760
    %v6482 = vsub.f32 %v6480, %v6481
    %v6483 = vand.u32 %v6482, 4294901760
    %6484 = vmatmul.mubr.f32.gmra.mrb[0].mxu0 %v6483
    %v6485 = vpop.f32.mrb[0].mxu0
    %v6486 = vadd.f32 0.0, %v6485
    %v6487 = vpop.f32.mrb[0].mxu0
    %6488 = vmatprep.mubr.f32.mxu0 0.0
    %v6489 = vand.u32 %v6372, 4294901760
    %v6490 = vsub.f32 %v6372, %v6489
    %v6491 = vand.u32 %v6490, 4294901760
    %v6492 = vsub.f32 %v6490, %v6491
    %v6493 = vand.u32 %v6492, 4294901760
    %6494 = vmatmul.mubr.f32.gmra.mrb[0].mxu0 %v6493
    %v6495 = vpop.f32.mrb[0].mxu0
    %v6496 = vadd.f32 0.0, %v6495
    %v6497 = vpop.f32.mrb[0].mxu0
    %6498 = vmatprep.mubr.f32.mxu0 0.0
    %v6499 = vand.u32 %v6375, 4294901760
    %v6500 = vsub.f32 %v6375, %v6499
    %v6501 = vand.u32 %v6500, 4294901760
    %v6502 = vsub.f32 %v6500, %v6501
    %v6503 = vand.u32 %v6502, 4294901760
    %6504 = vmatmul.mubr.f32.gmra.mrb[0].mxu0 %v6503
    %v6505 = vpop.f32.mrb[0].mxu0
    %v6506 = vadd.f32 0.0, %v6505
    %v6507 = vpop.f32.mrb[0].mxu0
    %6508 = vmatprep.mubr.f32.mxu0 0.0
    %v6509 = vand.u32 %v6378, 4294901760
    %v6510 = vsub.f32 %v6378, %v6509
    %v6511 = vand.u32 %v6510, 4294901760
    %v6512 = vsub.f32 %v6510, %v6511
    %v6513 = vand.u32 %v6512, 4294901760
    %6514 = vmatmul.mubr.f32.gmra.mrb[0].mxu0 %v6513
    %v6515 = vpop.f32.mrb[0].mxu0
    %v6516 = vadd.f32 0.0, %v6515
    %v6517 = vpop.f32.mrb[0].mxu0
    %6518 = vmatprep.mubr.f32.mxu0 0.0
    %v6519 = vand.u32 %v6381, 4294901760
    %v6520 = vsub.f32 %v6381, %v6519
    %v6521 = vand.u32 %v6520, 4294901760
    %v6522 = vsub.f32 %v6520, %v6521
    %v6523 = vand.u32 %v6522, 4294901760
    %6524 = vmatmul.mubr.f32.gmra.mrb[0].mxu0 %v6523
    %v6525 = vpop.f32.mrb[0].mxu0
    %v6526 = vadd.f32 0.0, %v6525
    %v6527 = vpop.f32.mrb[0].mxu0
    %6528 = vmatprep.mubr.f32.mxu0 0.0
    %v6529 = vand.u32 %v6384, 4294901760
    %v6530 = vsub.f32 %v6384, %v6529
    %v6531 = vand.u32 %v6530, 4294901760
    %v6532 = vsub.f32 %v6530, %v6531
    %v6533 = vand.u32 %v6532, 4294901760
    %6534 = vmatmul.mubr.f32.gmra.mrb[0].mxu0 %v6533
    %v6535 = vpop.f32.mrb[0].mxu0
    %v6536 = vadd.f32 0.0, %v6535
    %v6537 = vpop.f32.mrb[0].mxu0
    %6538 = vmatprep.mubr.f32.mxu0 0.0
    %v6539 = vand.u32 %v6387, 4294901760
    %v6540 = vsub.f32 %v6387, %v6539
    %v6541 = vand.u32 %v6540, 4294901760
    %v6542 = vsub.f32 %v6540, %v6541
    %v6543 = vand.u32 %v6542, 4294901760
    %6544 = vmatmul.mubr.f32.gmra.mrb[0].mxu0 %v6543
    %v6545 = vpop.f32.mrb[0].mxu0
    %v6546 = vadd.f32 0.0, %v6545
    %v6547 = vpop.f32.mrb[0].mxu0
    %6548 = vmatprep.mubr.f32.mxu0 0.0
    %v6549 = vand.u32 %v6390, 4294901760
    %v6550 = vsub.f32 %v6390, %v6549
    %v6551 = vand.u32 %v6550, 4294901760
    %v6552 = vsub.f32 %v6550, %v6551
    %v6553 = vand.u32 %v6552, 4294901760
    %6554 = vmatmul.mubr.f32.gmra.mrb[0].mxu0 %v6553
    %v6555 = vpop.f32.mrb[0].mxu0
    %v6556 = vadd.f32 0.0, %v6555
    %v6557 = vpop.f32.mrb[0].mxu0
    %6558 = vdwg.mxu0
    %6559 = vmatprep.subr.mxu0 0.0
    %v6560 = vand.u32 %v87, 4294901760
    %v6561 = vsub.f32 %v87, %v6560
    %v6562 = vand.u32 %v6561, 4294901760
    %v6563 = vsub.f32 %v6561, %v6562
    %v6564 = vand.u32 %v6563, 4294901760
    %6565 = vmatpush1.msra.mxu0 %v6564
    %6566 = vmatprep.subr.mxu0 0.0
    %v6567 = vand.u32 %v88, 4294901760
    %v6568 = vsub.f32 %v88, %v6567
    %v6569 = vand.u32 %v6568, 4294901760
    %v6570 = vsub.f32 %v6568, %v6569
    %v6571 = vand.u32 %v6570, 4294901760
    %6572 = vmatpush1.msra.mxu0 %v6571
    %6573 = vmatprep.subr.mxu0 0.0
    %6574 = vmatpush1.msra.mxu0 0.0
    %6575 = vmatprep.subr.mxu0 0.0
    %6576 = vmatpush1.msra.mxu0 0.0
    %6577 = vmatprep.subr.mxu0 0.0
    %6578 = vmatpush1.msra.mxu0 0.0
    %6579 = vmatprep.subr.mxu0 0.0
    %6580 = vmatpush1.msra.mxu0 0.0
    %6581 = vmatprep.subr.mxu0 0.0
    %6582 = vmatpush1.msra.mxu0 0.0
    %6583 = vmatprep.subr.mxu0 0.0
    %6584 = vmatpush1.msra.mxu0 0.0
    %6585 = vmatprep.subr.mxu0 0.0
    %6586 = vmatpush1.msra.mxu0 0.0
    %6587 = vmatprep.subr.mxu0 0.0
    %6588 = vmatpush1.msra.mxu0 0.0
    %6589 = vmatprep.subr.mxu0 0.0
    %6590 = vmatpush1.msra.mxu0 0.0
    %6591 = vmatprep.subr.mxu0 0.0
    %6592 = vmatpush1.msra.mxu0 0.0
    %6593 = vmatprep.subr.mxu0 0.0
    %6594 = vmatpush1.msra.mxu0 0.0
    %6595 = vmatprep.subr.mxu0 0.0
    %6596 = vmatpush1.msra.mxu0 0.0
    %6597 = vmatprep.subr.mxu0 0.0
    %6598 = vmatpush1.msra.mxu0 0.0
    %6599 = vmatprep.subr.mxu0 0.0
    %6600 = vmatpush1.msra.mxu0 0.0
    %6601 = vmatprep.subr.mxu0 0.0
    %6602 = vmatpush1.msra.mxu0 0.0
    %6603 = vmatprep.subr.mxu0 0.0
    %6604 = vmatpush1.msra.mxu0 0.0
    %6605 = vmatprep.subr.mxu0 0.0
    %6606 = vmatpush1.msra.mxu0 0.0
    %6607 = vmatprep.subr.mxu0 0.0
    %6608 = vmatpush1.msra.mxu0 0.0
    %6609 = vmatprep.subr.mxu0 0.0
    %6610 = vmatpush1.msra.mxu0 0.0
    %6611 = vmatprep.subr.mxu0 0.0
    %6612 = vmatpush1.msra.mxu0 0.0
    %6613 = vmatprep.subr.mxu0 0.0
    %6614 = vmatpush1.msra.mxu0 0.0
    %6615 = vmatprep.subr.mxu0 0.0
    %6616 = vmatpush1.msra.mxu0 0.0
    %6617 = vmatprep.subr.mxu0 0.0
    %6618 = vmatpush1.msra.mxu0 0.0
    %6619 = vmatprep.subr.mxu0 0.0
    %6620 = vmatpush1.msra.mxu0 0.0
    %6621 = vmatprep.subr.mxu0 0.0
    %6622 = vmatpush1.msra.mxu0 0.0
    %6623 = vmatprep.subr.mxu0 0.0
    %6624 = vmatpush1.msra.mxu0 0.0
    %6625 = vmatprep.subr.mxu0 0.0
    %6626 = vmatpush1.msra.mxu0 0.0
    %6627 = vmatprep.subr.mxu0 0.0
    %6628 = vmatpush1.msra.mxu0 0.0
    %6629 = vmatprep.subr.mxu0 0.0
    %6630 = vmatpush1.msra.mxu0 0.0
    %6631 = vmatprep.subr.mxu0 0.0
    %6632 = vmatpush1.msra.mxu0 0.0
    %6633 = vmatprep.mubr.f32.mxu0 0.0
    %v6634 = vand.u32 %v6363, 4294901760
    %6635 = vmatmul.mubr.f32.gmra.mrb[0].mxu0 %v6634
    %v6636 = vpop.f32.mrb[0].mxu0
    %v6637 = vadd.f32 %v6466, %v6636
    %v6638 = vpop.f32.mrb[0].mxu0
    %6639 = vmatprep.mubr.f32.mxu0 0.0
    %v6640 = vand.u32 %v6366, 4294901760
    %6641 = vmatmul.mubr.f32.gmra.mrb[0].mxu0 %v6640
    %v6642 = vpop.f32.mrb[0].mxu0
    %v6643 = vadd.f32 %v6476, %v6642
    %v6644 = vpop.f32.mrb[0].mxu0
    %6645 = vmatprep.mubr.f32.mxu0 0.0
    %v6646 = vand.u32 %v6369, 4294901760
    %6647 = vmatmul.mubr.f32.gmra.mrb[0].mxu0 %v6646
    %v6648 = vpop.f32.mrb[0].mxu0
    %v6649 = vadd.f32 %v6486, %v6648
    %v6650 = vpop.f32.mrb[0].mxu0
    %6651 = vmatprep.mubr.f32.mxu0 0.0
    %v6652 = vand.u32 %v6372, 4294901760
    %6653 = vmatmul.mubr.f32.gmra.mrb[0].mxu0 %v6652
    %v6654 = vpop.f32.mrb[0].mxu0
    %v6655 = vadd.f32 %v6496, %v6654
    %v6656 = vpop.f32.mrb[0].mxu0
    %6657 = vmatprep.mubr.f32.mxu0 0.0
    %v6658 = vand.u32 %v6375, 4294901760
    %6659 = vmatmul.mubr.f32.gmra.mrb[0].mxu0 %v6658
    %v6660 = vpop.f32.mrb[0].mxu0
    %v6661 = vadd.f32 %v6506, %v6660
    %v6662 = vpop.f32.mrb[0].mxu0
    %6663 = vmatprep.mubr.f32.mxu0 0.0
    %v6664 = vand.u32 %v6378, 4294901760
    %6665 = vmatmul.mubr.f32.gmra.mrb[0].mxu0 %v6664
    %v6666 = vpop.f32.mrb[0].mxu0
    %v6667 = vadd.f32 %v6516, %v6666
    %v6668 = vpop.f32.mrb[0].mxu0
    %6669 = vmatprep.mubr.f32.mxu0 0.0
    %v6670 = vand.u32 %v6381, 4294901760
    %6671 = vmatmul.mubr.f32.gmra.mrb[0].mxu0 %v6670
    %v6672 = vpop.f32.mrb[0].mxu0
    %v6673 = vadd.f32 %v6526, %v6672
    %v6674 = vpop.f32.mrb[0].mxu0
    %6675 = vmatprep.mubr.f32.mxu0 0.0
    %v6676 = vand.u32 %v6384, 4294901760
    %6677 = vmatmul.mubr.f32.gmra.mrb[0].mxu0 %v6676
    %v6678 = vpop.f32.mrb[0].mxu0
    %v6679 = vadd.f32 %v6536, %v6678
    %v6680 = vpop.f32.mrb[0].mxu0
    %6681 = vmatprep.mubr.f32.mxu0 0.0
    %v6682 = vand.u32 %v6387, 4294901760
    %6683 = vmatmul.mubr.f32.gmra.mrb[0].mxu0 %v6682
    %v6684 = vpop.f32.mrb[0].mxu0
    %v6685 = vadd.f32 %v6546, %v6684
    %v6686 = vpop.f32.mrb[0].mxu0
    %6687 = vmatprep.mubr.f32.mxu0 0.0
    %v6688 = vand.u32 %v6390, 4294901760
    %6689 = vmatmul.mubr.f32.gmra.mrb[0].mxu0 %v6688
    %v6690 = vpop.f32.mrb[0].mxu0
    %v6691 = vadd.f32 %v6556, %v6690
    %v6692 = vpop.f32.mrb[0].mxu0
    %6693 = vdwg.mxu0
    %6694 = vmatprep.subr.mxu0 0.0
    %v6695 = vand.u32 %v87, 4294901760
    %v6696 = vsub.f32 %v87, %v6695
    %6697 = vmatpush1.msra.mxu0 %v6696
    %6698 = vmatprep.subr.mxu0 0.0
    %v6699 = vand.u32 %v88, 4294901760
    %v6700 = vsub.f32 %v88, %v6699
    %6701 = vmatpush1.msra.mxu0 %v6700
    %6702 = vmatprep.subr.mxu0 0.0
    %6703 = vmatpush1.msra.mxu0 0.0
    %6704 = vmatprep.subr.mxu0 0.0
    %6705 = vmatpush1.msra.mxu0 0.0
    %6706 = vmatprep.subr.mxu0 0.0
    %6707 = vmatpush1.msra.mxu0 0.0
    %6708 = vmatprep.subr.mxu0 0.0
    %6709 = vmatpush1.msra.mxu0 0.0
    %6710 = vmatprep.subr.mxu0 0.0
    %6711 = vmatpush1.msra.mxu0 0.0
    %6712 = vmatprep.subr.mxu0 0.0
    %6713 = vmatpush1.msra.mxu0 0.0
    %6714 = vmatprep.subr.mxu0 0.0
    %6715 = vmatpush1.msra.mxu0 0.0
    %6716 = vmatprep.subr.mxu0 0.0
    %6717 = vmatpush1.msra.mxu0 0.0
    %6718 = vmatprep.subr.mxu0 0.0
    %6719 = vmatpush1.msra.mxu0 0.0
    %6720 = vmatprep.subr.mxu0 0.0
    %6721 = vmatpush1.msra.mxu0 0.0
    %6722 = vmatprep.subr.mxu0 0.0
    %6723 = vmatpush1.msra.mxu0 0.0
    %6724 = vmatprep.subr.mxu0 0.0
    %6725 = vmatpush1.msra.mxu0 0.0
    %6726 = vmatprep.subr.mxu0 0.0
    %6727 = vmatpush1.msra.mxu0 0.0
    %6728 = vmatprep.subr.mxu0 0.0
    %6729 = vmatpush1.msra.mxu0 0.0
    %6730 = vmatprep.subr.mxu0 0.0
    %6731 = vmatpush1.msra.mxu0 0.0
    %6732 = vmatprep.subr.mxu0 0.0
    %6733 = vmatpush1.msra.mxu0 0.0
    %6734 = vmatprep.subr.mxu0 0.0
    %6735 = vmatpush1.msra.mxu0 0.0
    %6736 = vmatprep.subr.mxu0 0.0
    %6737 = vmatpush1.msra.mxu0 0.0
    %6738 = vmatprep.subr.mxu0 0.0
    %6739 = vmatpush1.msra.mxu0 0.0
    %6740 = vmatprep.subr.mxu0 0.0
    %6741 = vmatpush1.msra.mxu0 0.0
    %6742 = vmatprep.subr.mxu0 0.0
    %6743 = vmatpush1.msra.mxu0 0.0
    %6744 = vmatprep.subr.mxu0 0.0
    %6745 = vmatpush1.msra.mxu0 0.0
    %6746 = vmatprep.subr.mxu0 0.0
    %6747 = vmatpush1.msra.mxu0 0.0
    %6748 = vmatprep.subr.mxu0 0.0
    %6749 = vmatpush1.msra.mxu0 0.0
    %6750 = vmatprep.subr.mxu0 0.0
    %6751 = vmatpush1.msra.mxu0 0.0
    %6752 = vmatprep.subr.mxu0 0.0
    %6753 = vmatpush1.msra.mxu0 0.0
    %6754 = vmatprep.subr.mxu0 0.0
    %6755 = vmatpush1.msra.mxu0 0.0
    %6756 = vmatprep.subr.mxu0 0.0
    %6757 = vmatpush1.msra.mxu0 0.0
    %6758 = vmatprep.subr.mxu0 0.0
    %6759 = vmatpush1.msra.mxu0 0.0
    %6760 = vmatprep.subr.mxu0 0.0
    %6761 = vmatpush1.msra.mxu0 0.0
    %6762 = vmatprep.mubr.f32.mxu0 0.0
    %v6763 = vand.u32 %v6363, 4294901760
    %v6764 = vsub.f32 %v6363, %v6763
    %6765 = vmatmul.mubr.f32.gmra.mrb[0].mxu0 %v6764
    %v6766 = vpop.f32.mrb[0].mxu0
    %v6767 = vadd.f32 %v6637, %v6766
    %v6768 = vpop.f32.mrb[0].mxu0
    %6769 = vmatprep.mubr.f32.mxu0 0.0
    %v6770 = vand.u32 %v6366, 4294901760
    %v6771 = vsub.f32 %v6366, %v6770
    %6772 = vmatmul.mubr.f32.gmra.mrb[0].mxu0 %v6771
    %v6773 = vpop.f32.mrb[0].mxu0
    %v6774 = vadd.f32 %v6643, %v6773
    %v6775 = vpop.f32.mrb[0].mxu0
    %6776 = vmatprep.mubr.f32.mxu0 0.0
    %v6777 = vand.u32 %v6369, 4294901760
    %v6778 = vsub.f32 %v6369, %v6777
    %6779 = vmatmul.mubr.f32.gmra.mrb[0].mxu0 %v6778
    %v6780 = vpop.f32.mrb[0].mxu0
    %v6781 = vadd.f32 %v6649, %v6780
    %v6782 = vpop.f32.mrb[0].mxu0
    %6783 = vmatprep.mubr.f32.mxu0 0.0
    %v6784 = vand.u32 %v6372, 4294901760
    %v6785 = vsub.f32 %v6372, %v6784
    %6786 = vmatmul.mubr.f32.gmra.mrb[0].mxu0 %v6785
    %v6787 = vpop.f32.mrb[0].mxu0
    %v6788 = vadd.f32 %v6655, %v6787
    %v6789 = vpop.f32.mrb[0].mxu0
    %6790 = vmatprep.mubr.f32.mxu0 0.0
    %v6791 = vand.u32 %v6375, 4294901760
    %v6792 = vsub.f32 %v6375, %v6791
    %6793 = vmatmul.mubr.f32.gmra.mrb[0].mxu0 %v6792
    %v6794 = vpop.f32.mrb[0].mxu0
    %v6795 = vadd.f32 %v6661, %v6794
    %v6796 = vpop.f32.mrb[0].mxu0
    %6797 = vmatprep.mubr.f32.mxu0 0.0
    %v6798 = vand.u32 %v6378, 4294901760
    %v6799 = vsub.f32 %v6378, %v6798
    %6800 = vmatmul.mubr.f32.gmra.mrb[0].mxu0 %v6799
    %v6801 = vpop.f32.mrb[0].mxu0
    %v6802 = vadd.f32 %v6667, %v6801
    %v6803 = vpop.f32.mrb[0].mxu0
    %6804 = vmatprep.mubr.f32.mxu0 0.0
    %v6805 = vand.u32 %v6381, 4294901760
    %v6806 = vsub.f32 %v6381, %v6805
    %6807 = vmatmul.mubr.f32.gmra.mrb[0].mxu0 %v6806
    %v6808 = vpop.f32.mrb[0].mxu0
    %v6809 = vadd.f32 %v6673, %v6808
    %v6810 = vpop.f32.mrb[0].mxu0
    %6811 = vmatprep.mubr.f32.mxu0 0.0
    %v6812 = vand.u32 %v6384, 4294901760
    %v6813 = vsub.f32 %v6384, %v6812
    %6814 = vmatmul.mubr.f32.gmra.mrb[0].mxu0 %v6813
    %v6815 = vpop.f32.mrb[0].mxu0
    %v6816 = vadd.f32 %v6679, %v6815
    %v6817 = vpop.f32.mrb[0].mxu0
    %6818 = vmatprep.mubr.f32.mxu0 0.0
    %v6819 = vand.u32 %v6387, 4294901760
    %v6820 = vsub.f32 %v6387, %v6819
    %6821 = vmatmul.mubr.f32.gmra.mrb[0].mxu0 %v6820
    %v6822 = vpop.f32.mrb[0].mxu0
    %v6823 = vadd.f32 %v6685, %v6822
    %v6824 = vpop.f32.mrb[0].mxu0
    %6825 = vmatprep.mubr.f32.mxu0 0.0
    %v6826 = vand.u32 %v6390, 4294901760
    %v6827 = vsub.f32 %v6390, %v6826
    %6828 = vmatmul.mubr.f32.gmra.mrb[0].mxu0 %v6827
    %v6829 = vpop.f32.mrb[0].mxu0
    %v6830 = vadd.f32 %v6691, %v6829
    %v6831 = vpop.f32.mrb[0].mxu0
    %6832 = vdwg.mxu0
    %6833 = vmatprep.subr.mxu0 0.0
    %v6834 = vand.u32 %v87, 4294901760
    %6835 = vmatpush1.msra.mxu0 %v6834
    %6836 = vmatprep.subr.mxu0 0.0
    %v6837 = vand.u32 %v88, 4294901760
    %6838 = vmatpush1.msra.mxu0 %v6837
    %6839 = vmatprep.subr.mxu0 0.0
    %6840 = vmatpush1.msra.mxu0 0.0
    %6841 = vmatprep.subr.mxu0 0.0
    %6842 = vmatpush1.msra.mxu0 0.0
    %6843 = vmatprep.subr.mxu0 0.0
    %6844 = vmatpush1.msra.mxu0 0.0
    %6845 = vmatprep.subr.mxu0 0.0
    %6846 = vmatpush1.msra.mxu0 0.0
    %6847 = vmatprep.subr.mxu0 0.0
    %6848 = vmatpush1.msra.mxu0 0.0
    %6849 = vmatprep.subr.mxu0 0.0
    %6850 = vmatpush1.msra.mxu0 0.0
    %6851 = vmatprep.subr.mxu0 0.0
    %6852 = vmatpush1.msra.mxu0 0.0
    %6853 = vmatprep.subr.mxu0 0.0
    %6854 = vmatpush1.msra.mxu0 0.0
    %6855 = vmatprep.subr.mxu0 0.0
    %6856 = vmatpush1.msra.mxu0 0.0
    %6857 = vmatprep.subr.mxu0 0.0
    %6858 = vmatpush1.msra.mxu0 0.0
    %6859 = vmatprep.subr.mxu0 0.0
    %6860 = vmatpush1.msra.mxu0 0.0
    %6861 = vmatprep.subr.mxu0 0.0
    %6862 = vmatpush1.msra.mxu0 0.0
    %6863 = vmatprep.subr.mxu0 0.0
    %6864 = vmatpush1.msra.mxu0 0.0
    %6865 = vmatprep.subr.mxu0 0.0
    %6866 = vmatpush1.msra.mxu0 0.0
    %6867 = vmatprep.subr.mxu0 0.0
    %6868 = vmatpush1.msra.mxu0 0.0
    %6869 = vmatprep.subr.mxu0 0.0
    %6870 = vmatpush1.msra.mxu0 0.0
    %6871 = vmatprep.subr.mxu0 0.0
    %6872 = vmatpush1.msra.mxu0 0.0
    %6873 = vmatprep.subr.mxu0 0.0
    %6874 = vmatpush1.msra.mxu0 0.0
    %6875 = vmatprep.subr.mxu0 0.0
    %6876 = vmatpush1.msra.mxu0 0.0
    %6877 = vmatprep.subr.mxu0 0.0
    %6878 = vmatpush1.msra.mxu0 0.0
    %6879 = vmatprep.subr.mxu0 0.0
    %6880 = vmatpush1.msra.mxu0 0.0
    %6881 = vmatprep.subr.mxu0 0.0
    %6882 = vmatpush1.msra.mxu0 0.0
    %6883 = vmatprep.subr.mxu0 0.0
    %6884 = vmatpush1.msra.mxu0 0.0
    %6885 = vmatprep.subr.mxu0 0.0
    %6886 = vmatpush1.msra.mxu0 0.0
    %6887 = vmatprep.subr.mxu0 0.0
    %6888 = vmatpush1.msra.mxu0 0.0
    %6889 = vmatprep.subr.mxu0 0.0
    %6890 = vmatpush1.msra.mxu0 0.0
    %6891 = vmatprep.subr.mxu0 0.0
    %6892 = vmatpush1.msra.mxu0 0.0
    %6893 = vmatprep.subr.mxu0 0.0
    %6894 = vmatpush1.msra.mxu0 0.0
    %6895 = vmatprep.subr.mxu0 0.0
    %6896 = vmatpush1.msra.mxu0 0.0
    %6897 = vmatprep.subr.mxu0 0.0
    %6898 = vmatpush1.msra.mxu0 0.0
    %6899 = vmatprep.mubr.f32.mxu0 0.0
    %v6900 = vand.u32 %v6363, 4294901760
    %v6901 = vsub.f32 %v6363, %v6900
    %v6902 = vand.u32 %v6901, 4294901760
    %6903 = vmatmul.mubr.f32.gmra.mrb[0].mxu0 %v6902
    %v6904 = vpop.f32.mrb[0].mxu0
    %v6905 = vadd.f32 %v6767, %v6904
    %v6906 = vpop.f32.mrb[0].mxu0
    %6907 = vmatprep.mubr.f32.mxu0 0.0
    %v6908 = vand.u32 %v6366, 4294901760
    %v6909 = vsub.f32 %v6366, %v6908
    %v6910 = vand.u32 %v6909, 4294901760
    %6911 = vmatmul.mubr.f32.gmra.mrb[0].mxu0 %v6910
    %v6912 = vpop.f32.mrb[0].mxu0
    %v6913 = vadd.f32 %v6774, %v6912
    %v6914 = vpop.f32.mrb[0].mxu0
    %6915 = vmatprep.mubr.f32.mxu0 0.0
    %v6916 = vand.u32 %v6369, 4294901760
    %v6917 = vsub.f32 %v6369, %v6916
    %v6918 = vand.u32 %v6917, 4294901760
    %6919 = vmatmul.mubr.f32.gmra.mrb[0].mxu0 %v6918
    %v6920 = vpop.f32.mrb[0].mxu0
    %v6921 = vadd.f32 %v6781, %v6920
    %v6922 = vpop.f32.mrb[0].mxu0
    %6923 = vmatprep.mubr.f32.mxu0 0.0
    %v6924 = vand.u32 %v6372, 4294901760
    %v6925 = vsub.f32 %v6372, %v6924
    %v6926 = vand.u32 %v6925, 4294901760
    %6927 = vmatmul.mubr.f32.gmra.mrb[0].mxu0 %v6926
    %v6928 = vpop.f32.mrb[0].mxu0
    %v6929 = vadd.f32 %v6788, %v6928
    %v6930 = vpop.f32.mrb[0].mxu0
    %6931 = vmatprep.mubr.f32.mxu0 0.0
    %v6932 = vand.u32 %v6375, 4294901760
    %v6933 = vsub.f32 %v6375, %v6932
    %v6934 = vand.u32 %v6933, 4294901760
    %6935 = vmatmul.mubr.f32.gmra.mrb[0].mxu0 %v6934
    %v6936 = vpop.f32.mrb[0].mxu0
    %v6937 = vadd.f32 %v6795, %v6936
    %v6938 = vpop.f32.mrb[0].mxu0
    %6939 = vmatprep.mubr.f32.mxu0 0.0
    %v6940 = vand.u32 %v6378, 4294901760
    %v6941 = vsub.f32 %v6378, %v6940
    %v6942 = vand.u32 %v6941, 4294901760
    %6943 = vmatmul.mubr.f32.gmra.mrb[0].mxu0 %v6942
    %v6944 = vpop.f32.mrb[0].mxu0
    %v6945 = vadd.f32 %v6802, %v6944
    %v6946 = vpop.f32.mrb[0].mxu0
    %6947 = vmatprep.mubr.f32.mxu0 0.0
    %v6948 = vand.u32 %v6381, 4294901760
    %v6949 = vsub.f32 %v6381, %v6948
    %v6950 = vand.u32 %v6949, 4294901760
    %6951 = vmatmul.mubr.f32.gmra.mrb[0].mxu0 %v6950
    %v6952 = vpop.f32.mrb[0].mxu0
    %v6953 = vadd.f32 %v6809, %v6952
    %v6954 = vpop.f32.mrb[0].mxu0
    %6955 = vmatprep.mubr.f32.mxu0 0.0
    %v6956 = vand.u32 %v6384, 4294901760
    %v6957 = vsub.f32 %v6384, %v6956
    %v6958 = vand.u32 %v6957, 4294901760
    %6959 = vmatmul.mubr.f32.gmra.mrb[0].mxu0 %v6958
    %v6960 = vpop.f32.mrb[0].mxu0
    %v6961 = vadd.f32 %v6816, %v6960
    %v6962 = vpop.f32.mrb[0].mxu0
    %6963 = vmatprep.mubr.f32.mxu0 0.0
    %v6964 = vand.u32 %v6387, 4294901760
    %v6965 = vsub.f32 %v6387, %v6964
    %v6966 = vand.u32 %v6965, 4294901760
    %6967 = vmatmul.mubr.f32.gmra.mrb[0].mxu0 %v6966
    %v6968 = vpop.f32.mrb[0].mxu0
    %v6969 = vadd.f32 %v6823, %v6968
    %v6970 = vpop.f32.mrb[0].mxu0
    %6971 = vmatprep.mubr.f32.mxu0 0.0
    %v6972 = vand.u32 %v6390, 4294901760
    %v6973 = vsub.f32 %v6390, %v6972
    %v6974 = vand.u32 %v6973, 4294901760
    %6975 = vmatmul.mubr.f32.gmra.mrb[0].mxu0 %v6974
    %v6976 = vpop.f32.mrb[0].mxu0
    %v6977 = vadd.f32 %v6830, %v6976
    %v6978 = vpop.f32.mrb[0].mxu0
    %6979 = vdwg.mxu0
    %6980 = vmatprep.subr.mxu0 0.0
    %v6981 = vand.u32 %v87, 4294901760
    %v6982 = vsub.f32 %v87, %v6981
    %v6983 = vand.u32 %v6982, 4294901760
    %6984 = vmatpush1.msra.mxu0 %v6983
    %6985 = vmatprep.subr.mxu0 0.0
    %v6986 = vand.u32 %v88, 4294901760
    %v6987 = vsub.f32 %v88, %v6986
    %v6988 = vand.u32 %v6987, 4294901760
    %6989 = vmatpush1.msra.mxu0 %v6988
    %6990 = vmatprep.subr.mxu0 0.0
    %6991 = vmatpush1.msra.mxu0 0.0
    %6992 = vmatprep.subr.mxu0 0.0
    %6993 = vmatpush1.msra.mxu0 0.0
    %6994 = vmatprep.subr.mxu0 0.0
    %6995 = vmatpush1.msra.mxu0 0.0
    %6996 = vmatprep.subr.mxu0 0.0
    %6997 = vmatpush1.msra.mxu0 0.0
    %6998 = vmatprep.subr.mxu0 0.0
    %6999 = vmatpush1.msra.mxu0 0.0
    %7000 = vmatprep.subr.mxu0 0.0
    %7001 = vmatpush1.msra.mxu0 0.0
    %7002 = vmatprep.subr.mxu0 0.0
    %7003 = vmatpush1.msra.mxu0 0.0
    %7004 = vmatprep.subr.mxu0 0.0
    %7005 = vmatpush1.msra.mxu0 0.0
    %7006 = vmatprep.subr.mxu0 0.0
    %7007 = vmatpush1.msra.mxu0 0.0
    %7008 = vmatprep.subr.mxu0 0.0
    %7009 = vmatpush1.msra.mxu0 0.0
    %7010 = vmatprep.subr.mxu0 0.0
    %7011 = vmatpush1.msra.mxu0 0.0
    %7012 = vmatprep.subr.mxu0 0.0
    %7013 = vmatpush1.msra.mxu0 0.0
    %7014 = vmatprep.subr.mxu0 0.0
    %7015 = vmatpush1.msra.mxu0 0.0
    %7016 = vmatprep.subr.mxu0 0.0
    %7017 = vmatpush1.msra.mxu0 0.0
    %7018 = vmatprep.subr.mxu0 0.0
    %7019 = vmatpush1.msra.mxu0 0.0
    %7020 = vmatprep.subr.mxu0 0.0
    %7021 = vmatpush1.msra.mxu0 0.0
    %7022 = vmatprep.subr.mxu0 0.0
    %7023 = vmatpush1.msra.mxu0 0.0
    %7024 = vmatprep.subr.mxu0 0.0
    %7025 = vmatpush1.msra.mxu0 0.0
    %7026 = vmatprep.subr.mxu0 0.0
    %7027 = vmatpush1.msra.mxu0 0.0
    %7028 = vmatprep.subr.mxu0 0.0
    %7029 = vmatpush1.msra.mxu0 0.0
    %7030 = vmatprep.subr.mxu0 0.0
    %7031 = vmatpush1.msra.mxu0 0.0
    %7032 = vmatprep.subr.mxu0 0.0
    %7033 = vmatpush1.msra.mxu0 0.0
    %7034 = vmatprep.subr.mxu0 0.0
    %7035 = vmatpush1.msra.mxu0 0.0
    %7036 = vmatprep.subr.mxu0 0.0
    %7037 = vmatpush1.msra.mxu0 0.0
    %7038 = vmatprep.subr.mxu0 0.0
    %7039 = vmatpush1.msra.mxu0 0.0
    %7040 = vmatprep.subr.mxu0 0.0
    %7041 = vmatpush1.msra.mxu0 0.0
    %7042 = vmatprep.subr.mxu0 0.0
    %7043 = vmatpush1.msra.mxu0 0.0
    %7044 = vmatprep.subr.mxu0 0.0
    %7045 = vmatpush1.msra.mxu0 0.0
    %7046 = vmatprep.subr.mxu0 0.0
    %7047 = vmatpush1.msra.mxu0 0.0
    %7048 = vmatprep.subr.mxu0 0.0
    %7049 = vmatpush1.msra.mxu0 0.0
    %7050 = vmatprep.mubr.f32.mxu0 0.0
    %v7051 = vand.u32 %v6363, 4294901760
    %7052 = vmatmul.mubr.f32.gmra.mrb[0].mxu0 %v7051
    %v7053 = vpop.f32.mrb[0].mxu0
    %v7054 = vadd.f32 %v6905, %v7053
    %v7055 = vpop.f32.mrb[0].mxu0
    %7056 = vmatprep.mubr.f32.mxu0 0.0
    %v7057 = vand.u32 %v6366, 4294901760
    %7058 = vmatmul.mubr.f32.gmra.mrb[0].mxu0 %v7057
    %v7059 = vpop.f32.mrb[0].mxu0
    %v7060 = vadd.f32 %v6913, %v7059
    %v7061 = vpop.f32.mrb[0].mxu0
    %7062 = vmatprep.mubr.f32.mxu0 0.0
    %v7063 = vand.u32 %v6369, 4294901760
    %7064 = vmatmul.mubr.f32.gmra.mrb[0].mxu0 %v7063
    %v7065 = vpop.f32.mrb[0].mxu0
    %v7066 = vadd.f32 %v6921, %v7065
    %v7067 = vpop.f32.mrb[0].mxu0
    %7068 = vmatprep.mubr.f32.mxu0 0.0
    %v7069 = vand.u32 %v6372, 4294901760
    %7070 = vmatmul.mubr.f32.gmra.mrb[0].mxu0 %v7069
    %v7071 = vpop.f32.mrb[0].mxu0
    %v7072 = vadd.f32 %v6929, %v7071
    %v7073 = vpop.f32.mrb[0].mxu0
    %7074 = vmatprep.mubr.f32.mxu0 0.0
    %v7075 = vand.u32 %v6375, 4294901760
    %7076 = vmatmul.mubr.f32.gmra.mrb[0].mxu0 %v7075
    %v7077 = vpop.f32.mrb[0].mxu0
    %v7078 = vadd.f32 %v6937, %v7077
    %v7079 = vpop.f32.mrb[0].mxu0
    %7080 = vmatprep.mubr.f32.mxu0 0.0
    %v7081 = vand.u32 %v6378, 4294901760
    %7082 = vmatmul.mubr.f32.gmra.mrb[0].mxu0 %v7081
    %v7083 = vpop.f32.mrb[0].mxu0
    %v7084 = vadd.f32 %v6945, %v7083
    %v7085 = vpop.f32.mrb[0].mxu0
    %7086 = vmatprep.mubr.f32.mxu0 0.0
    %v7087 = vand.u32 %v6381, 4294901760
    %7088 = vmatmul.mubr.f32.gmra.mrb[0].mxu0 %v7087
    %v7089 = vpop.f32.mrb[0].mxu0
    %v7090 = vadd.f32 %v6953, %v7089
    %v7091 = vpop.f32.mrb[0].mxu0
    %7092 = vmatprep.mubr.f32.mxu0 0.0
    %v7093 = vand.u32 %v6384, 4294901760
    %7094 = vmatmul.mubr.f32.gmra.mrb[0].mxu0 %v7093
    %v7095 = vpop.f32.mrb[0].mxu0
    %v7096 = vadd.f32 %v6961, %v7095
    %v7097 = vpop.f32.mrb[0].mxu0
    %7098 = vmatprep.mubr.f32.mxu0 0.0
    %v7099 = vand.u32 %v6387, 4294901760
    %7100 = vmatmul.mubr.f32.gmra.mrb[0].mxu0 %v7099
    %v7101 = vpop.f32.mrb[0].mxu0
    %v7102 = vadd.f32 %v6969, %v7101
    %v7103 = vpop.f32.mrb[0].mxu0
    %7104 = vmatprep.mubr.f32.mxu0 0.0
    %v7105 = vand.u32 %v6390, 4294901760
    %7106 = vmatmul.mubr.f32.gmra.mrb[0].mxu0 %v7105
    %v7107 = vpop.f32.mrb[0].mxu0
    %v7108 = vadd.f32 %v6977, %v7107
    %v7109 = vpop.f32.mrb[0].mxu0
    %7110 = vdwg.mxu0
    %7111 = vmatprep.subr.mxu0 0.0
    %v7112 = vand.u32 %v87, 4294901760
    %7113 = vmatpush1.msra.mxu0 %v7112
    %7114 = vmatprep.subr.mxu0 0.0
    %v7115 = vand.u32 %v88, 4294901760
    %7116 = vmatpush1.msra.mxu0 %v7115
    %7117 = vmatprep.subr.mxu0 0.0
    %7118 = vmatpush1.msra.mxu0 0.0
    %7119 = vmatprep.subr.mxu0 0.0
    %7120 = vmatpush1.msra.mxu0 0.0
    %7121 = vmatprep.subr.mxu0 0.0
    %7122 = vmatpush1.msra.mxu0 0.0
    %7123 = vmatprep.subr.mxu0 0.0
    %7124 = vmatpush1.msra.mxu0 0.0
    %7125 = vmatprep.subr.mxu0 0.0
    %7126 = vmatpush1.msra.mxu0 0.0
    %7127 = vmatprep.subr.mxu0 0.0
    %7128 = vmatpush1.msra.mxu0 0.0
    %7129 = vmatprep.subr.mxu0 0.0
    %7130 = vmatpush1.msra.mxu0 0.0
    %7131 = vmatprep.subr.mxu0 0.0
    %7132 = vmatpush1.msra.mxu0 0.0
    %7133 = vmatprep.subr.mxu0 0.0
    %7134 = vmatpush1.msra.mxu0 0.0
    %7135 = vmatprep.subr.mxu0 0.0
    %7136 = vmatpush1.msra.mxu0 0.0
    %7137 = vmatprep.subr.mxu0 0.0
    %7138 = vmatpush1.msra.mxu0 0.0
    %7139 = vmatprep.subr.mxu0 0.0
    %7140 = vmatpush1.msra.mxu0 0.0
    %7141 = vmatprep.subr.mxu0 0.0
    %7142 = vmatpush1.msra.mxu0 0.0
    %7143 = vmatprep.subr.mxu0 0.0
    %7144 = vmatpush1.msra.mxu0 0.0
    %7145 = vmatprep.subr.mxu0 0.0
    %7146 = vmatpush1.msra.mxu0 0.0
    %7147 = vmatprep.subr.mxu0 0.0
    %7148 = vmatpush1.msra.mxu0 0.0
    %7149 = vmatprep.subr.mxu0 0.0
    %7150 = vmatpush1.msra.mxu0 0.0
    %7151 = vmatprep.subr.mxu0 0.0
    %7152 = vmatpush1.msra.mxu0 0.0
    %7153 = vmatprep.subr.mxu0 0.0
    %7154 = vmatpush1.msra.mxu0 0.0
    %7155 = vmatprep.subr.mxu0 0.0
    %7156 = vmatpush1.msra.mxu0 0.0
    %7157 = vmatprep.subr.mxu0 0.0
    %7158 = vmatpush1.msra.mxu0 0.0
    %7159 = vmatprep.subr.mxu0 0.0
    %7160 = vmatpush1.msra.mxu0 0.0
    %7161 = vmatprep.subr.mxu0 0.0
    %7162 = vmatpush1.msra.mxu0 0.0
    %7163 = vmatprep.subr.mxu0 0.0
    %7164 = vmatpush1.msra.mxu0 0.0
    %7165 = vmatprep.subr.mxu0 0.0
    %7166 = vmatpush1.msra.mxu0 0.0
    %7167 = vmatprep.subr.mxu0 0.0
    %7168 = vmatpush1.msra.mxu0 0.0
    %7169 = vmatprep.subr.mxu0 0.0
    %7170 = vmatpush1.msra.mxu0 0.0
    %7171 = vmatprep.subr.mxu0 0.0
    %7172 = vmatpush1.msra.mxu0 0.0
    %7173 = vmatprep.subr.mxu0 0.0
    %7174 = vmatpush1.msra.mxu0 0.0
    %7175 = vmatprep.subr.mxu0 0.0
    %7176 = vmatpush1.msra.mxu0 0.0
    %7177 = vmatprep.mubr.f32.mxu0 0.0
    %v7178 = vand.u32 %v6363, 4294901760
    %7179 = vmatmul.mubr.f32.gmra.mrb[0].mxu0 %v7178
    %v7180 = vpop.f32.mrb[0].mxu0
    %v7181 = vadd.f32 %v7054, %v7180
    %v7182 = vpop.f32.mrb[0].mxu0
    %7183 = vmatprep.mubr.f32.mxu0 0.0
    %v7184 = vand.u32 %v6366, 4294901760
    %7185 = vmatmul.mubr.f32.gmra.mrb[0].mxu0 %v7184
    %v7186 = vpop.f32.mrb[0].mxu0
    %v7187 = vadd.f32 %v7060, %v7186
    %v7188 = vpop.f32.mrb[0].mxu0
    %7189 = vmatprep.mubr.f32.mxu0 0.0
    %v7190 = vand.u32 %v6369, 4294901760
    %7191 = vmatmul.mubr.f32.gmra.mrb[0].mxu0 %v7190
    %v7192 = vpop.f32.mrb[0].mxu0
    %v7193 = vadd.f32 %v7066, %v7192
    %v7194 = vpop.f32.mrb[0].mxu0
    %7195 = vmatprep.mubr.f32.mxu0 0.0
    %v7196 = vand.u32 %v6372, 4294901760
    %7197 = vmatmul.mubr.f32.gmra.mrb[0].mxu0 %v7196
    %v7198 = vpop.f32.mrb[0].mxu0
    %v7199 = vadd.f32 %v7072, %v7198
    %v7200 = vpop.f32.mrb[0].mxu0
    %7201 = vmatprep.mubr.f32.mxu0 0.0
    %v7202 = vand.u32 %v6375, 4294901760
    %7203 = vmatmul.mubr.f32.gmra.mrb[0].mxu0 %v7202
    %v7204 = vpop.f32.mrb[0].mxu0
    %v7205 = vadd.f32 %v7078, %v7204
    %v7206 = vpop.f32.mrb[0].mxu0
    %7207 = vmatprep.mubr.f32.mxu0 0.0
    %v7208 = vand.u32 %v6378, 4294901760
    %7209 = vmatmul.mubr.f32.gmra.mrb[0].mxu0 %v7208
    %v7210 = vpop.f32.mrb[0].mxu0
    %v7211 = vadd.f32 %v7084, %v7210
    %v7212 = vpop.f32.mrb[0].mxu0
    %7213 = vmatprep.mubr.f32.mxu0 0.0
    %v7214 = vand.u32 %v6381, 4294901760
    %7215 = vmatmul.mubr.f32.gmra.mrb[0].mxu0 %v7214
    %v7216 = vpop.f32.mrb[0].mxu0
    %v7217 = vadd.f32 %v7090, %v7216
    %v7218 = vpop.f32.mrb[0].mxu0
    %7219 = vmatprep.mubr.f32.mxu0 0.0
    %v7220 = vand.u32 %v6384, 4294901760
    %7221 = vmatmul.mubr.f32.gmra.mrb[0].mxu0 %v7220
    %v7222 = vpop.f32.mrb[0].mxu0
    %v7223 = vadd.f32 %v7096, %v7222
    %v7224 = vpop.f32.mrb[0].mxu0
    %7225 = vmatprep.mubr.f32.mxu0 0.0
    %v7226 = vand.u32 %v6387, 4294901760
    %7227 = vmatmul.mubr.f32.gmra.mrb[0].mxu0 %v7226
    %v7228 = vpop.f32.mrb[0].mxu0
    %v7229 = vadd.f32 %v7102, %v7228
    %v7230 = vpop.f32.mrb[0].mxu0
    %7231 = vmatprep.mubr.f32.mxu0 0.0
    %v7232 = vand.u32 %v6390, 4294901760
    %7233 = vmatmul.mubr.f32.gmra.mrb[0].mxu0 %v7232
    %v7234 = vpop.f32.mrb[0].mxu0
    %v7235 = vadd.f32 %v7108, %v7234
    %v7236 = vpop.f32.mrb[0].mxu0
    %7237 = vdwg.mxu0
    %v7238 = vadd.f32 %v6352, %v7181
    %v7239 = vadd.f32 %v6353, %v7187
    %v7240 = vadd.f32 %v6354, %v7193
    %v7241 = vadd.f32 %v6355, %v7199
    %v7242 = vadd.f32 %v6356, %v7205
    %v7243 = vadd.f32 %v6357, %v7211
    %v7244 = vadd.f32 %v6358, %v7217
    %v7245 = vadd.f32 %v6359, %v7223
    %v7246 = vadd.f32 %v6360, %v7229
    %v7247 = vadd.f32 %v6361, %v7235
    %vm7248 = vcmask 654336
    %v7250 = vsel %vm7248, %v89, 0
    %v7253 = vsel %vm7248, %v90, 0
    %v7256 = vsel %vm7248, %v91, 0
    %v7259 = vsel %vm7248, %v92, 0
    %v7262 = vsel %vm7248, %v93, 0
    %v7265 = vsel %vm7248, %v94, 0
    %v7268 = vsel %vm7248, %v95, 0
    %v7271 = vsel %vm7248, %v96, 0
    %v7274 = vsel %vm7248, %v97, 0
    %v7277 = vsel %vm7248, %v98, 0
    %7279 = vmatprep.subr.mxu0 0.0
    %v7280 = vand.u32 %v7238, 4294901760
    %7281 = vmatpush1.msra.mxu0 %v7280
    %7282 = vmatprep.subr.mxu0 0.0
    %v7283 = vand.u32 %v7239, 4294901760
    %7284 = vmatpush1.msra.mxu0 %v7283
    %7285 = vmatprep.subr.mxu0 0.0
    %v7286 = vand.u32 %v7240, 4294901760
    %7287 = vmatpush1.msra.mxu0 %v7286
    %7288 = vmatprep.subr.mxu0 0.0
    %v7289 = vand.u32 %v7241, 4294901760
    %7290 = vmatpush1.msra.mxu0 %v7289
    %7291 = vmatprep.subr.mxu0 0.0
    %v7292 = vand.u32 %v7242, 4294901760
    %7293 = vmatpush1.msra.mxu0 %v7292
    %7294 = vmatprep.subr.mxu0 0.0
    %v7295 = vand.u32 %v7243, 4294901760
    %7296 = vmatpush1.msra.mxu0 %v7295
    %7297 = vmatprep.subr.mxu0 0.0
    %v7298 = vand.u32 %v7244, 4294901760
    %7299 = vmatpush1.msra.mxu0 %v7298
    %7300 = vmatprep.subr.mxu0 0.0
    %v7301 = vand.u32 %v7245, 4294901760
    %7302 = vmatpush1.msra.mxu0 %v7301
    %7303 = vmatprep.subr.mxu0 0.0
    %v7304 = vand.u32 %v7246, 4294901760
    %7305 = vmatpush1.msra.mxu0 %v7304
    %7306 = vmatprep.subr.mxu0 0.0
    %v7307 = vand.u32 %v7247, 4294901760
    %7308 = vmatpush1.msra.mxu0 %v7307
    %7309 = vmatprep.subr.mxu0 0.0
    %7310 = vmatpush1.msra.mxu0 0.0
    %7311 = vmatprep.subr.mxu0 0.0
    %7312 = vmatpush1.msra.mxu0 0.0
    %7313 = vmatprep.subr.mxu0 0.0
    %7314 = vmatpush1.msra.mxu0 0.0
    %7315 = vmatprep.subr.mxu0 0.0
    %7316 = vmatpush1.msra.mxu0 0.0
    %7317 = vmatprep.subr.mxu0 0.0
    %7318 = vmatpush1.msra.mxu0 0.0
    %7319 = vmatprep.subr.mxu0 0.0
    %7320 = vmatpush1.msra.mxu0 0.0
    %7321 = vmatprep.subr.mxu0 0.0
    %7322 = vmatpush1.msra.mxu0 0.0
    %7323 = vmatprep.subr.mxu0 0.0
    %7324 = vmatpush1.msra.mxu0 0.0
    %7325 = vmatprep.subr.mxu0 0.0
    %7326 = vmatpush1.msra.mxu0 0.0
    %7327 = vmatprep.subr.mxu0 0.0
    %7328 = vmatpush1.msra.mxu0 0.0
    %7329 = vmatprep.subr.mxu0 0.0
    %7330 = vmatpush1.msra.mxu0 0.0
    %7331 = vmatprep.subr.mxu0 0.0
    %7332 = vmatpush1.msra.mxu0 0.0
    %7333 = vmatprep.subr.mxu0 0.0
    %7334 = vmatpush1.msra.mxu0 0.0
    %7335 = vmatprep.subr.mxu0 0.0
    %7336 = vmatpush1.msra.mxu0 0.0
    %7337 = vmatprep.subr.mxu0 0.0
    %7338 = vmatpush1.msra.mxu0 0.0
    %7339 = vmatprep.subr.mxu0 0.0
    %7340 = vmatpush1.msra.mxu0 0.0
    %7341 = vmatprep.subr.mxu0 0.0
    %7342 = vmatpush1.msra.mxu0 0.0
    %7343 = vmatprep.subr.mxu0 0.0
    %7344 = vmatpush1.msra.mxu0 0.0
    %7345 = vmatprep.subr.mxu0 0.0
    %7346 = vmatpush1.msra.mxu0 0.0
    %7347 = vmatprep.subr.mxu0 0.0
    %7348 = vmatpush1.msra.mxu0 0.0
    %7349 = vmatprep.subr.mxu0 0.0
    %7350 = vmatpush1.msra.mxu0 0.0
    %7351 = vmatprep.subr.mxu0 0.0
    %7352 = vmatpush1.msra.mxu0 0.0
    %7353 = vmatprep.mubr.f32.mxu0 0.0
    %v7354 = vand.u32 %v7250, 4294901760
    %v7355 = vsub.f32 %v7250, %v7354
    %v7356 = vand.u32 %v7355, 4294901760
    %v7357 = vsub.f32 %v7355, %v7356
    %v7358 = vand.u32 %v7357, 4294901760
    %7359 = vmatmul.mubr.f32.gmra.mrb[0].mxu0 %v7358
    %v7360 = vpop.f32.mrb[0].mxu0
    %v7361 = vadd.f32 0.0, %v7360
    %v7362 = vpop.f32.mrb[0].mxu0
    %7363 = vmatprep.mubr.f32.mxu0 0.0
    %v7364 = vand.u32 %v7253, 4294901760
    %v7365 = vsub.f32 %v7253, %v7364
    %v7366 = vand.u32 %v7365, 4294901760
    %v7367 = vsub.f32 %v7365, %v7366
    %v7368 = vand.u32 %v7367, 4294901760
    %7369 = vmatmul.mubr.f32.gmra.mrb[0].mxu0 %v7368
    %v7370 = vpop.f32.mrb[0].mxu0
    %v7371 = vadd.f32 0.0, %v7370
    %v7372 = vpop.f32.mrb[0].mxu0
    %7373 = vmatprep.mubr.f32.mxu0 0.0
    %v7374 = vand.u32 %v7256, 4294901760
    %v7375 = vsub.f32 %v7256, %v7374
    %v7376 = vand.u32 %v7375, 4294901760
    %v7377 = vsub.f32 %v7375, %v7376
    %v7378 = vand.u32 %v7377, 4294901760
    %7379 = vmatmul.mubr.f32.gmra.mrb[0].mxu0 %v7378
    %v7380 = vpop.f32.mrb[0].mxu0
    %v7381 = vadd.f32 0.0, %v7380
    %v7382 = vpop.f32.mrb[0].mxu0
    %7383 = vmatprep.mubr.f32.mxu0 0.0
    %v7384 = vand.u32 %v7259, 4294901760
    %v7385 = vsub.f32 %v7259, %v7384
    %v7386 = vand.u32 %v7385, 4294901760
    %v7387 = vsub.f32 %v7385, %v7386
    %v7388 = vand.u32 %v7387, 4294901760
    %7389 = vmatmul.mubr.f32.gmra.mrb[0].mxu0 %v7388
    %v7390 = vpop.f32.mrb[0].mxu0
    %v7391 = vadd.f32 0.0, %v7390
    %v7392 = vpop.f32.mrb[0].mxu0
    %7393 = vmatprep.mubr.f32.mxu0 0.0
    %v7394 = vand.u32 %v7262, 4294901760
    %v7395 = vsub.f32 %v7262, %v7394
    %v7396 = vand.u32 %v7395, 4294901760
    %v7397 = vsub.f32 %v7395, %v7396
    %v7398 = vand.u32 %v7397, 4294901760
    %7399 = vmatmul.mubr.f32.gmra.mrb[0].mxu0 %v7398
    %v7400 = vpop.f32.mrb[0].mxu0
    %v7401 = vadd.f32 0.0, %v7400
    %v7402 = vpop.f32.mrb[0].mxu0
    %7403 = vmatprep.mubr.f32.mxu0 0.0
    %v7404 = vand.u32 %v7265, 4294901760
    %v7405 = vsub.f32 %v7265, %v7404
    %v7406 = vand.u32 %v7405, 4294901760
    %v7407 = vsub.f32 %v7405, %v7406
    %v7408 = vand.u32 %v7407, 4294901760
    %7409 = vmatmul.mubr.f32.gmra.mrb[0].mxu0 %v7408
    %v7410 = vpop.f32.mrb[0].mxu0
    %v7411 = vadd.f32 0.0, %v7410
    %v7412 = vpop.f32.mrb[0].mxu0
    %7413 = vmatprep.mubr.f32.mxu0 0.0
    %v7414 = vand.u32 %v7268, 4294901760
    %v7415 = vsub.f32 %v7268, %v7414
    %v7416 = vand.u32 %v7415, 4294901760
    %v7417 = vsub.f32 %v7415, %v7416
    %v7418 = vand.u32 %v7417, 4294901760
    %7419 = vmatmul.mubr.f32.gmra.mrb[0].mxu0 %v7418
    %v7420 = vpop.f32.mrb[0].mxu0
    %v7421 = vadd.f32 0.0, %v7420
    %v7422 = vpop.f32.mrb[0].mxu0
    %7423 = vmatprep.mubr.f32.mxu0 0.0
    %v7424 = vand.u32 %v7271, 4294901760
    %v7425 = vsub.f32 %v7271, %v7424
    %v7426 = vand.u32 %v7425, 4294901760
    %v7427 = vsub.f32 %v7425, %v7426
    %v7428 = vand.u32 %v7427, 4294901760
    %7429 = vmatmul.mubr.f32.gmra.mrb[0].mxu0 %v7428
    %v7430 = vpop.f32.mrb[0].mxu0
    %v7431 = vadd.f32 0.0, %v7430
    %v7432 = vpop.f32.mrb[0].mxu0
    %7433 = vmatprep.mubr.f32.mxu0 0.0
    %v7434 = vand.u32 %v7274, 4294901760
    %v7435 = vsub.f32 %v7274, %v7434
    %v7436 = vand.u32 %v7435, 4294901760
    %v7437 = vsub.f32 %v7435, %v7436
    %v7438 = vand.u32 %v7437, 4294901760
    %7439 = vmatmul.mubr.f32.gmra.mrb[0].mxu0 %v7438
    %v7440 = vpop.f32.mrb[0].mxu0
    %v7441 = vadd.f32 0.0, %v7440
    %v7442 = vpop.f32.mrb[0].mxu0
    %7443 = vmatprep.mubr.f32.mxu0 0.0
    %v7444 = vand.u32 %v7277, 4294901760
    %v7445 = vsub.f32 %v7277, %v7444
    %v7446 = vand.u32 %v7445, 4294901760
    %v7447 = vsub.f32 %v7445, %v7446
    %v7448 = vand.u32 %v7447, 4294901760
    %7449 = vmatmul.mubr.f32.gmra.mrb[0].mxu0 %v7448
    %v7450 = vpop.f32.mrb[0].mxu0
    %v7451 = vadd.f32 0.0, %v7450
    %v7452 = vpop.f32.mrb[0].mxu0
    %7453 = vdwg.mxu0
    %7454 = vmatprep.subr.mxu0 0.0
    %v7455 = vand.u32 %v7238, 4294901760
    %v7456 = vsub.f32 %v7238, %v7455
    %v7457 = vand.u32 %v7456, 4294901760
    %v7458 = vsub.f32 %v7456, %v7457
    %v7459 = vand.u32 %v7458, 4294901760
    %7460 = vmatpush1.msra.mxu0 %v7459
    %7461 = vmatprep.subr.mxu0 0.0
    %v7462 = vand.u32 %v7239, 4294901760
    %v7463 = vsub.f32 %v7239, %v7462
    %v7464 = vand.u32 %v7463, 4294901760
    %v7465 = vsub.f32 %v7463, %v7464
    %v7466 = vand.u32 %v7465, 4294901760
    %7467 = vmatpush1.msra.mxu0 %v7466
    %7468 = vmatprep.subr.mxu0 0.0
    %v7469 = vand.u32 %v7240, 4294901760
    %v7470 = vsub.f32 %v7240, %v7469
    %v7471 = vand.u32 %v7470, 4294901760
    %v7472 = vsub.f32 %v7470, %v7471
    %v7473 = vand.u32 %v7472, 4294901760
    %7474 = vmatpush1.msra.mxu0 %v7473
    %7475 = vmatprep.subr.mxu0 0.0
    %v7476 = vand.u32 %v7241, 4294901760
    %v7477 = vsub.f32 %v7241, %v7476
    %v7478 = vand.u32 %v7477, 4294901760
    %v7479 = vsub.f32 %v7477, %v7478
    %v7480 = vand.u32 %v7479, 4294901760
    %7481 = vmatpush1.msra.mxu0 %v7480
    %7482 = vmatprep.subr.mxu0 0.0
    %v7483 = vand.u32 %v7242, 4294901760
    %v7484 = vsub.f32 %v7242, %v7483
    %v7485 = vand.u32 %v7484, 4294901760
    %v7486 = vsub.f32 %v7484, %v7485
    %v7487 = vand.u32 %v7486, 4294901760
    %7488 = vmatpush1.msra.mxu0 %v7487
    %7489 = vmatprep.subr.mxu0 0.0
    %v7490 = vand.u32 %v7243, 4294901760
    %v7491 = vsub.f32 %v7243, %v7490
    %v7492 = vand.u32 %v7491, 4294901760
    %v7493 = vsub.f32 %v7491, %v7492
    %v7494 = vand.u32 %v7493, 4294901760
    %7495 = vmatpush1.msra.mxu0 %v7494
    %7496 = vmatprep.subr.mxu0 0.0
    %v7497 = vand.u32 %v7244, 4294901760
    %v7498 = vsub.f32 %v7244, %v7497
    %v7499 = vand.u32 %v7498, 4294901760
    %v7500 = vsub.f32 %v7498, %v7499
    %v7501 = vand.u32 %v7500, 4294901760
    %7502 = vmatpush1.msra.mxu0 %v7501
    %7503 = vmatprep.subr.mxu0 0.0
    %v7504 = vand.u32 %v7245, 4294901760
    %v7505 = vsub.f32 %v7245, %v7504
    %v7506 = vand.u32 %v7505, 4294901760
    %v7507 = vsub.f32 %v7505, %v7506
    %v7508 = vand.u32 %v7507, 4294901760
    %7509 = vmatpush1.msra.mxu0 %v7508
    %7510 = vmatprep.subr.mxu0 0.0
    %v7511 = vand.u32 %v7246, 4294901760
    %v7512 = vsub.f32 %v7246, %v7511
    %v7513 = vand.u32 %v7512, 4294901760
    %v7514 = vsub.f32 %v7512, %v7513
    %v7515 = vand.u32 %v7514, 4294901760
    %7516 = vmatpush1.msra.mxu0 %v7515
    %7517 = vmatprep.subr.mxu0 0.0
    %v7518 = vand.u32 %v7247, 4294901760
    %v7519 = vsub.f32 %v7247, %v7518
    %v7520 = vand.u32 %v7519, 4294901760
    %v7521 = vsub.f32 %v7519, %v7520
    %v7522 = vand.u32 %v7521, 4294901760
    %7523 = vmatpush1.msra.mxu0 %v7522
    %7524 = vmatprep.subr.mxu0 0.0
    %7525 = vmatpush1.msra.mxu0 0.0
    %7526 = vmatprep.subr.mxu0 0.0
    %7527 = vmatpush1.msra.mxu0 0.0
    %7528 = vmatprep.subr.mxu0 0.0
    %7529 = vmatpush1.msra.mxu0 0.0
    %7530 = vmatprep.subr.mxu0 0.0
    %7531 = vmatpush1.msra.mxu0 0.0
    %7532 = vmatprep.subr.mxu0 0.0
    %7533 = vmatpush1.msra.mxu0 0.0
    %7534 = vmatprep.subr.mxu0 0.0
    %7535 = vmatpush1.msra.mxu0 0.0
    %7536 = vmatprep.subr.mxu0 0.0
    %7537 = vmatpush1.msra.mxu0 0.0
    %7538 = vmatprep.subr.mxu0 0.0
    %7539 = vmatpush1.msra.mxu0 0.0
    %7540 = vmatprep.subr.mxu0 0.0
    %7541 = vmatpush1.msra.mxu0 0.0
    %7542 = vmatprep.subr.mxu0 0.0
    %7543 = vmatpush1.msra.mxu0 0.0
    %7544 = vmatprep.subr.mxu0 0.0
    %7545 = vmatpush1.msra.mxu0 0.0
    %7546 = vmatprep.subr.mxu0 0.0
    %7547 = vmatpush1.msra.mxu0 0.0
    %7548 = vmatprep.subr.mxu0 0.0
    %7549 = vmatpush1.msra.mxu0 0.0
    %7550 = vmatprep.subr.mxu0 0.0
    %7551 = vmatpush1.msra.mxu0 0.0
    %7552 = vmatprep.subr.mxu0 0.0
    %7553 = vmatpush1.msra.mxu0 0.0
    %7554 = vmatprep.subr.mxu0 0.0
    %7555 = vmatpush1.msra.mxu0 0.0
    %7556 = vmatprep.subr.mxu0 0.0
    %7557 = vmatpush1.msra.mxu0 0.0
    %7558 = vmatprep.subr.mxu0 0.0
    %7559 = vmatpush1.msra.mxu0 0.0
    %7560 = vmatprep.subr.mxu0 0.0
    %7561 = vmatpush1.msra.mxu0 0.0
    %7562 = vmatprep.subr.mxu0 0.0
    %7563 = vmatpush1.msra.mxu0 0.0
    %7564 = vmatprep.subr.mxu0 0.0
    %7565 = vmatpush1.msra.mxu0 0.0
    %7566 = vmatprep.subr.mxu0 0.0
    %7567 = vmatpush1.msra.mxu0 0.0
    %7568 = vmatprep.mubr.f32.mxu0 0.0
    %v7569 = vand.u32 %v7250, 4294901760
    %7570 = vmatmul.mubr.f32.gmra.mrb[0].mxu0 %v7569
    %v7571 = vpop.f32.mrb[0].mxu0
    %v7572 = vadd.f32 %v7361, %v7571
    %v7573 = vpop.f32.mrb[0].mxu0
    %7574 = vmatprep.mubr.f32.mxu0 0.0
    %v7575 = vand.u32 %v7253, 4294901760
    %7576 = vmatmul.mubr.f32.gmra.mrb[0].mxu0 %v7575
    %v7577 = vpop.f32.mrb[0].mxu0
    %v7578 = vadd.f32 %v7371, %v7577
    %v7579 = vpop.f32.mrb[0].mxu0
    %7580 = vmatprep.mubr.f32.mxu0 0.0
    %v7581 = vand.u32 %v7256, 4294901760
    %7582 = vmatmul.mubr.f32.gmra.mrb[0].mxu0 %v7581
    %v7583 = vpop.f32.mrb[0].mxu0
    %v7584 = vadd.f32 %v7381, %v7583
    %v7585 = vpop.f32.mrb[0].mxu0
    %7586 = vmatprep.mubr.f32.mxu0 0.0
    %v7587 = vand.u32 %v7259, 4294901760
    %7588 = vmatmul.mubr.f32.gmra.mrb[0].mxu0 %v7587
    %v7589 = vpop.f32.mrb[0].mxu0
    %v7590 = vadd.f32 %v7391, %v7589
    %v7591 = vpop.f32.mrb[0].mxu0
    %7592 = vmatprep.mubr.f32.mxu0 0.0
    %v7593 = vand.u32 %v7262, 4294901760
    %7594 = vmatmul.mubr.f32.gmra.mrb[0].mxu0 %v7593
    %v7595 = vpop.f32.mrb[0].mxu0
    %v7596 = vadd.f32 %v7401, %v7595
    %v7597 = vpop.f32.mrb[0].mxu0
    %7598 = vmatprep.mubr.f32.mxu0 0.0
    %v7599 = vand.u32 %v7265, 4294901760
    %7600 = vmatmul.mubr.f32.gmra.mrb[0].mxu0 %v7599
    %v7601 = vpop.f32.mrb[0].mxu0
    %v7602 = vadd.f32 %v7411, %v7601
    %v7603 = vpop.f32.mrb[0].mxu0
    %7604 = vmatprep.mubr.f32.mxu0 0.0
    %v7605 = vand.u32 %v7268, 4294901760
    %7606 = vmatmul.mubr.f32.gmra.mrb[0].mxu0 %v7605
    %v7607 = vpop.f32.mrb[0].mxu0
    %v7608 = vadd.f32 %v7421, %v7607
    %v7609 = vpop.f32.mrb[0].mxu0
    %7610 = vmatprep.mubr.f32.mxu0 0.0
    %v7611 = vand.u32 %v7271, 4294901760
    %7612 = vmatmul.mubr.f32.gmra.mrb[0].mxu0 %v7611
    %v7613 = vpop.f32.mrb[0].mxu0
    %v7614 = vadd.f32 %v7431, %v7613
    %v7615 = vpop.f32.mrb[0].mxu0
    %7616 = vmatprep.mubr.f32.mxu0 0.0
    %v7617 = vand.u32 %v7274, 4294901760
    %7618 = vmatmul.mubr.f32.gmra.mrb[0].mxu0 %v7617
    %v7619 = vpop.f32.mrb[0].mxu0
    %v7620 = vadd.f32 %v7441, %v7619
    %v7621 = vpop.f32.mrb[0].mxu0
    %7622 = vmatprep.mubr.f32.mxu0 0.0
    %v7623 = vand.u32 %v7277, 4294901760
    %7624 = vmatmul.mubr.f32.gmra.mrb[0].mxu0 %v7623
    %v7625 = vpop.f32.mrb[0].mxu0
    %v7626 = vadd.f32 %v7451, %v7625
    %v7627 = vpop.f32.mrb[0].mxu0
    %7628 = vdwg.mxu0
    %7629 = vmatprep.subr.mxu0 0.0
    %v7630 = vand.u32 %v7238, 4294901760
    %v7631 = vsub.f32 %v7238, %v7630
    %7632 = vmatpush1.msra.mxu0 %v7631
    %7633 = vmatprep.subr.mxu0 0.0
    %v7634 = vand.u32 %v7239, 4294901760
    %v7635 = vsub.f32 %v7239, %v7634
    %7636 = vmatpush1.msra.mxu0 %v7635
    %7637 = vmatprep.subr.mxu0 0.0
    %v7638 = vand.u32 %v7240, 4294901760
    %v7639 = vsub.f32 %v7240, %v7638
    %7640 = vmatpush1.msra.mxu0 %v7639
    %7641 = vmatprep.subr.mxu0 0.0
    %v7642 = vand.u32 %v7241, 4294901760
    %v7643 = vsub.f32 %v7241, %v7642
    %7644 = vmatpush1.msra.mxu0 %v7643
    %7645 = vmatprep.subr.mxu0 0.0
    %v7646 = vand.u32 %v7242, 4294901760
    %v7647 = vsub.f32 %v7242, %v7646
    %7648 = vmatpush1.msra.mxu0 %v7647
    %7649 = vmatprep.subr.mxu0 0.0
    %v7650 = vand.u32 %v7243, 4294901760
    %v7651 = vsub.f32 %v7243, %v7650
    %7652 = vmatpush1.msra.mxu0 %v7651
    %7653 = vmatprep.subr.mxu0 0.0
    %v7654 = vand.u32 %v7244, 4294901760
    %v7655 = vsub.f32 %v7244, %v7654
    %7656 = vmatpush1.msra.mxu0 %v7655
    %7657 = vmatprep.subr.mxu0 0.0
    %v7658 = vand.u32 %v7245, 4294901760
    %v7659 = vsub.f32 %v7245, %v7658
    %7660 = vmatpush1.msra.mxu0 %v7659
    %7661 = vmatprep.subr.mxu0 0.0
    %v7662 = vand.u32 %v7246, 4294901760
    %v7663 = vsub.f32 %v7246, %v7662
    %7664 = vmatpush1.msra.mxu0 %v7663
    %7665 = vmatprep.subr.mxu0 0.0
    %v7666 = vand.u32 %v7247, 4294901760
    %v7667 = vsub.f32 %v7247, %v7666
    %7668 = vmatpush1.msra.mxu0 %v7667
    %7669 = vmatprep.subr.mxu0 0.0
    %7670 = vmatpush1.msra.mxu0 0.0
    %7671 = vmatprep.subr.mxu0 0.0
    %7672 = vmatpush1.msra.mxu0 0.0
    %7673 = vmatprep.subr.mxu0 0.0
    %7674 = vmatpush1.msra.mxu0 0.0
    %7675 = vmatprep.subr.mxu0 0.0
    %7676 = vmatpush1.msra.mxu0 0.0
    %7677 = vmatprep.subr.mxu0 0.0
    %7678 = vmatpush1.msra.mxu0 0.0
    %7679 = vmatprep.subr.mxu0 0.0
    %7680 = vmatpush1.msra.mxu0 0.0
    %7681 = vmatprep.subr.mxu0 0.0
    %7682 = vmatpush1.msra.mxu0 0.0
    %7683 = vmatprep.subr.mxu0 0.0
    %7684 = vmatpush1.msra.mxu0 0.0
    %7685 = vmatprep.subr.mxu0 0.0
    %7686 = vmatpush1.msra.mxu0 0.0
    %7687 = vmatprep.subr.mxu0 0.0
    %7688 = vmatpush1.msra.mxu0 0.0
    %7689 = vmatprep.subr.mxu0 0.0
    %7690 = vmatpush1.msra.mxu0 0.0
    %7691 = vmatprep.subr.mxu0 0.0
    %7692 = vmatpush1.msra.mxu0 0.0
    %7693 = vmatprep.subr.mxu0 0.0
    %7694 = vmatpush1.msra.mxu0 0.0
    %7695 = vmatprep.subr.mxu0 0.0
    %7696 = vmatpush1.msra.mxu0 0.0
    %7697 = vmatprep.subr.mxu0 0.0
    %7698 = vmatpush1.msra.mxu0 0.0
    %7699 = vmatprep.subr.mxu0 0.0
    %7700 = vmatpush1.msra.mxu0 0.0
    %7701 = vmatprep.subr.mxu0 0.0
    %7702 = vmatpush1.msra.mxu0 0.0
    %7703 = vmatprep.subr.mxu0 0.0
    %7704 = vmatpush1.msra.mxu0 0.0
    %7705 = vmatprep.subr.mxu0 0.0
    %7706 = vmatpush1.msra.mxu0 0.0
    %7707 = vmatprep.subr.mxu0 0.0
    %7708 = vmatpush1.msra.mxu0 0.0
    %7709 = vmatprep.subr.mxu0 0.0
    %7710 = vmatpush1.msra.mxu0 0.0
    %7711 = vmatprep.subr.mxu0 0.0
    %7712 = vmatpush1.msra.mxu0 0.0
    %7713 = vmatprep.mubr.f32.mxu0 0.0
    %v7714 = vand.u32 %v7250, 4294901760
    %v7715 = vsub.f32 %v7250, %v7714
    %7716 = vmatmul.mubr.f32.gmra.mrb[0].mxu0 %v7715
    %v7717 = vpop.f32.mrb[0].mxu0
    %v7718 = vadd.f32 %v7572, %v7717
    %v7719 = vpop.f32.mrb[0].mxu0
    %7720 = vmatprep.mubr.f32.mxu0 0.0
    %v7721 = vand.u32 %v7253, 4294901760
    %v7722 = vsub.f32 %v7253, %v7721
    %7723 = vmatmul.mubr.f32.gmra.mrb[0].mxu0 %v7722
    %v7724 = vpop.f32.mrb[0].mxu0
    %v7725 = vadd.f32 %v7578, %v7724
    %v7726 = vpop.f32.mrb[0].mxu0
    %7727 = vmatprep.mubr.f32.mxu0 0.0
    %v7728 = vand.u32 %v7256, 4294901760
    %v7729 = vsub.f32 %v7256, %v7728
    %7730 = vmatmul.mubr.f32.gmra.mrb[0].mxu0 %v7729
    %v7731 = vpop.f32.mrb[0].mxu0
    %v7732 = vadd.f32 %v7584, %v7731
    %v7733 = vpop.f32.mrb[0].mxu0
    %7734 = vmatprep.mubr.f32.mxu0 0.0
    %v7735 = vand.u32 %v7259, 4294901760
    %v7736 = vsub.f32 %v7259, %v7735
    %7737 = vmatmul.mubr.f32.gmra.mrb[0].mxu0 %v7736
    %v7738 = vpop.f32.mrb[0].mxu0
    %v7739 = vadd.f32 %v7590, %v7738
    %v7740 = vpop.f32.mrb[0].mxu0
    %7741 = vmatprep.mubr.f32.mxu0 0.0
    %v7742 = vand.u32 %v7262, 4294901760
    %v7743 = vsub.f32 %v7262, %v7742
    %7744 = vmatmul.mubr.f32.gmra.mrb[0].mxu0 %v7743
    %v7745 = vpop.f32.mrb[0].mxu0
    %v7746 = vadd.f32 %v7596, %v7745
    %v7747 = vpop.f32.mrb[0].mxu0
    %7748 = vmatprep.mubr.f32.mxu0 0.0
    %v7749 = vand.u32 %v7265, 4294901760
    %v7750 = vsub.f32 %v7265, %v7749
    %7751 = vmatmul.mubr.f32.gmra.mrb[0].mxu0 %v7750
    %v7752 = vpop.f32.mrb[0].mxu0
    %v7753 = vadd.f32 %v7602, %v7752
    %v7754 = vpop.f32.mrb[0].mxu0
    %7755 = vmatprep.mubr.f32.mxu0 0.0
    %v7756 = vand.u32 %v7268, 4294901760
    %v7757 = vsub.f32 %v7268, %v7756
    %7758 = vmatmul.mubr.f32.gmra.mrb[0].mxu0 %v7757
    %v7759 = vpop.f32.mrb[0].mxu0
    %v7760 = vadd.f32 %v7608, %v7759
    %v7761 = vpop.f32.mrb[0].mxu0
    %7762 = vmatprep.mubr.f32.mxu0 0.0
    %v7763 = vand.u32 %v7271, 4294901760
    %v7764 = vsub.f32 %v7271, %v7763
    %7765 = vmatmul.mubr.f32.gmra.mrb[0].mxu0 %v7764
    %v7766 = vpop.f32.mrb[0].mxu0
    %v7767 = vadd.f32 %v7614, %v7766
    %v7768 = vpop.f32.mrb[0].mxu0
    %7769 = vmatprep.mubr.f32.mxu0 0.0
    %v7770 = vand.u32 %v7274, 4294901760
    %v7771 = vsub.f32 %v7274, %v7770
    %7772 = vmatmul.mubr.f32.gmra.mrb[0].mxu0 %v7771
    %v7773 = vpop.f32.mrb[0].mxu0
    %v7774 = vadd.f32 %v7620, %v7773
    %v7775 = vpop.f32.mrb[0].mxu0
    %7776 = vmatprep.mubr.f32.mxu0 0.0
    %v7777 = vand.u32 %v7277, 4294901760
    %v7778 = vsub.f32 %v7277, %v7777
    %7779 = vmatmul.mubr.f32.gmra.mrb[0].mxu0 %v7778
    %v7780 = vpop.f32.mrb[0].mxu0
    %v7781 = vadd.f32 %v7626, %v7780
    %v7782 = vpop.f32.mrb[0].mxu0
    %7783 = vdwg.mxu0
    %7784 = vmatprep.subr.mxu0 0.0
    %v7785 = vand.u32 %v7238, 4294901760
    %7786 = vmatpush1.msra.mxu0 %v7785
    %7787 = vmatprep.subr.mxu0 0.0
    %v7788 = vand.u32 %v7239, 4294901760
    %7789 = vmatpush1.msra.mxu0 %v7788
    %7790 = vmatprep.subr.mxu0 0.0
    %v7791 = vand.u32 %v7240, 4294901760
    %7792 = vmatpush1.msra.mxu0 %v7791
    %7793 = vmatprep.subr.mxu0 0.0
    %v7794 = vand.u32 %v7241, 4294901760
    %7795 = vmatpush1.msra.mxu0 %v7794
    %7796 = vmatprep.subr.mxu0 0.0
    %v7797 = vand.u32 %v7242, 4294901760
    %7798 = vmatpush1.msra.mxu0 %v7797
    %7799 = vmatprep.subr.mxu0 0.0
    %v7800 = vand.u32 %v7243, 4294901760
    %7801 = vmatpush1.msra.mxu0 %v7800
    %7802 = vmatprep.subr.mxu0 0.0
    %v7803 = vand.u32 %v7244, 4294901760
    %7804 = vmatpush1.msra.mxu0 %v7803
    %7805 = vmatprep.subr.mxu0 0.0
    %v7806 = vand.u32 %v7245, 4294901760
    %7807 = vmatpush1.msra.mxu0 %v7806
    %7808 = vmatprep.subr.mxu0 0.0
    %v7809 = vand.u32 %v7246, 4294901760
    %7810 = vmatpush1.msra.mxu0 %v7809
    %7811 = vmatprep.subr.mxu0 0.0
    %v7812 = vand.u32 %v7247, 4294901760
    %7813 = vmatpush1.msra.mxu0 %v7812
    %7814 = vmatprep.subr.mxu0 0.0
    %7815 = vmatpush1.msra.mxu0 0.0
    %7816 = vmatprep.subr.mxu0 0.0
    %7817 = vmatpush1.msra.mxu0 0.0
    %7818 = vmatprep.subr.mxu0 0.0
    %7819 = vmatpush1.msra.mxu0 0.0
    %7820 = vmatprep.subr.mxu0 0.0
    %7821 = vmatpush1.msra.mxu0 0.0
    %7822 = vmatprep.subr.mxu0 0.0
    %7823 = vmatpush1.msra.mxu0 0.0
    %7824 = vmatprep.subr.mxu0 0.0
    %7825 = vmatpush1.msra.mxu0 0.0
    %7826 = vmatprep.subr.mxu0 0.0
    %7827 = vmatpush1.msra.mxu0 0.0
    %7828 = vmatprep.subr.mxu0 0.0
    %7829 = vmatpush1.msra.mxu0 0.0
    %7830 = vmatprep.subr.mxu0 0.0
    %7831 = vmatpush1.msra.mxu0 0.0
    %7832 = vmatprep.subr.mxu0 0.0
    %7833 = vmatpush1.msra.mxu0 0.0
    %7834 = vmatprep.subr.mxu0 0.0
    %7835 = vmatpush1.msra.mxu0 0.0
    %7836 = vmatprep.subr.mxu0 0.0
    %7837 = vmatpush1.msra.mxu0 0.0
    %7838 = vmatprep.subr.mxu0 0.0
    %7839 = vmatpush1.msra.mxu0 0.0
    %7840 = vmatprep.subr.mxu0 0.0
    %7841 = vmatpush1.msra.mxu0 0.0
    %7842 = vmatprep.subr.mxu0 0.0
    %7843 = vmatpush1.msra.mxu0 0.0
    %7844 = vmatprep.subr.mxu0 0.0
    %7845 = vmatpush1.msra.mxu0 0.0
    %7846 = vmatprep.subr.mxu0 0.0
    %7847 = vmatpush1.msra.mxu0 0.0
    %7848 = vmatprep.subr.mxu0 0.0
    %7849 = vmatpush1.msra.mxu0 0.0
    %7850 = vmatprep.subr.mxu0 0.0
    %7851 = vmatpush1.msra.mxu0 0.0
    %7852 = vmatprep.subr.mxu0 0.0
    %7853 = vmatpush1.msra.mxu0 0.0
    %7854 = vmatprep.subr.mxu0 0.0
    %7855 = vmatpush1.msra.mxu0 0.0
    %7856 = vmatprep.subr.mxu0 0.0
    %7857 = vmatpush1.msra.mxu0 0.0
    %7858 = vmatprep.mubr.f32.mxu0 0.0
    %v7859 = vand.u32 %v7250, 4294901760
    %v7860 = vsub.f32 %v7250, %v7859
    %v7861 = vand.u32 %v7860, 4294901760
    %7862 = vmatmul.mubr.f32.gmra.mrb[0].mxu0 %v7861
    %v7863 = vpop.f32.mrb[0].mxu0
    %v7864 = vadd.f32 %v7718, %v7863
    %v7865 = vpop.f32.mrb[0].mxu0
    %7866 = vmatprep.mubr.f32.mxu0 0.0
    %v7867 = vand.u32 %v7253, 4294901760
    %v7868 = vsub.f32 %v7253, %v7867
    %v7869 = vand.u32 %v7868, 4294901760
    %7870 = vmatmul.mubr.f32.gmra.mrb[0].mxu0 %v7869
    %v7871 = vpop.f32.mrb[0].mxu0
    %v7872 = vadd.f32 %v7725, %v7871
    %v7873 = vpop.f32.mrb[0].mxu0
    %7874 = vmatprep.mubr.f32.mxu0 0.0
    %v7875 = vand.u32 %v7256, 4294901760
    %v7876 = vsub.f32 %v7256, %v7875
    %v7877 = vand.u32 %v7876, 4294901760
    %7878 = vmatmul.mubr.f32.gmra.mrb[0].mxu0 %v7877
    %v7879 = vpop.f32.mrb[0].mxu0
    %v7880 = vadd.f32 %v7732, %v7879
    %v7881 = vpop.f32.mrb[0].mxu0
    %7882 = vmatprep.mubr.f32.mxu0 0.0
    %v7883 = vand.u32 %v7259, 4294901760
    %v7884 = vsub.f32 %v7259, %v7883
    %v7885 = vand.u32 %v7884, 4294901760
    %7886 = vmatmul.mubr.f32.gmra.mrb[0].mxu0 %v7885
    %v7887 = vpop.f32.mrb[0].mxu0
    %v7888 = vadd.f32 %v7739, %v7887
    %v7889 = vpop.f32.mrb[0].mxu0
    %7890 = vmatprep.mubr.f32.mxu0 0.0
    %v7891 = vand.u32 %v7262, 4294901760
    %v7892 = vsub.f32 %v7262, %v7891
    %v7893 = vand.u32 %v7892, 4294901760
    %7894 = vmatmul.mubr.f32.gmra.mrb[0].mxu0 %v7893
    %v7895 = vpop.f32.mrb[0].mxu0
    %v7896 = vadd.f32 %v7746, %v7895
    %v7897 = vpop.f32.mrb[0].mxu0
    %7898 = vmatprep.mubr.f32.mxu0 0.0
    %v7899 = vand.u32 %v7265, 4294901760
    %v7900 = vsub.f32 %v7265, %v7899
    %v7901 = vand.u32 %v7900, 4294901760
    %7902 = vmatmul.mubr.f32.gmra.mrb[0].mxu0 %v7901
    %v7903 = vpop.f32.mrb[0].mxu0
    %v7904 = vadd.f32 %v7753, %v7903
    %v7905 = vpop.f32.mrb[0].mxu0
    %7906 = vmatprep.mubr.f32.mxu0 0.0
    %v7907 = vand.u32 %v7268, 4294901760
    %v7908 = vsub.f32 %v7268, %v7907
    %v7909 = vand.u32 %v7908, 4294901760
    %7910 = vmatmul.mubr.f32.gmra.mrb[0].mxu0 %v7909
    %v7911 = vpop.f32.mrb[0].mxu0
    %v7912 = vadd.f32 %v7760, %v7911
    %v7913 = vpop.f32.mrb[0].mxu0
    %7914 = vmatprep.mubr.f32.mxu0 0.0
    %v7915 = vand.u32 %v7271, 4294901760
    %v7916 = vsub.f32 %v7271, %v7915
    %v7917 = vand.u32 %v7916, 4294901760
    %7918 = vmatmul.mubr.f32.gmra.mrb[0].mxu0 %v7917
    %v7919 = vpop.f32.mrb[0].mxu0
    %v7920 = vadd.f32 %v7767, %v7919
    %v7921 = vpop.f32.mrb[0].mxu0
    %7922 = vmatprep.mubr.f32.mxu0 0.0
    %v7923 = vand.u32 %v7274, 4294901760
    %v7924 = vsub.f32 %v7274, %v7923
    %v7925 = vand.u32 %v7924, 4294901760
    %7926 = vmatmul.mubr.f32.gmra.mrb[0].mxu0 %v7925
    %v7927 = vpop.f32.mrb[0].mxu0
    %v7928 = vadd.f32 %v7774, %v7927
    %v7929 = vpop.f32.mrb[0].mxu0
    %7930 = vmatprep.mubr.f32.mxu0 0.0
    %v7931 = vand.u32 %v7277, 4294901760
    %v7932 = vsub.f32 %v7277, %v7931
    %v7933 = vand.u32 %v7932, 4294901760
    %7934 = vmatmul.mubr.f32.gmra.mrb[0].mxu0 %v7933
    %v7935 = vpop.f32.mrb[0].mxu0
    %v7936 = vadd.f32 %v7781, %v7935
    %v7937 = vpop.f32.mrb[0].mxu0
    %7938 = vdwg.mxu0
    %7939 = vmatprep.subr.mxu0 0.0
    %v7940 = vand.u32 %v7238, 4294901760
    %v7941 = vsub.f32 %v7238, %v7940
    %v7942 = vand.u32 %v7941, 4294901760
    %7943 = vmatpush1.msra.mxu0 %v7942
    %7944 = vmatprep.subr.mxu0 0.0
    %v7945 = vand.u32 %v7239, 4294901760
    %v7946 = vsub.f32 %v7239, %v7945
    %v7947 = vand.u32 %v7946, 4294901760
    %7948 = vmatpush1.msra.mxu0 %v7947
    %7949 = vmatprep.subr.mxu0 0.0
    %v7950 = vand.u32 %v7240, 4294901760
    %v7951 = vsub.f32 %v7240, %v7950
    %v7952 = vand.u32 %v7951, 4294901760
    %7953 = vmatpush1.msra.mxu0 %v7952
    %7954 = vmatprep.subr.mxu0 0.0
    %v7955 = vand.u32 %v7241, 4294901760
    %v7956 = vsub.f32 %v7241, %v7955
    %v7957 = vand.u32 %v7956, 4294901760
    %7958 = vmatpush1.msra.mxu0 %v7957
    %7959 = vmatprep.subr.mxu0 0.0
    %v7960 = vand.u32 %v7242, 4294901760
    %v7961 = vsub.f32 %v7242, %v7960
    %v7962 = vand.u32 %v7961, 4294901760
    %7963 = vmatpush1.msra.mxu0 %v7962
    %7964 = vmatprep.subr.mxu0 0.0
    %v7965 = vand.u32 %v7243, 4294901760
    %v7966 = vsub.f32 %v7243, %v7965
    %v7967 = vand.u32 %v7966, 4294901760
    %7968 = vmatpush1.msra.mxu0 %v7967
    %7969 = vmatprep.subr.mxu0 0.0
    %v7970 = vand.u32 %v7244, 4294901760
    %v7971 = vsub.f32 %v7244, %v7970
    %v7972 = vand.u32 %v7971, 4294901760
    %7973 = vmatpush1.msra.mxu0 %v7972
    %7974 = vmatprep.subr.mxu0 0.0
    %v7975 = vand.u32 %v7245, 4294901760
    %v7976 = vsub.f32 %v7245, %v7975
    %v7977 = vand.u32 %v7976, 4294901760
    %7978 = vmatpush1.msra.mxu0 %v7977
    %7979 = vmatprep.subr.mxu0 0.0
    %v7980 = vand.u32 %v7246, 4294901760
    %v7981 = vsub.f32 %v7246, %v7980
    %v7982 = vand.u32 %v7981, 4294901760
    %7983 = vmatpush1.msra.mxu0 %v7982
    %7984 = vmatprep.subr.mxu0 0.0
    %v7985 = vand.u32 %v7247, 4294901760
    %v7986 = vsub.f32 %v7247, %v7985
    %v7987 = vand.u32 %v7986, 4294901760
    %7988 = vmatpush1.msra.mxu0 %v7987
    %7989 = vmatprep.subr.mxu0 0.0
    %7990 = vmatpush1.msra.mxu0 0.0
    %7991 = vmatprep.subr.mxu0 0.0
    %7992 = vmatpush1.msra.mxu0 0.0
    %7993 = vmatprep.subr.mxu0 0.0
    %7994 = vmatpush1.msra.mxu0 0.0
    %7995 = vmatprep.subr.mxu0 0.0
    %7996 = vmatpush1.msra.mxu0 0.0
    %7997 = vmatprep.subr.mxu0 0.0
    %7998 = vmatpush1.msra.mxu0 0.0
    %7999 = vmatprep.subr.mxu0 0.0
    %8000 = vmatpush1.msra.mxu0 0.0
    %8001 = vmatprep.subr.mxu0 0.0
    %8002 = vmatpush1.msra.mxu0 0.0
    %8003 = vmatprep.subr.mxu0 0.0
    %8004 = vmatpush1.msra.mxu0 0.0
    %8005 = vmatprep.subr.mxu0 0.0
    %8006 = vmatpush1.msra.mxu0 0.0
    %8007 = vmatprep.subr.mxu0 0.0
    %8008 = vmatpush1.msra.mxu0 0.0
    %8009 = vmatprep.subr.mxu0 0.0
    %8010 = vmatpush1.msra.mxu0 0.0
    %8011 = vmatprep.subr.mxu0 0.0
    %8012 = vmatpush1.msra.mxu0 0.0
    %8013 = vmatprep.subr.mxu0 0.0
    %8014 = vmatpush1.msra.mxu0 0.0
    %8015 = vmatprep.subr.mxu0 0.0
    %8016 = vmatpush1.msra.mxu0 0.0
    %8017 = vmatprep.subr.mxu0 0.0
    %8018 = vmatpush1.msra.mxu0 0.0
    %8019 = vmatprep.subr.mxu0 0.0
    %8020 = vmatpush1.msra.mxu0 0.0
    %8021 = vmatprep.subr.mxu0 0.0
    %8022 = vmatpush1.msra.mxu0 0.0
    %8023 = vmatprep.subr.mxu0 0.0
    %8024 = vmatpush1.msra.mxu0 0.0
    %8025 = vmatprep.subr.mxu0 0.0
    %8026 = vmatpush1.msra.mxu0 0.0
    %8027 = vmatprep.subr.mxu0 0.0
    %8028 = vmatpush1.msra.mxu0 0.0
    %8029 = vmatprep.subr.mxu0 0.0
    %8030 = vmatpush1.msra.mxu0 0.0
    %8031 = vmatprep.subr.mxu0 0.0
    %8032 = vmatpush1.msra.mxu0 0.0
    %8033 = vmatprep.mubr.f32.mxu0 0.0
    %v8034 = vand.u32 %v7250, 4294901760
    %8035 = vmatmul.mubr.f32.gmra.mrb[0].mxu0 %v8034
    %v8036 = vpop.f32.mrb[0].mxu0
    %v8037 = vadd.f32 %v7864, %v8036
    %v8038 = vpop.f32.mrb[0].mxu0
    %8039 = vmatprep.mubr.f32.mxu0 0.0
    %v8040 = vand.u32 %v7253, 4294901760
    %8041 = vmatmul.mubr.f32.gmra.mrb[0].mxu0 %v8040
    %v8042 = vpop.f32.mrb[0].mxu0
    %v8043 = vadd.f32 %v7872, %v8042
    %v8044 = vpop.f32.mrb[0].mxu0
    %8045 = vmatprep.mubr.f32.mxu0 0.0
    %v8046 = vand.u32 %v7256, 4294901760
    %8047 = vmatmul.mubr.f32.gmra.mrb[0].mxu0 %v8046
    %v8048 = vpop.f32.mrb[0].mxu0
    %v8049 = vadd.f32 %v7880, %v8048
    %v8050 = vpop.f32.mrb[0].mxu0
    %8051 = vmatprep.mubr.f32.mxu0 0.0
    %v8052 = vand.u32 %v7259, 4294901760
    %8053 = vmatmul.mubr.f32.gmra.mrb[0].mxu0 %v8052
    %v8054 = vpop.f32.mrb[0].mxu0
    %v8055 = vadd.f32 %v7888, %v8054
    %v8056 = vpop.f32.mrb[0].mxu0
    %8057 = vmatprep.mubr.f32.mxu0 0.0
    %v8058 = vand.u32 %v7262, 4294901760
    %8059 = vmatmul.mubr.f32.gmra.mrb[0].mxu0 %v8058
    %v8060 = vpop.f32.mrb[0].mxu0
    %v8061 = vadd.f32 %v7896, %v8060
    %v8062 = vpop.f32.mrb[0].mxu0
    %8063 = vmatprep.mubr.f32.mxu0 0.0
    %v8064 = vand.u32 %v7265, 4294901760
    %8065 = vmatmul.mubr.f32.gmra.mrb[0].mxu0 %v8064
    %v8066 = vpop.f32.mrb[0].mxu0
    %v8067 = vadd.f32 %v7904, %v8066
    %v8068 = vpop.f32.mrb[0].mxu0
    %8069 = vmatprep.mubr.f32.mxu0 0.0
    %v8070 = vand.u32 %v7268, 4294901760
    %8071 = vmatmul.mubr.f32.gmra.mrb[0].mxu0 %v8070
    %v8072 = vpop.f32.mrb[0].mxu0
    %v8073 = vadd.f32 %v7912, %v8072
    %v8074 = vpop.f32.mrb[0].mxu0
    %8075 = vmatprep.mubr.f32.mxu0 0.0
    %v8076 = vand.u32 %v7271, 4294901760
    %8077 = vmatmul.mubr.f32.gmra.mrb[0].mxu0 %v8076
    %v8078 = vpop.f32.mrb[0].mxu0
    %v8079 = vadd.f32 %v7920, %v8078
    %v8080 = vpop.f32.mrb[0].mxu0
    %8081 = vmatprep.mubr.f32.mxu0 0.0
    %v8082 = vand.u32 %v7274, 4294901760
    %8083 = vmatmul.mubr.f32.gmra.mrb[0].mxu0 %v8082
    %v8084 = vpop.f32.mrb[0].mxu0
    %v8085 = vadd.f32 %v7928, %v8084
    %v8086 = vpop.f32.mrb[0].mxu0
    %8087 = vmatprep.mubr.f32.mxu0 0.0
    %v8088 = vand.u32 %v7277, 4294901760
    %8089 = vmatmul.mubr.f32.gmra.mrb[0].mxu0 %v8088
    %v8090 = vpop.f32.mrb[0].mxu0
    %v8091 = vadd.f32 %v7936, %v8090
    %v8092 = vpop.f32.mrb[0].mxu0
    %8093 = vdwg.mxu0
    %8094 = vmatprep.subr.mxu0 0.0
    %v8095 = vand.u32 %v7238, 4294901760
    %8096 = vmatpush1.msra.mxu0 %v8095
    %8097 = vmatprep.subr.mxu0 0.0
    %v8098 = vand.u32 %v7239, 4294901760
    %8099 = vmatpush1.msra.mxu0 %v8098
    %8100 = vmatprep.subr.mxu0 0.0
    %v8101 = vand.u32 %v7240, 4294901760
    %8102 = vmatpush1.msra.mxu0 %v8101
    %8103 = vmatprep.subr.mxu0 0.0
    %v8104 = vand.u32 %v7241, 4294901760
    %8105 = vmatpush1.msra.mxu0 %v8104
    %8106 = vmatprep.subr.mxu0 0.0
    %v8107 = vand.u32 %v7242, 4294901760
    %8108 = vmatpush1.msra.mxu0 %v8107
    %8109 = vmatprep.subr.mxu0 0.0
    %v8110 = vand.u32 %v7243, 4294901760
    %8111 = vmatpush1.msra.mxu0 %v8110
    %8112 = vmatprep.subr.mxu0 0.0
    %v8113 = vand.u32 %v7244, 4294901760
    %8114 = vmatpush1.msra.mxu0 %v8113
    %8115 = vmatprep.subr.mxu0 0.0
    %v8116 = vand.u32 %v7245, 4294901760
    %8117 = vmatpush1.msra.mxu0 %v8116
    %8118 = vmatprep.subr.mxu0 0.0
    %v8119 = vand.u32 %v7246, 4294901760
    %8120 = vmatpush1.msra.mxu0 %v8119
    %8121 = vmatprep.subr.mxu0 0.0
    %v8122 = vand.u32 %v7247, 4294901760
    %8123 = vmatpush1.msra.mxu0 %v8122
    %8124 = vmatprep.subr.mxu0 0.0
    %8125 = vmatpush1.msra.mxu0 0.0
    %8126 = vmatprep.subr.mxu0 0.0
    %8127 = vmatpush1.msra.mxu0 0.0
    %8128 = vmatprep.subr.mxu0 0.0
    %8129 = vmatpush1.msra.mxu0 0.0
    %8130 = vmatprep.subr.mxu0 0.0
    %8131 = vmatpush1.msra.mxu0 0.0
    %8132 = vmatprep.subr.mxu0 0.0
    %8133 = vmatpush1.msra.mxu0 0.0
    %8134 = vmatprep.subr.mxu0 0.0
    %8135 = vmatpush1.msra.mxu0 0.0
    %8136 = vmatprep.subr.mxu0 0.0
    %8137 = vmatpush1.msra.mxu0 0.0
    %8138 = vmatprep.subr.mxu0 0.0
    %8139 = vmatpush1.msra.mxu0 0.0
    %8140 = vmatprep.subr.mxu0 0.0
    %8141 = vmatpush1.msra.mxu0 0.0
    %8142 = vmatprep.subr.mxu0 0.0
    %8143 = vmatpush1.msra.mxu0 0.0
    %8144 = vmatprep.subr.mxu0 0.0
    %8145 = vmatpush1.msra.mxu0 0.0
    %8146 = vmatprep.subr.mxu0 0.0
    %8147 = vmatpush1.msra.mxu0 0.0
    %8148 = vmatprep.subr.mxu0 0.0
    %8149 = vmatpush1.msra.mxu0 0.0
    %8150 = vmatprep.subr.mxu0 0.0
    %8151 = vmatpush1.msra.mxu0 0.0
    %8152 = vmatprep.subr.mxu0 0.0
    %8153 = vmatpush1.msra.mxu0 0.0
    %8154 = vmatprep.subr.mxu0 0.0
    %8155 = vmatpush1.msra.mxu0 0.0
    %8156 = vmatprep.subr.mxu0 0.0
    %8157 = vmatpush1.msra.mxu0 0.0
    %8158 = vmatprep.subr.mxu0 0.0
    %8159 = vmatpush1.msra.mxu0 0.0
    %8160 = vmatprep.subr.mxu0 0.0
    %8161 = vmatpush1.msra.mxu0 0.0
    %8162 = vmatprep.subr.mxu0 0.0
    %8163 = vmatpush1.msra.mxu0 0.0
    %8164 = vmatprep.subr.mxu0 0.0
    %8165 = vmatpush1.msra.mxu0 0.0
    %8166 = vmatprep.subr.mxu0 0.0
    %8167 = vmatpush1.msra.mxu0 0.0
    %8168 = vmatprep.mubr.f32.mxu0 0.0
    %v8169 = vand.u32 %v7250, 4294901760
    %8170 = vmatmul.mubr.f32.gmra.mrb[0].mxu0 %v8169
    %v8171 = vpop.f32.mrb[0].mxu0
    %v8172 = vadd.f32 %v8037, %v8171
    %v8173 = vpop.f32.mrb[0].mxu0
    %8174 = vmatprep.mubr.f32.mxu0 0.0
    %v8175 = vand.u32 %v7253, 4294901760
    %8176 = vmatmul.mubr.f32.gmra.mrb[0].mxu0 %v8175
    %v8177 = vpop.f32.mrb[0].mxu0
    %v8178 = vadd.f32 %v8043, %v8177
    %v8179 = vpop.f32.mrb[0].mxu0
    %8180 = vmatprep.mubr.f32.mxu0 0.0
    %v8181 = vand.u32 %v7256, 4294901760
    %8182 = vmatmul.mubr.f32.gmra.mrb[0].mxu0 %v8181
    %v8183 = vpop.f32.mrb[0].mxu0
    %v8184 = vadd.f32 %v8049, %v8183
    %v8185 = vpop.f32.mrb[0].mxu0
    %8186 = vmatprep.mubr.f32.mxu0 0.0
    %v8187 = vand.u32 %v7259, 4294901760
    %8188 = vmatmul.mubr.f32.gmra.mrb[0].mxu0 %v8187
    %v8189 = vpop.f32.mrb[0].mxu0
    %v8190 = vadd.f32 %v8055, %v8189
    %v8191 = vpop.f32.mrb[0].mxu0
    %8192 = vmatprep.mubr.f32.mxu0 0.0
    %v8193 = vand.u32 %v7262, 4294901760
    %8194 = vmatmul.mubr.f32.gmra.mrb[0].mxu0 %v8193
    %v8195 = vpop.f32.mrb[0].mxu0
    %v8196 = vadd.f32 %v8061, %v8195
    %v8197 = vpop.f32.mrb[0].mxu0
    %8198 = vmatprep.mubr.f32.mxu0 0.0
    %v8199 = vand.u32 %v7265, 4294901760
    %8200 = vmatmul.mubr.f32.gmra.mrb[0].mxu0 %v8199
    %v8201 = vpop.f32.mrb[0].mxu0
    %v8202 = vadd.f32 %v8067, %v8201
    %v8203 = vpop.f32.mrb[0].mxu0
    %8204 = vmatprep.mubr.f32.mxu0 0.0
    %v8205 = vand.u32 %v7268, 4294901760
    %8206 = vmatmul.mubr.f32.gmra.mrb[0].mxu0 %v8205
    %v8207 = vpop.f32.mrb[0].mxu0
    %v8208 = vadd.f32 %v8073, %v8207
    %v8209 = vpop.f32.mrb[0].mxu0
    %8210 = vmatprep.mubr.f32.mxu0 0.0
    %v8211 = vand.u32 %v7271, 4294901760
    %8212 = vmatmul.mubr.f32.gmra.mrb[0].mxu0 %v8211
    %v8213 = vpop.f32.mrb[0].mxu0
    %v8214 = vadd.f32 %v8079, %v8213
    %v8215 = vpop.f32.mrb[0].mxu0
    %8216 = vmatprep.mubr.f32.mxu0 0.0
    %v8217 = vand.u32 %v7274, 4294901760
    %8218 = vmatmul.mubr.f32.gmra.mrb[0].mxu0 %v8217
    %v8219 = vpop.f32.mrb[0].mxu0
    %v8220 = vadd.f32 %v8085, %v8219
    %v8221 = vpop.f32.mrb[0].mxu0
    %8222 = vmatprep.mubr.f32.mxu0 0.0
    %v8223 = vand.u32 %v7277, 4294901760
    %8224 = vmatmul.mubr.f32.gmra.mrb[0].mxu0 %v8223
    %v8225 = vpop.f32.mrb[0].mxu0
    %v8226 = vadd.f32 %v8091, %v8225
    %v8227 = vpop.f32.mrb[0].mxu0
    %8228 = vdwg.mxu0
    %v8229 = vmul.f32 %v8172, %v8172
    %v8230 = vmul.f32 %v8178, %v8178
    %v8231 = vmul.f32 %v8184, %v8184
    %v8232 = vmul.f32 %v8190, %v8190
    %v8233 = vmul.f32 %v8172, %v8184
    %v8234 = vmul.f32 %v8178, %v8190
    %v8235 = vsub.f32 %v8196, %v8229
    %v8236 = vsub.f32 %v8202, %v8230
    %v8237 = vsub.f32 %v8208, %v8231
    %v8238 = vsub.f32 %v8214, %v8232
    %v8239 = vsub.f32 %v8220, %v8233
    %v8240 = vsub.f32 %v8226, %v8234
    %v8241 = vmul.f32 %v8233, 2.0
    %v8242 = vmul.f32 %v8234, 2.0
    %v8243 = vadd.f32 %v8241, 0.0001
    %v8244 = vadd.f32 %v8242, 0.0001
    %v8245 = vmul.f32 %v8239, 2.0
    %v8246 = vmul.f32 %v8240, 2.0
    %v8247 = vadd.f32 %v8245, 0.0009
    %v8248 = vadd.f32 %v8246, 0.0009
    %v8249 = vmul.f32 %v8243, %v8247
    %v8250 = vmul.f32 %v8244, %v8248
    %v8251 = vadd.f32 %v8229, %v8231
    %v8252 = vadd.f32 %v8230, %v8232
    %v8253 = vadd.f32 %v8251, 0.0001
    %v8254 = vadd.f32 %v8252, 0.0001
    %v8255 = vadd.f32 %v8235, %v8237
    %v8256 = vadd.f32 %v8236, %v8238
    %v8257 = vadd.f32 %v8255, 0.0009
    %v8258 = vadd.f32 %v8256, 0.0009
    %v8259 = vmul.f32 %v8253, %v8257
    %v8260 = vmul.f32 %v8254, %v8258
    %v8261 = vrcp.pop %v8259
    %v8262 = vrcp.pop %v8260
    %v8263 = vmul.f32 %v8259, %v8261
    %v8264 = vmul.f32 %v8260, %v8262
    %v8265 = vsub.f32 2.0, %v8263
    %v8266 = vsub.f32 2.0, %v8264
    %v8267 = vmul.f32 %v8261, %v8265
    %v8268 = vmul.f32 %v8262, %v8266
    %v8269 = vmul.f32 %v8249, %v8267
    %v8270 = vmul.f32 %v8250, %v8268
    %v8271 = vadd.f32 %v8269, %v8270
    %8272 = vst [vmem:[#allocation10] sm:$0xff] %v8271
    // Predicated region
    $region34: #{tpu_custom_call.1} parent=1 // pred_check
      _
    $region35: #{tpu_custom_call.1} parent=1 // pred_check_branch
      %8274 = sbr.rel (0) target = $region37
    $region36: #{tpu_custom_call.1} parent=1 // pred_region
      %s8276 = ssub.s32 128, 128
      %8277 = vsyncadd [#allocation4], %s8276
      %s8279 = sshll.u32 [#allocation10], 4
      %s8280 = int_to_ptr.vmem [resolvable:$true] %s8279
      %8282 = dma.vmem_to_hbm [thread:$0]  %s8280, 128, %s4, [#allocation4]
    $region37: #{tpu_custom_call.1} parent=1 // pred_fallthru
      _
    // Predicated region
    $region38: #{tpu_custom_call.1} parent=1 // pred_check
      _
    $region39: #{tpu_custom_call.1} parent=1 // pred_check_branch
      %8284 = sbr.rel (0) target = $region41
    $region40: #{tpu_custom_call.1} parent=1 // pred_region
      %8285 = dma.done [#allocation4], 128
    $region41: #{tpu_custom_call.1} parent=1 // pred_fallthru
      _
    %8286 = vsyncpa [#allocation3], 1
    %8287 = vsyncpa [#allocation6], 1
    %8288 = vsyncpa [#allocation9], 1
    %8289 = vsyncpa [#allocation4], 1

</llo_original>
